<compile_context>
chip_gen: v7x
topology: tpu7x:2x2x1
jax: 0.10.0
libtpu: 0.0.40
codegen_flags: <defaults>
</compile_context>

<pallas_src>
import jax
import jax.numpy as jnp
from jax.experimental import pallas as pl
from jax.experimental.pallas import tpu as pltpu

CHANNELS = 3
INPUT_SIZE = CHANNELS * 32 * 32       # 3072
HIDDEN_SIZE = 1500
NUM_CLASSES = 10
HIDDEN_PAD = 1536                     # next multiple of 128 >= 1500
TILE_H = 768                          # hidden-dim tile (1536 / 768 = 2 tiles)
N_TILES = HIDDEN_PAD // TILE_H

# TODO(synk): nn.Dropout is implemented as identity (eval mode / p=0.0); training-mode
# stochastic dropout would use pltpu.prng_seed + pltpu.stateful_bernoulli.


def _mlp_kernel(x_ref, w1_ref, b1_ref, w2_ref, b2_ref, out_ref):
    k = pl.program_id(0)  # hidden-tile index (reduction axis of the 2nd matmul)

    @pl.when(k == 0)
    def _():
        out_ref[...] = jnp.zeros_like(out_ref)

    # Layer 1 tile: (B, 3072) @ (3072, TILE_H), bf16 x bf16 -> f32 on the MXU.
    h = jnp.dot(x_ref[...], w1_ref[...], preferred_element_type=jnp.float32)
    h = jnp.maximum(h + b1_ref[...], 0.0)

    # Dropout: identity (see TODO above).

    # Layer 2 partial contraction over this hidden tile, accumulated in f32
    # directly into the resident output slab.  h recast to bf16 (tiny (B, TILE_H)
    # VPU cast) so this dot also runs the native bf16 MXU path.
    out_ref[...] += jnp.dot(h.astype(jnp.bfloat16), w2_ref[...],
                            preferred_element_type=jnp.float32)

    @pl.when(k == pl.num_programs(0) - 1)
    def _():
        out_ref[...] += b2_ref[...]


@jax.jit
def mlp_forward(x, w1t, b1, w2, b2):
    """x: (B, INPUT_SIZE) f32.
    w1t: (N_TILES, INPUT_SIZE, TILE_H) bf16 (pre-tiled, hidden-dim zero-padded).
    b1:  (1, HIDDEN_PAD) f32.  w2: (HIDDEN_PAD, NUM_CLASSES) bf16.  b2: (1, NUM_CLASSES) f32.
    """
    batch = x.shape[0]
    x_bf = x.astype(jnp.bfloat16)  # one cheap cast outside the kernel

    cost = pl.CostEstimate(
        flops=2 * batch * INPUT_SIZE * HIDDEN_PAD
              + 2 * batch * HIDDEN_PAD * NUM_CLASSES,
        transcendentals=0,
        bytes_accessed=(w1t.size * 2 + w2.size * 2 + x_bf.size * 2
                        + b1.size * 4 + b2.size * 4
                        + batch * NUM_CLASSES * 4),
    )

    grid_spec = pltpu.PrefetchScalarGridSpec(
        num_scalar_prefetch=0,
        grid=(N_TILES,),
        in_specs=[
            # x: resident across all hidden tiles.
            pl.BlockSpec((batch, INPUT_SIZE), lambda k: (0, 0)),
            # W1 hidden tile: contiguous (INPUT_SIZE, TILE_H) slab per grid step.
            pl.BlockSpec((None, INPUT_SIZE, TILE_H), lambda k: (k, 0, 0)),
            # b1 tile.
            pl.BlockSpec((1, TILE_H), lambda k: (0, k)),
            # W2 tile (rows matching this hidden tile).
            pl.BlockSpec((TILE_H, NUM_CLASSES), lambda k: (k, 0)),
            # b2: tiny, resident.
            pl.BlockSpec((1, NUM_CLASSES), lambda k: (0, 0)),
        ],
        # Output accumulator resident across the whole (reduction) grid.
        out_specs=pl.BlockSpec((batch, NUM_CLASSES), lambda k: (0, 0)),
    )

    return pl.pallas_call(
        _mlp_kernel,
        out_shape=jax.ShapeDtypeStruct((batch, NUM_CLASSES), jnp.float32),
        grid_spec=grid_spec,
        compiler_params=pltpu.CompilerParams(
            dimension_semantics=("arbitrary",),
            vmem_limit_bytes=32 * 1024 * 1024,
        ),
        cost_estimate=cost,
    )(x_bf, w1t, b1, w2, b2)


def init_params(key):
    """Deterministic init mimicking PyTorch Linear default U(-1/sqrt(fan_in), 1/sqrt(fan_in))."""
    k1, k2, k3, k4 = jax.random.split(key, 4)
    bound1 = 1.0 / (INPUT_SIZE ** 0.5)
    bound2 = 1.0 / (HIDDEN_SIZE ** 0.5)

    w1 = jax.random.uniform(k1, (INPUT_SIZE, HIDDEN_SIZE), jnp.float32, -bound1, bound1)
    b1 = jax.random.uniform(k2, (HIDDEN_SIZE,), jnp.float32, -bound1, bound1)
    w2 = jax.random.uniform(k3, (HIDDEN_SIZE, NUM_CLASSES), jnp.float32, -bound2, bound2)
    b2 = jax.random.uniform(k4, (NUM_CLASSES,), jnp.float32, -bound2, bound2)

    # bf16 weight streams (halves HBM bytes; accumulation stays f32 in-kernel).
    w1_bf = w1.astype(jnp.bfloat16)
    w2_bf = w2.astype(jnp.bfloat16)

    # Zero-pad hidden dim 1500 -> 1536 (exact: relu(0)=0, zero W2 rows), then
    # pre-tile W1 so each kernel block is a contiguous HBM slab.
    w1p = jnp.zeros((INPUT_SIZE, HIDDEN_PAD), jnp.bfloat16).at[:, :HIDDEN_SIZE].set(w1_bf)
    w1t = w1p.reshape(INPUT_SIZE, N_TILES, TILE_H).transpose(1, 0, 2)  # (N_TILES, 3072, 768)
    b1p = jnp.zeros((1, HIDDEN_PAD), jnp.float32).at[0, :HIDDEN_SIZE].set(b1)
    w2p = jnp.zeros((HIDDEN_PAD, NUM_CLASSES), jnp.bfloat16).at[:HIDDEN_SIZE, :].set(w2_bf)
    b2p = b2.reshape(1, NUM_CLASSES)

    # Reference uses the SAME quantized weight values, dequantized to f32.
    ref_params = (w1_bf.astype(jnp.float32), b1, w2_bf.astype(jnp.float32), b2)
    return (w1t, b1p, w2p, b2p), ref_params


def reference_forward(x, w1, b1, w2, b2):
    # Mirror the kernel's numerics: bf16-rounded x, f32 accumulation, bf16-rounded h
    # into the second matmul (bf16 x bf16 products are exact in f32).
    xq = x.astype(jnp.bfloat16).astype(jnp.float32)
    h = jnp.maximum(xq @ w1 + b1, 0.0)
    hq = h.astype(jnp.bfloat16).astype(jnp.float32)
    return hq @ w2 + b2


if __name__ == "__main__":
    key = jax.random.PRNGKey(0)
    kx, kp = jax.random.split(key)

    batch = 2
    # Input is a flattened CIFAR-like image batch: (2, 3, 32, 32) -> (2, 3072).
    x = jax.random.normal(kx, (batch, CHANNELS, 32, 32), jnp.float32).reshape(batch, INPUT_SIZE)

    (w1t, b1p, w2p, b2p), (w1r, b1r, w2r, b2r) = init_params(kp)

    out = mlp_forward(x, w1t, b1p, w2p, b2p)
    out = jax.block_until_ready(out)

    ref = reference_forward(x, w1r, b1r, w2r, b2r)
    assert out.shape == (batch, NUM_CLASSES)
    assert jnp.allclose(out, ref, atol=2e-3, rtol=2e-3), "mismatch vs pure-JAX reference"

    print("KERNEL_OK")
</pallas_src>

<mosaic_0001>
module attributes {stable_mosaic.version = 11 : i64} {
  func.func @_mlp_kernel(%arg0: i32, %arg1: memref<2x3072xbf16, #tpu.memory_space<vmem>>, %arg2: memref<1x3072x768xbf16, #tpu.memory_space<vmem>>, %arg3: memref<1x768xf32, #tpu.memory_space<vmem>>, %arg4: memref<768x10xbf16, #tpu.memory_space<vmem>>, %arg5: memref<1x10xf32, #tpu.memory_space<vmem>>, %arg6: memref<2x10xf32, #tpu.memory_space<vmem>>) attributes {dimension_semantics = [#tpu.dimension_semantics<arbitrary>], iteration_bounds = array<i64: 2>, scalar_prefetch = 0 : i64, scratch_operands = 0 : i64, tpu.core_type = #tpu.core_type<tc>, window_params = [{pipeline_mode = #tpu.pipeline_mode<synchronous>, transform_indices = @transform_0, window_bounds = array<i64: 2, 3072>}, {transform_indices = @transform_1, window_bounds = array<i64: 1, 3072, 768>}, {transform_indices = @transform_2, window_bounds = array<i64: 1, 768>}, {transform_indices = @transform_3, window_bounds = array<i64: 768, 10>}, {pipeline_mode = #tpu.pipeline_mode<synchronous>, transform_indices = @transform_4, window_bounds = array<i64: 1, 10>}, {pipeline_mode = #tpu.pipeline_mode<synchronous>, transform_indices = @transform_5, window_bounds = array<i64: 2, 10>}]} {
    %c0_i32 = arith.constant 0 : i32
    %0 = arith.cmpi eq, %arg0, %c0_i32 : i32
    %1 = arith.extui %0 : i1 to i32
    %c0_i32_0 = arith.constant 0 : i32
    %2 = arith.cmpi ne, %1, %c0_i32_0 : i32
    scf.if %2 {
      %cst_16 = arith.constant 0.000000e+00 : f32
      %21 = vector.broadcast %cst_16 : f32 to vector<2x10xf32>
      %c0_17 = arith.constant 0 : index
      %c0_18 = arith.constant 0 : index
      %22 = vector.load %arg6[%c0_17, %c0_18] : memref<2x10xf32, #tpu.memory_space<vmem>>, vector<2x10xf32>
      tpu.vector_store %arg6[%c0_17, %c0_18], %21 {strides = array<i32>} : memref<2x10xf32, #tpu.memory_space<vmem>>, vector<2x10xf32>,
    } else {
    }
    %c0 = arith.constant 0 : index
    %c0_1 = arith.constant 0 : index
    %3 = vector.load %arg1[%c0, %c0_1] : memref<2x3072xbf16, #tpu.memory_space<vmem>>, vector<2x3072xbf16>
    %c0_2 = arith.constant 0 : index
    %c0_3 = arith.constant 0 : index
    %c0_4 = arith.constant 0 : index
    %4 = vector.load %arg2[%c0_2, %c0_3, %c0_4] : memref<1x3072x768xbf16, #tpu.memory_space<vmem>>, vector<1x3072x768xbf16>
    %5 = vector.shape_cast %4 : vector<1x3072x768xbf16> to vector<3072x768xbf16>
    %cst = arith.constant dense<0.000000e+00> : vector<2x768xf32>
    %6 = tpu.matmul %3, %5, %cst {dimension_numbers = #tpu.dot_dimension_numbers<[1], [0], [0], [1], [0, 0, 1, 1], [], []>} : vector<2x3072xbf16>, vector<3072x768xbf16>, vector<2x768xf32> -> vector<2x768xf32>
    %c0_5 = arith.constant 0 : index
    %c0_6 = arith.constant 0 : index
    %7 = vector.load %arg3[%c0_5, %c0_6] : memref<1x768xf32, #tpu.memory_space<vmem>>, vector<1x768xf32>
    %8 = vector.broadcast %7 : vector<1x768xf32> to vector<2x768xf32>
    %9 = arith.addf %6, %8 : vector<2x768xf32>
    %cst_7 = arith.constant 0.000000e+00 : f32
    %10 = vector.broadcast %cst_7 : f32 to vector<2x768xf32>
    %11 = arith.maximumf %9, %10 : vector<2x768xf32>
    %c0_8 = arith.constant 0 : index
    %c0_9 = arith.constant 0 : index
    %12 = vector.load %arg6[%c0_8, %c0_9] : memref<2x10xf32, #tpu.memory_space<vmem>>, vector<2x10xf32>
    %13 = arith.truncf %11 : vector<2x768xf32> to vector<2x768xbf16>
    %c0_10 = arith.constant 0 : index
    %c0_11 = arith.constant 0 : index
    %14 = vector.load %arg4[%c0_10, %c0_11] : memref<768x10xbf16, #tpu.memory_space<vmem>>, vector<768x10xbf16>
    %cst_12 = arith.constant dense<0.000000e+00> : vector<2x10xf32>
    %15 = tpu.matmul %13, %14, %cst_12 {dimension_numbers = #tpu.dot_dimension_numbers<[1], [0], [0], [1], [0, 0, 1, 1], [], []>} : vector<2x768xbf16>, vector<768x10xbf16>, vector<2x10xf32> -> vector<2x10xf32>
    %16 = arith.addf %12, %15 : vector<2x10xf32>
    %c0_13 = arith.constant 0 : index
    %c0_14 = arith.constant 0 : index
    %17 = vector.load %arg6[%c0_13, %c0_14] : memref<2x10xf32, #tpu.memory_space<vmem>>, vector<2x10xf32>
    tpu.vector_store %arg6[%c0_13, %c0_14], %16 {strides = array<i32>} : memref<2x10xf32, #tpu.memory_space<vmem>>, vector<2x10xf32>,
    %c1_i32 = arith.constant 1 : i32
    %18 = arith.cmpi eq, %arg0, %c1_i32 : i32
    %19 = arith.extui %18 : i1 to i32
    %c0_i32_15 = arith.constant 0 : i32
    %20 = arith.cmpi ne, %19, %c0_i32_15 : i32
    scf.if %20 {
      %c0_16 = arith.constant 0 : index
      %c0_17 = arith.constant 0 : index
      %21 = vector.load %arg6[%c0_16, %c0_17] : memref<2x10xf32, #tpu.memory_space<vmem>>, vector<2x10xf32>
      %c0_18 = arith.constant 0 : index
      %c0_19 = arith.constant 0 : index
      %22 = vector.load %arg5[%c0_18, %c0_19] : memref<1x10xf32, #tpu.memory_space<vmem>>, vector<1x10xf32>
      %23 = vector.broadcast %22 : vector<1x10xf32> to vector<2x10xf32>
      %24 = arith.addf %21, %23 : vector<2x10xf32>
      %c0_20 = arith.constant 0 : index
      %c0_21 = arith.constant 0 : index
      %25 = vector.load %arg6[%c0_20, %c0_21] : memref<2x10xf32, #tpu.memory_space<vmem>>, vector<2x10xf32>
      tpu.vector_store %arg6[%c0_20, %c0_21], %24 {strides = array<i32>} : memref<2x10xf32, #tpu.memory_space<vmem>>, vector<2x10xf32>,
    } else {
    }
    return
  }
  func.func @transform_0(%arg0: i32) -> (i32, i32) {
    %c0_i32 = arith.constant 0 : i32
    %c0_i32_0 = arith.constant 0 : i32
    %c0_i32_1 = arith.constant 0 : i32
    return %c0_i32, %c0_i32_0 : i32, i32
  }
  func.func @transform_1(%arg0: i32) -> (i32, i32, i32) {
    %c0_i32 = arith.constant 0 : i32
    %c0_i32_0 = arith.constant 0 : i32
    %c0_i32_1 = arith.constant 0 : i32
    return %arg0, %c0_i32, %c0_i32_0 : i32, i32, i32
  }
  func.func @transform_2(%arg0: i32) -> (i32, i32) {
    %c0_i32 = arith.constant 0 : i32
    %c0_i32_0 = arith.constant 0 : i32
    return %c0_i32, %arg0 : i32, i32
  }
  func.func @transform_3(%arg0: i32) -> (i32, i32) {
    %c0_i32 = arith.constant 0 : i32
    %c0_i32_0 = arith.constant 0 : i32
    return %arg0, %c0_i32 : i32, i32
  }
  func.func @transform_4(%arg0: i32) -> (i32, i32) {
    %c0_i32 = arith.constant 0 : i32
    %c0_i32_0 = arith.constant 0 : i32
    %c0_i32_1 = arith.constant 0 : i32
    return %c0_i32, %c0_i32_0 : i32, i32
  }
  func.func @transform_5(%arg0: i32) -> (i32, i32) {
    %c0_i32 = arith.constant 0 : i32
    %c0_i32_0 = arith.constant 0 : i32
    %c0_i32_1 = arith.constant 0 : i32
    return %c0_i32, %c0_i32_0 : i32, i32
  }
}

</mosaic_0001>

<llo_original>
// kernel: mlp_forward.1
$region0: #{mlp_forward.1}
  #allocation0 [shape = 'u32[]', space=smem, size = 0x4, offset = 0x4, fixed_abs, tag = 'smem constant byte address 0x4 - core index']
  #allocation1 [shape = 'u32[144,128]{1,0:T(1,128)}', space=vmem, size = 0x12000, scoped, tag = 'internal scratch']
  %s0 = inlined_call_operand.vmem [shape: bf16[2,3072], index: 0, kind: input, shape index: {}]
  %s1 = inlined_call_operand.hbm [shape: bf16[2,3072,768], index: 1, kind: input, shape index: {}]
  %s2 = inlined_call_operand.hbm [shape: f32[1,1536], index: 2, kind: input, shape index: {}]
  %s3 = inlined_call_operand.vmem [shape: bf16[1536,10], index: 3, kind: input, shape index: {}]
  %s4 = inlined_call_operand.hbm [shape: f32[1,10], index: 4, kind: input, shape index: {}]
  %s5 = inlined_call_operand.hbm [shape: f32[2,10], index: 5, kind: output, shape index: {}]
  %s6 = sld [smem:[#allocation0]]
  $region73: #{mlp_forward.1} parent=0
    _
  %s8 = ssub.s32 1, %s6
  %s9 = scalar_select 0, %s8, %s6
  $region1: #{mlp_forward.1} parent=0
    #allocation2 [shape = 'u8[9437184]{0}', space=vmem, size = 0x900000, scoped, tag = 'input window, operand 1']
    #allocation3 [shape = 's32[2]{0}', space=sflag, size = 0x8, scoped, tag = 'scoped memory for mlp_forward.1']
    #allocation4 [shape = 's32[2]{0}', space=sflag, size = 0x8, scoped, tag = 'scoped memory for mlp_forward.1']
    #allocation5 [shape = 'u8[6144]{0}', space=vmem, size = 0x1800, scoped, tag = 'input window, operand 2']
    #allocation6 [shape = 's32[2]{0}', space=sflag, size = 0x8, scoped, tag = 'scoped memory for mlp_forward.1']
    #allocation7 [shape = 'u8[512]{0}', space=vmem, size = 0x400, scoped, tag = 'input window, operand 4, single buffered']
    #allocation8 [shape = 'u8[1024]{0}', space=vmem, size = 0x400, scoped, tag = 'output window, operand 0, single buffered']
    %10 = vsyncpa [#allocation3], 0
    %s11 = scalar_lea.sflag [#allocation3], 1
    %12 = vsyncpa %s11, 0
    %13 = vsyncpa [#allocation6], 0
    %s14 = scalar_lea.sflag [#allocation6], 1
    %15 = vsyncpa %s14, 0
    %16 = vsyncpa [#allocation4], 0
    loop: start=0, step=1, limit=4
    $region2: #{mlp_forward.1} parent=1 // loop_pre_header
      _
    $region3: #{mlp_forward.1} parent=1 // loop_header
      %s18 = sphi 0, %s22
      %p19 = scmp.ge.s32.totalorder %s18, 4
      %s26 = sphi 0, %s26
      %s28 = sphi 0, %s26
      %s29 = sphi 0, %s28
      %s43 = sphi 0, %s29
      %s49 = sphi 0, %s51
      %s52 = sphi 0, %s49
      %s53 = sphi 0, %s52
      %s69 = sphi 0, %s53
      %s75 = sphi 0, %s77
      %s78 = sphi 0, %s75
      %s79 = sphi 0, %s78
      %s95 = sphi 0, %s79
      %s101 = sphi 0, %s103
      %s104 = sphi 0, %s101
      %s105 = sphi 0, %s104
      %s121 = sphi 0, %s105
      %s125 = sphi 0, %s125
      %s127 = sphi 0, %s125
      %s128 = sphi 0, %s127
      %s142 = sphi 0, %s128
      %s146 = sphi 0, %s146
      %s148 = sphi 0, %s146
      %s149 = sphi 0, %s148
      %s163 = sphi 0, %s149
    $region4: #{mlp_forward.1} parent=1 // loop_header_branch
      %21 = sbr.rel (%p19) target = $region8
    $region5: #{mlp_forward.1} parent=1 // loop_body
      %s23 = ssub.s32 %s18, 1
      %s24 = ssub.s32 %s18, 2
      %s25 = sadd.s32 %s18, 1
      %s27 = sadd.s32 %s26, 1
      %p30 = scmp.eq.s32.totalorder %s18, 1
      %p31 = scmp.ne.s32.totalorder %s26, %s28
      %p32 = scmp.eq.s32.totalorder %s18, 0
      %p33 = por %p31, %p32
      %p34 = scmp.ne.s32.totalorder %s26, %s28
      %p35 = scmp.eq.s32.totalorder %s23, 1
      %p36 = por %p34, %p35
      %p37 = scmp.ne.s32.totalorder %s28, %s29
      %p38 = scmp.eq.s32.totalorder %s23, 0
      %p39 = por %p37, %p38
      %p40 = scmp.ne.s32.totalorder %s28, %s29
      %p41 = scmp.eq.s32.totalorder %s24, 1
      %p42 = por %p40, %p41
      %p44 = scmp.ne.s32.totalorder %s29, %s43
      %p45 = scmp.eq.s32.totalorder %s24, 0
      %p46 = por %p44, %p45
      %s47 = ssub.s32 %s18, %s25
      %p48 = scmp.eq.s32.totalorder %s47, 0
      %s50 = sadd.s32 %s49, 1
      %s51 = scalar_select %p48, %s49, %s50
      %p54 = pneg %p48
      %p55 = scmp.eq.s32.totalorder %s18, 1
      %p56 = por %p54, %p55
      %p57 = scmp.ne.s32.totalorder %s49, %s52
      %p58 = scmp.eq.s32.totalorder %s18, 0
      %p59 = por %p57, %p58
      %p60 = scmp.ne.s32.totalorder %s49, %s52
      %p61 = scmp.eq.s32.totalorder %s23, 1
      %p62 = por %p60, %p61
      %p63 = scmp.ne.s32.totalorder %s52, %s53
      %p64 = scmp.eq.s32.totalorder %s23, 0
      %p65 = por %p63, %p64
      %p66 = scmp.ne.s32.totalorder %s52, %s53
      %p67 = scmp.eq.s32.totalorder %s24, 1
      %p68 = por %p66, %p67
      %p70 = scmp.ne.s32.totalorder %s53, %s69
      %p71 = scmp.eq.s32.totalorder %s24, 0
      %p72 = por %p70, %p71
      %s73 = ssub.s32 %s18, %s25
      %p74 = scmp.eq.s32.totalorder %s73, 0
      %s76 = sadd.s32 %s75, 1
      %s77 = scalar_select %p74, %s75, %s76
      %p80 = pneg %p74
      %p81 = scmp.eq.s32.totalorder %s18, 1
      %p82 = por %p80, %p81
      %p83 = scmp.ne.s32.totalorder %s75, %s78
      %p84 = scmp.eq.s32.totalorder %s18, 0
      %p85 = por %p83, %p84
      %p86 = scmp.ne.s32.totalorder %s75, %s78
      %p87 = scmp.eq.s32.totalorder %s23, 1
      %p88 = por %p86, %p87
      %p89 = scmp.ne.s32.totalorder %s78, %s79
      %p90 = scmp.eq.s32.totalorder %s23, 0
      %p91 = por %p89, %p90
      %p92 = scmp.ne.s32.totalorder %s78, %s79
      %p93 = scmp.eq.s32.totalorder %s24, 1
      %p94 = por %p92, %p93
      %p96 = scmp.ne.s32.totalorder %s79, %s95
      %p97 = scmp.eq.s32.totalorder %s24, 0
      %p98 = por %p96, %p97
      %s99 = ssub.s32 %s18, %s25
      %p100 = scmp.eq.s32.totalorder %s99, 0
      %s102 = sadd.s32 %s101, 1
      %s103 = scalar_select %p100, %s101, %s102
      %p106 = pneg %p100
      %p107 = scmp.eq.s32.totalorder %s18, 1
      %p108 = por %p106, %p107
      %p109 = scmp.ne.s32.totalorder %s101, %s104
      %p110 = scmp.eq.s32.totalorder %s18, 0
      %p111 = por %p109, %p110
      %p112 = scmp.ne.s32.totalorder %s101, %s104
      %p113 = scmp.eq.s32.totalorder %s23, 1
      %p114 = por %p112, %p113
      %p115 = scmp.ne.s32.totalorder %s104, %s105
      %p116 = scmp.eq.s32.totalorder %s23, 0
      %p117 = por %p115, %p116
      %p118 = scmp.ne.s32.totalorder %s104, %s105
      %p119 = scmp.eq.s32.totalorder %s24, 1
      %p120 = por %p118, %p119
      %p122 = scmp.ne.s32.totalorder %s105, %s121
      %p123 = scmp.eq.s32.totalorder %s24, 0
      %p124 = por %p122, %p123
      %s126 = sadd.s32 %s125, 1
      %p129 = scmp.eq.s32.totalorder %s18, 1
      %p130 = scmp.ne.s32.totalorder %s125, %s127
      %p131 = scmp.eq.s32.totalorder %s18, 0
      %p132 = por %p130, %p131
      %p133 = scmp.ne.s32.totalorder %s125, %s127
      %p134 = scmp.eq.s32.totalorder %s23, 1
      %p135 = por %p133, %p134
      %p136 = scmp.ne.s32.totalorder %s127, %s128
      %p137 = scmp.eq.s32.totalorder %s23, 0
      %p138 = por %p136, %p137
      %p139 = scmp.ne.s32.totalorder %s127, %s128
      %p140 = scmp.eq.s32.totalorder %s24, 1
      %p141 = por %p139, %p140
      %p143 = scmp.ne.s32.totalorder %s128, %s142
      %p144 = scmp.eq.s32.totalorder %s24, 0
      %p145 = por %p143, %p144
      %s147 = sadd.s32 %s146, 1
      %p150 = scmp.eq.s32.totalorder %s18, 1
      %p151 = scmp.ne.s32.totalorder %s146, %s148
      %p152 = scmp.eq.s32.totalorder %s18, 0
      %p153 = por %p151, %p152
      %p154 = scmp.ne.s32.totalorder %s146, %s148
      %p155 = scmp.eq.s32.totalorder %s23, 1
      %p156 = por %p154, %p155
      %p157 = scmp.ne.s32.totalorder %s148, %s149
      %p158 = scmp.eq.s32.totalorder %s23, 0
      %p159 = por %p157, %p158
      %p160 = scmp.ne.s32.totalorder %s148, %s149
      %p161 = scmp.eq.s32.totalorder %s24, 1
      %p162 = por %p160, %p161
      %p164 = scmp.ne.s32.totalorder %s149, %s163
      %p165 = scmp.eq.s32.totalorder %s24, 0
      %p166 = por %p164, %p165
      %p167 = scmp.le.s32.totalorder 1, %s18
      %p168 = scmp.lt.s32.totalorder %s18, 3
      %p169 = pnand %p167, %p168
      %p170 = pneg %p169
      // Predicated region
      $region9: #{mlp_forward.1} parent=5 // pred_check
        _
      $region10: #{mlp_forward.1} parent=5 // pred_check_branch
        %172 = sbr.rel (%p169) target = $region12
      $region11: #{mlp_forward.1} parent=5 // pred_region
        %s173 = ssub.s32 %s18, 1
        // Predicated region
        $region13: #{mlp_forward.1} parent=11 // pred_check
          %p174 = pneg %p39
        $region14: #{mlp_forward.1} parent=11 // pred_check_branch
          %176 = sbr.rel (%p174) target = $region16
        $region15: #{mlp_forward.1} parent=11 // pred_region
          _
        $region16: #{mlp_forward.1} parent=11 // pred_fallthru
          _
        // Predicated region
        $region17: #{mlp_forward.1} parent=11 // pred_check
          %p177 = pneg %p138
        $region18: #{mlp_forward.1} parent=11 // pred_check_branch
          %179 = sbr.rel (%p177) target = $region20
        $region19: #{mlp_forward.1} parent=11 // pred_region
          %s181 = ssub.s32 16, 16
          %182 = vsyncadd [#allocation6], %s181
          %s184 = sshll.u32 [#allocation7], 4
          %s185 = int_to_ptr.vmem [resolvable:$true] %s184
          %187 = dma.hbm_to_vmem [thread:$0]  %s4, 16, %s185, [#allocation6]
        $region20: #{mlp_forward.1} parent=11 // pred_fallthru
          _
      $region12: #{mlp_forward.1} parent=5 // pred_fallthru
        _
      %p188 = scmp.lt.s32.totalorder %s18, 2
      // Predicated region
      $region21: #{mlp_forward.1} parent=5 // pred_check
        %p189 = pneg %p188
      $region22: #{mlp_forward.1} parent=5 // pred_check_branch
        %191 = sbr.rel (%p189) target = $region24
      $region23: #{mlp_forward.1} parent=5 // pred_region
        // Predicated region
        $region25: #{mlp_forward.1} parent=23 // pred_check
          %p192 = pneg %p59
        $region26: #{mlp_forward.1} parent=23 // pred_check_branch
          %194 = sbr.rel (%p192) target = $region28
        $region27: #{mlp_forward.1} parent=23 // pred_region
          %s195 = sand.u32 %s49, 1
          %s196 = scalar_lea.sflag [#allocation3], %s195
          %s197 = sand.u32 %s49, 1
          %s198 = smul.addr %s197, 9216
          %s199 = scalar_lea.vmem [#allocation2], %s198
          %s201 = ssub.s32 147456, 147456
          %202 = vsyncadd %s196, %s201
          %s203 = smul.addr %s18, 2304
          %s204 = smul.addr %s203, 64
          %s205 = scalar_lea.hbm %s1, %s204
          %s206 = sshll.u32 %s199, 4
          %s207 = int_to_ptr.vmem [resolvable:$true] %s206
          %212 = dma.hbm_to_vmem [thread:$0]  %s205, 147456, %s207, %s196, 384, 384, 24
        $region28: #{mlp_forward.1} parent=23 // pred_fallthru
          _
        // Predicated region
        $region29: #{mlp_forward.1} parent=23 // pred_check
          %p213 = pneg %p85
        $region30: #{mlp_forward.1} parent=23 // pred_check_branch
          %215 = sbr.rel (%p213) target = $region32
        $region31: #{mlp_forward.1} parent=23 // pred_region
          %s216 = sand.u32 %s18, 1
          %s217 = scalar_lea.sflag [#allocation6], %s216
          %s218 = sand.u32 %s75, 1
          %s219 = smul.addr %s218, 6
          %s220 = scalar_lea.vmem [#allocation5], %s219
          %s221 = smul.u32 6, %s18
          %s223 = ssub.s32 96, 96
          %224 = vsyncadd %s217, %s223
          %s225 = smul.addr %s221, 16
          %s226 = scalar_lea.hbm %s2, %s225
          %s228 = sshll.u32 %s220, 4
          %s229 = int_to_ptr.vmem [resolvable:$true] %s228
          %231 = dma.hbm_to_vmem [thread:$0]  %s226, 96, %s229, %s217
        $region32: #{mlp_forward.1} parent=23 // pred_fallthru
          _
        // Predicated region
        $region33: #{mlp_forward.1} parent=23 // pred_check
          %p232 = pneg %p111
        $region34: #{mlp_forward.1} parent=23 // pred_check_branch
          %234 = sbr.rel (%p232) target = $region36
        $region35: #{mlp_forward.1} parent=23 // pred_region
          %s235 = smul.u32 96, %s18
          %p236 = scmp.lt.s32.totalorder %s235, 191
          %s237 = scalar_select %p236, %s235, 191
          %s238 = smul.addr %s237, 4
          %s239 = scalar_lea.vmem %s3, %s238
          %s240 = smul.u32 96, %s18
        $region36: #{mlp_forward.1} parent=23 // pred_fallthru
          _
      $region24: #{mlp_forward.1} parent=5 // pred_fallthru
        _
      %p241 = scmp.le.s32.totalorder 1, %s18
      %p242 = scmp.lt.s32.totalorder %s18, 3
      %p243 = pnand %p241, %p242
      %p244 = pneg %p243
      // Predicated region
      $region37: #{mlp_forward.1} parent=5 // pred_check
        _
      $region38: #{mlp_forward.1} parent=5 // pred_check_branch
        %246 = sbr.rel (%p243) target = $region40
      $region39: #{mlp_forward.1} parent=5 // pred_region
        %s247 = ssub.s32 %s18, 1
        %s248 = sand.u32 %s52, 1
        %s249 = scalar_lea.sflag [#allocation3], %s248
        %s250 = sand.u32 %s52, 1
        %s251 = smul.addr %s250, 9216
        %s252 = scalar_lea.vmem [#allocation2], %s251
        // Predicated region
        $region41: #{mlp_forward.1} parent=39 // pred_check
          %p253 = pneg %p65
        $region42: #{mlp_forward.1} parent=39 // pred_check_branch
          %255 = sbr.rel (%p253) target = $region44
        $region43: #{mlp_forward.1} parent=39 // pred_region
          %256 = dma.done %s249, 147456
        $region44: #{mlp_forward.1} parent=39 // pred_fallthru
          _
        %s257 = sand.u32 %s23, 1
        %s258 = scalar_lea.sflag [#allocation6], %s257
        %s259 = sand.u32 %s78, 1
        %s260 = smul.addr %s259, 6
        %s261 = scalar_lea.vmem [#allocation5], %s260
        // Predicated region
        $region45: #{mlp_forward.1} parent=39 // pred_check
          %p262 = pneg %p91
        $region46: #{mlp_forward.1} parent=39 // pred_check_branch
          %264 = sbr.rel (%p262) target = $region48
        $region47: #{mlp_forward.1} parent=39 // pred_region
          %265 = dma.done %s258, 96
        $region48: #{mlp_forward.1} parent=39 // pred_fallthru
          _
        // Predicated region
        $region49: #{mlp_forward.1} parent=39 // pred_check
          %p266 = pneg %p138
        $region50: #{mlp_forward.1} parent=39 // pred_check_branch
          %268 = sbr.rel (%p266) target = $region52
        $region51: #{mlp_forward.1} parent=39 // pred_region
          %269 = dma.done [#allocation6], 16
        $region52: #{mlp_forward.1} parent=39 // pred_fallthru
          _
        %p270 = pneg %p39
        %p271 = pneg %p36
        %s272 = sand.u32 %s52, 1
        %s273 = scalar_lea.sflag [#allocation3], %s272
        %s274 = sand.u32 %s52, 1
        %s275 = smul.addr %s274, 9216
        %s276 = scalar_lea.vmem [#allocation2], %s275
        %p277 = pneg %p65
        %p278 = pneg %p62
        %s279 = sand.u32 %s23, 1
        %s280 = scalar_lea.sflag [#allocation6], %s279
        %s281 = sand.u32 %s78, 1
        %s282 = smul.addr %s281, 6
        %s283 = scalar_lea.vmem [#allocation5], %s282
        %p284 = pneg %p91
        %p285 = pneg %p88
        %s286 = smul.u32 96, %s23
        %p287 = scmp.lt.s32.totalorder %s286, 191
        %s288 = scalar_select %p287, %s286, 191
        %s289 = smul.addr %s288, 4
        %s290 = scalar_lea.vmem %s3, %s289
        %p291 = pneg %p117
        %p292 = pneg %p114
        %p293 = pneg %p138
        %p294 = pneg %p135
        %p295 = pneg %p159
        %p296 = pneg %p156
        %s297 = smul.u32 6, %s23
        %s298 = smul.u32 96, %s23
        %p299 = scmp.lt.s32.totalorder %s298, 191
        %s300 = scalar_select %p299, %s298, 191
        %s301 = smul.addr %s300, 4
        %s302 = scalar_lea.vmem %s3, %s301
        %s303 = smul.u32 96, %s23
        %p305 = scmp.eq.s32.totalorder %s23, 0
        // Predicated region
        $region53: #{mlp_forward.1} parent=39 // pred_check
          %p306 = pneg %p305
        $region54: #{mlp_forward.1} parent=39 // pred_check_branch
          %308 = sbr.rel (%p306) target = $region56
        $region55: #{mlp_forward.1} parent=39 // pred_region
          %vm309 = vcmask 74752
          %310 = vst.msk [vmem:[#allocation8] sm:$0x3] %vm309, 0.0
        $region56: #{mlp_forward.1} parent=39 // pred_fallthru
          _
        %v311 = vld [vmem:[%s0] sm:$0xff]
        %v312 = vld [vmem:[%s0 + $0x8] sm:$0xff]
        %v313 = vld [vmem:[%s0 + $0x10] sm:$0xff]
        %v314 = vld [vmem:[%s252] sm:$0xff]
        %v315 = vld [vmem:[%s252 + $0x8] sm:$0xff]
        %v316 = vld [vmem:[%s252 + $0x10] sm:$0xff]
        %v317 = vld [vmem:[%s252 + $0x18] sm:$0xff]
        %v318 = vld [vmem:[%s252 + $0x20] sm:$0xff]
        %v319 = vld [vmem:[%s252 + $0x28] sm:$0xff]
        %v320 = vld [vmem:[%s252 + $0x30] sm:$0xff]
        %v321 = vld [vmem:[%s252 + $0x38] sm:$0xff]
        %v322 = vld [vmem:[%s252 + $0x40] sm:$0xff]
        %v323 = vld [vmem:[%s252 + $0x48] sm:$0xff]
        %v324 = vld [vmem:[%s252 + $0x50] sm:$0xff]
        %v325 = vld [vmem:[%s252 + $0x58] sm:$0xff]
        %v326 = vld [vmem:[%s252 + $0x60] sm:$0xff]
        %v327 = vld [vmem:[%s252 + $0x68] sm:$0xff]
        %v328 = vld [vmem:[%s252 + $0x70] sm:$0xff]
        %v329 = vld [vmem:[%s252 + $0x78] sm:$0xff]
        %v330 = vld [vmem:[%s252 + $0x80] sm:$0xff]
        %v331 = vld [vmem:[%s252 + $0x88] sm:$0xff]
        %v332 = vld [vmem:[%s252 + $0x90] sm:$0xff]
        %v333 = vld [vmem:[%s252 + $0x98] sm:$0xff]
        %v334 = vld [vmem:[%s252 + $0xa0] sm:$0xff]
        %v335 = vld [vmem:[%s252 + $0xa8] sm:$0xff]
        %v336 = vld [vmem:[%s252 + $0xb0] sm:$0xff]
        %v337 = vld [vmem:[%s252 + $0xb8] sm:$0xff]
        %v338 = vld [vmem:[%s252 + $0xc0] sm:$0xff]
        %v339 = vld [vmem:[%s252 + $0xc8] sm:$0xff]
        %v340 = vld [vmem:[%s252 + $0xd0] sm:$0xff]
        %v341 = vld [vmem:[%s252 + $0xd8] sm:$0xff]
        %v342 = vld [vmem:[%s252 + $0xe0] sm:$0xff]
        %v343 = vld [vmem:[%s252 + $0xe8] sm:$0xff]
        %v344 = vld [vmem:[%s252 + $0xf0] sm:$0xff]
        %v345 = vld [vmem:[%s252 + $0xf8] sm:$0xff]
        %v346 = vld [vmem:[%s252 + $0x100] sm:$0xff]
        %v347 = vld [vmem:[%s252 + $0x108] sm:$0xff]
        %v348 = vld [vmem:[%s252 + $0x110] sm:$0xff]
        %v349 = vld [vmem:[%s252 + $0x118] sm:$0xff]
        %v350 = vld [vmem:[%s252 + $0x120] sm:$0xff]
        %v351 = vld [vmem:[%s252 + $0x128] sm:$0xff]
        %v352 = vld [vmem:[%s252 + $0x130] sm:$0xff]
        %v353 = vld [vmem:[%s252 + $0x138] sm:$0xff]
        %v354 = vld [vmem:[%s252 + $0x140] sm:$0xff]
        %v355 = vld [vmem:[%s252 + $0x148] sm:$0xff]
        %v356 = vld [vmem:[%s252 + $0x150] sm:$0xff]
        %v357 = vld [vmem:[%s252 + $0x158] sm:$0xff]
        %v358 = vld [vmem:[%s252 + $0x160] sm:$0xff]
        %v359 = vld [vmem:[%s252 + $0x168] sm:$0xff]
        %v360 = vld [vmem:[%s252 + $0x170] sm:$0xff]
        %v361 = vld [vmem:[%s252 + $0x178] sm:$0xff]
        %v362 = vld [vmem:[%s252 + $0x180] sm:$0xff]
        %v363 = vld [vmem:[%s252 + $0x188] sm:$0xff]
        %v364 = vld [vmem:[%s252 + $0x190] sm:$0xff]
        %v365 = vld [vmem:[%s252 + $0x198] sm:$0xff]
        %v366 = vld [vmem:[%s252 + $0x1a0] sm:$0xff]
        %v367 = vld [vmem:[%s252 + $0x1a8] sm:$0xff]
        %v368 = vld [vmem:[%s252 + $0x1b0] sm:$0xff]
        %v369 = vld [vmem:[%s252 + $0x1b8] sm:$0xff]
        %v370 = vld [vmem:[%s252 + $0x1c0] sm:$0xff]
        %v371 = vld [vmem:[%s252 + $0x1c8] sm:$0xff]
        %v372 = vld [vmem:[%s252 + $0x1d0] sm:$0xff]
        %v373 = vld [vmem:[%s252 + $0x1d8] sm:$0xff]
        %v374 = vld [vmem:[%s252 + $0x1e0] sm:$0xff]
        %v375 = vld [vmem:[%s252 + $0x1e8] sm:$0xff]
        %v376 = vld [vmem:[%s252 + $0x1f0] sm:$0xff]
        %v377 = vld [vmem:[%s252 + $0x1f8] sm:$0xff]
        %v378 = vld [vmem:[%s252 + $0x200] sm:$0xff]
        %v379 = vld [vmem:[%s252 + $0x208] sm:$0xff]
        %v380 = vld [vmem:[%s252 + $0x210] sm:$0xff]
        %v381 = vld [vmem:[%s252 + $0x218] sm:$0xff]
        %v382 = vld [vmem:[%s252 + $0x220] sm:$0xff]
        %v383 = vld [vmem:[%s252 + $0x228] sm:$0xff]
        %v384 = vld [vmem:[%s252 + $0x230] sm:$0xff]
        %v385 = vld [vmem:[%s252 + $0x238] sm:$0xff]
        %v386 = vld [vmem:[%s252 + $0x240] sm:$0xff]
        %v387 = vld [vmem:[%s252 + $0x248] sm:$0xff]
        %v388 = vld [vmem:[%s252 + $0x250] sm:$0xff]
        %v389 = vld [vmem:[%s252 + $0x258] sm:$0xff]
        %v390 = vld [vmem:[%s252 + $0x260] sm:$0xff]
        %v391 = vld [vmem:[%s252 + $0x268] sm:$0xff]
        %v392 = vld [vmem:[%s252 + $0x270] sm:$0xff]
        %v393 = vld [vmem:[%s252 + $0x278] sm:$0xff]
        %v394 = vld [vmem:[%s252 + $0x280] sm:$0xff]
        %v395 = vld [vmem:[%s252 + $0x288] sm:$0xff]
        %v396 = vld [vmem:[%s252 + $0x290] sm:$0xff]
        %v397 = vld [vmem:[%s252 + $0x298] sm:$0xff]
        %v398 = vld [vmem:[%s252 + $0x2a0] sm:$0xff]
        %v399 = vld [vmem:[%s252 + $0x2a8] sm:$0xff]
        %v400 = vld [vmem:[%s252 + $0x2b0] sm:$0xff]
        %v401 = vld [vmem:[%s252 + $0x2b8] sm:$0xff]
        %v402 = vld [vmem:[%s252 + $0x2c0] sm:$0xff]
        %v403 = vld [vmem:[%s252 + $0x2c8] sm:$0xff]
        %v404 = vld [vmem:[%s252 + $0x2d0] sm:$0xff]
        %v405 = vld [vmem:[%s252 + $0x2d8] sm:$0xff]
        %v406 = vld [vmem:[%s252 + $0x2e0] sm:$0xff]
        %v407 = vld [vmem:[%s252 + $0x2e8] sm:$0xff]
        %v408 = vld [vmem:[%s252 + $0x2f0] sm:$0xff]
        %v409 = vld [vmem:[%s252 + $0x2f8] sm:$0xff]
        %v410 = vld [vmem:[%s252 + $0x300] sm:$0xff]
        %v411 = vld [vmem:[%s252 + $0x308] sm:$0xff]
        %v412 = vld [vmem:[%s252 + $0x310] sm:$0xff]
        %v413 = vld [vmem:[%s252 + $0x318] sm:$0xff]
        %v414 = vld [vmem:[%s252 + $0x320] sm:$0xff]
        %v415 = vld [vmem:[%s252 + $0x328] sm:$0xff]
        %v416 = vld [vmem:[%s252 + $0x330] sm:$0xff]
        %v417 = vld [vmem:[%s252 + $0x338] sm:$0xff]
        %v418 = vld [vmem:[%s252 + $0x340] sm:$0xff]
        %v419 = vld [vmem:[%s252 + $0x348] sm:$0xff]
        %v420 = vld [vmem:[%s252 + $0x350] sm:$0xff]
        %v421 = vld [vmem:[%s252 + $0x358] sm:$0xff]
        %v422 = vld [vmem:[%s252 + $0x360] sm:$0xff]
        %v423 = vld [vmem:[%s252 + $0x368] sm:$0xff]
        %v424 = vld [vmem:[%s252 + $0x370] sm:$0xff]
        %v425 = vld [vmem:[%s252 + $0x378] sm:$0xff]
        %v426 = vld [vmem:[%s252 + $0x380] sm:$0xff]
        %v427 = vld [vmem:[%s252 + $0x388] sm:$0xff]
        %v428 = vld [vmem:[%s252 + $0x390] sm:$0xff]
        %v429 = vld [vmem:[%s252 + $0x398] sm:$0xff]
        %v430 = vld [vmem:[%s252 + $0x3a0] sm:$0xff]
        %v431 = vld [vmem:[%s252 + $0x3a8] sm:$0xff]
        %v432 = vld [vmem:[%s252 + $0x3b0] sm:$0xff]
        %v433 = vld [vmem:[%s252 + $0x3b8] sm:$0xff]
        %v434 = vld [vmem:[%s252 + $0x3c0] sm:$0xff]
        %v435 = vld [vmem:[%s252 + $0x3c8] sm:$0xff]
        %v436 = vld [vmem:[%s252 + $0x3d0] sm:$0xff]
        %v437 = vld [vmem:[%s252 + $0x3d8] sm:$0xff]
        %v438 = vld [vmem:[%s252 + $0x3e0] sm:$0xff]
        %v439 = vld [vmem:[%s252 + $0x3e8] sm:$0xff]
        %v440 = vld [vmem:[%s252 + $0x3f0] sm:$0xff]
        %v441 = vld [vmem:[%s252 + $0x3f8] sm:$0xff]
        %v442 = vld [vmem:[%s252 + $0x400] sm:$0xff]
        %v443 = vld [vmem:[%s252 + $0x408] sm:$0xff]
        %v444 = vld [vmem:[%s252 + $0x410] sm:$0xff]
        %v445 = vld [vmem:[%s252 + $0x418] sm:$0xff]
        %v446 = vld [vmem:[%s252 + $0x420] sm:$0xff]
        %v447 = vld [vmem:[%s252 + $0x428] sm:$0xff]
        %v448 = vld [vmem:[%s252 + $0x430] sm:$0xff]
        %v449 = vld [vmem:[%s252 + $0x438] sm:$0xff]
        %v450 = vld [vmem:[%s252 + $0x440] sm:$0xff]
        %v451 = vld [vmem:[%s252 + $0x448] sm:$0xff]
        %v452 = vld [vmem:[%s252 + $0x450] sm:$0xff]
        %v453 = vld [vmem:[%s252 + $0x458] sm:$0xff]
        %v454 = vld [vmem:[%s252 + $0x460] sm:$0xff]
        %v455 = vld [vmem:[%s252 + $0x468] sm:$0xff]
        %v456 = vld [vmem:[%s252 + $0x470] sm:$0xff]
        %v457 = vld [vmem:[%s252 + $0x478] sm:$0xff]
        %v458 = vld [vmem:[%s252 + $0x480] sm:$0xff]
        %v459 = vld [vmem:[%s252 + $0x488] sm:$0xff]
        %v460 = vld [vmem:[%s252 + $0x490] sm:$0xff]
        %v461 = vld [vmem:[%s252 + $0x498] sm:$0xff]
        %v462 = vld [vmem:[%s252 + $0x4a0] sm:$0xff]
        %v463 = vld [vmem:[%s252 + $0x4a8] sm:$0xff]
        %v464 = vld [vmem:[%s252 + $0x4b0] sm:$0xff]
        %v465 = vld [vmem:[%s252 + $0x4b8] sm:$0xff]
        %v466 = vld [vmem:[%s252 + $0x4c0] sm:$0xff]
        %v467 = vld [vmem:[%s252 + $0x4c8] sm:$0xff]
        %v468 = vld [vmem:[%s252 + $0x4d0] sm:$0xff]
        %v469 = vld [vmem:[%s252 + $0x4d8] sm:$0xff]
        %v470 = vld [vmem:[%s252 + $0x4e0] sm:$0xff]
        %v471 = vld [vmem:[%s252 + $0x4e8] sm:$0xff]
        %v472 = vld [vmem:[%s252 + $0x4f0] sm:$0xff]
        %v473 = vld [vmem:[%s252 + $0x4f8] sm:$0xff]
        %v474 = vld [vmem:[%s252 + $0x500] sm:$0xff]
        %v475 = vld [vmem:[%s252 + $0x508] sm:$0xff]
        %v476 = vld [vmem:[%s252 + $0x510] sm:$0xff]
        %v477 = vld [vmem:[%s252 + $0x518] sm:$0xff]
        %v478 = vld [vmem:[%s252 + $0x520] sm:$0xff]
        %v479 = vld [vmem:[%s252 + $0x528] sm:$0xff]
        %v480 = vld [vmem:[%s252 + $0x530] sm:$0xff]
        %v481 = vld [vmem:[%s252 + $0x538] sm:$0xff]
        %v482 = vld [vmem:[%s252 + $0x540] sm:$0xff]
        %v483 = vld [vmem:[%s252 + $0x548] sm:$0xff]
        %v484 = vld [vmem:[%s252 + $0x550] sm:$0xff]
        %v485 = vld [vmem:[%s252 + $0x558] sm:$0xff]
        %v486 = vld [vmem:[%s252 + $0x560] sm:$0xff]
        %v487 = vld [vmem:[%s252 + $0x568] sm:$0xff]
        %v488 = vld [vmem:[%s252 + $0x570] sm:$0xff]
        %v489 = vld [vmem:[%s252 + $0x578] sm:$0xff]
        %v490 = vld [vmem:[%s252 + $0x580] sm:$0xff]
        %v491 = vld [vmem:[%s252 + $0x588] sm:$0xff]
        %v492 = vld [vmem:[%s252 + $0x590] sm:$0xff]
        %v493 = vld [vmem:[%s252 + $0x598] sm:$0xff]
        %v494 = vld [vmem:[%s252 + $0x5a0] sm:$0xff]
        %v495 = vld [vmem:[%s252 + $0x5a8] sm:$0xff]
        %v496 = vld [vmem:[%s252 + $0x5b0] sm:$0xff]
        %v497 = vld [vmem:[%s252 + $0x5b8] sm:$0xff]
        %v498 = vld [vmem:[%s252 + $0x5c0] sm:$0xff]
        %v499 = vld [vmem:[%s252 + $0x5c8] sm:$0xff]
        %v500 = vld [vmem:[%s252 + $0x5d0] sm:$0xff]
        %v501 = vld [vmem:[%s252 + $0x5d8] sm:$0xff]
        %v502 = vld [vmem:[%s252 + $0x5e0] sm:$0xff]
        %v503 = vld [vmem:[%s252 + $0x5e8] sm:$0xff]
        %v504 = vld [vmem:[%s252 + $0x5f0] sm:$0xff]
        %v505 = vld [vmem:[%s252 + $0x5f8] sm:$0xff]
        %v506 = vld [vmem:[%s252 + $0x600] sm:$0xff]
        %v507 = vld [vmem:[%s252 + $0x608] sm:$0xff]
        %v508 = vld [vmem:[%s252 + $0x610] sm:$0xff]
        %v509 = vld [vmem:[%s252 + $0x618] sm:$0xff]
        %v510 = vld [vmem:[%s252 + $0x620] sm:$0xff]
        %v511 = vld [vmem:[%s252 + $0x628] sm:$0xff]
        %v512 = vld [vmem:[%s252 + $0x630] sm:$0xff]
        %v513 = vld [vmem:[%s252 + $0x638] sm:$0xff]
        %v514 = vld [vmem:[%s252 + $0x640] sm:$0xff]
        %v515 = vld [vmem:[%s252 + $0x648] sm:$0xff]
        %v516 = vld [vmem:[%s252 + $0x650] sm:$0xff]
        %v517 = vld [vmem:[%s252 + $0x658] sm:$0xff]
        %v518 = vld [vmem:[%s252 + $0x660] sm:$0xff]
        %v519 = vld [vmem:[%s252 + $0x668] sm:$0xff]
        %v520 = vld [vmem:[%s252 + $0x670] sm:$0xff]
        %v521 = vld [vmem:[%s252 + $0x678] sm:$0xff]
        %v522 = vld [vmem:[%s252 + $0x680] sm:$0xff]
        %v523 = vld [vmem:[%s252 + $0x688] sm:$0xff]
        %v524 = vld [vmem:[%s252 + $0x690] sm:$0xff]
        %v525 = vld [vmem:[%s252 + $0x698] sm:$0xff]
        %v526 = vld [vmem:[%s252 + $0x6a0] sm:$0xff]
        %v527 = vld [vmem:[%s252 + $0x6a8] sm:$0xff]
        %v528 = vld [vmem:[%s252 + $0x6b0] sm:$0xff]
        %v529 = vld [vmem:[%s252 + $0x6b8] sm:$0xff]
        %v530 = vld [vmem:[%s252 + $0x6c0] sm:$0xff]
        %v531 = vld [vmem:[%s252 + $0x6c8] sm:$0xff]
        %v532 = vld [vmem:[%s252 + $0x6d0] sm:$0xff]
        %v533 = vld [vmem:[%s252 + $0x6d8] sm:$0xff]
        %v534 = vld [vmem:[%s252 + $0x6e0] sm:$0xff]
        %v535 = vld [vmem:[%s252 + $0x6e8] sm:$0xff]
        %v536 = vld [vmem:[%s252 + $0x6f0] sm:$0xff]
        %v537 = vld [vmem:[%s252 + $0x6f8] sm:$0xff]
        %v538 = vld [vmem:[%s252 + $0x700] sm:$0xff]
        %v539 = vld [vmem:[%s252 + $0x708] sm:$0xff]
        %v540 = vld [vmem:[%s252 + $0x710] sm:$0xff]
        %v541 = vld [vmem:[%s252 + $0x718] sm:$0xff]
        %v542 = vld [vmem:[%s252 + $0x720] sm:$0xff]
        %v543 = vld [vmem:[%s252 + $0x728] sm:$0xff]
        %v544 = vld [vmem:[%s252 + $0x730] sm:$0xff]
        %v545 = vld [vmem:[%s252 + $0x738] sm:$0xff]
        %v546 = vld [vmem:[%s252 + $0x740] sm:$0xff]
        %v547 = vld [vmem:[%s252 + $0x748] sm:$0xff]
        %v548 = vld [vmem:[%s252 + $0x750] sm:$0xff]
        %v549 = vld [vmem:[%s252 + $0x758] sm:$0xff]
        %v550 = vld [vmem:[%s252 + $0x760] sm:$0xff]
        %v551 = vld [vmem:[%s252 + $0x768] sm:$0xff]
        %v552 = vld [vmem:[%s252 + $0x770] sm:$0xff]
        %v553 = vld [vmem:[%s252 + $0x778] sm:$0xff]
        %v554 = vld [vmem:[%s252 + $0x780] sm:$0xff]
        %v555 = vld [vmem:[%s252 + $0x788] sm:$0xff]
        %v556 = vld [vmem:[%s252 + $0x790] sm:$0xff]
        %v557 = vld [vmem:[%s252 + $0x798] sm:$0xff]
        %v558 = vld [vmem:[%s252 + $0x7a0] sm:$0xff]
        %v559 = vld [vmem:[%s252 + $0x7a8] sm:$0xff]
        %v560 = vld [vmem:[%s252 + $0x7b0] sm:$0xff]
        %v561 = vld [vmem:[%s252 + $0x7b8] sm:$0xff]
        %v562 = vld [vmem:[%s252 + $0x7c0] sm:$0xff]
        %v563 = vld [vmem:[%s252 + $0x7c8] sm:$0xff]
        %v564 = vld [vmem:[%s252 + $0x7d0] sm:$0xff]
        %v565 = vld [vmem:[%s252 + $0x7d8] sm:$0xff]
        %v566 = vld [vmem:[%s252 + $0x7e0] sm:$0xff]
        %v567 = vld [vmem:[%s252 + $0x7e8] sm:$0xff]
        %v568 = vld [vmem:[%s252 + $0x7f0] sm:$0xff]
        %v569 = vld [vmem:[%s252 + $0x7f8] sm:$0xff]
        %v570 = vld [vmem:[%s252 + $0x800] sm:$0xff]
        %v571 = vld [vmem:[%s252 + $0x808] sm:$0xff]
        %v572 = vld [vmem:[%s252 + $0x810] sm:$0xff]
        %v573 = vld [vmem:[%s252 + $0x818] sm:$0xff]
        %v574 = vld [vmem:[%s252 + $0x820] sm:$0xff]
        %v575 = vld [vmem:[%s252 + $0x828] sm:$0xff]
        %v576 = vld [vmem:[%s252 + $0x830] sm:$0xff]
        %v577 = vld [vmem:[%s252 + $0x838] sm:$0xff]
        %v578 = vld [vmem:[%s252 + $0x840] sm:$0xff]
        %v579 = vld [vmem:[%s252 + $0x848] sm:$0xff]
        %v580 = vld [vmem:[%s252 + $0x850] sm:$0xff]
        %v581 = vld [vmem:[%s252 + $0x858] sm:$0xff]
        %v582 = vld [vmem:[%s252 + $0x860] sm:$0xff]
        %v583 = vld [vmem:[%s252 + $0x868] sm:$0xff]
        %v584 = vld [vmem:[%s252 + $0x870] sm:$0xff]
        %v585 = vld [vmem:[%s252 + $0x878] sm:$0xff]
        %v586 = vld [vmem:[%s252 + $0x880] sm:$0xff]
        %v587 = vld [vmem:[%s252 + $0x888] sm:$0xff]
        %v588 = vld [vmem:[%s252 + $0x890] sm:$0xff]
        %v589 = vld [vmem:[%s252 + $0x898] sm:$0xff]
        %v590 = vld [vmem:[%s252 + $0x8a0] sm:$0xff]
        %v591 = vld [vmem:[%s252 + $0x8a8] sm:$0xff]
        %v592 = vld [vmem:[%s252 + $0x8b0] sm:$0xff]
        %v593 = vld [vmem:[%s252 + $0x8b8] sm:$0xff]
        %v594 = vld [vmem:[%s252 + $0x8c0] sm:$0xff]
        %v595 = vld [vmem:[%s252 + $0x8c8] sm:$0xff]
        %v596 = vld [vmem:[%s252 + $0x8d0] sm:$0xff]
        %v597 = vld [vmem:[%s252 + $0x8d8] sm:$0xff]
        %v598 = vld [vmem:[%s252 + $0x8e0] sm:$0xff]
        %v599 = vld [vmem:[%s252 + $0x8e8] sm:$0xff]
        %v600 = vld [vmem:[%s252 + $0x8f0] sm:$0xff]
        %v601 = vld [vmem:[%s252 + $0x8f8] sm:$0xff]
        %v602 = vld [vmem:[%s252 + $0x900] sm:$0xff]
        %v603 = vld [vmem:[%s252 + $0x908] sm:$0xff]
        %v604 = vld [vmem:[%s252 + $0x910] sm:$0xff]
        %v605 = vld [vmem:[%s252 + $0x918] sm:$0xff]
        %v606 = vld [vmem:[%s252 + $0x920] sm:$0xff]
        %v607 = vld [vmem:[%s252 + $0x928] sm:$0xff]
        %v608 = vld [vmem:[%s252 + $0x930] sm:$0xff]
        %v609 = vld [vmem:[%s252 + $0x938] sm:$0xff]
        %v610 = vld [vmem:[%s252 + $0x940] sm:$0xff]
        %v611 = vld [vmem:[%s252 + $0x948] sm:$0xff]
        %v612 = vld [vmem:[%s252 + $0x950] sm:$0xff]
        %v613 = vld [vmem:[%s252 + $0x958] sm:$0xff]
        %v614 = vld [vmem:[%s252 + $0x960] sm:$0xff]
        %v615 = vld [vmem:[%s252 + $0x968] sm:$0xff]
        %v616 = vld [vmem:[%s252 + $0x970] sm:$0xff]
        %v617 = vld [vmem:[%s252 + $0x978] sm:$0xff]
        %v618 = vld [vmem:[%s252 + $0x980] sm:$0xff]
        %v619 = vld [vmem:[%s252 + $0x988] sm:$0xff]
        %v620 = vld [vmem:[%s252 + $0x990] sm:$0xff]
        %v621 = vld [vmem:[%s252 + $0x998] sm:$0xff]
        %v622 = vld [vmem:[%s252 + $0x9a0] sm:$0xff]
        %v623 = vld [vmem:[%s252 + $0x9a8] sm:$0xff]
        %v624 = vld [vmem:[%s252 + $0x9b0] sm:$0xff]
        %v625 = vld [vmem:[%s252 + $0x9b8] sm:$0xff]
        %v626 = vld [vmem:[%s252 + $0x9c0] sm:$0xff]
        %v627 = vld [vmem:[%s252 + $0x9c8] sm:$0xff]
        %v628 = vld [vmem:[%s252 + $0x9d0] sm:$0xff]
        %v629 = vld [vmem:[%s252 + $0x9d8] sm:$0xff]
        %v630 = vld [vmem:[%s252 + $0x9e0] sm:$0xff]
        %v631 = vld [vmem:[%s252 + $0x9e8] sm:$0xff]
        %v632 = vld [vmem:[%s252 + $0x9f0] sm:$0xff]
        %v633 = vld [vmem:[%s252 + $0x9f8] sm:$0xff]
        %v634 = vld [vmem:[%s252 + $0xa00] sm:$0xff]
        %v635 = vld [vmem:[%s252 + $0xa08] sm:$0xff]
        %v636 = vld [vmem:[%s252 + $0xa10] sm:$0xff]
        %v637 = vld [vmem:[%s252 + $0xa18] sm:$0xff]
        %v638 = vld [vmem:[%s252 + $0xa20] sm:$0xff]
        %v639 = vld [vmem:[%s252 + $0xa28] sm:$0xff]
        %v640 = vld [vmem:[%s252 + $0xa30] sm:$0xff]
        %v641 = vld [vmem:[%s252 + $0xa38] sm:$0xff]
        %v642 = vld [vmem:[%s252 + $0xa40] sm:$0xff]
        %v643 = vld [vmem:[%s252 + $0xa48] sm:$0xff]
        %v644 = vld [vmem:[%s252 + $0xa50] sm:$0xff]
        %v645 = vld [vmem:[%s252 + $0xa58] sm:$0xff]
        %v646 = vld [vmem:[%s252 + $0xa60] sm:$0xff]
        %v647 = vld [vmem:[%s252 + $0xa68] sm:$0xff]
        %v648 = vld [vmem:[%s252 + $0xa70] sm:$0xff]
        %v649 = vld [vmem:[%s252 + $0xa78] sm:$0xff]
        %v650 = vld [vmem:[%s252 + $0xa80] sm:$0xff]
        %v651 = vld [vmem:[%s252 + $0xa88] sm:$0xff]
        %v652 = vld [vmem:[%s252 + $0xa90] sm:$0xff]
        %v653 = vld [vmem:[%s252 + $0xa98] sm:$0xff]
        %v654 = vld [vmem:[%s252 + $0xaa0] sm:$0xff]
        %v655 = vld [vmem:[%s252 + $0xaa8] sm:$0xff]
        %v656 = vld [vmem:[%s252 + $0xab0] sm:$0xff]
        %v657 = vld [vmem:[%s252 + $0xab8] sm:$0xff]
        %v658 = vld [vmem:[%s252 + $0xac0] sm:$0xff]
        %v659 = vld [vmem:[%s252 + $0xac8] sm:$0xff]
        %v660 = vld [vmem:[%s252 + $0xad0] sm:$0xff]
        %v661 = vld [vmem:[%s252 + $0xad8] sm:$0xff]
        %v662 = vld [vmem:[%s252 + $0xae0] sm:$0xff]
        %v663 = vld [vmem:[%s252 + $0xae8] sm:$0xff]
        %v664 = vld [vmem:[%s252 + $0xaf0] sm:$0xff]
        %v665 = vld [vmem:[%s252 + $0xaf8] sm:$0xff]
        %v666 = vld [vmem:[%s252 + $0xb00] sm:$0xff]
        %v667 = vld [vmem:[%s252 + $0xb08] sm:$0xff]
        %v668 = vld [vmem:[%s252 + $0xb10] sm:$0xff]
        %v669 = vld [vmem:[%s252 + $0xb18] sm:$0xff]
        %v670 = vld [vmem:[%s252 + $0xb20] sm:$0xff]
        %v671 = vld [vmem:[%s252 + $0xb28] sm:$0xff]
        %v672 = vld [vmem:[%s252 + $0xb30] sm:$0xff]
        %v673 = vld [vmem:[%s252 + $0xb38] sm:$0xff]
        %v674 = vld [vmem:[%s252 + $0xb40] sm:$0xff]
        %v675 = vld [vmem:[%s252 + $0xb48] sm:$0xff]
        %v676 = vld [vmem:[%s252 + $0xb50] sm:$0xff]
        %v677 = vld [vmem:[%s252 + $0xb58] sm:$0xff]
        %v678 = vld [vmem:[%s252 + $0xb60] sm:$0xff]
        %v679 = vld [vmem:[%s252 + $0xb68] sm:$0xff]
        %v680 = vld [vmem:[%s252 + $0xb70] sm:$0xff]
        %v681 = vld [vmem:[%s252 + $0xb78] sm:$0xff]
        %v682 = vld [vmem:[%s252 + $0xb80] sm:$0xff]
        %v683 = vld [vmem:[%s252 + $0xb88] sm:$0xff]
        %v684 = vld [vmem:[%s252 + $0xb90] sm:$0xff]
        %v685 = vld [vmem:[%s252 + $0xb98] sm:$0xff]
        %v686 = vld [vmem:[%s252 + $0xba0] sm:$0xff]
        %v687 = vld [vmem:[%s252 + $0xba8] sm:$0xff]
        %v688 = vld [vmem:[%s252 + $0xbb0] sm:$0xff]
        %v689 = vld [vmem:[%s252 + $0xbb8] sm:$0xff]
        %v690 = vld [vmem:[%s252 + $0xbc0] sm:$0xff]
        %v691 = vld [vmem:[%s252 + $0xbc8] sm:$0xff]
        %v692 = vld [vmem:[%s252 + $0xbd0] sm:$0xff]
        %v693 = vld [vmem:[%s252 + $0xbd8] sm:$0xff]
        %v694 = vld [vmem:[%s252 + $0xbe0] sm:$0xff]
        %v695 = vld [vmem:[%s252 + $0xbe8] sm:$0xff]
        %v696 = vld [vmem:[%s252 + $0xbf0] sm:$0xff]
        %v697 = vld [vmem:[%s252 + $0xbf8] sm:$0xff]
        %v698 = vld [vmem:[%s252 + $0xc00] sm:$0xff]
        %v699 = vld [vmem:[%s252 + $0xc08] sm:$0xff]
        %v700 = vld [vmem:[%s252 + $0xc10] sm:$0xff]
        %v701 = vld [vmem:[%s252 + $0xc18] sm:$0xff]
        %v702 = vld [vmem:[%s252 + $0xc20] sm:$0xff]
        %v703 = vld [vmem:[%s252 + $0xc28] sm:$0xff]
        %v704 = vld [vmem:[%s252 + $0xc30] sm:$0xff]
        %v705 = vld [vmem:[%s252 + $0xc38] sm:$0xff]
        %v706 = vld [vmem:[%s252 + $0xc40] sm:$0xff]
        %v707 = vld [vmem:[%s252 + $0xc48] sm:$0xff]
        %v708 = vld [vmem:[%s252 + $0xc50] sm:$0xff]
        %v709 = vld [vmem:[%s252 + $0xc58] sm:$0xff]
        %v710 = vld [vmem:[%s252 + $0xc60] sm:$0xff]
        %v711 = vld [vmem:[%s252 + $0xc68] sm:$0xff]
        %v712 = vld [vmem:[%s252 + $0xc70] sm:$0xff]
        %v713 = vld [vmem:[%s252 + $0xc78] sm:$0xff]
        %v714 = vld [vmem:[%s252 + $0xc80] sm:$0xff]
        %v715 = vld [vmem:[%s252 + $0xc88] sm:$0xff]
        %v716 = vld [vmem:[%s252 + $0xc90] sm:$0xff]
        %v717 = vld [vmem:[%s252 + $0xc98] sm:$0xff]
        %v718 = vld [vmem:[%s252 + $0xca0] sm:$0xff]
        %v719 = vld [vmem:[%s252 + $0xca8] sm:$0xff]
        %v720 = vld [vmem:[%s252 + $0xcb0] sm:$0xff]
        %v721 = vld [vmem:[%s252 + $0xcb8] sm:$0xff]
        %v722 = vld [vmem:[%s252 + $0xcc0] sm:$0xff]
        %v723 = vld [vmem:[%s252 + $0xcc8] sm:$0xff]
        %v724 = vld [vmem:[%s252 + $0xcd0] sm:$0xff]
        %v725 = vld [vmem:[%s252 + $0xcd8] sm:$0xff]
        %v726 = vld [vmem:[%s252 + $0xce0] sm:$0xff]
        %v727 = vld [vmem:[%s252 + $0xce8] sm:$0xff]
        %v728 = vld [vmem:[%s252 + $0xcf0] sm:$0xff]
        %v729 = vld [vmem:[%s252 + $0xcf8] sm:$0xff]
        %v730 = vld [vmem:[%s252 + $0xd00] sm:$0xff]
        %v731 = vld [vmem:[%s252 + $0xd08] sm:$0xff]
        %v732 = vld [vmem:[%s252 + $0xd10] sm:$0xff]
        %v733 = vld [vmem:[%s252 + $0xd18] sm:$0xff]
        %v734 = vld [vmem:[%s252 + $0xd20] sm:$0xff]
        %v735 = vld [vmem:[%s252 + $0xd28] sm:$0xff]
        %v736 = vld [vmem:[%s252 + $0xd30] sm:$0xff]
        %v737 = vld [vmem:[%s252 + $0xd38] sm:$0xff]
        %v738 = vld [vmem:[%s252 + $0xd40] sm:$0xff]
        %v739 = vld [vmem:[%s252 + $0xd48] sm:$0xff]
        %v740 = vld [vmem:[%s252 + $0xd50] sm:$0xff]
        %v741 = vld [vmem:[%s252 + $0xd58] sm:$0xff]
        %v742 = vld [vmem:[%s252 + $0xd60] sm:$0xff]
        %v743 = vld [vmem:[%s252 + $0xd68] sm:$0xff]
        %v744 = vld [vmem:[%s252 + $0xd70] sm:$0xff]
        %v745 = vld [vmem:[%s252 + $0xd78] sm:$0xff]
        %v746 = vld [vmem:[%s252 + $0xd80] sm:$0xff]
        %v747 = vld [vmem:[%s252 + $0xd88] sm:$0xff]
        %v748 = vld [vmem:[%s252 + $0xd90] sm:$0xff]
        %v749 = vld [vmem:[%s252 + $0xd98] sm:$0xff]
        %v750 = vld [vmem:[%s252 + $0xda0] sm:$0xff]
        %v751 = vld [vmem:[%s252 + $0xda8] sm:$0xff]
        %v752 = vld [vmem:[%s252 + $0xdb0] sm:$0xff]
        %v753 = vld [vmem:[%s252 + $0xdb8] sm:$0xff]
        %v754 = vld [vmem:[%s252 + $0xdc0] sm:$0xff]
        %v755 = vld [vmem:[%s252 + $0xdc8] sm:$0xff]
        %v756 = vld [vmem:[%s252 + $0xdd0] sm:$0xff]
        %v757 = vld [vmem:[%s252 + $0xdd8] sm:$0xff]
        %v758 = vld [vmem:[%s252 + $0xde0] sm:$0xff]
        %v759 = vld [vmem:[%s252 + $0xde8] sm:$0xff]
        %v760 = vld [vmem:[%s252 + $0xdf0] sm:$0xff]
        %v761 = vld [vmem:[%s252 + $0xdf8] sm:$0xff]
        %v762 = vld [vmem:[%s252 + $0xe00] sm:$0xff]
        %v763 = vld [vmem:[%s252 + $0xe08] sm:$0xff]
        %v764 = vld [vmem:[%s252 + $0xe10] sm:$0xff]
        %v765 = vld [vmem:[%s252 + $0xe18] sm:$0xff]
        %v766 = vld [vmem:[%s252 + $0xe20] sm:$0xff]
        %v767 = vld [vmem:[%s252 + $0xe28] sm:$0xff]
        %v768 = vld [vmem:[%s252 + $0xe30] sm:$0xff]
        %v769 = vld [vmem:[%s252 + $0xe38] sm:$0xff]
        %v770 = vld [vmem:[%s252 + $0xe40] sm:$0xff]
        %v771 = vld [vmem:[%s252 + $0xe48] sm:$0xff]
        %v772 = vld [vmem:[%s252 + $0xe50] sm:$0xff]
        %v773 = vld [vmem:[%s252 + $0xe58] sm:$0xff]
        %v774 = vld [vmem:[%s252 + $0xe60] sm:$0xff]
        %v775 = vld [vmem:[%s252 + $0xe68] sm:$0xff]
        %v776 = vld [vmem:[%s252 + $0xe70] sm:$0xff]
        %v777 = vld [vmem:[%s252 + $0xe78] sm:$0xff]
        %v778 = vld [vmem:[%s252 + $0xe80] sm:$0xff]
        %v779 = vld [vmem:[%s252 + $0xe88] sm:$0xff]
        %v780 = vld [vmem:[%s252 + $0xe90] sm:$0xff]
        %v781 = vld [vmem:[%s252 + $0xe98] sm:$0xff]
        %v782 = vld [vmem:[%s252 + $0xea0] sm:$0xff]
        %v783 = vld [vmem:[%s252 + $0xea8] sm:$0xff]
        %v784 = vld [vmem:[%s252 + $0xeb0] sm:$0xff]
        %v785 = vld [vmem:[%s252 + $0xeb8] sm:$0xff]
        %v786 = vld [vmem:[%s252 + $0xec0] sm:$0xff]
        %v787 = vld [vmem:[%s252 + $0xec8] sm:$0xff]
        %v788 = vld [vmem:[%s252 + $0xed0] sm:$0xff]
        %v789 = vld [vmem:[%s252 + $0xed8] sm:$0xff]
        %v790 = vld [vmem:[%s252 + $0xee0] sm:$0xff]
        %v791 = vld [vmem:[%s252 + $0xee8] sm:$0xff]
        %v792 = vld [vmem:[%s252 + $0xef0] sm:$0xff]
        %v793 = vld [vmem:[%s252 + $0xef8] sm:$0xff]
        %v794 = vld [vmem:[%s252 + $0xf00] sm:$0xff]
        %v795 = vld [vmem:[%s252 + $0xf08] sm:$0xff]
        %v796 = vld [vmem:[%s252 + $0xf10] sm:$0xff]
        %v797 = vld [vmem:[%s252 + $0xf18] sm:$0xff]
        %v798 = vld [vmem:[%s252 + $0xf20] sm:$0xff]
        %v799 = vld [vmem:[%s252 + $0xf28] sm:$0xff]
        %v800 = vld [vmem:[%s252 + $0xf30] sm:$0xff]
        %v801 = vld [vmem:[%s252 + $0xf38] sm:$0xff]
        %v802 = vld [vmem:[%s252 + $0xf40] sm:$0xff]
        %v803 = vld [vmem:[%s252 + $0xf48] sm:$0xff]
        %v804 = vld [vmem:[%s252 + $0xf50] sm:$0xff]
        %v805 = vld [vmem:[%s252 + $0xf58] sm:$0xff]
        %v806 = vld [vmem:[%s252 + $0xf60] sm:$0xff]
        %v807 = vld [vmem:[%s252 + $0xf68] sm:$0xff]
        %v808 = vld [vmem:[%s252 + $0xf70] sm:$0xff]
        %v809 = vld [vmem:[%s252 + $0xf78] sm:$0xff]
        %v810 = vld [vmem:[%s252 + $0xf80] sm:$0xff]
        %v811 = vld [vmem:[%s252 + $0xf88] sm:$0xff]
        %v812 = vld [vmem:[%s252 + $0xf90] sm:$0xff]
        %v813 = vld [vmem:[%s252 + $0xf98] sm:$0xff]
        %v814 = vld [vmem:[%s252 + $0xfa0] sm:$0xff]
        %v815 = vld [vmem:[%s252 + $0xfa8] sm:$0xff]
        %v816 = vld [vmem:[%s252 + $0xfb0] sm:$0xff]
        %v817 = vld [vmem:[%s252 + $0xfb8] sm:$0xff]
        %v818 = vld [vmem:[%s252 + $0xfc0] sm:$0xff]
        %v819 = vld [vmem:[%s252 + $0xfc8] sm:$0xff]
        %v820 = vld [vmem:[%s252 + $0xfd0] sm:$0xff]
        %v821 = vld [vmem:[%s252 + $0xfd8] sm:$0xff]
        %v822 = vld [vmem:[%s252 + $0xfe0] sm:$0xff]
        %v823 = vld [vmem:[%s252 + $0xfe8] sm:$0xff]
        %v824 = vld [vmem:[%s252 + $0xff0] sm:$0xff]
        %v825 = vld [vmem:[%s252 + $0xff8] sm:$0xff]
        %v826 = vld [vmem:[%s252 + $0x1000] sm:$0xff]
        %v827 = vld [vmem:[%s252 + $0x1008] sm:$0xff]
        %v828 = vld [vmem:[%s252 + $0x1010] sm:$0xff]
        %v829 = vld [vmem:[%s252 + $0x1018] sm:$0xff]
        %v830 = vld [vmem:[%s252 + $0x1020] sm:$0xff]
        %v831 = vld [vmem:[%s252 + $0x1028] sm:$0xff]
        %v832 = vld [vmem:[%s252 + $0x1030] sm:$0xff]
        %v833 = vld [vmem:[%s252 + $0x1038] sm:$0xff]
        %v834 = vld [vmem:[%s252 + $0x1040] sm:$0xff]
        %v835 = vld [vmem:[%s252 + $0x1048] sm:$0xff]
        %v836 = vld [vmem:[%s252 + $0x1050] sm:$0xff]
        %v837 = vld [vmem:[%s252 + $0x1058] sm:$0xff]
        %v838 = vld [vmem:[%s252 + $0x1060] sm:$0xff]
        %v839 = vld [vmem:[%s252 + $0x1068] sm:$0xff]
        %v840 = vld [vmem:[%s252 + $0x1070] sm:$0xff]
        %v841 = vld [vmem:[%s252 + $0x1078] sm:$0xff]
        %v842 = vld [vmem:[%s252 + $0x1080] sm:$0xff]
        %v843 = vld [vmem:[%s252 + $0x1088] sm:$0xff]
        %v844 = vld [vmem:[%s252 + $0x1090] sm:$0xff]
        %v845 = vld [vmem:[%s252 + $0x1098] sm:$0xff]
        %v846 = vld [vmem:[%s252 + $0x10a0] sm:$0xff]
        %v847 = vld [vmem:[%s252 + $0x10a8] sm:$0xff]
        %v848 = vld [vmem:[%s252 + $0x10b0] sm:$0xff]
        %v849 = vld [vmem:[%s252 + $0x10b8] sm:$0xff]
        %v850 = vld [vmem:[%s252 + $0x10c0] sm:$0xff]
        %v851 = vld [vmem:[%s252 + $0x10c8] sm:$0xff]
        %v852 = vld [vmem:[%s252 + $0x10d0] sm:$0xff]
        %v853 = vld [vmem:[%s252 + $0x10d8] sm:$0xff]
        %v854 = vld [vmem:[%s252 + $0x10e0] sm:$0xff]
        %v855 = vld [vmem:[%s252 + $0x10e8] sm:$0xff]
        %v856 = vld [vmem:[%s252 + $0x10f0] sm:$0xff]
        %v857 = vld [vmem:[%s252 + $0x10f8] sm:$0xff]
        %v858 = vld [vmem:[%s252 + $0x1100] sm:$0xff]
        %v859 = vld [vmem:[%s252 + $0x1108] sm:$0xff]
        %v860 = vld [vmem:[%s252 + $0x1110] sm:$0xff]
        %v861 = vld [vmem:[%s252 + $0x1118] sm:$0xff]
        %v862 = vld [vmem:[%s252 + $0x1120] sm:$0xff]
        %v863 = vld [vmem:[%s252 + $0x1128] sm:$0xff]
        %v864 = vld [vmem:[%s252 + $0x1130] sm:$0xff]
        %v865 = vld [vmem:[%s252 + $0x1138] sm:$0xff]
        %v866 = vld [vmem:[%s252 + $0x1140] sm:$0xff]
        %v867 = vld [vmem:[%s252 + $0x1148] sm:$0xff]
        %v868 = vld [vmem:[%s252 + $0x1150] sm:$0xff]
        %v869 = vld [vmem:[%s252 + $0x1158] sm:$0xff]
        %v870 = vld [vmem:[%s252 + $0x1160] sm:$0xff]
        %v871 = vld [vmem:[%s252 + $0x1168] sm:$0xff]
        %v872 = vld [vmem:[%s252 + $0x1170] sm:$0xff]
        %v873 = vld [vmem:[%s252 + $0x1178] sm:$0xff]
        %v874 = vld [vmem:[%s252 + $0x1180] sm:$0xff]
        %v875 = vld [vmem:[%s252 + $0x1188] sm:$0xff]
        %v876 = vld [vmem:[%s252 + $0x1190] sm:$0xff]
        %v877 = vld [vmem:[%s252 + $0x1198] sm:$0xff]
        %v878 = vld [vmem:[%s252 + $0x11a0] sm:$0xff]
        %v879 = vld [vmem:[%s252 + $0x11a8] sm:$0xff]
        %v880 = vld [vmem:[%s252 + $0x11b0] sm:$0xff]
        %v881 = vld [vmem:[%s252 + $0x11b8] sm:$0xff]
        %v882 = vld [vmem:[%s252 + $0x11c0] sm:$0xff]
        %v883 = vld [vmem:[%s252 + $0x11c8] sm:$0xff]
        %v884 = vld [vmem:[%s252 + $0x11d0] sm:$0xff]
        %v885 = vld [vmem:[%s252 + $0x11d8] sm:$0xff]
        %v886 = vld [vmem:[%s252 + $0x11e0] sm:$0xff]
        %v887 = vld [vmem:[%s252 + $0x11e8] sm:$0xff]
        %v888 = vld [vmem:[%s252 + $0x11f0] sm:$0xff]
        %v889 = vld [vmem:[%s252 + $0x11f8] sm:$0xff]
        %v890 = vld [vmem:[%s252 + $0x1200] sm:$0xff]
        %v891 = vld [vmem:[%s252 + $0x1208] sm:$0xff]
        %v892 = vld [vmem:[%s252 + $0x1210] sm:$0xff]
        %v893 = vld [vmem:[%s252 + $0x1218] sm:$0xff]
        %v894 = vld [vmem:[%s252 + $0x1220] sm:$0xff]
        %v895 = vld [vmem:[%s252 + $0x1228] sm:$0xff]
        %v896 = vld [vmem:[%s252 + $0x1230] sm:$0xff]
        %v897 = vld [vmem:[%s252 + $0x1238] sm:$0xff]
        %v898 = vld [vmem:[%s252 + $0x1240] sm:$0xff]
        %v899 = vld [vmem:[%s252 + $0x1248] sm:$0xff]
        %v900 = vld [vmem:[%s252 + $0x1250] sm:$0xff]
        %v901 = vld [vmem:[%s252 + $0x1258] sm:$0xff]
        %v902 = vld [vmem:[%s252 + $0x1260] sm:$0xff]
        %v903 = vld [vmem:[%s252 + $0x1268] sm:$0xff]
        %v904 = vld [vmem:[%s252 + $0x1270] sm:$0xff]
        %v905 = vld [vmem:[%s252 + $0x1278] sm:$0xff]
        %v906 = vld [vmem:[%s252 + $0x1280] sm:$0xff]
        %v907 = vld [vmem:[%s252 + $0x1288] sm:$0xff]
        %v908 = vld [vmem:[%s252 + $0x1290] sm:$0xff]
        %v909 = vld [vmem:[%s252 + $0x1298] sm:$0xff]
        %v910 = vld [vmem:[%s252 + $0x12a0] sm:$0xff]
        %v911 = vld [vmem:[%s252 + $0x12a8] sm:$0xff]
        %v912 = vld [vmem:[%s252 + $0x12b0] sm:$0xff]
        %v913 = vld [vmem:[%s252 + $0x12b8] sm:$0xff]
        %v914 = vld [vmem:[%s252 + $0x12c0] sm:$0xff]
        %v915 = vld [vmem:[%s252 + $0x12c8] sm:$0xff]
        %v916 = vld [vmem:[%s252 + $0x12d0] sm:$0xff]
        %v917 = vld [vmem:[%s252 + $0x12d8] sm:$0xff]
        %v918 = vld [vmem:[%s252 + $0x12e0] sm:$0xff]
        %v919 = vld [vmem:[%s252 + $0x12e8] sm:$0xff]
        %v920 = vld [vmem:[%s252 + $0x12f0] sm:$0xff]
        %v921 = vld [vmem:[%s252 + $0x12f8] sm:$0xff]
        %v922 = vld [vmem:[%s252 + $0x1300] sm:$0xff]
        %v923 = vld [vmem:[%s252 + $0x1308] sm:$0xff]
        %v924 = vld [vmem:[%s252 + $0x1310] sm:$0xff]
        %v925 = vld [vmem:[%s252 + $0x1318] sm:$0xff]
        %v926 = vld [vmem:[%s252 + $0x1320] sm:$0xff]
        %v927 = vld [vmem:[%s252 + $0x1328] sm:$0xff]
        %v928 = vld [vmem:[%s252 + $0x1330] sm:$0xff]
        %v929 = vld [vmem:[%s252 + $0x1338] sm:$0xff]
        %v930 = vld [vmem:[%s252 + $0x1340] sm:$0xff]
        %v931 = vld [vmem:[%s252 + $0x1348] sm:$0xff]
        %v932 = vld [vmem:[%s252 + $0x1350] sm:$0xff]
        %v933 = vld [vmem:[%s252 + $0x1358] sm:$0xff]
        %v934 = vld [vmem:[%s252 + $0x1360] sm:$0xff]
        %v935 = vld [vmem:[%s252 + $0x1368] sm:$0xff]
        %v936 = vld [vmem:[%s252 + $0x1370] sm:$0xff]
        %v937 = vld [vmem:[%s252 + $0x1378] sm:$0xff]
        %v938 = vld [vmem:[%s252 + $0x1380] sm:$0xff]
        %v939 = vld [vmem:[%s252 + $0x1388] sm:$0xff]
        %v940 = vld [vmem:[%s252 + $0x1390] sm:$0xff]
        %v941 = vld [vmem:[%s252 + $0x1398] sm:$0xff]
        %v942 = vld [vmem:[%s252 + $0x13a0] sm:$0xff]
        %v943 = vld [vmem:[%s252 + $0x13a8] sm:$0xff]
        %v944 = vld [vmem:[%s252 + $0x13b0] sm:$0xff]
        %v945 = vld [vmem:[%s252 + $0x13b8] sm:$0xff]
        %v946 = vld [vmem:[%s252 + $0x13c0] sm:$0xff]
        %v947 = vld [vmem:[%s252 + $0x13c8] sm:$0xff]
        %v948 = vld [vmem:[%s252 + $0x13d0] sm:$0xff]
        %v949 = vld [vmem:[%s252 + $0x13d8] sm:$0xff]
        %v950 = vld [vmem:[%s252 + $0x13e0] sm:$0xff]
        %v951 = vld [vmem:[%s252 + $0x13e8] sm:$0xff]
        %v952 = vld [vmem:[%s252 + $0x13f0] sm:$0xff]
        %v953 = vld [vmem:[%s252 + $0x13f8] sm:$0xff]
        %v954 = vld [vmem:[%s252 + $0x1400] sm:$0xff]
        %v955 = vld [vmem:[%s252 + $0x1408] sm:$0xff]
        %v956 = vld [vmem:[%s252 + $0x1410] sm:$0xff]
        %v957 = vld [vmem:[%s252 + $0x1418] sm:$0xff]
        %v958 = vld [vmem:[%s252 + $0x1420] sm:$0xff]
        %v959 = vld [vmem:[%s252 + $0x1428] sm:$0xff]
        %v960 = vld [vmem:[%s252 + $0x1430] sm:$0xff]
        %v961 = vld [vmem:[%s252 + $0x1438] sm:$0xff]
        %v962 = vld [vmem:[%s252 + $0x1440] sm:$0xff]
        %v963 = vld [vmem:[%s252 + $0x1448] sm:$0xff]
        %v964 = vld [vmem:[%s252 + $0x1450] sm:$0xff]
        %v965 = vld [vmem:[%s252 + $0x1458] sm:$0xff]
        %v966 = vld [vmem:[%s252 + $0x1460] sm:$0xff]
        %v967 = vld [vmem:[%s252 + $0x1468] sm:$0xff]
        %v968 = vld [vmem:[%s252 + $0x1470] sm:$0xff]
        %v969 = vld [vmem:[%s252 + $0x1478] sm:$0xff]
        %v970 = vld [vmem:[%s252 + $0x1480] sm:$0xff]
        %v971 = vld [vmem:[%s252 + $0x1488] sm:$0xff]
        %v972 = vld [vmem:[%s252 + $0x1490] sm:$0xff]
        %v973 = vld [vmem:[%s252 + $0x1498] sm:$0xff]
        %v974 = vld [vmem:[%s252 + $0x14a0] sm:$0xff]
        %v975 = vld [vmem:[%s252 + $0x14a8] sm:$0xff]
        %v976 = vld [vmem:[%s252 + $0x14b0] sm:$0xff]
        %v977 = vld [vmem:[%s252 + $0x14b8] sm:$0xff]
        %v978 = vld [vmem:[%s252 + $0x14c0] sm:$0xff]
        %v979 = vld [vmem:[%s252 + $0x14c8] sm:$0xff]
        %v980 = vld [vmem:[%s252 + $0x14d0] sm:$0xff]
        %v981 = vld [vmem:[%s252 + $0x14d8] sm:$0xff]
        %v982 = vld [vmem:[%s252 + $0x14e0] sm:$0xff]
        %v983 = vld [vmem:[%s252 + $0x14e8] sm:$0xff]
        %v984 = vld [vmem:[%s252 + $0x14f0] sm:$0xff]
        %v985 = vld [vmem:[%s252 + $0x14f8] sm:$0xff]
        %v986 = vld [vmem:[%s252 + $0x1500] sm:$0xff]
        %v987 = vld [vmem:[%s252 + $0x1508] sm:$0xff]
        %v988 = vld [vmem:[%s252 + $0x1510] sm:$0xff]
        %v989 = vld [vmem:[%s252 + $0x1518] sm:$0xff]
        %v990 = vld [vmem:[%s252 + $0x1520] sm:$0xff]
        %v991 = vld [vmem:[%s252 + $0x1528] sm:$0xff]
        %v992 = vld [vmem:[%s252 + $0x1530] sm:$0xff]
        %v993 = vld [vmem:[%s252 + $0x1538] sm:$0xff]
        %v994 = vld [vmem:[%s252 + $0x1540] sm:$0xff]
        %v995 = vld [vmem:[%s252 + $0x1548] sm:$0xff]
        %v996 = vld [vmem:[%s252 + $0x1550] sm:$0xff]
        %v997 = vld [vmem:[%s252 + $0x1558] sm:$0xff]
        %v998 = vld [vmem:[%s252 + $0x1560] sm:$0xff]
        %v999 = vld [vmem:[%s252 + $0x1568] sm:$0xff]
        %v1000 = vld [vmem:[%s252 + $0x1570] sm:$0xff]
        %v1001 = vld [vmem:[%s252 + $0x1578] sm:$0xff]
        %v1002 = vld [vmem:[%s252 + $0x1580] sm:$0xff]
        %v1003 = vld [vmem:[%s252 + $0x1588] sm:$0xff]
        %v1004 = vld [vmem:[%s252 + $0x1590] sm:$0xff]
        %v1005 = vld [vmem:[%s252 + $0x1598] sm:$0xff]
        %v1006 = vld [vmem:[%s252 + $0x15a0] sm:$0xff]
        %v1007 = vld [vmem:[%s252 + $0x15a8] sm:$0xff]
        %v1008 = vld [vmem:[%s252 + $0x15b0] sm:$0xff]
        %v1009 = vld [vmem:[%s252 + $0x15b8] sm:$0xff]
        %v1010 = vld [vmem:[%s252 + $0x15c0] sm:$0xff]
        %v1011 = vld [vmem:[%s252 + $0x15c8] sm:$0xff]
        %v1012 = vld [vmem:[%s252 + $0x15d0] sm:$0xff]
        %v1013 = vld [vmem:[%s252 + $0x15d8] sm:$0xff]
        %v1014 = vld [vmem:[%s252 + $0x15e0] sm:$0xff]
        %v1015 = vld [vmem:[%s252 + $0x15e8] sm:$0xff]
        %v1016 = vld [vmem:[%s252 + $0x15f0] sm:$0xff]
        %v1017 = vld [vmem:[%s252 + $0x15f8] sm:$0xff]
        %v1018 = vld [vmem:[%s252 + $0x1600] sm:$0xff]
        %v1019 = vld [vmem:[%s252 + $0x1608] sm:$0xff]
        %v1020 = vld [vmem:[%s252 + $0x1610] sm:$0xff]
        %v1021 = vld [vmem:[%s252 + $0x1618] sm:$0xff]
        %v1022 = vld [vmem:[%s252 + $0x1620] sm:$0xff]
        %v1023 = vld [vmem:[%s252 + $0x1628] sm:$0xff]
        %v1024 = vld [vmem:[%s252 + $0x1630] sm:$0xff]
        %v1025 = vld [vmem:[%s252 + $0x1638] sm:$0xff]
        %v1026 = vld [vmem:[%s252 + $0x1640] sm:$0xff]
        %v1027 = vld [vmem:[%s252 + $0x1648] sm:$0xff]
        %v1028 = vld [vmem:[%s252 + $0x1650] sm:$0xff]
        %v1029 = vld [vmem:[%s252 + $0x1658] sm:$0xff]
        %v1030 = vld [vmem:[%s252 + $0x1660] sm:$0xff]
        %v1031 = vld [vmem:[%s252 + $0x1668] sm:$0xff]
        %v1032 = vld [vmem:[%s252 + $0x1670] sm:$0xff]
        %v1033 = vld [vmem:[%s252 + $0x1678] sm:$0xff]
        %v1034 = vld [vmem:[%s252 + $0x1680] sm:$0xff]
        %v1035 = vld [vmem:[%s252 + $0x1688] sm:$0xff]
        %v1036 = vld [vmem:[%s252 + $0x1690] sm:$0xff]
        %v1037 = vld [vmem:[%s252 + $0x1698] sm:$0xff]
        %v1038 = vld [vmem:[%s252 + $0x16a0] sm:$0xff]
        %v1039 = vld [vmem:[%s252 + $0x16a8] sm:$0xff]
        %v1040 = vld [vmem:[%s252 + $0x16b0] sm:$0xff]
        %v1041 = vld [vmem:[%s252 + $0x16b8] sm:$0xff]
        %v1042 = vld [vmem:[%s252 + $0x16c0] sm:$0xff]
        %v1043 = vld [vmem:[%s252 + $0x16c8] sm:$0xff]
        %v1044 = vld [vmem:[%s252 + $0x16d0] sm:$0xff]
        %v1045 = vld [vmem:[%s252 + $0x16d8] sm:$0xff]
        %v1046 = vld [vmem:[%s252 + $0x16e0] sm:$0xff]
        %v1047 = vld [vmem:[%s252 + $0x16e8] sm:$0xff]
        %v1048 = vld [vmem:[%s252 + $0x16f0] sm:$0xff]
        %v1049 = vld [vmem:[%s252 + $0x16f8] sm:$0xff]
        %v1050 = vld [vmem:[%s252 + $0x1700] sm:$0xff]
        %v1051 = vld [vmem:[%s252 + $0x1708] sm:$0xff]
        %v1052 = vld [vmem:[%s252 + $0x1710] sm:$0xff]
        %v1053 = vld [vmem:[%s252 + $0x1718] sm:$0xff]
        %v1054 = vld [vmem:[%s252 + $0x1720] sm:$0xff]
        %v1055 = vld [vmem:[%s252 + $0x1728] sm:$0xff]
        %v1056 = vld [vmem:[%s252 + $0x1730] sm:$0xff]
        %v1057 = vld [vmem:[%s252 + $0x1738] sm:$0xff]
        %v1058 = vld [vmem:[%s252 + $0x1740] sm:$0xff]
        %v1059 = vld [vmem:[%s252 + $0x1748] sm:$0xff]
        %v1060 = vld [vmem:[%s252 + $0x1750] sm:$0xff]
        %v1061 = vld [vmem:[%s252 + $0x1758] sm:$0xff]
        %v1062 = vld [vmem:[%s252 + $0x1760] sm:$0xff]
        %v1063 = vld [vmem:[%s252 + $0x1768] sm:$0xff]
        %v1064 = vld [vmem:[%s252 + $0x1770] sm:$0xff]
        %v1065 = vld [vmem:[%s252 + $0x1778] sm:$0xff]
        %v1066 = vld [vmem:[%s252 + $0x1780] sm:$0xff]
        %v1067 = vld [vmem:[%s252 + $0x1788] sm:$0xff]
        %v1068 = vld [vmem:[%s252 + $0x1790] sm:$0xff]
        %v1069 = vld [vmem:[%s252 + $0x1798] sm:$0xff]
        %v1070 = vld [vmem:[%s252 + $0x17a0] sm:$0xff]
        %v1071 = vld [vmem:[%s252 + $0x17a8] sm:$0xff]
        %v1072 = vld [vmem:[%s252 + $0x17b0] sm:$0xff]
        %v1073 = vld [vmem:[%s252 + $0x17b8] sm:$0xff]
        %v1074 = vld [vmem:[%s252 + $0x17c0] sm:$0xff]
        %v1075 = vld [vmem:[%s252 + $0x17c8] sm:$0xff]
        %v1076 = vld [vmem:[%s252 + $0x17d0] sm:$0xff]
        %v1077 = vld [vmem:[%s252 + $0x17d8] sm:$0xff]
        %v1078 = vld [vmem:[%s252 + $0x17e0] sm:$0xff]
        %v1079 = vld [vmem:[%s252 + $0x17e8] sm:$0xff]
        %v1080 = vld [vmem:[%s252 + $0x17f0] sm:$0xff]
        %v1081 = vld [vmem:[%s252 + $0x17f8] sm:$0xff]
        %v1082 = vld [vmem:[%s252 + $0x1800] sm:$0xff]
        %v1083 = vld [vmem:[%s252 + $0x1808] sm:$0xff]
        %v1084 = vld [vmem:[%s252 + $0x1810] sm:$0xff]
        %v1085 = vld [vmem:[%s252 + $0x1818] sm:$0xff]
        %v1086 = vld [vmem:[%s252 + $0x1820] sm:$0xff]
        %v1087 = vld [vmem:[%s252 + $0x1828] sm:$0xff]
        %v1088 = vld [vmem:[%s252 + $0x1830] sm:$0xff]
        %v1089 = vld [vmem:[%s252 + $0x1838] sm:$0xff]
        %v1090 = vld [vmem:[%s252 + $0x1840] sm:$0xff]
        %v1091 = vld [vmem:[%s252 + $0x1848] sm:$0xff]
        %v1092 = vld [vmem:[%s252 + $0x1850] sm:$0xff]
        %v1093 = vld [vmem:[%s252 + $0x1858] sm:$0xff]
        %v1094 = vld [vmem:[%s252 + $0x1860] sm:$0xff]
        %v1095 = vld [vmem:[%s252 + $0x1868] sm:$0xff]
        %v1096 = vld [vmem:[%s252 + $0x1870] sm:$0xff]
        %v1097 = vld [vmem:[%s252 + $0x1878] sm:$0xff]
        %v1098 = vld [vmem:[%s252 + $0x1880] sm:$0xff]
        %v1099 = vld [vmem:[%s252 + $0x1888] sm:$0xff]
        %v1100 = vld [vmem:[%s252 + $0x1890] sm:$0xff]
        %v1101 = vld [vmem:[%s252 + $0x1898] sm:$0xff]
        %v1102 = vld [vmem:[%s252 + $0x18a0] sm:$0xff]
        %v1103 = vld [vmem:[%s252 + $0x18a8] sm:$0xff]
        %v1104 = vld [vmem:[%s252 + $0x18b0] sm:$0xff]
        %v1105 = vld [vmem:[%s252 + $0x18b8] sm:$0xff]
        %v1106 = vld [vmem:[%s252 + $0x18c0] sm:$0xff]
        %v1107 = vld [vmem:[%s252 + $0x18c8] sm:$0xff]
        %v1108 = vld [vmem:[%s252 + $0x18d0] sm:$0xff]
        %v1109 = vld [vmem:[%s252 + $0x18d8] sm:$0xff]
        %v1110 = vld [vmem:[%s252 + $0x18e0] sm:$0xff]
        %v1111 = vld [vmem:[%s252 + $0x18e8] sm:$0xff]
        %v1112 = vld [vmem:[%s252 + $0x18f0] sm:$0xff]
        %v1113 = vld [vmem:[%s252 + $0x18f8] sm:$0xff]
        %v1114 = vld [vmem:[%s252 + $0x1900] sm:$0xff]
        %v1115 = vld [vmem:[%s252 + $0x1908] sm:$0xff]
        %v1116 = vld [vmem:[%s252 + $0x1910] sm:$0xff]
        %v1117 = vld [vmem:[%s252 + $0x1918] sm:$0xff]
        %v1118 = vld [vmem:[%s252 + $0x1920] sm:$0xff]
        %v1119 = vld [vmem:[%s252 + $0x1928] sm:$0xff]
        %v1120 = vld [vmem:[%s252 + $0x1930] sm:$0xff]
        %v1121 = vld [vmem:[%s252 + $0x1938] sm:$0xff]
        %v1122 = vld [vmem:[%s252 + $0x1940] sm:$0xff]
        %v1123 = vld [vmem:[%s252 + $0x1948] sm:$0xff]
        %v1124 = vld [vmem:[%s252 + $0x1950] sm:$0xff]
        %v1125 = vld [vmem:[%s252 + $0x1958] sm:$0xff]
        %v1126 = vld [vmem:[%s252 + $0x1960] sm:$0xff]
        %v1127 = vld [vmem:[%s252 + $0x1968] sm:$0xff]
        %v1128 = vld [vmem:[%s252 + $0x1970] sm:$0xff]
        %v1129 = vld [vmem:[%s252 + $0x1978] sm:$0xff]
        %v1130 = vld [vmem:[%s252 + $0x1980] sm:$0xff]
        %v1131 = vld [vmem:[%s252 + $0x1988] sm:$0xff]
        %v1132 = vld [vmem:[%s252 + $0x1990] sm:$0xff]
        %v1133 = vld [vmem:[%s252 + $0x1998] sm:$0xff]
        %v1134 = vld [vmem:[%s252 + $0x19a0] sm:$0xff]
        %v1135 = vld [vmem:[%s252 + $0x19a8] sm:$0xff]
        %v1136 = vld [vmem:[%s252 + $0x19b0] sm:$0xff]
        %v1137 = vld [vmem:[%s252 + $0x19b8] sm:$0xff]
        %v1138 = vld [vmem:[%s252 + $0x19c0] sm:$0xff]
        %v1139 = vld [vmem:[%s252 + $0x19c8] sm:$0xff]
        %v1140 = vld [vmem:[%s252 + $0x19d0] sm:$0xff]
        %v1141 = vld [vmem:[%s252 + $0x19d8] sm:$0xff]
        %v1142 = vld [vmem:[%s252 + $0x19e0] sm:$0xff]
        %v1143 = vld [vmem:[%s252 + $0x19e8] sm:$0xff]
        %v1144 = vld [vmem:[%s252 + $0x19f0] sm:$0xff]
        %v1145 = vld [vmem:[%s252 + $0x19f8] sm:$0xff]
        %v1146 = vld [vmem:[%s252 + $0x1a00] sm:$0xff]
        %v1147 = vld [vmem:[%s252 + $0x1a08] sm:$0xff]
        %v1148 = vld [vmem:[%s252 + $0x1a10] sm:$0xff]
        %v1149 = vld [vmem:[%s252 + $0x1a18] sm:$0xff]
        %v1150 = vld [vmem:[%s252 + $0x1a20] sm:$0xff]
        %v1151 = vld [vmem:[%s252 + $0x1a28] sm:$0xff]
        %v1152 = vld [vmem:[%s252 + $0x1a30] sm:$0xff]
        %v1153 = vld [vmem:[%s252 + $0x1a38] sm:$0xff]
        %v1154 = vld [vmem:[%s252 + $0x1a40] sm:$0xff]
        %v1155 = vld [vmem:[%s252 + $0x1a48] sm:$0xff]
        %v1156 = vld [vmem:[%s252 + $0x1a50] sm:$0xff]
        %v1157 = vld [vmem:[%s252 + $0x1a58] sm:$0xff]
        %v1158 = vld [vmem:[%s252 + $0x1a60] sm:$0xff]
        %v1159 = vld [vmem:[%s252 + $0x1a68] sm:$0xff]
        %v1160 = vld [vmem:[%s252 + $0x1a70] sm:$0xff]
        %v1161 = vld [vmem:[%s252 + $0x1a78] sm:$0xff]
        %v1162 = vld [vmem:[%s252 + $0x1a80] sm:$0xff]
        %v1163 = vld [vmem:[%s252 + $0x1a88] sm:$0xff]
        %v1164 = vld [vmem:[%s252 + $0x1a90] sm:$0xff]
        %v1165 = vld [vmem:[%s252 + $0x1a98] sm:$0xff]
        %v1166 = vld [vmem:[%s252 + $0x1aa0] sm:$0xff]
        %v1167 = vld [vmem:[%s252 + $0x1aa8] sm:$0xff]
        %v1168 = vld [vmem:[%s252 + $0x1ab0] sm:$0xff]
        %v1169 = vld [vmem:[%s252 + $0x1ab8] sm:$0xff]
        %v1170 = vld [vmem:[%s252 + $0x1ac0] sm:$0xff]
        %v1171 = vld [vmem:[%s252 + $0x1ac8] sm:$0xff]
        %v1172 = vld [vmem:[%s252 + $0x1ad0] sm:$0xff]
        %v1173 = vld [vmem:[%s252 + $0x1ad8] sm:$0xff]
        %v1174 = vld [vmem:[%s252 + $0x1ae0] sm:$0xff]
        %v1175 = vld [vmem:[%s252 + $0x1ae8] sm:$0xff]
        %v1176 = vld [vmem:[%s252 + $0x1af0] sm:$0xff]
        %v1177 = vld [vmem:[%s252 + $0x1af8] sm:$0xff]
        %v1178 = vld [vmem:[%s252 + $0x1b00] sm:$0xff]
        %v1179 = vld [vmem:[%s252 + $0x1b08] sm:$0xff]
        %v1180 = vld [vmem:[%s252 + $0x1b10] sm:$0xff]
        %v1181 = vld [vmem:[%s252 + $0x1b18] sm:$0xff]
        %v1182 = vld [vmem:[%s252 + $0x1b20] sm:$0xff]
        %v1183 = vld [vmem:[%s252 + $0x1b28] sm:$0xff]
        %v1184 = vld [vmem:[%s252 + $0x1b30] sm:$0xff]
        %v1185 = vld [vmem:[%s252 + $0x1b38] sm:$0xff]
        %v1186 = vld [vmem:[%s252 + $0x1b40] sm:$0xff]
        %v1187 = vld [vmem:[%s252 + $0x1b48] sm:$0xff]
        %v1188 = vld [vmem:[%s252 + $0x1b50] sm:$0xff]
        %v1189 = vld [vmem:[%s252 + $0x1b58] sm:$0xff]
        %v1190 = vld [vmem:[%s252 + $0x1b60] sm:$0xff]
        %v1191 = vld [vmem:[%s252 + $0x1b68] sm:$0xff]
        %v1192 = vld [vmem:[%s252 + $0x1b70] sm:$0xff]
        %v1193 = vld [vmem:[%s252 + $0x1b78] sm:$0xff]
        %v1194 = vld [vmem:[%s252 + $0x1b80] sm:$0xff]
        %v1195 = vld [vmem:[%s252 + $0x1b88] sm:$0xff]
        %v1196 = vld [vmem:[%s252 + $0x1b90] sm:$0xff]
        %v1197 = vld [vmem:[%s252 + $0x1b98] sm:$0xff]
        %v1198 = vld [vmem:[%s252 + $0x1ba0] sm:$0xff]
        %v1199 = vld [vmem:[%s252 + $0x1ba8] sm:$0xff]
        %v1200 = vld [vmem:[%s252 + $0x1bb0] sm:$0xff]
        %v1201 = vld [vmem:[%s252 + $0x1bb8] sm:$0xff]
        %v1202 = vld [vmem:[%s252 + $0x1bc0] sm:$0xff]
        %v1203 = vld [vmem:[%s252 + $0x1bc8] sm:$0xff]
        %v1204 = vld [vmem:[%s252 + $0x1bd0] sm:$0xff]
        %v1205 = vld [vmem:[%s252 + $0x1bd8] sm:$0xff]
        %v1206 = vld [vmem:[%s252 + $0x1be0] sm:$0xff]
        %v1207 = vld [vmem:[%s252 + $0x1be8] sm:$0xff]
        %v1208 = vld [vmem:[%s252 + $0x1bf0] sm:$0xff]
        %v1209 = vld [vmem:[%s252 + $0x1bf8] sm:$0xff]
        %v1210 = vld [vmem:[%s252 + $0x1c00] sm:$0xff]
        %v1211 = vld [vmem:[%s252 + $0x1c08] sm:$0xff]
        %v1212 = vld [vmem:[%s252 + $0x1c10] sm:$0xff]
        %v1213 = vld [vmem:[%s252 + $0x1c18] sm:$0xff]
        %v1214 = vld [vmem:[%s252 + $0x1c20] sm:$0xff]
        %v1215 = vld [vmem:[%s252 + $0x1c28] sm:$0xff]
        %v1216 = vld [vmem:[%s252 + $0x1c30] sm:$0xff]
        %v1217 = vld [vmem:[%s252 + $0x1c38] sm:$0xff]
        %v1218 = vld [vmem:[%s252 + $0x1c40] sm:$0xff]
        %v1219 = vld [vmem:[%s252 + $0x1c48] sm:$0xff]
        %v1220 = vld [vmem:[%s252 + $0x1c50] sm:$0xff]
        %v1221 = vld [vmem:[%s252 + $0x1c58] sm:$0xff]
        %v1222 = vld [vmem:[%s252 + $0x1c60] sm:$0xff]
        %v1223 = vld [vmem:[%s252 + $0x1c68] sm:$0xff]
        %v1224 = vld [vmem:[%s252 + $0x1c70] sm:$0xff]
        %v1225 = vld [vmem:[%s252 + $0x1c78] sm:$0xff]
        %v1226 = vld [vmem:[%s252 + $0x1c80] sm:$0xff]
        %v1227 = vld [vmem:[%s252 + $0x1c88] sm:$0xff]
        %v1228 = vld [vmem:[%s252 + $0x1c90] sm:$0xff]
        %v1229 = vld [vmem:[%s252 + $0x1c98] sm:$0xff]
        %v1230 = vld [vmem:[%s252 + $0x1ca0] sm:$0xff]
        %v1231 = vld [vmem:[%s252 + $0x1ca8] sm:$0xff]
        %v1232 = vld [vmem:[%s252 + $0x1cb0] sm:$0xff]
        %v1233 = vld [vmem:[%s252 + $0x1cb8] sm:$0xff]
        %v1234 = vld [vmem:[%s252 + $0x1cc0] sm:$0xff]
        %v1235 = vld [vmem:[%s252 + $0x1cc8] sm:$0xff]
        %v1236 = vld [vmem:[%s252 + $0x1cd0] sm:$0xff]
        %v1237 = vld [vmem:[%s252 + $0x1cd8] sm:$0xff]
        %v1238 = vld [vmem:[%s252 + $0x1ce0] sm:$0xff]
        %v1239 = vld [vmem:[%s252 + $0x1ce8] sm:$0xff]
        %v1240 = vld [vmem:[%s252 + $0x1cf0] sm:$0xff]
        %v1241 = vld [vmem:[%s252 + $0x1cf8] sm:$0xff]
        %v1242 = vld [vmem:[%s252 + $0x1d00] sm:$0xff]
        %v1243 = vld [vmem:[%s252 + $0x1d08] sm:$0xff]
        %v1244 = vld [vmem:[%s252 + $0x1d10] sm:$0xff]
        %v1245 = vld [vmem:[%s252 + $0x1d18] sm:$0xff]
        %v1246 = vld [vmem:[%s252 + $0x1d20] sm:$0xff]
        %v1247 = vld [vmem:[%s252 + $0x1d28] sm:$0xff]
        %v1248 = vld [vmem:[%s252 + $0x1d30] sm:$0xff]
        %v1249 = vld [vmem:[%s252 + $0x1d38] sm:$0xff]
        %v1250 = vld [vmem:[%s252 + $0x1d40] sm:$0xff]
        %v1251 = vld [vmem:[%s252 + $0x1d48] sm:$0xff]
        %v1252 = vld [vmem:[%s252 + $0x1d50] sm:$0xff]
        %v1253 = vld [vmem:[%s252 + $0x1d58] sm:$0xff]
        %v1254 = vld [vmem:[%s252 + $0x1d60] sm:$0xff]
        %v1255 = vld [vmem:[%s252 + $0x1d68] sm:$0xff]
        %v1256 = vld [vmem:[%s252 + $0x1d70] sm:$0xff]
        %v1257 = vld [vmem:[%s252 + $0x1d78] sm:$0xff]
        %v1258 = vld [vmem:[%s252 + $0x1d80] sm:$0xff]
        %v1259 = vld [vmem:[%s252 + $0x1d88] sm:$0xff]
        %v1260 = vld [vmem:[%s252 + $0x1d90] sm:$0xff]
        %v1261 = vld [vmem:[%s252 + $0x1d98] sm:$0xff]
        %v1262 = vld [vmem:[%s252 + $0x1da0] sm:$0xff]
        %v1263 = vld [vmem:[%s252 + $0x1da8] sm:$0xff]
        %v1264 = vld [vmem:[%s252 + $0x1db0] sm:$0xff]
        %v1265 = vld [vmem:[%s252 + $0x1db8] sm:$0xff]
        %v1266 = vld [vmem:[%s252 + $0x1dc0] sm:$0xff]
        %v1267 = vld [vmem:[%s252 + $0x1dc8] sm:$0xff]
        %v1268 = vld [vmem:[%s252 + $0x1dd0] sm:$0xff]
        %v1269 = vld [vmem:[%s252 + $0x1dd8] sm:$0xff]
        %v1270 = vld [vmem:[%s252 + $0x1de0] sm:$0xff]
        %v1271 = vld [vmem:[%s252 + $0x1de8] sm:$0xff]
        %v1272 = vld [vmem:[%s252 + $0x1df0] sm:$0xff]
        %v1273 = vld [vmem:[%s252 + $0x1df8] sm:$0xff]
        %v1274 = vld [vmem:[%s252 + $0x1e00] sm:$0xff]
        %v1275 = vld [vmem:[%s252 + $0x1e08] sm:$0xff]
        %v1276 = vld [vmem:[%s252 + $0x1e10] sm:$0xff]
        %v1277 = vld [vmem:[%s252 + $0x1e18] sm:$0xff]
        %v1278 = vld [vmem:[%s252 + $0x1e20] sm:$0xff]
        %v1279 = vld [vmem:[%s252 + $0x1e28] sm:$0xff]
        %v1280 = vld [vmem:[%s252 + $0x1e30] sm:$0xff]
        %v1281 = vld [vmem:[%s252 + $0x1e38] sm:$0xff]
        %v1282 = vld [vmem:[%s252 + $0x1e40] sm:$0xff]
        %v1283 = vld [vmem:[%s252 + $0x1e48] sm:$0xff]
        %v1284 = vld [vmem:[%s252 + $0x1e50] sm:$0xff]
        %v1285 = vld [vmem:[%s252 + $0x1e58] sm:$0xff]
        %v1286 = vld [vmem:[%s252 + $0x1e60] sm:$0xff]
        %v1287 = vld [vmem:[%s252 + $0x1e68] sm:$0xff]
        %v1288 = vld [vmem:[%s252 + $0x1e70] sm:$0xff]
        %v1289 = vld [vmem:[%s252 + $0x1e78] sm:$0xff]
        %v1290 = vld [vmem:[%s252 + $0x1e80] sm:$0xff]
        %v1291 = vld [vmem:[%s252 + $0x1e88] sm:$0xff]
        %v1292 = vld [vmem:[%s252 + $0x1e90] sm:$0xff]
        %v1293 = vld [vmem:[%s252 + $0x1e98] sm:$0xff]
        %v1294 = vld [vmem:[%s252 + $0x1ea0] sm:$0xff]
        %v1295 = vld [vmem:[%s252 + $0x1ea8] sm:$0xff]
        %v1296 = vld [vmem:[%s252 + $0x1eb0] sm:$0xff]
        %v1297 = vld [vmem:[%s252 + $0x1eb8] sm:$0xff]
        %v1298 = vld [vmem:[%s252 + $0x1ec0] sm:$0xff]
        %v1299 = vld [vmem:[%s252 + $0x1ec8] sm:$0xff]
        %v1300 = vld [vmem:[%s252 + $0x1ed0] sm:$0xff]
        %v1301 = vld [vmem:[%s252 + $0x1ed8] sm:$0xff]
        %v1302 = vld [vmem:[%s252 + $0x1ee0] sm:$0xff]
        %v1303 = vld [vmem:[%s252 + $0x1ee8] sm:$0xff]
        %v1304 = vld [vmem:[%s252 + $0x1ef0] sm:$0xff]
        %v1305 = vld [vmem:[%s252 + $0x1ef8] sm:$0xff]
        %v1306 = vld [vmem:[%s252 + $0x1f00] sm:$0xff]
        %v1307 = vld [vmem:[%s252 + $0x1f08] sm:$0xff]
        %v1308 = vld [vmem:[%s252 + $0x1f10] sm:$0xff]
        %v1309 = vld [vmem:[%s252 + $0x1f18] sm:$0xff]
        %v1310 = vld [vmem:[%s252 + $0x1f20] sm:$0xff]
        %v1311 = vld [vmem:[%s252 + $0x1f28] sm:$0xff]
        %v1312 = vld [vmem:[%s252 + $0x1f30] sm:$0xff]
        %v1313 = vld [vmem:[%s252 + $0x1f38] sm:$0xff]
        %v1314 = vld [vmem:[%s252 + $0x1f40] sm:$0xff]
        %v1315 = vld [vmem:[%s252 + $0x1f48] sm:$0xff]
        %v1316 = vld [vmem:[%s252 + $0x1f50] sm:$0xff]
        %v1317 = vld [vmem:[%s252 + $0x1f58] sm:$0xff]
        %v1318 = vld [vmem:[%s252 + $0x1f60] sm:$0xff]
        %v1319 = vld [vmem:[%s252 + $0x1f68] sm:$0xff]
        %v1320 = vld [vmem:[%s252 + $0x1f70] sm:$0xff]
        %v1321 = vld [vmem:[%s252 + $0x1f78] sm:$0xff]
        %v1322 = vld [vmem:[%s252 + $0x1f80] sm:$0xff]
        %v1323 = vld [vmem:[%s252 + $0x1f88] sm:$0xff]
        %v1324 = vld [vmem:[%s252 + $0x1f90] sm:$0xff]
        %v1325 = vld [vmem:[%s252 + $0x1f98] sm:$0xff]
        %v1326 = vld [vmem:[%s252 + $0x1fa0] sm:$0xff]
        %v1327 = vld [vmem:[%s252 + $0x1fa8] sm:$0xff]
        %v1328 = vld [vmem:[%s252 + $0x1fb0] sm:$0xff]
        %v1329 = vld [vmem:[%s252 + $0x1fb8] sm:$0xff]
        %v1330 = vld [vmem:[%s252 + $0x1fc0] sm:$0xff]
        %v1331 = vld [vmem:[%s252 + $0x1fc8] sm:$0xff]
        %v1332 = vld [vmem:[%s252 + $0x1fd0] sm:$0xff]
        %v1333 = vld [vmem:[%s252 + $0x1fd8] sm:$0xff]
        %v1334 = vld [vmem:[%s252 + $0x1fe0] sm:$0xff]
        %v1335 = vld [vmem:[%s252 + $0x1fe8] sm:$0xff]
        %v1336 = vld [vmem:[%s252 + $0x1ff0] sm:$0xff]
        %v1337 = vld [vmem:[%s252 + $0x1ff8] sm:$0xff]
        %v1338 = vld [vmem:[%s252 + $0x2000] sm:$0xff]
        %v1339 = vld [vmem:[%s252 + $0x2008] sm:$0xff]
        %v1340 = vld [vmem:[%s252 + $0x2010] sm:$0xff]
        %v1341 = vld [vmem:[%s252 + $0x2018] sm:$0xff]
        %v1342 = vld [vmem:[%s252 + $0x2020] sm:$0xff]
        %v1343 = vld [vmem:[%s252 + $0x2028] sm:$0xff]
        %v1344 = vld [vmem:[%s252 + $0x2030] sm:$0xff]
        %v1345 = vld [vmem:[%s252 + $0x2038] sm:$0xff]
        %v1346 = vld [vmem:[%s252 + $0x2040] sm:$0xff]
        %v1347 = vld [vmem:[%s252 + $0x2048] sm:$0xff]
        %v1348 = vld [vmem:[%s252 + $0x2050] sm:$0xff]
        %v1349 = vld [vmem:[%s252 + $0x2058] sm:$0xff]
        %v1350 = vld [vmem:[%s252 + $0x2060] sm:$0xff]
        %v1351 = vld [vmem:[%s252 + $0x2068] sm:$0xff]
        %v1352 = vld [vmem:[%s252 + $0x2070] sm:$0xff]
        %v1353 = vld [vmem:[%s252 + $0x2078] sm:$0xff]
        %v1354 = vld [vmem:[%s252 + $0x2080] sm:$0xff]
        %v1355 = vld [vmem:[%s252 + $0x2088] sm:$0xff]
        %v1356 = vld [vmem:[%s252 + $0x2090] sm:$0xff]
        %v1357 = vld [vmem:[%s252 + $0x2098] sm:$0xff]
        %v1358 = vld [vmem:[%s252 + $0x20a0] sm:$0xff]
        %v1359 = vld [vmem:[%s252 + $0x20a8] sm:$0xff]
        %v1360 = vld [vmem:[%s252 + $0x20b0] sm:$0xff]
        %v1361 = vld [vmem:[%s252 + $0x20b8] sm:$0xff]
        %v1362 = vld [vmem:[%s252 + $0x20c0] sm:$0xff]
        %v1363 = vld [vmem:[%s252 + $0x20c8] sm:$0xff]
        %v1364 = vld [vmem:[%s252 + $0x20d0] sm:$0xff]
        %v1365 = vld [vmem:[%s252 + $0x20d8] sm:$0xff]
        %v1366 = vld [vmem:[%s252 + $0x20e0] sm:$0xff]
        %v1367 = vld [vmem:[%s252 + $0x20e8] sm:$0xff]
        %v1368 = vld [vmem:[%s252 + $0x20f0] sm:$0xff]
        %v1369 = vld [vmem:[%s252 + $0x20f8] sm:$0xff]
        %v1370 = vld [vmem:[%s252 + $0x2100] sm:$0xff]
        %v1371 = vld [vmem:[%s252 + $0x2108] sm:$0xff]
        %v1372 = vld [vmem:[%s252 + $0x2110] sm:$0xff]
        %v1373 = vld [vmem:[%s252 + $0x2118] sm:$0xff]
        %v1374 = vld [vmem:[%s252 + $0x2120] sm:$0xff]
        %v1375 = vld [vmem:[%s252 + $0x2128] sm:$0xff]
        %v1376 = vld [vmem:[%s252 + $0x2130] sm:$0xff]
        %v1377 = vld [vmem:[%s252 + $0x2138] sm:$0xff]
        %v1378 = vld [vmem:[%s252 + $0x2140] sm:$0xff]
        %v1379 = vld [vmem:[%s252 + $0x2148] sm:$0xff]
        %v1380 = vld [vmem:[%s252 + $0x2150] sm:$0xff]
        %v1381 = vld [vmem:[%s252 + $0x2158] sm:$0xff]
        %v1382 = vld [vmem:[%s252 + $0x2160] sm:$0xff]
        %v1383 = vld [vmem:[%s252 + $0x2168] sm:$0xff]
        %v1384 = vld [vmem:[%s252 + $0x2170] sm:$0xff]
        %v1385 = vld [vmem:[%s252 + $0x2178] sm:$0xff]
        %v1386 = vld [vmem:[%s252 + $0x2180] sm:$0xff]
        %v1387 = vld [vmem:[%s252 + $0x2188] sm:$0xff]
        %v1388 = vld [vmem:[%s252 + $0x2190] sm:$0xff]
        %v1389 = vld [vmem:[%s252 + $0x2198] sm:$0xff]
        %v1390 = vld [vmem:[%s252 + $0x21a0] sm:$0xff]
        %v1391 = vld [vmem:[%s252 + $0x21a8] sm:$0xff]
        %v1392 = vld [vmem:[%s252 + $0x21b0] sm:$0xff]
        %v1393 = vld [vmem:[%s252 + $0x21b8] sm:$0xff]
        %v1394 = vld [vmem:[%s252 + $0x21c0] sm:$0xff]
        %v1395 = vld [vmem:[%s252 + $0x21c8] sm:$0xff]
        %v1396 = vld [vmem:[%s252 + $0x21d0] sm:$0xff]
        %v1397 = vld [vmem:[%s252 + $0x21d8] sm:$0xff]
        %v1398 = vld [vmem:[%s252 + $0x21e0] sm:$0xff]
        %v1399 = vld [vmem:[%s252 + $0x21e8] sm:$0xff]
        %v1400 = vld [vmem:[%s252 + $0x21f0] sm:$0xff]
        %v1401 = vld [vmem:[%s252 + $0x21f8] sm:$0xff]
        %v1402 = vld [vmem:[%s252 + $0x2200] sm:$0xff]
        %v1403 = vld [vmem:[%s252 + $0x2208] sm:$0xff]
        %v1404 = vld [vmem:[%s252 + $0x2210] sm:$0xff]
        %v1405 = vld [vmem:[%s252 + $0x2218] sm:$0xff]
        %v1406 = vld [vmem:[%s252 + $0x2220] sm:$0xff]
        %v1407 = vld [vmem:[%s252 + $0x2228] sm:$0xff]
        %v1408 = vld [vmem:[%s252 + $0x2230] sm:$0xff]
        %v1409 = vld [vmem:[%s252 + $0x2238] sm:$0xff]
        %v1410 = vld [vmem:[%s252 + $0x2240] sm:$0xff]
        %v1411 = vld [vmem:[%s252 + $0x2248] sm:$0xff]
        %v1412 = vld [vmem:[%s252 + $0x2250] sm:$0xff]
        %v1413 = vld [vmem:[%s252 + $0x2258] sm:$0xff]
        %v1414 = vld [vmem:[%s252 + $0x2260] sm:$0xff]
        %v1415 = vld [vmem:[%s252 + $0x2268] sm:$0xff]
        %v1416 = vld [vmem:[%s252 + $0x2270] sm:$0xff]
        %v1417 = vld [vmem:[%s252 + $0x2278] sm:$0xff]
        %v1418 = vld [vmem:[%s252 + $0x2280] sm:$0xff]
        %v1419 = vld [vmem:[%s252 + $0x2288] sm:$0xff]
        %v1420 = vld [vmem:[%s252 + $0x2290] sm:$0xff]
        %v1421 = vld [vmem:[%s252 + $0x2298] sm:$0xff]
        %v1422 = vld [vmem:[%s252 + $0x22a0] sm:$0xff]
        %v1423 = vld [vmem:[%s252 + $0x22a8] sm:$0xff]
        %v1424 = vld [vmem:[%s252 + $0x22b0] sm:$0xff]
        %v1425 = vld [vmem:[%s252 + $0x22b8] sm:$0xff]
        %v1426 = vld [vmem:[%s252 + $0x22c0] sm:$0xff]
        %v1427 = vld [vmem:[%s252 + $0x22c8] sm:$0xff]
        %v1428 = vld [vmem:[%s252 + $0x22d0] sm:$0xff]
        %v1429 = vld [vmem:[%s252 + $0x22d8] sm:$0xff]
        %v1430 = vld [vmem:[%s252 + $0x22e0] sm:$0xff]
        %v1431 = vld [vmem:[%s252 + $0x22e8] sm:$0xff]
        %v1432 = vld [vmem:[%s252 + $0x22f0] sm:$0xff]
        %v1433 = vld [vmem:[%s252 + $0x22f8] sm:$0xff]
        %v1434 = vld [vmem:[%s252 + $0x2300] sm:$0xff]
        %v1435 = vld [vmem:[%s252 + $0x2308] sm:$0xff]
        %v1436 = vld [vmem:[%s252 + $0x2310] sm:$0xff]
        %v1437 = vld [vmem:[%s252 + $0x2318] sm:$0xff]
        %v1438 = vld [vmem:[%s252 + $0x2320] sm:$0xff]
        %v1439 = vld [vmem:[%s252 + $0x2328] sm:$0xff]
        %v1440 = vld [vmem:[%s252 + $0x2330] sm:$0xff]
        %v1441 = vld [vmem:[%s252 + $0x2338] sm:$0xff]
        %v1442 = vld [vmem:[%s252 + $0x2340] sm:$0xff]
        %v1443 = vld [vmem:[%s252 + $0x2348] sm:$0xff]
        %v1444 = vld [vmem:[%s252 + $0x2350] sm:$0xff]
        %v1445 = vld [vmem:[%s252 + $0x2358] sm:$0xff]
        %v1446 = vld [vmem:[%s252 + $0x2360] sm:$0xff]
        %v1447 = vld [vmem:[%s252 + $0x2368] sm:$0xff]
        %v1448 = vld [vmem:[%s252 + $0x2370] sm:$0xff]
        %v1449 = vld [vmem:[%s252 + $0x2378] sm:$0xff]
        %v1450 = vld [vmem:[%s252 + $0x2380] sm:$0xff]
        %v1451 = vld [vmem:[%s252 + $0x2388] sm:$0xff]
        %v1452 = vld [vmem:[%s252 + $0x2390] sm:$0xff]
        %v1453 = vld [vmem:[%s252 + $0x2398] sm:$0xff]
        %v1454 = vld [vmem:[%s252 + $0x23a0] sm:$0xff]
        %v1455 = vld [vmem:[%s252 + $0x23a8] sm:$0xff]
        %v1456 = vld [vmem:[%s252 + $0x23b0] sm:$0xff]
        %v1457 = vld [vmem:[%s252 + $0x23b8] sm:$0xff]
        %v1458 = vld [vmem:[%s252 + $0x23c0] sm:$0xff]
        %v1459 = vld [vmem:[%s252 + $0x23c8] sm:$0xff]
        %v1460 = vld [vmem:[%s252 + $0x23d0] sm:$0xff]
        %v1461 = vld [vmem:[%s252 + $0x23d8] sm:$0xff]
        %v1462 = vld [vmem:[%s252 + $0x23e0] sm:$0xff]
        %v1463 = vld [vmem:[%s252 + $0x23e8] sm:$0xff]
        %v1464 = vld [vmem:[%s252 + $0x23f0] sm:$0xff]
        %v1465 = vld [vmem:[%s252 + $0x23f8] sm:$0xff]
        %v1466 = vld [vmem:[%s261] sm:$0x3f]
        %v1468 = vlaneseq
        %v1469 = vshrl.u32 %v1468, 7
        %v1470 = vsub.s32 0, %v1469
        %v1471 = vrot.slane %v1466, %v1470
        %v1472 = vlaneseq
        %v1473 = vshrl.u32 %v1472, 7
        %v1474 = vsub.s32 1, %v1473
        %v1475 = vrot.slane %v1466, %v1474
        %v1476 = vlaneseq
        %v1477 = vshrl.u32 %v1476, 7
        %v1478 = vsub.s32 2, %v1477
        %v1479 = vrot.slane %v1466, %v1478
        %v1480 = vlaneseq
        %v1481 = vshrl.u32 %v1480, 7
        %v1482 = vsub.s32 3, %v1481
        %v1483 = vrot.slane %v1466, %v1482
        %v1484 = vlaneseq
        %v1485 = vshrl.u32 %v1484, 7
        %v1486 = vsub.s32 4, %v1485
        %v1487 = vrot.slane %v1466, %v1486
        %v1488 = vlaneseq
        %v1489 = vshrl.u32 %v1488, 7
        %v1490 = vsub.s32 5, %v1489
        %v1491 = vrot.slane %v1466, %v1490
        %v1501 = vcombine.high %v311, %v311
        %v1503 = vunpack.c.l.s4 1966171168
        %v1504 = vunpack.c.0.s8 %v1503
        %v1505 = vlaneseq
        %v1506 = vshrl.u32 %v1505, 7
        %v1507 = vsub.s32 %v1504, %v1506
        %v1508 = vrot.slane %v311, %v1507
        %v1510 = vunpack.c.l.s4 1966171168
        %v1511 = vunpack.c.0.s8 %v1510
        %v1512 = vlaneseq
        %v1513 = vshrl.u32 %v1512, 7
        %v1514 = vsub.s32 %v1511, %v1513
        %v1515 = vrot.slane %v1501, %v1514
        %v1516 = vcombine.high %v1508, %v1508
        %v1517 = vcombine.high %v1515, %v1515
        %v1519 = vunpack.c.l.s4 1966171168
        %v1520 = vunpack.c.0.s8 %v1519
        %v1521 = vlaneseq
        %v1522 = vshrl.u32 %v1521, 7
        %v1523 = vsub.s32 %v1520, %v1522
        %v1524 = vrot.slane %v1508, %v1523
        %v1526 = vunpack.c.l.s4 1966171168
        %v1527 = vunpack.c.0.s8 %v1526
        %v1528 = vlaneseq
        %v1529 = vshrl.u32 %v1528, 7
        %v1530 = vsub.s32 %v1527, %v1529
        %v1531 = vrot.slane %v1515, %v1530
        %v1533 = vunpack.c.l.s4 1966171168
        %v1534 = vunpack.c.0.s8 %v1533
        %v1535 = vlaneseq
        %v1536 = vshrl.u32 %v1535, 7
        %v1537 = vsub.s32 %v1534, %v1536
        %v1538 = vrot.slane %v1516, %v1537
        %v1540 = vunpack.c.l.s4 1966171168
        %v1541 = vunpack.c.0.s8 %v1540
        %v1542 = vlaneseq
        %v1543 = vshrl.u32 %v1542, 7
        %v1544 = vsub.s32 %v1541, %v1543
        %v1545 = vrot.slane %v1517, %v1544
        %v1546 = vcombine.high %v1524, %v1524
        %v1547 = vcombine.high %v1531, %v1531
        %v1548 = vcombine.high %v1538, %v1538
        %v1549 = vcombine.high %v1545, %v1545
        %v1550 = vcombine.high %v312, %v312
        %v1552 = vunpack.c.l.s4 1966171168
        %v1553 = vunpack.c.0.s8 %v1552
        %v1554 = vlaneseq
        %v1555 = vshrl.u32 %v1554, 7
        %v1556 = vsub.s32 %v1553, %v1555
        %v1557 = vrot.slane %v312, %v1556
        %v1559 = vunpack.c.l.s4 1966171168
        %v1560 = vunpack.c.0.s8 %v1559
        %v1561 = vlaneseq
        %v1562 = vshrl.u32 %v1561, 7
        %v1563 = vsub.s32 %v1560, %v1562
        %v1564 = vrot.slane %v1550, %v1563
        %v1565 = vcombine.high %v1557, %v1557
        %v1566 = vcombine.high %v1564, %v1564
        %v1568 = vunpack.c.l.s4 1966171168
        %v1569 = vunpack.c.0.s8 %v1568
        %v1570 = vlaneseq
        %v1571 = vshrl.u32 %v1570, 7
        %v1572 = vsub.s32 %v1569, %v1571
        %v1573 = vrot.slane %v1557, %v1572
        %v1575 = vunpack.c.l.s4 1966171168
        %v1576 = vunpack.c.0.s8 %v1575
        %v1577 = vlaneseq
        %v1578 = vshrl.u32 %v1577, 7
        %v1579 = vsub.s32 %v1576, %v1578
        %v1580 = vrot.slane %v1564, %v1579
        %v1582 = vunpack.c.l.s4 1966171168
        %v1583 = vunpack.c.0.s8 %v1582
        %v1584 = vlaneseq
        %v1585 = vshrl.u32 %v1584, 7
        %v1586 = vsub.s32 %v1583, %v1585
        %v1587 = vrot.slane %v1565, %v1586
        %v1589 = vunpack.c.l.s4 1966171168
        %v1590 = vunpack.c.0.s8 %v1589
        %v1591 = vlaneseq
        %v1592 = vshrl.u32 %v1591, 7
        %v1593 = vsub.s32 %v1590, %v1592
        %v1594 = vrot.slane %v1566, %v1593
        %v1595 = vcombine.high %v1573, %v1573
        %v1596 = vcombine.high %v1580, %v1580
        %v1597 = vcombine.high %v1587, %v1587
        %v1598 = vcombine.high %v1594, %v1594
        %v1599 = vcombine.high %v313, %v313
        %v1601 = vunpack.c.l.s4 1966171168
        %v1602 = vunpack.c.0.s8 %v1601
        %v1603 = vlaneseq
        %v1604 = vshrl.u32 %v1603, 7
        %v1605 = vsub.s32 %v1602, %v1604
        %v1606 = vrot.slane %v313, %v1605
        %v1608 = vunpack.c.l.s4 1966171168
        %v1609 = vunpack.c.0.s8 %v1608
        %v1610 = vlaneseq
        %v1611 = vshrl.u32 %v1610, 7
        %v1612 = vsub.s32 %v1609, %v1611
        %v1613 = vrot.slane %v1599, %v1612
        %v1614 = vcombine.high %v1606, %v1606
        %v1615 = vcombine.high %v1613, %v1613
        %v1617 = vunpack.c.l.s4 1966171168
        %v1618 = vunpack.c.0.s8 %v1617
        %v1619 = vlaneseq
        %v1620 = vshrl.u32 %v1619, 7
        %v1621 = vsub.s32 %v1618, %v1620
        %v1622 = vrot.slane %v1606, %v1621
        %v1624 = vunpack.c.l.s4 1966171168
        %v1625 = vunpack.c.0.s8 %v1624
        %v1626 = vlaneseq
        %v1627 = vshrl.u32 %v1626, 7
        %v1628 = vsub.s32 %v1625, %v1627
        %v1629 = vrot.slane %v1613, %v1628
        %v1631 = vunpack.c.l.s4 1966171168
        %v1632 = vunpack.c.0.s8 %v1631
        %v1633 = vlaneseq
        %v1634 = vshrl.u32 %v1633, 7
        %v1635 = vsub.s32 %v1632, %v1634
        %v1636 = vrot.slane %v1614, %v1635
        %v1638 = vunpack.c.l.s4 1966171168
        %v1639 = vunpack.c.0.s8 %v1638
        %v1640 = vlaneseq
        %v1641 = vshrl.u32 %v1640, 7
        %v1642 = vsub.s32 %v1639, %v1641
        %v1643 = vrot.slane %v1615, %v1642
        %v1644 = vcombine.high %v1622, %v1622
        %v1645 = vcombine.high %v1629, %v1629
        %v1646 = vcombine.high %v1636, %v1636
        %v1647 = vcombine.high %v1643, %v1643
        %v2824 = vunpack.c.l.b16 %v314
        %v2825 = vunpack.c.h.b16 %v314
        %v2826 = vunpack.c.l.b16 %v315
        %v2827 = vunpack.c.h.b16 %v315
        %v2828 = vunpack.c.l.b16 %v316
        %v2829 = vunpack.c.h.b16 %v316
        %v2830 = vunpack.c.l.b16 %v317
        %v2831 = vunpack.c.h.b16 %v317
        %v2832 = vunpack.c.l.b16 %v318
        %v2833 = vunpack.c.h.b16 %v318
        %v2834 = vunpack.c.l.b16 %v319
        %v2835 = vunpack.c.h.b16 %v319
        %v2836 = vunpack.c.l.b16 %v320
        %v2837 = vunpack.c.h.b16 %v320
        %v2838 = vunpack.c.l.b16 %v321
        %v2839 = vunpack.c.h.b16 %v321
        %v2840 = vunpack.c.l.b16 %v322
        %v2841 = vunpack.c.h.b16 %v322
        %v2842 = vunpack.c.l.b16 %v323
        %v2843 = vunpack.c.h.b16 %v323
        %v2844 = vunpack.c.l.b16 %v324
        %v2845 = vunpack.c.h.b16 %v324
        %v2846 = vunpack.c.l.b16 %v325
        %v2847 = vunpack.c.h.b16 %v325
        %v2848 = vunpack.c.l.b16 %v326
        %v2849 = vunpack.c.h.b16 %v326
        %v2850 = vunpack.c.l.b16 %v327
        %v2851 = vunpack.c.h.b16 %v327
        %v2852 = vunpack.c.l.b16 %v328
        %v2853 = vunpack.c.h.b16 %v328
        %v2854 = vunpack.c.l.b16 %v329
        %v2855 = vunpack.c.h.b16 %v329
        %v2856 = vunpack.c.l.b16 %v330
        %v2857 = vunpack.c.h.b16 %v330
        %v2858 = vunpack.c.l.b16 %v331
        %v2859 = vunpack.c.h.b16 %v331
        %v2860 = vunpack.c.l.b16 %v332
        %v2861 = vunpack.c.h.b16 %v332
        %v2862 = vunpack.c.l.b16 %v333
        %v2863 = vunpack.c.h.b16 %v333
        %v2864 = vunpack.c.l.b16 %v334
        %v2865 = vunpack.c.h.b16 %v334
        %v2866 = vunpack.c.l.b16 %v335
        %v2867 = vunpack.c.h.b16 %v335
        %v2868 = vunpack.c.l.b16 %v336
        %v2869 = vunpack.c.h.b16 %v336
        %v2870 = vunpack.c.l.b16 %v337
        %v2871 = vunpack.c.h.b16 %v337
        %v2872 = vunpack.c.l.b16 %v338
        %v2873 = vunpack.c.h.b16 %v338
        %v2874 = vunpack.c.l.b16 %v339
        %v2875 = vunpack.c.h.b16 %v339
        %v2876 = vunpack.c.l.b16 %v340
        %v2877 = vunpack.c.h.b16 %v340
        %v2878 = vunpack.c.l.b16 %v341
        %v2879 = vunpack.c.h.b16 %v341
        %v2880 = vunpack.c.l.b16 %v342
        %v2881 = vunpack.c.h.b16 %v342
        %v2882 = vunpack.c.l.b16 %v343
        %v2883 = vunpack.c.h.b16 %v343
        %v2884 = vunpack.c.l.b16 %v344
        %v2885 = vunpack.c.h.b16 %v344
        %v2886 = vunpack.c.l.b16 %v345
        %v2887 = vunpack.c.h.b16 %v345
        %v2888 = vunpack.c.l.b16 %v346
        %v2889 = vunpack.c.h.b16 %v346
        %v2890 = vunpack.c.l.b16 %v347
        %v2891 = vunpack.c.h.b16 %v347
        %v2892 = vunpack.c.l.b16 %v348
        %v2893 = vunpack.c.h.b16 %v348
        %v2894 = vunpack.c.l.b16 %v349
        %v2895 = vunpack.c.h.b16 %v349
        %v2896 = vunpack.c.l.b16 %v350
        %v2897 = vunpack.c.h.b16 %v350
        %v2898 = vunpack.c.l.b16 %v351
        %v2899 = vunpack.c.h.b16 %v351
        %v2900 = vunpack.c.l.b16 %v352
        %v2901 = vunpack.c.h.b16 %v352
        %v2902 = vunpack.c.l.b16 %v353
        %v2903 = vunpack.c.h.b16 %v353
        %v2904 = vunpack.c.l.b16 %v354
        %v2905 = vunpack.c.h.b16 %v354
        %v2906 = vunpack.c.l.b16 %v355
        %v2907 = vunpack.c.h.b16 %v355
        %v2908 = vunpack.c.l.b16 %v356
        %v2909 = vunpack.c.h.b16 %v356
        %v2910 = vunpack.c.l.b16 %v357
        %v2911 = vunpack.c.h.b16 %v357
        %v2912 = vunpack.c.l.b16 %v358
        %v2913 = vunpack.c.h.b16 %v358
        %v2914 = vunpack.c.l.b16 %v359
        %v2915 = vunpack.c.h.b16 %v359
        %v2916 = vunpack.c.l.b16 %v360
        %v2917 = vunpack.c.h.b16 %v360
        %v2918 = vunpack.c.l.b16 %v361
        %v2919 = vunpack.c.h.b16 %v361
        %v2920 = vunpack.c.l.b16 %v362
        %v2921 = vunpack.c.h.b16 %v362
        %v2922 = vunpack.c.l.b16 %v363
        %v2923 = vunpack.c.h.b16 %v363
        %v2924 = vunpack.c.l.b16 %v364
        %v2925 = vunpack.c.h.b16 %v364
        %v2926 = vunpack.c.l.b16 %v365
        %v2927 = vunpack.c.h.b16 %v365
        %v2928 = vunpack.c.l.b16 %v366
        %v2929 = vunpack.c.h.b16 %v366
        %v2930 = vunpack.c.l.b16 %v367
        %v2931 = vunpack.c.h.b16 %v367
        %v2932 = vunpack.c.l.b16 %v368
        %v2933 = vunpack.c.h.b16 %v368
        %v2934 = vunpack.c.l.b16 %v369
        %v2935 = vunpack.c.h.b16 %v369
        %v2936 = vunpack.c.l.b16 %v370
        %v2937 = vunpack.c.h.b16 %v370
        %v2938 = vunpack.c.l.b16 %v371
        %v2939 = vunpack.c.h.b16 %v371
        %v2940 = vunpack.c.l.b16 %v372
        %v2941 = vunpack.c.h.b16 %v372
        %v2942 = vunpack.c.l.b16 %v373
        %v2943 = vunpack.c.h.b16 %v373
        %v2944 = vunpack.c.l.b16 %v374
        %v2945 = vunpack.c.h.b16 %v374
        %v2946 = vunpack.c.l.b16 %v375
        %v2947 = vunpack.c.h.b16 %v375
        %v2948 = vunpack.c.l.b16 %v376
        %v2949 = vunpack.c.h.b16 %v376
        %v2950 = vunpack.c.l.b16 %v377
        %v2951 = vunpack.c.h.b16 %v377
        %v2952 = vunpack.c.l.b16 %v378
        %v2953 = vunpack.c.h.b16 %v378
        %v2954 = vunpack.c.l.b16 %v379
        %v2955 = vunpack.c.h.b16 %v379
        %v2956 = vunpack.c.l.b16 %v380
        %v2957 = vunpack.c.h.b16 %v380
        %v2958 = vunpack.c.l.b16 %v381
        %v2959 = vunpack.c.h.b16 %v381
        %v2960 = vunpack.c.l.b16 %v382
        %v2961 = vunpack.c.h.b16 %v382
        %v2962 = vunpack.c.l.b16 %v383
        %v2963 = vunpack.c.h.b16 %v383
        %v2964 = vunpack.c.l.b16 %v384
        %v2965 = vunpack.c.h.b16 %v384
        %v2966 = vunpack.c.l.b16 %v385
        %v2967 = vunpack.c.h.b16 %v385
        %v2968 = vunpack.c.l.b16 %v386
        %v2969 = vunpack.c.h.b16 %v386
        %v2970 = vunpack.c.l.b16 %v387
        %v2971 = vunpack.c.h.b16 %v387
        %v2972 = vunpack.c.l.b16 %v388
        %v2973 = vunpack.c.h.b16 %v388
        %v2974 = vunpack.c.l.b16 %v389
        %v2975 = vunpack.c.h.b16 %v389
        %v2976 = vunpack.c.l.b16 %v390
        %v2977 = vunpack.c.h.b16 %v390
        %v2978 = vunpack.c.l.b16 %v391
        %v2979 = vunpack.c.h.b16 %v391
        %v2980 = vunpack.c.l.b16 %v392
        %v2981 = vunpack.c.h.b16 %v392
        %v2982 = vunpack.c.l.b16 %v393
        %v2983 = vunpack.c.h.b16 %v393
        %v2984 = vunpack.c.l.b16 %v394
        %v2985 = vunpack.c.h.b16 %v394
        %v2986 = vunpack.c.l.b16 %v395
        %v2987 = vunpack.c.h.b16 %v395
        %v2988 = vunpack.c.l.b16 %v396
        %v2989 = vunpack.c.h.b16 %v396
        %v2990 = vunpack.c.l.b16 %v397
        %v2991 = vunpack.c.h.b16 %v397
        %v2992 = vunpack.c.l.b16 %v398
        %v2993 = vunpack.c.h.b16 %v398
        %v2994 = vunpack.c.l.b16 %v399
        %v2995 = vunpack.c.h.b16 %v399
        %v2996 = vunpack.c.l.b16 %v400
        %v2997 = vunpack.c.h.b16 %v400
        %v2998 = vunpack.c.l.b16 %v401
        %v2999 = vunpack.c.h.b16 %v401
        %v3000 = vunpack.c.l.b16 %v402
        %v3001 = vunpack.c.h.b16 %v402
        %v3002 = vunpack.c.l.b16 %v403
        %v3003 = vunpack.c.h.b16 %v403
        %v3004 = vunpack.c.l.b16 %v404
        %v3005 = vunpack.c.h.b16 %v404
        %v3006 = vunpack.c.l.b16 %v405
        %v3007 = vunpack.c.h.b16 %v405
        %v3008 = vunpack.c.l.b16 %v406
        %v3009 = vunpack.c.h.b16 %v406
        %v3010 = vunpack.c.l.b16 %v407
        %v3011 = vunpack.c.h.b16 %v407
        %v3012 = vunpack.c.l.b16 %v408
        %v3013 = vunpack.c.h.b16 %v408
        %v3014 = vunpack.c.l.b16 %v409
        %v3015 = vunpack.c.h.b16 %v409
        %v3016 = vunpack.c.l.b16 %v410
        %v3017 = vunpack.c.h.b16 %v410
        %v3018 = vunpack.c.l.b16 %v411
        %v3019 = vunpack.c.h.b16 %v411
        %v3020 = vunpack.c.l.b16 %v412
        %v3021 = vunpack.c.h.b16 %v412
        %v3022 = vunpack.c.l.b16 %v413
        %v3023 = vunpack.c.h.b16 %v413
        %v3024 = vunpack.c.l.b16 %v414
        %v3025 = vunpack.c.h.b16 %v414
        %v3026 = vunpack.c.l.b16 %v415
        %v3027 = vunpack.c.h.b16 %v415
        %v3028 = vunpack.c.l.b16 %v416
        %v3029 = vunpack.c.h.b16 %v416
        %v3030 = vunpack.c.l.b16 %v417
        %v3031 = vunpack.c.h.b16 %v417
        %v3032 = vunpack.c.l.b16 %v418
        %v3033 = vunpack.c.h.b16 %v418
        %v3034 = vunpack.c.l.b16 %v419
        %v3035 = vunpack.c.h.b16 %v419
        %v3036 = vunpack.c.l.b16 %v420
        %v3037 = vunpack.c.h.b16 %v420
        %v3038 = vunpack.c.l.b16 %v421
        %v3039 = vunpack.c.h.b16 %v421
        %v3040 = vunpack.c.l.b16 %v422
        %v3041 = vunpack.c.h.b16 %v422
        %v3042 = vunpack.c.l.b16 %v423
        %v3043 = vunpack.c.h.b16 %v423
        %v3044 = vunpack.c.l.b16 %v424
        %v3045 = vunpack.c.h.b16 %v424
        %v3046 = vunpack.c.l.b16 %v425
        %v3047 = vunpack.c.h.b16 %v425
        %v3048 = vunpack.c.l.b16 %v426
        %v3049 = vunpack.c.h.b16 %v426
        %v3050 = vunpack.c.l.b16 %v427
        %v3051 = vunpack.c.h.b16 %v427
        %v3052 = vunpack.c.l.b16 %v428
        %v3053 = vunpack.c.h.b16 %v428
        %v3054 = vunpack.c.l.b16 %v429
        %v3055 = vunpack.c.h.b16 %v429
        %v3056 = vunpack.c.l.b16 %v430
        %v3057 = vunpack.c.h.b16 %v430
        %v3058 = vunpack.c.l.b16 %v431
        %v3059 = vunpack.c.h.b16 %v431
        %v3060 = vunpack.c.l.b16 %v432
        %v3061 = vunpack.c.h.b16 %v432
        %v3062 = vunpack.c.l.b16 %v433
        %v3063 = vunpack.c.h.b16 %v433
        %v3064 = vunpack.c.l.b16 %v434
        %v3065 = vunpack.c.h.b16 %v434
        %v3066 = vunpack.c.l.b16 %v435
        %v3067 = vunpack.c.h.b16 %v435
        %v3068 = vunpack.c.l.b16 %v436
        %v3069 = vunpack.c.h.b16 %v436
        %v3070 = vunpack.c.l.b16 %v437
        %v3071 = vunpack.c.h.b16 %v437
        %v3072 = vunpack.c.l.b16 %v438
        %v3073 = vunpack.c.h.b16 %v438
        %v3074 = vunpack.c.l.b16 %v439
        %v3075 = vunpack.c.h.b16 %v439
        %v3076 = vunpack.c.l.b16 %v440
        %v3077 = vunpack.c.h.b16 %v440
        %v3078 = vunpack.c.l.b16 %v441
        %v3079 = vunpack.c.h.b16 %v441
        %v3080 = vunpack.c.l.b16 %v442
        %v3081 = vunpack.c.h.b16 %v442
        %v3082 = vunpack.c.l.b16 %v443
        %v3083 = vunpack.c.h.b16 %v443
        %v3084 = vunpack.c.l.b16 %v444
        %v3085 = vunpack.c.h.b16 %v444
        %v3086 = vunpack.c.l.b16 %v445
        %v3087 = vunpack.c.h.b16 %v445
        %v3088 = vunpack.c.l.b16 %v446
        %v3089 = vunpack.c.h.b16 %v446
        %v3090 = vunpack.c.l.b16 %v447
        %v3091 = vunpack.c.h.b16 %v447
        %v3092 = vunpack.c.l.b16 %v448
        %v3093 = vunpack.c.h.b16 %v448
        %v3094 = vunpack.c.l.b16 %v449
        %v3095 = vunpack.c.h.b16 %v449
        %v3096 = vunpack.c.l.b16 %v450
        %v3097 = vunpack.c.h.b16 %v450
        %v3098 = vunpack.c.l.b16 %v451
        %v3099 = vunpack.c.h.b16 %v451
        %v3100 = vunpack.c.l.b16 %v452
        %v3101 = vunpack.c.h.b16 %v452
        %v3102 = vunpack.c.l.b16 %v453
        %v3103 = vunpack.c.h.b16 %v453
        %v3104 = vunpack.c.l.b16 %v454
        %v3105 = vunpack.c.h.b16 %v454
        %v3106 = vunpack.c.l.b16 %v455
        %v3107 = vunpack.c.h.b16 %v455
        %v3108 = vunpack.c.l.b16 %v456
        %v3109 = vunpack.c.h.b16 %v456
        %v3110 = vunpack.c.l.b16 %v457
        %v3111 = vunpack.c.h.b16 %v457
        %v3112 = vunpack.c.l.b16 %v458
        %v3113 = vunpack.c.h.b16 %v458
        %v3114 = vunpack.c.l.b16 %v459
        %v3115 = vunpack.c.h.b16 %v459
        %v3116 = vunpack.c.l.b16 %v460
        %v3117 = vunpack.c.h.b16 %v460
        %v3118 = vunpack.c.l.b16 %v461
        %v3119 = vunpack.c.h.b16 %v461
        %v3120 = vunpack.c.l.b16 %v462
        %v3121 = vunpack.c.h.b16 %v462
        %v3122 = vunpack.c.l.b16 %v463
        %v3123 = vunpack.c.h.b16 %v463
        %v3124 = vunpack.c.l.b16 %v464
        %v3125 = vunpack.c.h.b16 %v464
        %v3126 = vunpack.c.l.b16 %v465
        %v3127 = vunpack.c.h.b16 %v465
        %v3128 = vunpack.c.l.b16 %v466
        %v3129 = vunpack.c.h.b16 %v466
        %v3130 = vunpack.c.l.b16 %v467
        %v3131 = vunpack.c.h.b16 %v467
        %v3132 = vunpack.c.l.b16 %v468
        %v3133 = vunpack.c.h.b16 %v468
        %v3134 = vunpack.c.l.b16 %v469
        %v3135 = vunpack.c.h.b16 %v469
        %v3136 = vunpack.c.l.b16 %v470
        %v3137 = vunpack.c.h.b16 %v470
        %v3138 = vunpack.c.l.b16 %v471
        %v3139 = vunpack.c.h.b16 %v471
        %v3140 = vunpack.c.l.b16 %v472
        %v3141 = vunpack.c.h.b16 %v472
        %v3142 = vunpack.c.l.b16 %v473
        %v3143 = vunpack.c.h.b16 %v473
        %v3144 = vunpack.c.l.b16 %v474
        %v3145 = vunpack.c.h.b16 %v474
        %v3146 = vunpack.c.l.b16 %v475
        %v3147 = vunpack.c.h.b16 %v475
        %v3148 = vunpack.c.l.b16 %v476
        %v3149 = vunpack.c.h.b16 %v476
        %v3150 = vunpack.c.l.b16 %v477
        %v3151 = vunpack.c.h.b16 %v477
        %v3152 = vunpack.c.l.b16 %v478
        %v3153 = vunpack.c.h.b16 %v478
        %v3154 = vunpack.c.l.b16 %v479
        %v3155 = vunpack.c.h.b16 %v479
        %v3156 = vunpack.c.l.b16 %v480
        %v3157 = vunpack.c.h.b16 %v480
        %v3158 = vunpack.c.l.b16 %v481
        %v3159 = vunpack.c.h.b16 %v481
        %v3160 = vunpack.c.l.b16 %v482
        %v3161 = vunpack.c.h.b16 %v482
        %v3162 = vunpack.c.l.b16 %v483
        %v3163 = vunpack.c.h.b16 %v483
        %v3164 = vunpack.c.l.b16 %v484
        %v3165 = vunpack.c.h.b16 %v484
        %v3166 = vunpack.c.l.b16 %v485
        %v3167 = vunpack.c.h.b16 %v485
        %v3168 = vunpack.c.l.b16 %v486
        %v3169 = vunpack.c.h.b16 %v486
        %v3170 = vunpack.c.l.b16 %v487
        %v3171 = vunpack.c.h.b16 %v487
        %v3172 = vunpack.c.l.b16 %v488
        %v3173 = vunpack.c.h.b16 %v488
        %v3174 = vunpack.c.l.b16 %v489
        %v3175 = vunpack.c.h.b16 %v489
        %v3176 = vunpack.c.l.b16 %v490
        %v3177 = vunpack.c.h.b16 %v490
        %v3178 = vunpack.c.l.b16 %v491
        %v3179 = vunpack.c.h.b16 %v491
        %v3180 = vunpack.c.l.b16 %v492
        %v3181 = vunpack.c.h.b16 %v492
        %v3182 = vunpack.c.l.b16 %v493
        %v3183 = vunpack.c.h.b16 %v493
        %v3184 = vunpack.c.l.b16 %v494
        %v3185 = vunpack.c.h.b16 %v494
        %v3186 = vunpack.c.l.b16 %v495
        %v3187 = vunpack.c.h.b16 %v495
        %v3188 = vunpack.c.l.b16 %v496
        %v3189 = vunpack.c.h.b16 %v496
        %v3190 = vunpack.c.l.b16 %v497
        %v3191 = vunpack.c.h.b16 %v497
        %v3192 = vunpack.c.l.b16 %v498
        %v3193 = vunpack.c.h.b16 %v498
        %v3194 = vunpack.c.l.b16 %v499
        %v3195 = vunpack.c.h.b16 %v499
        %v3196 = vunpack.c.l.b16 %v500
        %v3197 = vunpack.c.h.b16 %v500
        %v3198 = vunpack.c.l.b16 %v501
        %v3199 = vunpack.c.h.b16 %v501
        %v3200 = vunpack.c.l.b16 %v502
        %v3201 = vunpack.c.h.b16 %v502
        %v3202 = vunpack.c.l.b16 %v503
        %v3203 = vunpack.c.h.b16 %v503
        %v3204 = vunpack.c.l.b16 %v504
        %v3205 = vunpack.c.h.b16 %v504
        %v3206 = vunpack.c.l.b16 %v505
        %v3207 = vunpack.c.h.b16 %v505
        %v3208 = vunpack.c.l.b16 %v506
        %v3209 = vunpack.c.h.b16 %v506
        %v3210 = vunpack.c.l.b16 %v507
        %v3211 = vunpack.c.h.b16 %v507
        %v3212 = vunpack.c.l.b16 %v508
        %v3213 = vunpack.c.h.b16 %v508
        %v3214 = vunpack.c.l.b16 %v509
        %v3215 = vunpack.c.h.b16 %v509
        %v3216 = vunpack.c.l.b16 %v510
        %v3217 = vunpack.c.h.b16 %v510
        %v3218 = vunpack.c.l.b16 %v511
        %v3219 = vunpack.c.h.b16 %v511
        %v3220 = vunpack.c.l.b16 %v512
        %v3221 = vunpack.c.h.b16 %v512
        %v3222 = vunpack.c.l.b16 %v513
        %v3223 = vunpack.c.h.b16 %v513
        %v3224 = vunpack.c.l.b16 %v514
        %v3225 = vunpack.c.h.b16 %v514
        %v3226 = vunpack.c.l.b16 %v515
        %v3227 = vunpack.c.h.b16 %v515
        %v3228 = vunpack.c.l.b16 %v516
        %v3229 = vunpack.c.h.b16 %v516
        %v3230 = vunpack.c.l.b16 %v517
        %v3231 = vunpack.c.h.b16 %v517
        %v3232 = vunpack.c.l.b16 %v518
        %v3233 = vunpack.c.h.b16 %v518
        %v3234 = vunpack.c.l.b16 %v519
        %v3235 = vunpack.c.h.b16 %v519
        %v3236 = vunpack.c.l.b16 %v520
        %v3237 = vunpack.c.h.b16 %v520
        %v3238 = vunpack.c.l.b16 %v521
        %v3239 = vunpack.c.h.b16 %v521
        %v3240 = vunpack.c.l.b16 %v522
        %v3241 = vunpack.c.h.b16 %v522
        %v3242 = vunpack.c.l.b16 %v523
        %v3243 = vunpack.c.h.b16 %v523
        %v3244 = vunpack.c.l.b16 %v524
        %v3245 = vunpack.c.h.b16 %v524
        %v3246 = vunpack.c.l.b16 %v525
        %v3247 = vunpack.c.h.b16 %v525
        %v3248 = vunpack.c.l.b16 %v526
        %v3249 = vunpack.c.h.b16 %v526
        %v3250 = vunpack.c.l.b16 %v527
        %v3251 = vunpack.c.h.b16 %v527
        %v3252 = vunpack.c.l.b16 %v528
        %v3253 = vunpack.c.h.b16 %v528
        %v3254 = vunpack.c.l.b16 %v529
        %v3255 = vunpack.c.h.b16 %v529
        %v3256 = vunpack.c.l.b16 %v530
        %v3257 = vunpack.c.h.b16 %v530
        %v3258 = vunpack.c.l.b16 %v531
        %v3259 = vunpack.c.h.b16 %v531
        %v3260 = vunpack.c.l.b16 %v532
        %v3261 = vunpack.c.h.b16 %v532
        %v3262 = vunpack.c.l.b16 %v533
        %v3263 = vunpack.c.h.b16 %v533
        %v3264 = vunpack.c.l.b16 %v534
        %v3265 = vunpack.c.h.b16 %v534
        %v3266 = vunpack.c.l.b16 %v535
        %v3267 = vunpack.c.h.b16 %v535
        %v3268 = vunpack.c.l.b16 %v536
        %v3269 = vunpack.c.h.b16 %v536
        %v3270 = vunpack.c.l.b16 %v537
        %v3271 = vunpack.c.h.b16 %v537
        %v3272 = vunpack.c.l.b16 %v538
        %v3273 = vunpack.c.h.b16 %v538
        %v3274 = vunpack.c.l.b16 %v539
        %v3275 = vunpack.c.h.b16 %v539
        %v3276 = vunpack.c.l.b16 %v540
        %v3277 = vunpack.c.h.b16 %v540
        %v3278 = vunpack.c.l.b16 %v541
        %v3279 = vunpack.c.h.b16 %v541
        %v3280 = vunpack.c.l.b16 %v542
        %v3281 = vunpack.c.h.b16 %v542
        %v3282 = vunpack.c.l.b16 %v543
        %v3283 = vunpack.c.h.b16 %v543
        %v3284 = vunpack.c.l.b16 %v544
        %v3285 = vunpack.c.h.b16 %v544
        %v3286 = vunpack.c.l.b16 %v545
        %v3287 = vunpack.c.h.b16 %v545
        %v3288 = vunpack.c.l.b16 %v546
        %v3289 = vunpack.c.h.b16 %v546
        %v3290 = vunpack.c.l.b16 %v547
        %v3291 = vunpack.c.h.b16 %v547
        %v3292 = vunpack.c.l.b16 %v548
        %v3293 = vunpack.c.h.b16 %v548
        %v3294 = vunpack.c.l.b16 %v549
        %v3295 = vunpack.c.h.b16 %v549
        %v3296 = vunpack.c.l.b16 %v550
        %v3297 = vunpack.c.h.b16 %v550
        %v3298 = vunpack.c.l.b16 %v551
        %v3299 = vunpack.c.h.b16 %v551
        %v3300 = vunpack.c.l.b16 %v552
        %v3301 = vunpack.c.h.b16 %v552
        %v3302 = vunpack.c.l.b16 %v553
        %v3303 = vunpack.c.h.b16 %v553
        %v3304 = vunpack.c.l.b16 %v554
        %v3305 = vunpack.c.h.b16 %v554
        %v3306 = vunpack.c.l.b16 %v555
        %v3307 = vunpack.c.h.b16 %v555
        %v3308 = vunpack.c.l.b16 %v556
        %v3309 = vunpack.c.h.b16 %v556
        %v3310 = vunpack.c.l.b16 %v557
        %v3311 = vunpack.c.h.b16 %v557
        %v3312 = vunpack.c.l.b16 %v558
        %v3313 = vunpack.c.h.b16 %v558
        %v3314 = vunpack.c.l.b16 %v559
        %v3315 = vunpack.c.h.b16 %v559
        %v3316 = vunpack.c.l.b16 %v560
        %v3317 = vunpack.c.h.b16 %v560
        %v3318 = vunpack.c.l.b16 %v561
        %v3319 = vunpack.c.h.b16 %v561
        %v3320 = vunpack.c.l.b16 %v562
        %v3321 = vunpack.c.h.b16 %v562
        %v3322 = vunpack.c.l.b16 %v563
        %v3323 = vunpack.c.h.b16 %v563
        %v3324 = vunpack.c.l.b16 %v564
        %v3325 = vunpack.c.h.b16 %v564
        %v3326 = vunpack.c.l.b16 %v565
        %v3327 = vunpack.c.h.b16 %v565
        %v3328 = vunpack.c.l.b16 %v566
        %v3329 = vunpack.c.h.b16 %v566
        %v3330 = vunpack.c.l.b16 %v567
        %v3331 = vunpack.c.h.b16 %v567
        %v3332 = vunpack.c.l.b16 %v568
        %v3333 = vunpack.c.h.b16 %v568
        %v3334 = vunpack.c.l.b16 %v569
        %v3335 = vunpack.c.h.b16 %v569
        %v3336 = vunpack.c.l.b16 %v570
        %v3337 = vunpack.c.h.b16 %v570
        %v3338 = vunpack.c.l.b16 %v571
        %v3339 = vunpack.c.h.b16 %v571
        %v3340 = vunpack.c.l.b16 %v572
        %v3341 = vunpack.c.h.b16 %v572
        %v3342 = vunpack.c.l.b16 %v573
        %v3343 = vunpack.c.h.b16 %v573
        %v3344 = vunpack.c.l.b16 %v574
        %v3345 = vunpack.c.h.b16 %v574
        %v3346 = vunpack.c.l.b16 %v575
        %v3347 = vunpack.c.h.b16 %v575
        %v3348 = vunpack.c.l.b16 %v576
        %v3349 = vunpack.c.h.b16 %v576
        %v3350 = vunpack.c.l.b16 %v577
        %v3351 = vunpack.c.h.b16 %v577
        %v3352 = vunpack.c.l.b16 %v578
        %v3353 = vunpack.c.h.b16 %v578
        %v3354 = vunpack.c.l.b16 %v579
        %v3355 = vunpack.c.h.b16 %v579
        %v3356 = vunpack.c.l.b16 %v580
        %v3357 = vunpack.c.h.b16 %v580
        %v3358 = vunpack.c.l.b16 %v581
        %v3359 = vunpack.c.h.b16 %v581
        %v3360 = vunpack.c.l.b16 %v582
        %v3361 = vunpack.c.h.b16 %v582
        %v3362 = vunpack.c.l.b16 %v583
        %v3363 = vunpack.c.h.b16 %v583
        %v3364 = vunpack.c.l.b16 %v584
        %v3365 = vunpack.c.h.b16 %v584
        %v3366 = vunpack.c.l.b16 %v585
        %v3367 = vunpack.c.h.b16 %v585
        %v3368 = vunpack.c.l.b16 %v586
        %v3369 = vunpack.c.h.b16 %v586
        %v3370 = vunpack.c.l.b16 %v587
        %v3371 = vunpack.c.h.b16 %v587
        %v3372 = vunpack.c.l.b16 %v588
        %v3373 = vunpack.c.h.b16 %v588
        %v3374 = vunpack.c.l.b16 %v589
        %v3375 = vunpack.c.h.b16 %v589
        %v3376 = vunpack.c.l.b16 %v590
        %v3377 = vunpack.c.h.b16 %v590
        %v3378 = vunpack.c.l.b16 %v591
        %v3379 = vunpack.c.h.b16 %v591
        %v3380 = vunpack.c.l.b16 %v592
        %v3381 = vunpack.c.h.b16 %v592
        %v3382 = vunpack.c.l.b16 %v593
        %v3383 = vunpack.c.h.b16 %v593
        %v3384 = vunpack.c.l.b16 %v594
        %v3385 = vunpack.c.h.b16 %v594
        %v3386 = vunpack.c.l.b16 %v595
        %v3387 = vunpack.c.h.b16 %v595
        %v3388 = vunpack.c.l.b16 %v596
        %v3389 = vunpack.c.h.b16 %v596
        %v3390 = vunpack.c.l.b16 %v597
        %v3391 = vunpack.c.h.b16 %v597
        %v3392 = vunpack.c.l.b16 %v598
        %v3393 = vunpack.c.h.b16 %v598
        %v3394 = vunpack.c.l.b16 %v599
        %v3395 = vunpack.c.h.b16 %v599
        %v3396 = vunpack.c.l.b16 %v600
        %v3397 = vunpack.c.h.b16 %v600
        %v3398 = vunpack.c.l.b16 %v601
        %v3399 = vunpack.c.h.b16 %v601
        %v3400 = vunpack.c.l.b16 %v602
        %v3401 = vunpack.c.h.b16 %v602
        %v3402 = vunpack.c.l.b16 %v603
        %v3403 = vunpack.c.h.b16 %v603
        %v3404 = vunpack.c.l.b16 %v604
        %v3405 = vunpack.c.h.b16 %v604
        %v3406 = vunpack.c.l.b16 %v605
        %v3407 = vunpack.c.h.b16 %v605
        %v3408 = vunpack.c.l.b16 %v606
        %v3409 = vunpack.c.h.b16 %v606
        %v3410 = vunpack.c.l.b16 %v607
        %v3411 = vunpack.c.h.b16 %v607
        %v3412 = vunpack.c.l.b16 %v608
        %v3413 = vunpack.c.h.b16 %v608
        %v3414 = vunpack.c.l.b16 %v609
        %v3415 = vunpack.c.h.b16 %v609
        %v3416 = vunpack.c.l.b16 %v610
        %v3417 = vunpack.c.h.b16 %v610
        %v3418 = vunpack.c.l.b16 %v611
        %v3419 = vunpack.c.h.b16 %v611
        %v3420 = vunpack.c.l.b16 %v612
        %v3421 = vunpack.c.h.b16 %v612
        %v3422 = vunpack.c.l.b16 %v613
        %v3423 = vunpack.c.h.b16 %v613
        %v3424 = vunpack.c.l.b16 %v614
        %v3425 = vunpack.c.h.b16 %v614
        %v3426 = vunpack.c.l.b16 %v615
        %v3427 = vunpack.c.h.b16 %v615
        %v3428 = vunpack.c.l.b16 %v616
        %v3429 = vunpack.c.h.b16 %v616
        %v3430 = vunpack.c.l.b16 %v617
        %v3431 = vunpack.c.h.b16 %v617
        %v3432 = vunpack.c.l.b16 %v618
        %v3433 = vunpack.c.h.b16 %v618
        %v3434 = vunpack.c.l.b16 %v619
        %v3435 = vunpack.c.h.b16 %v619
        %v3436 = vunpack.c.l.b16 %v620
        %v3437 = vunpack.c.h.b16 %v620
        %v3438 = vunpack.c.l.b16 %v621
        %v3439 = vunpack.c.h.b16 %v621
        %v3440 = vunpack.c.l.b16 %v622
        %v3441 = vunpack.c.h.b16 %v622
        %v3442 = vunpack.c.l.b16 %v623
        %v3443 = vunpack.c.h.b16 %v623
        %v3444 = vunpack.c.l.b16 %v624
        %v3445 = vunpack.c.h.b16 %v624
        %v3446 = vunpack.c.l.b16 %v625
        %v3447 = vunpack.c.h.b16 %v625
        %v3448 = vunpack.c.l.b16 %v626
        %v3449 = vunpack.c.h.b16 %v626
        %v3450 = vunpack.c.l.b16 %v627
        %v3451 = vunpack.c.h.b16 %v627
        %v3452 = vunpack.c.l.b16 %v628
        %v3453 = vunpack.c.h.b16 %v628
        %v3454 = vunpack.c.l.b16 %v629
        %v3455 = vunpack.c.h.b16 %v629
        %v3456 = vunpack.c.l.b16 %v630
        %v3457 = vunpack.c.h.b16 %v630
        %v3458 = vunpack.c.l.b16 %v631
        %v3459 = vunpack.c.h.b16 %v631
        %v3460 = vunpack.c.l.b16 %v632
        %v3461 = vunpack.c.h.b16 %v632
        %v3462 = vunpack.c.l.b16 %v633
        %v3463 = vunpack.c.h.b16 %v633
        %v3464 = vunpack.c.l.b16 %v634
        %v3465 = vunpack.c.h.b16 %v634
        %v3466 = vunpack.c.l.b16 %v635
        %v3467 = vunpack.c.h.b16 %v635
        %v3468 = vunpack.c.l.b16 %v636
        %v3469 = vunpack.c.h.b16 %v636
        %v3470 = vunpack.c.l.b16 %v637
        %v3471 = vunpack.c.h.b16 %v637
        %v3472 = vunpack.c.l.b16 %v638
        %v3473 = vunpack.c.h.b16 %v638
        %v3474 = vunpack.c.l.b16 %v639
        %v3475 = vunpack.c.h.b16 %v639
        %v3476 = vunpack.c.l.b16 %v640
        %v3477 = vunpack.c.h.b16 %v640
        %v3478 = vunpack.c.l.b16 %v641
        %v3479 = vunpack.c.h.b16 %v641
        %v3480 = vunpack.c.l.b16 %v642
        %v3481 = vunpack.c.h.b16 %v642
        %v3482 = vunpack.c.l.b16 %v643
        %v3483 = vunpack.c.h.b16 %v643
        %v3484 = vunpack.c.l.b16 %v644
        %v3485 = vunpack.c.h.b16 %v644
        %v3486 = vunpack.c.l.b16 %v645
        %v3487 = vunpack.c.h.b16 %v645
        %v3488 = vunpack.c.l.b16 %v646
        %v3489 = vunpack.c.h.b16 %v646
        %v3490 = vunpack.c.l.b16 %v647
        %v3491 = vunpack.c.h.b16 %v647
        %v3492 = vunpack.c.l.b16 %v648
        %v3493 = vunpack.c.h.b16 %v648
        %v3494 = vunpack.c.l.b16 %v649
        %v3495 = vunpack.c.h.b16 %v649
        %v3496 = vunpack.c.l.b16 %v650
        %v3497 = vunpack.c.h.b16 %v650
        %v3498 = vunpack.c.l.b16 %v651
        %v3499 = vunpack.c.h.b16 %v651
        %v3500 = vunpack.c.l.b16 %v652
        %v3501 = vunpack.c.h.b16 %v652
        %v3502 = vunpack.c.l.b16 %v653
        %v3503 = vunpack.c.h.b16 %v653
        %v3504 = vunpack.c.l.b16 %v654
        %v3505 = vunpack.c.h.b16 %v654
        %v3506 = vunpack.c.l.b16 %v655
        %v3507 = vunpack.c.h.b16 %v655
        %v3508 = vunpack.c.l.b16 %v656
        %v3509 = vunpack.c.h.b16 %v656
        %v3510 = vunpack.c.l.b16 %v657
        %v3511 = vunpack.c.h.b16 %v657
        %v3512 = vunpack.c.l.b16 %v658
        %v3513 = vunpack.c.h.b16 %v658
        %v3514 = vunpack.c.l.b16 %v659
        %v3515 = vunpack.c.h.b16 %v659
        %v3516 = vunpack.c.l.b16 %v660
        %v3517 = vunpack.c.h.b16 %v660
        %v3518 = vunpack.c.l.b16 %v661
        %v3519 = vunpack.c.h.b16 %v661
        %v3520 = vunpack.c.l.b16 %v662
        %v3521 = vunpack.c.h.b16 %v662
        %v3522 = vunpack.c.l.b16 %v663
        %v3523 = vunpack.c.h.b16 %v663
        %v3524 = vunpack.c.l.b16 %v664
        %v3525 = vunpack.c.h.b16 %v664
        %v3526 = vunpack.c.l.b16 %v665
        %v3527 = vunpack.c.h.b16 %v665
        %v3528 = vunpack.c.l.b16 %v666
        %v3529 = vunpack.c.h.b16 %v666
        %v3530 = vunpack.c.l.b16 %v667
        %v3531 = vunpack.c.h.b16 %v667
        %v3532 = vunpack.c.l.b16 %v668
        %v3533 = vunpack.c.h.b16 %v668
        %v3534 = vunpack.c.l.b16 %v669
        %v3535 = vunpack.c.h.b16 %v669
        %v3536 = vunpack.c.l.b16 %v670
        %v3537 = vunpack.c.h.b16 %v670
        %v3538 = vunpack.c.l.b16 %v671
        %v3539 = vunpack.c.h.b16 %v671
        %v3540 = vunpack.c.l.b16 %v672
        %v3541 = vunpack.c.h.b16 %v672
        %v3542 = vunpack.c.l.b16 %v673
        %v3543 = vunpack.c.h.b16 %v673
        %v3544 = vunpack.c.l.b16 %v674
        %v3545 = vunpack.c.h.b16 %v674
        %v3546 = vunpack.c.l.b16 %v675
        %v3547 = vunpack.c.h.b16 %v675
        %v3548 = vunpack.c.l.b16 %v676
        %v3549 = vunpack.c.h.b16 %v676
        %v3550 = vunpack.c.l.b16 %v677
        %v3551 = vunpack.c.h.b16 %v677
        %v3552 = vunpack.c.l.b16 %v678
        %v3553 = vunpack.c.h.b16 %v678
        %v3554 = vunpack.c.l.b16 %v679
        %v3555 = vunpack.c.h.b16 %v679
        %v3556 = vunpack.c.l.b16 %v680
        %v3557 = vunpack.c.h.b16 %v680
        %v3558 = vunpack.c.l.b16 %v681
        %v3559 = vunpack.c.h.b16 %v681
        %v3560 = vunpack.c.l.b16 %v682
        %v3561 = vunpack.c.h.b16 %v682
        %v3562 = vunpack.c.l.b16 %v683
        %v3563 = vunpack.c.h.b16 %v683
        %v3564 = vunpack.c.l.b16 %v684
        %v3565 = vunpack.c.h.b16 %v684
        %v3566 = vunpack.c.l.b16 %v685
        %v3567 = vunpack.c.h.b16 %v685
        %v3568 = vunpack.c.l.b16 %v686
        %v3569 = vunpack.c.h.b16 %v686
        %v3570 = vunpack.c.l.b16 %v687
        %v3571 = vunpack.c.h.b16 %v687
        %v3572 = vunpack.c.l.b16 %v688
        %v3573 = vunpack.c.h.b16 %v688
        %v3574 = vunpack.c.l.b16 %v689
        %v3575 = vunpack.c.h.b16 %v689
        %v3576 = vunpack.c.l.b16 %v690
        %v3577 = vunpack.c.h.b16 %v690
        %v3578 = vunpack.c.l.b16 %v691
        %v3579 = vunpack.c.h.b16 %v691
        %v3580 = vunpack.c.l.b16 %v692
        %v3581 = vunpack.c.h.b16 %v692
        %v3582 = vunpack.c.l.b16 %v693
        %v3583 = vunpack.c.h.b16 %v693
        %v3584 = vunpack.c.l.b16 %v694
        %v3585 = vunpack.c.h.b16 %v694
        %v3586 = vunpack.c.l.b16 %v695
        %v3587 = vunpack.c.h.b16 %v695
        %v3588 = vunpack.c.l.b16 %v696
        %v3589 = vunpack.c.h.b16 %v696
        %v3590 = vunpack.c.l.b16 %v697
        %v3591 = vunpack.c.h.b16 %v697
        %v3592 = vunpack.c.l.b16 %v698
        %v3593 = vunpack.c.h.b16 %v698
        %v3594 = vunpack.c.l.b16 %v699
        %v3595 = vunpack.c.h.b16 %v699
        %v3596 = vunpack.c.l.b16 %v700
        %v3597 = vunpack.c.h.b16 %v700
        %v3598 = vunpack.c.l.b16 %v701
        %v3599 = vunpack.c.h.b16 %v701
        %v3600 = vunpack.c.l.b16 %v702
        %v3601 = vunpack.c.h.b16 %v702
        %v3602 = vunpack.c.l.b16 %v703
        %v3603 = vunpack.c.h.b16 %v703
        %v3604 = vunpack.c.l.b16 %v704
        %v3605 = vunpack.c.h.b16 %v704
        %v3606 = vunpack.c.l.b16 %v705
        %v3607 = vunpack.c.h.b16 %v705
        %v3608 = vunpack.c.l.b16 %v706
        %v3609 = vunpack.c.h.b16 %v706
        %v3610 = vunpack.c.l.b16 %v707
        %v3611 = vunpack.c.h.b16 %v707
        %v3612 = vunpack.c.l.b16 %v708
        %v3613 = vunpack.c.h.b16 %v708
        %v3614 = vunpack.c.l.b16 %v709
        %v3615 = vunpack.c.h.b16 %v709
        %v3616 = vunpack.c.l.b16 %v710
        %v3617 = vunpack.c.h.b16 %v710
        %v3618 = vunpack.c.l.b16 %v711
        %v3619 = vunpack.c.h.b16 %v711
        %v3620 = vunpack.c.l.b16 %v712
        %v3621 = vunpack.c.h.b16 %v712
        %v3622 = vunpack.c.l.b16 %v713
        %v3623 = vunpack.c.h.b16 %v713
        %v3624 = vunpack.c.l.b16 %v714
        %v3625 = vunpack.c.h.b16 %v714
        %v3626 = vunpack.c.l.b16 %v715
        %v3627 = vunpack.c.h.b16 %v715
        %v3628 = vunpack.c.l.b16 %v716
        %v3629 = vunpack.c.h.b16 %v716
        %v3630 = vunpack.c.l.b16 %v717
        %v3631 = vunpack.c.h.b16 %v717
        %v3632 = vunpack.c.l.b16 %v718
        %v3633 = vunpack.c.h.b16 %v718
        %v3634 = vunpack.c.l.b16 %v719
        %v3635 = vunpack.c.h.b16 %v719
        %v3636 = vunpack.c.l.b16 %v720
        %v3637 = vunpack.c.h.b16 %v720
        %v3638 = vunpack.c.l.b16 %v721
        %v3639 = vunpack.c.h.b16 %v721
        %v3640 = vunpack.c.l.b16 %v722
        %v3641 = vunpack.c.h.b16 %v722
        %v3642 = vunpack.c.l.b16 %v723
        %v3643 = vunpack.c.h.b16 %v723
        %v3644 = vunpack.c.l.b16 %v724
        %v3645 = vunpack.c.h.b16 %v724
        %v3646 = vunpack.c.l.b16 %v725
        %v3647 = vunpack.c.h.b16 %v725
        %v3648 = vunpack.c.l.b16 %v726
        %v3649 = vunpack.c.h.b16 %v726
        %v3650 = vunpack.c.l.b16 %v727
        %v3651 = vunpack.c.h.b16 %v727
        %v3652 = vunpack.c.l.b16 %v728
        %v3653 = vunpack.c.h.b16 %v728
        %v3654 = vunpack.c.l.b16 %v729
        %v3655 = vunpack.c.h.b16 %v729
        %v3656 = vunpack.c.l.b16 %v730
        %v3657 = vunpack.c.h.b16 %v730
        %v3658 = vunpack.c.l.b16 %v731
        %v3659 = vunpack.c.h.b16 %v731
        %v3660 = vunpack.c.l.b16 %v732
        %v3661 = vunpack.c.h.b16 %v732
        %v3662 = vunpack.c.l.b16 %v733
        %v3663 = vunpack.c.h.b16 %v733
        %v3664 = vunpack.c.l.b16 %v734
        %v3665 = vunpack.c.h.b16 %v734
        %v3666 = vunpack.c.l.b16 %v735
        %v3667 = vunpack.c.h.b16 %v735
        %v3668 = vunpack.c.l.b16 %v736
        %v3669 = vunpack.c.h.b16 %v736
        %v3670 = vunpack.c.l.b16 %v737
        %v3671 = vunpack.c.h.b16 %v737
        %v3672 = vunpack.c.l.b16 %v738
        %v3673 = vunpack.c.h.b16 %v738
        %v3674 = vunpack.c.l.b16 %v739
        %v3675 = vunpack.c.h.b16 %v739
        %v3676 = vunpack.c.l.b16 %v740
        %v3677 = vunpack.c.h.b16 %v740
        %v3678 = vunpack.c.l.b16 %v741
        %v3679 = vunpack.c.h.b16 %v741
        %v3680 = vunpack.c.l.b16 %v742
        %v3681 = vunpack.c.h.b16 %v742
        %v3682 = vunpack.c.l.b16 %v743
        %v3683 = vunpack.c.h.b16 %v743
        %v3684 = vunpack.c.l.b16 %v744
        %v3685 = vunpack.c.h.b16 %v744
        %v3686 = vunpack.c.l.b16 %v745
        %v3687 = vunpack.c.h.b16 %v745
        %v3688 = vunpack.c.l.b16 %v746
        %v3689 = vunpack.c.h.b16 %v746
        %v3690 = vunpack.c.l.b16 %v747
        %v3691 = vunpack.c.h.b16 %v747
        %v3692 = vunpack.c.l.b16 %v748
        %v3693 = vunpack.c.h.b16 %v748
        %v3694 = vunpack.c.l.b16 %v749
        %v3695 = vunpack.c.h.b16 %v749
        %v3696 = vunpack.c.l.b16 %v750
        %v3697 = vunpack.c.h.b16 %v750
        %v3698 = vunpack.c.l.b16 %v751
        %v3699 = vunpack.c.h.b16 %v751
        %v3700 = vunpack.c.l.b16 %v752
        %v3701 = vunpack.c.h.b16 %v752
        %v3702 = vunpack.c.l.b16 %v753
        %v3703 = vunpack.c.h.b16 %v753
        %v3704 = vunpack.c.l.b16 %v754
        %v3705 = vunpack.c.h.b16 %v754
        %v3706 = vunpack.c.l.b16 %v755
        %v3707 = vunpack.c.h.b16 %v755
        %v3708 = vunpack.c.l.b16 %v756
        %v3709 = vunpack.c.h.b16 %v756
        %v3710 = vunpack.c.l.b16 %v757
        %v3711 = vunpack.c.h.b16 %v757
        %v3712 = vunpack.c.l.b16 %v758
        %v3713 = vunpack.c.h.b16 %v758
        %v3714 = vunpack.c.l.b16 %v759
        %v3715 = vunpack.c.h.b16 %v759
        %v3716 = vunpack.c.l.b16 %v760
        %v3717 = vunpack.c.h.b16 %v760
        %v3718 = vunpack.c.l.b16 %v761
        %v3719 = vunpack.c.h.b16 %v761
        %v3720 = vunpack.c.l.b16 %v762
        %v3721 = vunpack.c.h.b16 %v762
        %v3722 = vunpack.c.l.b16 %v763
        %v3723 = vunpack.c.h.b16 %v763
        %v3724 = vunpack.c.l.b16 %v764
        %v3725 = vunpack.c.h.b16 %v764
        %v3726 = vunpack.c.l.b16 %v765
        %v3727 = vunpack.c.h.b16 %v765
        %v3728 = vunpack.c.l.b16 %v766
        %v3729 = vunpack.c.h.b16 %v766
        %v3730 = vunpack.c.l.b16 %v767
        %v3731 = vunpack.c.h.b16 %v767
        %v3732 = vunpack.c.l.b16 %v768
        %v3733 = vunpack.c.h.b16 %v768
        %v3734 = vunpack.c.l.b16 %v769
        %v3735 = vunpack.c.h.b16 %v769
        %v3736 = vunpack.c.l.b16 %v770
        %v3737 = vunpack.c.h.b16 %v770
        %v3738 = vunpack.c.l.b16 %v771
        %v3739 = vunpack.c.h.b16 %v771
        %v3740 = vunpack.c.l.b16 %v772
        %v3741 = vunpack.c.h.b16 %v772
        %v3742 = vunpack.c.l.b16 %v773
        %v3743 = vunpack.c.h.b16 %v773
        %v3744 = vunpack.c.l.b16 %v774
        %v3745 = vunpack.c.h.b16 %v774
        %v3746 = vunpack.c.l.b16 %v775
        %v3747 = vunpack.c.h.b16 %v775
        %v3748 = vunpack.c.l.b16 %v776
        %v3749 = vunpack.c.h.b16 %v776
        %v3750 = vunpack.c.l.b16 %v777
        %v3751 = vunpack.c.h.b16 %v777
        %v3752 = vunpack.c.l.b16 %v778
        %v3753 = vunpack.c.h.b16 %v778
        %v3754 = vunpack.c.l.b16 %v779
        %v3755 = vunpack.c.h.b16 %v779
        %v3756 = vunpack.c.l.b16 %v780
        %v3757 = vunpack.c.h.b16 %v780
        %v3758 = vunpack.c.l.b16 %v781
        %v3759 = vunpack.c.h.b16 %v781
        %v3760 = vunpack.c.l.b16 %v782
        %v3761 = vunpack.c.h.b16 %v782
        %v3762 = vunpack.c.l.b16 %v783
        %v3763 = vunpack.c.h.b16 %v783
        %v3764 = vunpack.c.l.b16 %v784
        %v3765 = vunpack.c.h.b16 %v784
        %v3766 = vunpack.c.l.b16 %v785
        %v3767 = vunpack.c.h.b16 %v785
        %v3768 = vunpack.c.l.b16 %v786
        %v3769 = vunpack.c.h.b16 %v786
        %v3770 = vunpack.c.l.b16 %v787
        %v3771 = vunpack.c.h.b16 %v787
        %v3772 = vunpack.c.l.b16 %v788
        %v3773 = vunpack.c.h.b16 %v788
        %v3774 = vunpack.c.l.b16 %v789
        %v3775 = vunpack.c.h.b16 %v789
        %v3776 = vunpack.c.l.b16 %v790
        %v3777 = vunpack.c.h.b16 %v790
        %v3778 = vunpack.c.l.b16 %v791
        %v3779 = vunpack.c.h.b16 %v791
        %v3780 = vunpack.c.l.b16 %v792
        %v3781 = vunpack.c.h.b16 %v792
        %v3782 = vunpack.c.l.b16 %v793
        %v3783 = vunpack.c.h.b16 %v793
        %v3784 = vunpack.c.l.b16 %v794
        %v3785 = vunpack.c.h.b16 %v794
        %v3786 = vunpack.c.l.b16 %v795
        %v3787 = vunpack.c.h.b16 %v795
        %v3788 = vunpack.c.l.b16 %v796
        %v3789 = vunpack.c.h.b16 %v796
        %v3790 = vunpack.c.l.b16 %v797
        %v3791 = vunpack.c.h.b16 %v797
        %v3792 = vunpack.c.l.b16 %v798
        %v3793 = vunpack.c.h.b16 %v798
        %v3794 = vunpack.c.l.b16 %v799
        %v3795 = vunpack.c.h.b16 %v799
        %v3796 = vunpack.c.l.b16 %v800
        %v3797 = vunpack.c.h.b16 %v800
        %v3798 = vunpack.c.l.b16 %v801
        %v3799 = vunpack.c.h.b16 %v801
        %v3800 = vunpack.c.l.b16 %v802
        %v3801 = vunpack.c.h.b16 %v802
        %v3802 = vunpack.c.l.b16 %v803
        %v3803 = vunpack.c.h.b16 %v803
        %v3804 = vunpack.c.l.b16 %v804
        %v3805 = vunpack.c.h.b16 %v804
        %v3806 = vunpack.c.l.b16 %v805
        %v3807 = vunpack.c.h.b16 %v805
        %v3808 = vunpack.c.l.b16 %v806
        %v3809 = vunpack.c.h.b16 %v806
        %v3810 = vunpack.c.l.b16 %v807
        %v3811 = vunpack.c.h.b16 %v807
        %v3812 = vunpack.c.l.b16 %v808
        %v3813 = vunpack.c.h.b16 %v808
        %v3814 = vunpack.c.l.b16 %v809
        %v3815 = vunpack.c.h.b16 %v809
        %v3816 = vunpack.c.l.b16 %v810
        %v3817 = vunpack.c.h.b16 %v810
        %v3818 = vunpack.c.l.b16 %v811
        %v3819 = vunpack.c.h.b16 %v811
        %v3820 = vunpack.c.l.b16 %v812
        %v3821 = vunpack.c.h.b16 %v812
        %v3822 = vunpack.c.l.b16 %v813
        %v3823 = vunpack.c.h.b16 %v813
        %v3824 = vunpack.c.l.b16 %v814
        %v3825 = vunpack.c.h.b16 %v814
        %v3826 = vunpack.c.l.b16 %v815
        %v3827 = vunpack.c.h.b16 %v815
        %v3828 = vunpack.c.l.b16 %v816
        %v3829 = vunpack.c.h.b16 %v816
        %v3830 = vunpack.c.l.b16 %v817
        %v3831 = vunpack.c.h.b16 %v817
        %v3832 = vunpack.c.l.b16 %v818
        %v3833 = vunpack.c.h.b16 %v818
        %v3834 = vunpack.c.l.b16 %v819
        %v3835 = vunpack.c.h.b16 %v819
        %v3836 = vunpack.c.l.b16 %v820
        %v3837 = vunpack.c.h.b16 %v820
        %v3838 = vunpack.c.l.b16 %v821
        %v3839 = vunpack.c.h.b16 %v821
        %v3840 = vunpack.c.l.b16 %v822
        %v3841 = vunpack.c.h.b16 %v822
        %v3842 = vunpack.c.l.b16 %v823
        %v3843 = vunpack.c.h.b16 %v823
        %v3844 = vunpack.c.l.b16 %v824
        %v3845 = vunpack.c.h.b16 %v824
        %v3846 = vunpack.c.l.b16 %v825
        %v3847 = vunpack.c.h.b16 %v825
        %v3848 = vunpack.c.l.b16 %v826
        %v3849 = vunpack.c.h.b16 %v826
        %v3850 = vunpack.c.l.b16 %v827
        %v3851 = vunpack.c.h.b16 %v827
        %v3852 = vunpack.c.l.b16 %v828
        %v3853 = vunpack.c.h.b16 %v828
        %v3854 = vunpack.c.l.b16 %v829
        %v3855 = vunpack.c.h.b16 %v829
        %v3856 = vunpack.c.l.b16 %v830
        %v3857 = vunpack.c.h.b16 %v830
        %v3858 = vunpack.c.l.b16 %v831
        %v3859 = vunpack.c.h.b16 %v831
        %v3860 = vunpack.c.l.b16 %v832
        %v3861 = vunpack.c.h.b16 %v832
        %v3862 = vunpack.c.l.b16 %v833
        %v3863 = vunpack.c.h.b16 %v833
        %v3864 = vunpack.c.l.b16 %v834
        %v3865 = vunpack.c.h.b16 %v834
        %v3866 = vunpack.c.l.b16 %v835
        %v3867 = vunpack.c.h.b16 %v835
        %v3868 = vunpack.c.l.b16 %v836
        %v3869 = vunpack.c.h.b16 %v836
        %v3870 = vunpack.c.l.b16 %v837
        %v3871 = vunpack.c.h.b16 %v837
        %v3872 = vunpack.c.l.b16 %v838
        %v3873 = vunpack.c.h.b16 %v838
        %v3874 = vunpack.c.l.b16 %v839
        %v3875 = vunpack.c.h.b16 %v839
        %v3876 = vunpack.c.l.b16 %v840
        %v3877 = vunpack.c.h.b16 %v840
        %v3878 = vunpack.c.l.b16 %v841
        %v3879 = vunpack.c.h.b16 %v841
        %v3880 = vunpack.c.l.b16 %v842
        %v3881 = vunpack.c.h.b16 %v842
        %v3882 = vunpack.c.l.b16 %v843
        %v3883 = vunpack.c.h.b16 %v843
        %v3884 = vunpack.c.l.b16 %v844
        %v3885 = vunpack.c.h.b16 %v844
        %v3886 = vunpack.c.l.b16 %v845
        %v3887 = vunpack.c.h.b16 %v845
        %v3888 = vunpack.c.l.b16 %v846
        %v3889 = vunpack.c.h.b16 %v846
        %v3890 = vunpack.c.l.b16 %v847
        %v3891 = vunpack.c.h.b16 %v847
        %v3892 = vunpack.c.l.b16 %v848
        %v3893 = vunpack.c.h.b16 %v848
        %v3894 = vunpack.c.l.b16 %v849
        %v3895 = vunpack.c.h.b16 %v849
        %v3896 = vunpack.c.l.b16 %v850
        %v3897 = vunpack.c.h.b16 %v850
        %v3898 = vunpack.c.l.b16 %v851
        %v3899 = vunpack.c.h.b16 %v851
        %v3900 = vunpack.c.l.b16 %v852
        %v3901 = vunpack.c.h.b16 %v852
        %v3902 = vunpack.c.l.b16 %v853
        %v3903 = vunpack.c.h.b16 %v853
        %v3904 = vunpack.c.l.b16 %v854
        %v3905 = vunpack.c.h.b16 %v854
        %v3906 = vunpack.c.l.b16 %v855
        %v3907 = vunpack.c.h.b16 %v855
        %v3908 = vunpack.c.l.b16 %v856
        %v3909 = vunpack.c.h.b16 %v856
        %v3910 = vunpack.c.l.b16 %v857
        %v3911 = vunpack.c.h.b16 %v857
        %v3912 = vunpack.c.l.b16 %v858
        %v3913 = vunpack.c.h.b16 %v858
        %v3914 = vunpack.c.l.b16 %v859
        %v3915 = vunpack.c.h.b16 %v859
        %v3916 = vunpack.c.l.b16 %v860
        %v3917 = vunpack.c.h.b16 %v860
        %v3918 = vunpack.c.l.b16 %v861
        %v3919 = vunpack.c.h.b16 %v861
        %v3920 = vunpack.c.l.b16 %v862
        %v3921 = vunpack.c.h.b16 %v862
        %v3922 = vunpack.c.l.b16 %v863
        %v3923 = vunpack.c.h.b16 %v863
        %v3924 = vunpack.c.l.b16 %v864
        %v3925 = vunpack.c.h.b16 %v864
        %v3926 = vunpack.c.l.b16 %v865
        %v3927 = vunpack.c.h.b16 %v865
        %v3928 = vunpack.c.l.b16 %v866
        %v3929 = vunpack.c.h.b16 %v866
        %v3930 = vunpack.c.l.b16 %v867
        %v3931 = vunpack.c.h.b16 %v867
        %v3932 = vunpack.c.l.b16 %v868
        %v3933 = vunpack.c.h.b16 %v868
        %v3934 = vunpack.c.l.b16 %v869
        %v3935 = vunpack.c.h.b16 %v869
        %v3936 = vunpack.c.l.b16 %v870
        %v3937 = vunpack.c.h.b16 %v870
        %v3938 = vunpack.c.l.b16 %v871
        %v3939 = vunpack.c.h.b16 %v871
        %v3940 = vunpack.c.l.b16 %v872
        %v3941 = vunpack.c.h.b16 %v872
        %v3942 = vunpack.c.l.b16 %v873
        %v3943 = vunpack.c.h.b16 %v873
        %v3944 = vunpack.c.l.b16 %v874
        %v3945 = vunpack.c.h.b16 %v874
        %v3946 = vunpack.c.l.b16 %v875
        %v3947 = vunpack.c.h.b16 %v875
        %v3948 = vunpack.c.l.b16 %v876
        %v3949 = vunpack.c.h.b16 %v876
        %v3950 = vunpack.c.l.b16 %v877
        %v3951 = vunpack.c.h.b16 %v877
        %v3952 = vunpack.c.l.b16 %v878
        %v3953 = vunpack.c.h.b16 %v878
        %v3954 = vunpack.c.l.b16 %v879
        %v3955 = vunpack.c.h.b16 %v879
        %v3956 = vunpack.c.l.b16 %v880
        %v3957 = vunpack.c.h.b16 %v880
        %v3958 = vunpack.c.l.b16 %v881
        %v3959 = vunpack.c.h.b16 %v881
        %v3960 = vunpack.c.l.b16 %v882
        %v3961 = vunpack.c.h.b16 %v882
        %v3962 = vunpack.c.l.b16 %v883
        %v3963 = vunpack.c.h.b16 %v883
        %v3964 = vunpack.c.l.b16 %v884
        %v3965 = vunpack.c.h.b16 %v884
        %v3966 = vunpack.c.l.b16 %v885
        %v3967 = vunpack.c.h.b16 %v885
        %v3968 = vunpack.c.l.b16 %v886
        %v3969 = vunpack.c.h.b16 %v886
        %v3970 = vunpack.c.l.b16 %v887
        %v3971 = vunpack.c.h.b16 %v887
        %v3972 = vunpack.c.l.b16 %v888
        %v3973 = vunpack.c.h.b16 %v888
        %v3974 = vunpack.c.l.b16 %v889
        %v3975 = vunpack.c.h.b16 %v889
        %v3976 = vunpack.c.l.b16 %v890
        %v3977 = vunpack.c.h.b16 %v890
        %v3978 = vunpack.c.l.b16 %v891
        %v3979 = vunpack.c.h.b16 %v891
        %v3980 = vunpack.c.l.b16 %v892
        %v3981 = vunpack.c.h.b16 %v892
        %v3982 = vunpack.c.l.b16 %v893
        %v3983 = vunpack.c.h.b16 %v893
        %v3984 = vunpack.c.l.b16 %v894
        %v3985 = vunpack.c.h.b16 %v894
        %v3986 = vunpack.c.l.b16 %v895
        %v3987 = vunpack.c.h.b16 %v895
        %v3988 = vunpack.c.l.b16 %v896
        %v3989 = vunpack.c.h.b16 %v896
        %v3990 = vunpack.c.l.b16 %v897
        %v3991 = vunpack.c.h.b16 %v897
        %v3992 = vunpack.c.l.b16 %v898
        %v3993 = vunpack.c.h.b16 %v898
        %v3994 = vunpack.c.l.b16 %v899
        %v3995 = vunpack.c.h.b16 %v899
        %v3996 = vunpack.c.l.b16 %v900
        %v3997 = vunpack.c.h.b16 %v900
        %v3998 = vunpack.c.l.b16 %v901
        %v3999 = vunpack.c.h.b16 %v901
        %v4000 = vunpack.c.l.b16 %v902
        %v4001 = vunpack.c.h.b16 %v902
        %v4002 = vunpack.c.l.b16 %v903
        %v4003 = vunpack.c.h.b16 %v903
        %v4004 = vunpack.c.l.b16 %v904
        %v4005 = vunpack.c.h.b16 %v904
        %v4006 = vunpack.c.l.b16 %v905
        %v4007 = vunpack.c.h.b16 %v905
        %v4008 = vunpack.c.l.b16 %v906
        %v4009 = vunpack.c.h.b16 %v906
        %v4010 = vunpack.c.l.b16 %v907
        %v4011 = vunpack.c.h.b16 %v907
        %v4012 = vunpack.c.l.b16 %v908
        %v4013 = vunpack.c.h.b16 %v908
        %v4014 = vunpack.c.l.b16 %v909
        %v4015 = vunpack.c.h.b16 %v909
        %v4016 = vunpack.c.l.b16 %v910
        %v4017 = vunpack.c.h.b16 %v910
        %v4018 = vunpack.c.l.b16 %v911
        %v4019 = vunpack.c.h.b16 %v911
        %v4020 = vunpack.c.l.b16 %v912
        %v4021 = vunpack.c.h.b16 %v912
        %v4022 = vunpack.c.l.b16 %v913
        %v4023 = vunpack.c.h.b16 %v913
        %v4024 = vunpack.c.l.b16 %v914
        %v4025 = vunpack.c.h.b16 %v914
        %v4026 = vunpack.c.l.b16 %v915
        %v4027 = vunpack.c.h.b16 %v915
        %v4028 = vunpack.c.l.b16 %v916
        %v4029 = vunpack.c.h.b16 %v916
        %v4030 = vunpack.c.l.b16 %v917
        %v4031 = vunpack.c.h.b16 %v917
        %v4032 = vunpack.c.l.b16 %v918
        %v4033 = vunpack.c.h.b16 %v918
        %v4034 = vunpack.c.l.b16 %v919
        %v4035 = vunpack.c.h.b16 %v919
        %v4036 = vunpack.c.l.b16 %v920
        %v4037 = vunpack.c.h.b16 %v920
        %v4038 = vunpack.c.l.b16 %v921
        %v4039 = vunpack.c.h.b16 %v921
        %v4040 = vunpack.c.l.b16 %v922
        %v4041 = vunpack.c.h.b16 %v922
        %v4042 = vunpack.c.l.b16 %v923
        %v4043 = vunpack.c.h.b16 %v923
        %v4044 = vunpack.c.l.b16 %v924
        %v4045 = vunpack.c.h.b16 %v924
        %v4046 = vunpack.c.l.b16 %v925
        %v4047 = vunpack.c.h.b16 %v925
        %v4048 = vunpack.c.l.b16 %v926
        %v4049 = vunpack.c.h.b16 %v926
        %v4050 = vunpack.c.l.b16 %v927
        %v4051 = vunpack.c.h.b16 %v927
        %v4052 = vunpack.c.l.b16 %v928
        %v4053 = vunpack.c.h.b16 %v928
        %v4054 = vunpack.c.l.b16 %v929
        %v4055 = vunpack.c.h.b16 %v929
        %v4056 = vunpack.c.l.b16 %v930
        %v4057 = vunpack.c.h.b16 %v930
        %v4058 = vunpack.c.l.b16 %v931
        %v4059 = vunpack.c.h.b16 %v931
        %v4060 = vunpack.c.l.b16 %v932
        %v4061 = vunpack.c.h.b16 %v932
        %v4062 = vunpack.c.l.b16 %v933
        %v4063 = vunpack.c.h.b16 %v933
        %v4064 = vunpack.c.l.b16 %v934
        %v4065 = vunpack.c.h.b16 %v934
        %v4066 = vunpack.c.l.b16 %v935
        %v4067 = vunpack.c.h.b16 %v935
        %v4068 = vunpack.c.l.b16 %v936
        %v4069 = vunpack.c.h.b16 %v936
        %v4070 = vunpack.c.l.b16 %v937
        %v4071 = vunpack.c.h.b16 %v937
        %v4072 = vunpack.c.l.b16 %v938
        %v4073 = vunpack.c.h.b16 %v938
        %v4074 = vunpack.c.l.b16 %v939
        %v4075 = vunpack.c.h.b16 %v939
        %v4076 = vunpack.c.l.b16 %v940
        %v4077 = vunpack.c.h.b16 %v940
        %v4078 = vunpack.c.l.b16 %v941
        %v4079 = vunpack.c.h.b16 %v941
        %v4080 = vunpack.c.l.b16 %v942
        %v4081 = vunpack.c.h.b16 %v942
        %v4082 = vunpack.c.l.b16 %v943
        %v4083 = vunpack.c.h.b16 %v943
        %v4084 = vunpack.c.l.b16 %v944
        %v4085 = vunpack.c.h.b16 %v944
        %v4086 = vunpack.c.l.b16 %v945
        %v4087 = vunpack.c.h.b16 %v945
        %v4088 = vunpack.c.l.b16 %v946
        %v4089 = vunpack.c.h.b16 %v946
        %v4090 = vunpack.c.l.b16 %v947
        %v4091 = vunpack.c.h.b16 %v947
        %v4092 = vunpack.c.l.b16 %v948
        %v4093 = vunpack.c.h.b16 %v948
        %v4094 = vunpack.c.l.b16 %v949
        %v4095 = vunpack.c.h.b16 %v949
        %v4096 = vunpack.c.l.b16 %v950
        %v4097 = vunpack.c.h.b16 %v950
        %v4098 = vunpack.c.l.b16 %v951
        %v4099 = vunpack.c.h.b16 %v951
        %v4100 = vunpack.c.l.b16 %v952
        %v4101 = vunpack.c.h.b16 %v952
        %v4102 = vunpack.c.l.b16 %v953
        %v4103 = vunpack.c.h.b16 %v953
        %v4104 = vunpack.c.l.b16 %v954
        %v4105 = vunpack.c.h.b16 %v954
        %v4106 = vunpack.c.l.b16 %v955
        %v4107 = vunpack.c.h.b16 %v955
        %v4108 = vunpack.c.l.b16 %v956
        %v4109 = vunpack.c.h.b16 %v956
        %v4110 = vunpack.c.l.b16 %v957
        %v4111 = vunpack.c.h.b16 %v957
        %v4112 = vunpack.c.l.b16 %v958
        %v4113 = vunpack.c.h.b16 %v958
        %v4114 = vunpack.c.l.b16 %v959
        %v4115 = vunpack.c.h.b16 %v959
        %v4116 = vunpack.c.l.b16 %v960
        %v4117 = vunpack.c.h.b16 %v960
        %v4118 = vunpack.c.l.b16 %v961
        %v4119 = vunpack.c.h.b16 %v961
        %v4120 = vunpack.c.l.b16 %v962
        %v4121 = vunpack.c.h.b16 %v962
        %v4122 = vunpack.c.l.b16 %v963
        %v4123 = vunpack.c.h.b16 %v963
        %v4124 = vunpack.c.l.b16 %v964
        %v4125 = vunpack.c.h.b16 %v964
        %v4126 = vunpack.c.l.b16 %v965
        %v4127 = vunpack.c.h.b16 %v965
        %v4128 = vunpack.c.l.b16 %v966
        %v4129 = vunpack.c.h.b16 %v966
        %v4130 = vunpack.c.l.b16 %v967
        %v4131 = vunpack.c.h.b16 %v967
        %v4132 = vunpack.c.l.b16 %v968
        %v4133 = vunpack.c.h.b16 %v968
        %v4134 = vunpack.c.l.b16 %v969
        %v4135 = vunpack.c.h.b16 %v969
        %v4136 = vunpack.c.l.b16 %v970
        %v4137 = vunpack.c.h.b16 %v970
        %v4138 = vunpack.c.l.b16 %v971
        %v4139 = vunpack.c.h.b16 %v971
        %v4140 = vunpack.c.l.b16 %v972
        %v4141 = vunpack.c.h.b16 %v972
        %v4142 = vunpack.c.l.b16 %v973
        %v4143 = vunpack.c.h.b16 %v973
        %v4144 = vunpack.c.l.b16 %v974
        %v4145 = vunpack.c.h.b16 %v974
        %v4146 = vunpack.c.l.b16 %v975
        %v4147 = vunpack.c.h.b16 %v975
        %v4148 = vunpack.c.l.b16 %v976
        %v4149 = vunpack.c.h.b16 %v976
        %v4150 = vunpack.c.l.b16 %v977
        %v4151 = vunpack.c.h.b16 %v977
        %v4152 = vunpack.c.l.b16 %v978
        %v4153 = vunpack.c.h.b16 %v978
        %v4154 = vunpack.c.l.b16 %v979
        %v4155 = vunpack.c.h.b16 %v979
        %v4156 = vunpack.c.l.b16 %v980
        %v4157 = vunpack.c.h.b16 %v980
        %v4158 = vunpack.c.l.b16 %v981
        %v4159 = vunpack.c.h.b16 %v981
        %v4160 = vunpack.c.l.b16 %v982
        %v4161 = vunpack.c.h.b16 %v982
        %v4162 = vunpack.c.l.b16 %v983
        %v4163 = vunpack.c.h.b16 %v983
        %v4164 = vunpack.c.l.b16 %v984
        %v4165 = vunpack.c.h.b16 %v984
        %v4166 = vunpack.c.l.b16 %v985
        %v4167 = vunpack.c.h.b16 %v985
        %v4168 = vunpack.c.l.b16 %v986
        %v4169 = vunpack.c.h.b16 %v986
        %v4170 = vunpack.c.l.b16 %v987
        %v4171 = vunpack.c.h.b16 %v987
        %v4172 = vunpack.c.l.b16 %v988
        %v4173 = vunpack.c.h.b16 %v988
        %v4174 = vunpack.c.l.b16 %v989
        %v4175 = vunpack.c.h.b16 %v989
        %v4176 = vunpack.c.l.b16 %v990
        %v4177 = vunpack.c.h.b16 %v990
        %v4178 = vunpack.c.l.b16 %v991
        %v4179 = vunpack.c.h.b16 %v991
        %v4180 = vunpack.c.l.b16 %v992
        %v4181 = vunpack.c.h.b16 %v992
        %v4182 = vunpack.c.l.b16 %v993
        %v4183 = vunpack.c.h.b16 %v993
        %v4184 = vunpack.c.l.b16 %v994
        %v4185 = vunpack.c.h.b16 %v994
        %v4186 = vunpack.c.l.b16 %v995
        %v4187 = vunpack.c.h.b16 %v995
        %v4188 = vunpack.c.l.b16 %v996
        %v4189 = vunpack.c.h.b16 %v996
        %v4190 = vunpack.c.l.b16 %v997
        %v4191 = vunpack.c.h.b16 %v997
        %v4192 = vunpack.c.l.b16 %v998
        %v4193 = vunpack.c.h.b16 %v998
        %v4194 = vunpack.c.l.b16 %v999
        %v4195 = vunpack.c.h.b16 %v999
        %v4196 = vunpack.c.l.b16 %v1000
        %v4197 = vunpack.c.h.b16 %v1000
        %v4198 = vunpack.c.l.b16 %v1001
        %v4199 = vunpack.c.h.b16 %v1001
        %v4200 = vunpack.c.l.b16 %v1002
        %v4201 = vunpack.c.h.b16 %v1002
        %v4202 = vunpack.c.l.b16 %v1003
        %v4203 = vunpack.c.h.b16 %v1003
        %v4204 = vunpack.c.l.b16 %v1004
        %v4205 = vunpack.c.h.b16 %v1004
        %v4206 = vunpack.c.l.b16 %v1005
        %v4207 = vunpack.c.h.b16 %v1005
        %v4208 = vunpack.c.l.b16 %v1006
        %v4209 = vunpack.c.h.b16 %v1006
        %v4210 = vunpack.c.l.b16 %v1007
        %v4211 = vunpack.c.h.b16 %v1007
        %v4212 = vunpack.c.l.b16 %v1008
        %v4213 = vunpack.c.h.b16 %v1008
        %v4214 = vunpack.c.l.b16 %v1009
        %v4215 = vunpack.c.h.b16 %v1009
        %v4216 = vunpack.c.l.b16 %v1010
        %v4217 = vunpack.c.h.b16 %v1010
        %v4218 = vunpack.c.l.b16 %v1011
        %v4219 = vunpack.c.h.b16 %v1011
        %v4220 = vunpack.c.l.b16 %v1012
        %v4221 = vunpack.c.h.b16 %v1012
        %v4222 = vunpack.c.l.b16 %v1013
        %v4223 = vunpack.c.h.b16 %v1013
        %v4224 = vunpack.c.l.b16 %v1014
        %v4225 = vunpack.c.h.b16 %v1014
        %v4226 = vunpack.c.l.b16 %v1015
        %v4227 = vunpack.c.h.b16 %v1015
        %v4228 = vunpack.c.l.b16 %v1016
        %v4229 = vunpack.c.h.b16 %v1016
        %v4230 = vunpack.c.l.b16 %v1017
        %v4231 = vunpack.c.h.b16 %v1017
        %v4232 = vunpack.c.l.b16 %v1018
        %v4233 = vunpack.c.h.b16 %v1018
        %v4234 = vunpack.c.l.b16 %v1019
        %v4235 = vunpack.c.h.b16 %v1019
        %v4236 = vunpack.c.l.b16 %v1020
        %v4237 = vunpack.c.h.b16 %v1020
        %v4238 = vunpack.c.l.b16 %v1021
        %v4239 = vunpack.c.h.b16 %v1021
        %v4240 = vunpack.c.l.b16 %v1022
        %v4241 = vunpack.c.h.b16 %v1022
        %v4242 = vunpack.c.l.b16 %v1023
        %v4243 = vunpack.c.h.b16 %v1023
        %v4244 = vunpack.c.l.b16 %v1024
        %v4245 = vunpack.c.h.b16 %v1024
        %v4246 = vunpack.c.l.b16 %v1025
        %v4247 = vunpack.c.h.b16 %v1025
        %v4248 = vunpack.c.l.b16 %v1026
        %v4249 = vunpack.c.h.b16 %v1026
        %v4250 = vunpack.c.l.b16 %v1027
        %v4251 = vunpack.c.h.b16 %v1027
        %v4252 = vunpack.c.l.b16 %v1028
        %v4253 = vunpack.c.h.b16 %v1028
        %v4254 = vunpack.c.l.b16 %v1029
        %v4255 = vunpack.c.h.b16 %v1029
        %v4256 = vunpack.c.l.b16 %v1030
        %v4257 = vunpack.c.h.b16 %v1030
        %v4258 = vunpack.c.l.b16 %v1031
        %v4259 = vunpack.c.h.b16 %v1031
        %v4260 = vunpack.c.l.b16 %v1032
        %v4261 = vunpack.c.h.b16 %v1032
        %v4262 = vunpack.c.l.b16 %v1033
        %v4263 = vunpack.c.h.b16 %v1033
        %v4264 = vunpack.c.l.b16 %v1034
        %v4265 = vunpack.c.h.b16 %v1034
        %v4266 = vunpack.c.l.b16 %v1035
        %v4267 = vunpack.c.h.b16 %v1035
        %v4268 = vunpack.c.l.b16 %v1036
        %v4269 = vunpack.c.h.b16 %v1036
        %v4270 = vunpack.c.l.b16 %v1037
        %v4271 = vunpack.c.h.b16 %v1037
        %v4272 = vunpack.c.l.b16 %v1038
        %v4273 = vunpack.c.h.b16 %v1038
        %v4274 = vunpack.c.l.b16 %v1039
        %v4275 = vunpack.c.h.b16 %v1039
        %v4276 = vunpack.c.l.b16 %v1040
        %v4277 = vunpack.c.h.b16 %v1040
        %v4278 = vunpack.c.l.b16 %v1041
        %v4279 = vunpack.c.h.b16 %v1041
        %v4280 = vunpack.c.l.b16 %v1042
        %v4281 = vunpack.c.h.b16 %v1042
        %v4282 = vunpack.c.l.b16 %v1043
        %v4283 = vunpack.c.h.b16 %v1043
        %v4284 = vunpack.c.l.b16 %v1044
        %v4285 = vunpack.c.h.b16 %v1044
        %v4286 = vunpack.c.l.b16 %v1045
        %v4287 = vunpack.c.h.b16 %v1045
        %v4288 = vunpack.c.l.b16 %v1046
        %v4289 = vunpack.c.h.b16 %v1046
        %v4290 = vunpack.c.l.b16 %v1047
        %v4291 = vunpack.c.h.b16 %v1047
        %v4292 = vunpack.c.l.b16 %v1048
        %v4293 = vunpack.c.h.b16 %v1048
        %v4294 = vunpack.c.l.b16 %v1049
        %v4295 = vunpack.c.h.b16 %v1049
        %v4296 = vunpack.c.l.b16 %v1050
        %v4297 = vunpack.c.h.b16 %v1050
        %v4298 = vunpack.c.l.b16 %v1051
        %v4299 = vunpack.c.h.b16 %v1051
        %v4300 = vunpack.c.l.b16 %v1052
        %v4301 = vunpack.c.h.b16 %v1052
        %v4302 = vunpack.c.l.b16 %v1053
        %v4303 = vunpack.c.h.b16 %v1053
        %v4304 = vunpack.c.l.b16 %v1054
        %v4305 = vunpack.c.h.b16 %v1054
        %v4306 = vunpack.c.l.b16 %v1055
        %v4307 = vunpack.c.h.b16 %v1055
        %v4308 = vunpack.c.l.b16 %v1056
        %v4309 = vunpack.c.h.b16 %v1056
        %v4310 = vunpack.c.l.b16 %v1057
        %v4311 = vunpack.c.h.b16 %v1057
        %v4312 = vunpack.c.l.b16 %v1058
        %v4313 = vunpack.c.h.b16 %v1058
        %v4314 = vunpack.c.l.b16 %v1059
        %v4315 = vunpack.c.h.b16 %v1059
        %v4316 = vunpack.c.l.b16 %v1060
        %v4317 = vunpack.c.h.b16 %v1060
        %v4318 = vunpack.c.l.b16 %v1061
        %v4319 = vunpack.c.h.b16 %v1061
        %v4320 = vunpack.c.l.b16 %v1062
        %v4321 = vunpack.c.h.b16 %v1062
        %v4322 = vunpack.c.l.b16 %v1063
        %v4323 = vunpack.c.h.b16 %v1063
        %v4324 = vunpack.c.l.b16 %v1064
        %v4325 = vunpack.c.h.b16 %v1064
        %v4326 = vunpack.c.l.b16 %v1065
        %v4327 = vunpack.c.h.b16 %v1065
        %v4328 = vunpack.c.l.b16 %v1066
        %v4329 = vunpack.c.h.b16 %v1066
        %v4330 = vunpack.c.l.b16 %v1067
        %v4331 = vunpack.c.h.b16 %v1067
        %v4332 = vunpack.c.l.b16 %v1068
        %v4333 = vunpack.c.h.b16 %v1068
        %v4334 = vunpack.c.l.b16 %v1069
        %v4335 = vunpack.c.h.b16 %v1069
        %v4336 = vunpack.c.l.b16 %v1070
        %v4337 = vunpack.c.h.b16 %v1070
        %v4338 = vunpack.c.l.b16 %v1071
        %v4339 = vunpack.c.h.b16 %v1071
        %v4340 = vunpack.c.l.b16 %v1072
        %v4341 = vunpack.c.h.b16 %v1072
        %v4342 = vunpack.c.l.b16 %v1073
        %v4343 = vunpack.c.h.b16 %v1073
        %v4344 = vunpack.c.l.b16 %v1074
        %v4345 = vunpack.c.h.b16 %v1074
        %v4346 = vunpack.c.l.b16 %v1075
        %v4347 = vunpack.c.h.b16 %v1075
        %v4348 = vunpack.c.l.b16 %v1076
        %v4349 = vunpack.c.h.b16 %v1076
        %v4350 = vunpack.c.l.b16 %v1077
        %v4351 = vunpack.c.h.b16 %v1077
        %v4352 = vunpack.c.l.b16 %v1078
        %v4353 = vunpack.c.h.b16 %v1078
        %v4354 = vunpack.c.l.b16 %v1079
        %v4355 = vunpack.c.h.b16 %v1079
        %v4356 = vunpack.c.l.b16 %v1080
        %v4357 = vunpack.c.h.b16 %v1080
        %v4358 = vunpack.c.l.b16 %v1081
        %v4359 = vunpack.c.h.b16 %v1081
        %v4360 = vunpack.c.l.b16 %v1082
        %v4361 = vunpack.c.h.b16 %v1082
        %v4362 = vunpack.c.l.b16 %v1083
        %v4363 = vunpack.c.h.b16 %v1083
        %v4364 = vunpack.c.l.b16 %v1084
        %v4365 = vunpack.c.h.b16 %v1084
        %v4366 = vunpack.c.l.b16 %v1085
        %v4367 = vunpack.c.h.b16 %v1085
        %v4368 = vunpack.c.l.b16 %v1086
        %v4369 = vunpack.c.h.b16 %v1086
        %v4370 = vunpack.c.l.b16 %v1087
        %v4371 = vunpack.c.h.b16 %v1087
        %v4372 = vunpack.c.l.b16 %v1088
        %v4373 = vunpack.c.h.b16 %v1088
        %v4374 = vunpack.c.l.b16 %v1089
        %v4375 = vunpack.c.h.b16 %v1089
        %v4376 = vunpack.c.l.b16 %v1090
        %v4377 = vunpack.c.h.b16 %v1090
        %v4378 = vunpack.c.l.b16 %v1091
        %v4379 = vunpack.c.h.b16 %v1091
        %v4380 = vunpack.c.l.b16 %v1092
        %v4381 = vunpack.c.h.b16 %v1092
        %v4382 = vunpack.c.l.b16 %v1093
        %v4383 = vunpack.c.h.b16 %v1093
        %v4384 = vunpack.c.l.b16 %v1094
        %v4385 = vunpack.c.h.b16 %v1094
        %v4386 = vunpack.c.l.b16 %v1095
        %v4387 = vunpack.c.h.b16 %v1095
        %v4388 = vunpack.c.l.b16 %v1096
        %v4389 = vunpack.c.h.b16 %v1096
        %v4390 = vunpack.c.l.b16 %v1097
        %v4391 = vunpack.c.h.b16 %v1097
        %v4392 = vunpack.c.l.b16 %v1098
        %v4393 = vunpack.c.h.b16 %v1098
        %v4394 = vunpack.c.l.b16 %v1099
        %v4395 = vunpack.c.h.b16 %v1099
        %v4396 = vunpack.c.l.b16 %v1100
        %v4397 = vunpack.c.h.b16 %v1100
        %v4398 = vunpack.c.l.b16 %v1101
        %v4399 = vunpack.c.h.b16 %v1101
        %v4400 = vunpack.c.l.b16 %v1102
        %v4401 = vunpack.c.h.b16 %v1102
        %v4402 = vunpack.c.l.b16 %v1103
        %v4403 = vunpack.c.h.b16 %v1103
        %v4404 = vunpack.c.l.b16 %v1104
        %v4405 = vunpack.c.h.b16 %v1104
        %v4406 = vunpack.c.l.b16 %v1105
        %v4407 = vunpack.c.h.b16 %v1105
        %v4408 = vunpack.c.l.b16 %v1106
        %v4409 = vunpack.c.h.b16 %v1106
        %v4410 = vunpack.c.l.b16 %v1107
        %v4411 = vunpack.c.h.b16 %v1107
        %v4412 = vunpack.c.l.b16 %v1108
        %v4413 = vunpack.c.h.b16 %v1108
        %v4414 = vunpack.c.l.b16 %v1109
        %v4415 = vunpack.c.h.b16 %v1109
        %v4416 = vunpack.c.l.b16 %v1110
        %v4417 = vunpack.c.h.b16 %v1110
        %v4418 = vunpack.c.l.b16 %v1111
        %v4419 = vunpack.c.h.b16 %v1111
        %v4420 = vunpack.c.l.b16 %v1112
        %v4421 = vunpack.c.h.b16 %v1112
        %v4422 = vunpack.c.l.b16 %v1113
        %v4423 = vunpack.c.h.b16 %v1113
        %v4424 = vunpack.c.l.b16 %v1114
        %v4425 = vunpack.c.h.b16 %v1114
        %v4426 = vunpack.c.l.b16 %v1115
        %v4427 = vunpack.c.h.b16 %v1115
        %v4428 = vunpack.c.l.b16 %v1116
        %v4429 = vunpack.c.h.b16 %v1116
        %v4430 = vunpack.c.l.b16 %v1117
        %v4431 = vunpack.c.h.b16 %v1117
        %v4432 = vunpack.c.l.b16 %v1118
        %v4433 = vunpack.c.h.b16 %v1118
        %v4434 = vunpack.c.l.b16 %v1119
        %v4435 = vunpack.c.h.b16 %v1119
        %v4436 = vunpack.c.l.b16 %v1120
        %v4437 = vunpack.c.h.b16 %v1120
        %v4438 = vunpack.c.l.b16 %v1121
        %v4439 = vunpack.c.h.b16 %v1121
        %v4440 = vunpack.c.l.b16 %v1122
        %v4441 = vunpack.c.h.b16 %v1122
        %v4442 = vunpack.c.l.b16 %v1123
        %v4443 = vunpack.c.h.b16 %v1123
        %v4444 = vunpack.c.l.b16 %v1124
        %v4445 = vunpack.c.h.b16 %v1124
        %v4446 = vunpack.c.l.b16 %v1125
        %v4447 = vunpack.c.h.b16 %v1125
        %v4448 = vunpack.c.l.b16 %v1126
        %v4449 = vunpack.c.h.b16 %v1126
        %v4450 = vunpack.c.l.b16 %v1127
        %v4451 = vunpack.c.h.b16 %v1127
        %v4452 = vunpack.c.l.b16 %v1128
        %v4453 = vunpack.c.h.b16 %v1128
        %v4454 = vunpack.c.l.b16 %v1129
        %v4455 = vunpack.c.h.b16 %v1129
        %v4456 = vunpack.c.l.b16 %v1130
        %v4457 = vunpack.c.h.b16 %v1130
        %v4458 = vunpack.c.l.b16 %v1131
        %v4459 = vunpack.c.h.b16 %v1131
        %v4460 = vunpack.c.l.b16 %v1132
        %v4461 = vunpack.c.h.b16 %v1132
        %v4462 = vunpack.c.l.b16 %v1133
        %v4463 = vunpack.c.h.b16 %v1133
        %v4464 = vunpack.c.l.b16 %v1134
        %v4465 = vunpack.c.h.b16 %v1134
        %v4466 = vunpack.c.l.b16 %v1135
        %v4467 = vunpack.c.h.b16 %v1135
        %v4468 = vunpack.c.l.b16 %v1136
        %v4469 = vunpack.c.h.b16 %v1136
        %v4470 = vunpack.c.l.b16 %v1137
        %v4471 = vunpack.c.h.b16 %v1137
        %v4472 = vunpack.c.l.b16 %v1138
        %v4473 = vunpack.c.h.b16 %v1138
        %v4474 = vunpack.c.l.b16 %v1139
        %v4475 = vunpack.c.h.b16 %v1139
        %v4476 = vunpack.c.l.b16 %v1140
        %v4477 = vunpack.c.h.b16 %v1140
        %v4478 = vunpack.c.l.b16 %v1141
        %v4479 = vunpack.c.h.b16 %v1141
        %v4480 = vunpack.c.l.b16 %v1142
        %v4481 = vunpack.c.h.b16 %v1142
        %v4482 = vunpack.c.l.b16 %v1143
        %v4483 = vunpack.c.h.b16 %v1143
        %v4484 = vunpack.c.l.b16 %v1144
        %v4485 = vunpack.c.h.b16 %v1144
        %v4486 = vunpack.c.l.b16 %v1145
        %v4487 = vunpack.c.h.b16 %v1145
        %v4488 = vunpack.c.l.b16 %v1146
        %v4489 = vunpack.c.h.b16 %v1146
        %v4490 = vunpack.c.l.b16 %v1147
        %v4491 = vunpack.c.h.b16 %v1147
        %v4492 = vunpack.c.l.b16 %v1148
        %v4493 = vunpack.c.h.b16 %v1148
        %v4494 = vunpack.c.l.b16 %v1149
        %v4495 = vunpack.c.h.b16 %v1149
        %v4496 = vunpack.c.l.b16 %v1150
        %v4497 = vunpack.c.h.b16 %v1150
        %v4498 = vunpack.c.l.b16 %v1151
        %v4499 = vunpack.c.h.b16 %v1151
        %v4500 = vunpack.c.l.b16 %v1152
        %v4501 = vunpack.c.h.b16 %v1152
        %v4502 = vunpack.c.l.b16 %v1153
        %v4503 = vunpack.c.h.b16 %v1153
        %v4504 = vunpack.c.l.b16 %v1154
        %v4505 = vunpack.c.h.b16 %v1154
        %v4506 = vunpack.c.l.b16 %v1155
        %v4507 = vunpack.c.h.b16 %v1155
        %v4508 = vunpack.c.l.b16 %v1156
        %v4509 = vunpack.c.h.b16 %v1156
        %v4510 = vunpack.c.l.b16 %v1157
        %v4511 = vunpack.c.h.b16 %v1157
        %v4512 = vunpack.c.l.b16 %v1158
        %v4513 = vunpack.c.h.b16 %v1158
        %v4514 = vunpack.c.l.b16 %v1159
        %v4515 = vunpack.c.h.b16 %v1159
        %v4516 = vunpack.c.l.b16 %v1160
        %v4517 = vunpack.c.h.b16 %v1160
        %v4518 = vunpack.c.l.b16 %v1161
        %v4519 = vunpack.c.h.b16 %v1161
        %v4520 = vunpack.c.l.b16 %v1162
        %v4521 = vunpack.c.h.b16 %v1162
        %v4522 = vunpack.c.l.b16 %v1163
        %v4523 = vunpack.c.h.b16 %v1163
        %v4524 = vunpack.c.l.b16 %v1164
        %v4525 = vunpack.c.h.b16 %v1164
        %v4526 = vunpack.c.l.b16 %v1165
        %v4527 = vunpack.c.h.b16 %v1165
        %v4528 = vunpack.c.l.b16 %v1166
        %v4529 = vunpack.c.h.b16 %v1166
        %v4530 = vunpack.c.l.b16 %v1167
        %v4531 = vunpack.c.h.b16 %v1167
        %v4532 = vunpack.c.l.b16 %v1168
        %v4533 = vunpack.c.h.b16 %v1168
        %v4534 = vunpack.c.l.b16 %v1169
        %v4535 = vunpack.c.h.b16 %v1169
        %v4536 = vunpack.c.l.b16 %v1170
        %v4537 = vunpack.c.h.b16 %v1170
        %v4538 = vunpack.c.l.b16 %v1171
        %v4539 = vunpack.c.h.b16 %v1171
        %v4540 = vunpack.c.l.b16 %v1172
        %v4541 = vunpack.c.h.b16 %v1172
        %v4542 = vunpack.c.l.b16 %v1173
        %v4543 = vunpack.c.h.b16 %v1173
        %v4544 = vunpack.c.l.b16 %v1174
        %v4545 = vunpack.c.h.b16 %v1174
        %v4546 = vunpack.c.l.b16 %v1175
        %v4547 = vunpack.c.h.b16 %v1175
        %v4548 = vunpack.c.l.b16 %v1176
        %v4549 = vunpack.c.h.b16 %v1176
        %v4550 = vunpack.c.l.b16 %v1177
        %v4551 = vunpack.c.h.b16 %v1177
        %v4552 = vunpack.c.l.b16 %v1178
        %v4553 = vunpack.c.h.b16 %v1178
        %v4554 = vunpack.c.l.b16 %v1179
        %v4555 = vunpack.c.h.b16 %v1179
        %v4556 = vunpack.c.l.b16 %v1180
        %v4557 = vunpack.c.h.b16 %v1180
        %v4558 = vunpack.c.l.b16 %v1181
        %v4559 = vunpack.c.h.b16 %v1181
        %v4560 = vunpack.c.l.b16 %v1182
        %v4561 = vunpack.c.h.b16 %v1182
        %v4562 = vunpack.c.l.b16 %v1183
        %v4563 = vunpack.c.h.b16 %v1183
        %v4564 = vunpack.c.l.b16 %v1184
        %v4565 = vunpack.c.h.b16 %v1184
        %v4566 = vunpack.c.l.b16 %v1185
        %v4567 = vunpack.c.h.b16 %v1185
        %v4568 = vunpack.c.l.b16 %v1186
        %v4569 = vunpack.c.h.b16 %v1186
        %v4570 = vunpack.c.l.b16 %v1187
        %v4571 = vunpack.c.h.b16 %v1187
        %v4572 = vunpack.c.l.b16 %v1188
        %v4573 = vunpack.c.h.b16 %v1188
        %v4574 = vunpack.c.l.b16 %v1189
        %v4575 = vunpack.c.h.b16 %v1189
        %v4576 = vunpack.c.l.b16 %v1190
        %v4577 = vunpack.c.h.b16 %v1190
        %v4578 = vunpack.c.l.b16 %v1191
        %v4579 = vunpack.c.h.b16 %v1191
        %v4580 = vunpack.c.l.b16 %v1192
        %v4581 = vunpack.c.h.b16 %v1192
        %v4582 = vunpack.c.l.b16 %v1193
        %v4583 = vunpack.c.h.b16 %v1193
        %v4584 = vunpack.c.l.b16 %v1194
        %v4585 = vunpack.c.h.b16 %v1194
        %v4586 = vunpack.c.l.b16 %v1195
        %v4587 = vunpack.c.h.b16 %v1195
        %v4588 = vunpack.c.l.b16 %v1196
        %v4589 = vunpack.c.h.b16 %v1196
        %v4590 = vunpack.c.l.b16 %v1197
        %v4591 = vunpack.c.h.b16 %v1197
        %v4592 = vunpack.c.l.b16 %v1198
        %v4593 = vunpack.c.h.b16 %v1198
        %v4594 = vunpack.c.l.b16 %v1199
        %v4595 = vunpack.c.h.b16 %v1199
        %v4596 = vunpack.c.l.b16 %v1200
        %v4597 = vunpack.c.h.b16 %v1200
        %v4598 = vunpack.c.l.b16 %v1201
        %v4599 = vunpack.c.h.b16 %v1201
        %v4600 = vunpack.c.l.b16 %v1202
        %v4601 = vunpack.c.h.b16 %v1202
        %v4602 = vunpack.c.l.b16 %v1203
        %v4603 = vunpack.c.h.b16 %v1203
        %v4604 = vunpack.c.l.b16 %v1204
        %v4605 = vunpack.c.h.b16 %v1204
        %v4606 = vunpack.c.l.b16 %v1205
        %v4607 = vunpack.c.h.b16 %v1205
        %v4608 = vunpack.c.l.b16 %v1206
        %v4609 = vunpack.c.h.b16 %v1206
        %v4610 = vunpack.c.l.b16 %v1207
        %v4611 = vunpack.c.h.b16 %v1207
        %v4612 = vunpack.c.l.b16 %v1208
        %v4613 = vunpack.c.h.b16 %v1208
        %v4614 = vunpack.c.l.b16 %v1209
        %v4615 = vunpack.c.h.b16 %v1209
        %v4616 = vunpack.c.l.b16 %v1210
        %v4617 = vunpack.c.h.b16 %v1210
        %v4618 = vunpack.c.l.b16 %v1211
        %v4619 = vunpack.c.h.b16 %v1211
        %v4620 = vunpack.c.l.b16 %v1212
        %v4621 = vunpack.c.h.b16 %v1212
        %v4622 = vunpack.c.l.b16 %v1213
        %v4623 = vunpack.c.h.b16 %v1213
        %v4624 = vunpack.c.l.b16 %v1214
        %v4625 = vunpack.c.h.b16 %v1214
        %v4626 = vunpack.c.l.b16 %v1215
        %v4627 = vunpack.c.h.b16 %v1215
        %v4628 = vunpack.c.l.b16 %v1216
        %v4629 = vunpack.c.h.b16 %v1216
        %v4630 = vunpack.c.l.b16 %v1217
        %v4631 = vunpack.c.h.b16 %v1217
        %v4632 = vunpack.c.l.b16 %v1218
        %v4633 = vunpack.c.h.b16 %v1218
        %v4634 = vunpack.c.l.b16 %v1219
        %v4635 = vunpack.c.h.b16 %v1219
        %v4636 = vunpack.c.l.b16 %v1220
        %v4637 = vunpack.c.h.b16 %v1220
        %v4638 = vunpack.c.l.b16 %v1221
        %v4639 = vunpack.c.h.b16 %v1221
        %v4640 = vunpack.c.l.b16 %v1222
        %v4641 = vunpack.c.h.b16 %v1222
        %v4642 = vunpack.c.l.b16 %v1223
        %v4643 = vunpack.c.h.b16 %v1223
        %v4644 = vunpack.c.l.b16 %v1224
        %v4645 = vunpack.c.h.b16 %v1224
        %v4646 = vunpack.c.l.b16 %v1225
        %v4647 = vunpack.c.h.b16 %v1225
        %v4648 = vunpack.c.l.b16 %v1226
        %v4649 = vunpack.c.h.b16 %v1226
        %v4650 = vunpack.c.l.b16 %v1227
        %v4651 = vunpack.c.h.b16 %v1227
        %v4652 = vunpack.c.l.b16 %v1228
        %v4653 = vunpack.c.h.b16 %v1228
        %v4654 = vunpack.c.l.b16 %v1229
        %v4655 = vunpack.c.h.b16 %v1229
        %v4656 = vunpack.c.l.b16 %v1230
        %v4657 = vunpack.c.h.b16 %v1230
        %v4658 = vunpack.c.l.b16 %v1231
        %v4659 = vunpack.c.h.b16 %v1231
        %v4660 = vunpack.c.l.b16 %v1232
        %v4661 = vunpack.c.h.b16 %v1232
        %v4662 = vunpack.c.l.b16 %v1233
        %v4663 = vunpack.c.h.b16 %v1233
        %v4664 = vunpack.c.l.b16 %v1234
        %v4665 = vunpack.c.h.b16 %v1234
        %v4666 = vunpack.c.l.b16 %v1235
        %v4667 = vunpack.c.h.b16 %v1235
        %v4668 = vunpack.c.l.b16 %v1236
        %v4669 = vunpack.c.h.b16 %v1236
        %v4670 = vunpack.c.l.b16 %v1237
        %v4671 = vunpack.c.h.b16 %v1237
        %v4672 = vunpack.c.l.b16 %v1238
        %v4673 = vunpack.c.h.b16 %v1238
        %v4674 = vunpack.c.l.b16 %v1239
        %v4675 = vunpack.c.h.b16 %v1239
        %v4676 = vunpack.c.l.b16 %v1240
        %v4677 = vunpack.c.h.b16 %v1240
        %v4678 = vunpack.c.l.b16 %v1241
        %v4679 = vunpack.c.h.b16 %v1241
        %v4680 = vunpack.c.l.b16 %v1242
        %v4681 = vunpack.c.h.b16 %v1242
        %v4682 = vunpack.c.l.b16 %v1243
        %v4683 = vunpack.c.h.b16 %v1243
        %v4684 = vunpack.c.l.b16 %v1244
        %v4685 = vunpack.c.h.b16 %v1244
        %v4686 = vunpack.c.l.b16 %v1245
        %v4687 = vunpack.c.h.b16 %v1245
        %v4688 = vunpack.c.l.b16 %v1246
        %v4689 = vunpack.c.h.b16 %v1246
        %v4690 = vunpack.c.l.b16 %v1247
        %v4691 = vunpack.c.h.b16 %v1247
        %v4692 = vunpack.c.l.b16 %v1248
        %v4693 = vunpack.c.h.b16 %v1248
        %v4694 = vunpack.c.l.b16 %v1249
        %v4695 = vunpack.c.h.b16 %v1249
        %v4696 = vunpack.c.l.b16 %v1250
        %v4697 = vunpack.c.h.b16 %v1250
        %v4698 = vunpack.c.l.b16 %v1251
        %v4699 = vunpack.c.h.b16 %v1251
        %v4700 = vunpack.c.l.b16 %v1252
        %v4701 = vunpack.c.h.b16 %v1252
        %v4702 = vunpack.c.l.b16 %v1253
        %v4703 = vunpack.c.h.b16 %v1253
        %v4704 = vunpack.c.l.b16 %v1254
        %v4705 = vunpack.c.h.b16 %v1254
        %v4706 = vunpack.c.l.b16 %v1255
        %v4707 = vunpack.c.h.b16 %v1255
        %v4708 = vunpack.c.l.b16 %v1256
        %v4709 = vunpack.c.h.b16 %v1256
        %v4710 = vunpack.c.l.b16 %v1257
        %v4711 = vunpack.c.h.b16 %v1257
        %v4712 = vunpack.c.l.b16 %v1258
        %v4713 = vunpack.c.h.b16 %v1258
        %v4714 = vunpack.c.l.b16 %v1259
        %v4715 = vunpack.c.h.b16 %v1259
        %v4716 = vunpack.c.l.b16 %v1260
        %v4717 = vunpack.c.h.b16 %v1260
        %v4718 = vunpack.c.l.b16 %v1261
        %v4719 = vunpack.c.h.b16 %v1261
        %v4720 = vunpack.c.l.b16 %v1262
        %v4721 = vunpack.c.h.b16 %v1262
        %v4722 = vunpack.c.l.b16 %v1263
        %v4723 = vunpack.c.h.b16 %v1263
        %v4724 = vunpack.c.l.b16 %v1264
        %v4725 = vunpack.c.h.b16 %v1264
        %v4726 = vunpack.c.l.b16 %v1265
        %v4727 = vunpack.c.h.b16 %v1265
        %v4728 = vunpack.c.l.b16 %v1266
        %v4729 = vunpack.c.h.b16 %v1266
        %v4730 = vunpack.c.l.b16 %v1267
        %v4731 = vunpack.c.h.b16 %v1267
        %v4732 = vunpack.c.l.b16 %v1268
        %v4733 = vunpack.c.h.b16 %v1268
        %v4734 = vunpack.c.l.b16 %v1269
        %v4735 = vunpack.c.h.b16 %v1269
        %v4736 = vunpack.c.l.b16 %v1270
        %v4737 = vunpack.c.h.b16 %v1270
        %v4738 = vunpack.c.l.b16 %v1271
        %v4739 = vunpack.c.h.b16 %v1271
        %v4740 = vunpack.c.l.b16 %v1272
        %v4741 = vunpack.c.h.b16 %v1272
        %v4742 = vunpack.c.l.b16 %v1273
        %v4743 = vunpack.c.h.b16 %v1273
        %v4744 = vunpack.c.l.b16 %v1274
        %v4745 = vunpack.c.h.b16 %v1274
        %v4746 = vunpack.c.l.b16 %v1275
        %v4747 = vunpack.c.h.b16 %v1275
        %v4748 = vunpack.c.l.b16 %v1276
        %v4749 = vunpack.c.h.b16 %v1276
        %v4750 = vunpack.c.l.b16 %v1277
        %v4751 = vunpack.c.h.b16 %v1277
        %v4752 = vunpack.c.l.b16 %v1278
        %v4753 = vunpack.c.h.b16 %v1278
        %v4754 = vunpack.c.l.b16 %v1279
        %v4755 = vunpack.c.h.b16 %v1279
        %v4756 = vunpack.c.l.b16 %v1280
        %v4757 = vunpack.c.h.b16 %v1280
        %v4758 = vunpack.c.l.b16 %v1281
        %v4759 = vunpack.c.h.b16 %v1281
        %v4760 = vunpack.c.l.b16 %v1282
        %v4761 = vunpack.c.h.b16 %v1282
        %v4762 = vunpack.c.l.b16 %v1283
        %v4763 = vunpack.c.h.b16 %v1283
        %v4764 = vunpack.c.l.b16 %v1284
        %v4765 = vunpack.c.h.b16 %v1284
        %v4766 = vunpack.c.l.b16 %v1285
        %v4767 = vunpack.c.h.b16 %v1285
        %v4768 = vunpack.c.l.b16 %v1286
        %v4769 = vunpack.c.h.b16 %v1286
        %v4770 = vunpack.c.l.b16 %v1287
        %v4771 = vunpack.c.h.b16 %v1287
        %v4772 = vunpack.c.l.b16 %v1288
        %v4773 = vunpack.c.h.b16 %v1288
        %v4774 = vunpack.c.l.b16 %v1289
        %v4775 = vunpack.c.h.b16 %v1289
        %v4776 = vunpack.c.l.b16 %v1290
        %v4777 = vunpack.c.h.b16 %v1290
        %v4778 = vunpack.c.l.b16 %v1291
        %v4779 = vunpack.c.h.b16 %v1291
        %v4780 = vunpack.c.l.b16 %v1292
        %v4781 = vunpack.c.h.b16 %v1292
        %v4782 = vunpack.c.l.b16 %v1293
        %v4783 = vunpack.c.h.b16 %v1293
        %v4784 = vunpack.c.l.b16 %v1294
        %v4785 = vunpack.c.h.b16 %v1294
        %v4786 = vunpack.c.l.b16 %v1295
        %v4787 = vunpack.c.h.b16 %v1295
        %v4788 = vunpack.c.l.b16 %v1296
        %v4789 = vunpack.c.h.b16 %v1296
        %v4790 = vunpack.c.l.b16 %v1297
        %v4791 = vunpack.c.h.b16 %v1297
        %v4792 = vunpack.c.l.b16 %v1298
        %v4793 = vunpack.c.h.b16 %v1298
        %v4794 = vunpack.c.l.b16 %v1299
        %v4795 = vunpack.c.h.b16 %v1299
        %v4796 = vunpack.c.l.b16 %v1300
        %v4797 = vunpack.c.h.b16 %v1300
        %v4798 = vunpack.c.l.b16 %v1301
        %v4799 = vunpack.c.h.b16 %v1301
        %v4800 = vunpack.c.l.b16 %v1302
        %v4801 = vunpack.c.h.b16 %v1302
        %v4802 = vunpack.c.l.b16 %v1303
        %v4803 = vunpack.c.h.b16 %v1303
        %v4804 = vunpack.c.l.b16 %v1304
        %v4805 = vunpack.c.h.b16 %v1304
        %v4806 = vunpack.c.l.b16 %v1305
        %v4807 = vunpack.c.h.b16 %v1305
        %v4808 = vunpack.c.l.b16 %v1306
        %v4809 = vunpack.c.h.b16 %v1306
        %v4810 = vunpack.c.l.b16 %v1307
        %v4811 = vunpack.c.h.b16 %v1307
        %v4812 = vunpack.c.l.b16 %v1308
        %v4813 = vunpack.c.h.b16 %v1308
        %v4814 = vunpack.c.l.b16 %v1309
        %v4815 = vunpack.c.h.b16 %v1309
        %v4816 = vunpack.c.l.b16 %v1310
        %v4817 = vunpack.c.h.b16 %v1310
        %v4818 = vunpack.c.l.b16 %v1311
        %v4819 = vunpack.c.h.b16 %v1311
        %v4820 = vunpack.c.l.b16 %v1312
        %v4821 = vunpack.c.h.b16 %v1312
        %v4822 = vunpack.c.l.b16 %v1313
        %v4823 = vunpack.c.h.b16 %v1313
        %v4824 = vunpack.c.l.b16 %v1314
        %v4825 = vunpack.c.h.b16 %v1314
        %v4826 = vunpack.c.l.b16 %v1315
        %v4827 = vunpack.c.h.b16 %v1315
        %v4828 = vunpack.c.l.b16 %v1316
        %v4829 = vunpack.c.h.b16 %v1316
        %v4830 = vunpack.c.l.b16 %v1317
        %v4831 = vunpack.c.h.b16 %v1317
        %v4832 = vunpack.c.l.b16 %v1318
        %v4833 = vunpack.c.h.b16 %v1318
        %v4834 = vunpack.c.l.b16 %v1319
        %v4835 = vunpack.c.h.b16 %v1319
        %v4836 = vunpack.c.l.b16 %v1320
        %v4837 = vunpack.c.h.b16 %v1320
        %v4838 = vunpack.c.l.b16 %v1321
        %v4839 = vunpack.c.h.b16 %v1321
        %v4840 = vunpack.c.l.b16 %v1322
        %v4841 = vunpack.c.h.b16 %v1322
        %v4842 = vunpack.c.l.b16 %v1323
        %v4843 = vunpack.c.h.b16 %v1323
        %v4844 = vunpack.c.l.b16 %v1324
        %v4845 = vunpack.c.h.b16 %v1324
        %v4846 = vunpack.c.l.b16 %v1325
        %v4847 = vunpack.c.h.b16 %v1325
        %v4848 = vunpack.c.l.b16 %v1326
        %v4849 = vunpack.c.h.b16 %v1326
        %v4850 = vunpack.c.l.b16 %v1327
        %v4851 = vunpack.c.h.b16 %v1327
        %v4852 = vunpack.c.l.b16 %v1328
        %v4853 = vunpack.c.h.b16 %v1328
        %v4854 = vunpack.c.l.b16 %v1329
        %v4855 = vunpack.c.h.b16 %v1329
        %v4856 = vunpack.c.l.b16 %v1330
        %v4857 = vunpack.c.h.b16 %v1330
        %v4858 = vunpack.c.l.b16 %v1331
        %v4859 = vunpack.c.h.b16 %v1331
        %v4860 = vunpack.c.l.b16 %v1332
        %v4861 = vunpack.c.h.b16 %v1332
        %v4862 = vunpack.c.l.b16 %v1333
        %v4863 = vunpack.c.h.b16 %v1333
        %v4864 = vunpack.c.l.b16 %v1334
        %v4865 = vunpack.c.h.b16 %v1334
        %v4866 = vunpack.c.l.b16 %v1335
        %v4867 = vunpack.c.h.b16 %v1335
        %v4868 = vunpack.c.l.b16 %v1336
        %v4869 = vunpack.c.h.b16 %v1336
        %v4870 = vunpack.c.l.b16 %v1337
        %v4871 = vunpack.c.h.b16 %v1337
        %v4872 = vunpack.c.l.b16 %v1338
        %v4873 = vunpack.c.h.b16 %v1338
        %v4874 = vunpack.c.l.b16 %v1339
        %v4875 = vunpack.c.h.b16 %v1339
        %v4876 = vunpack.c.l.b16 %v1340
        %v4877 = vunpack.c.h.b16 %v1340
        %v4878 = vunpack.c.l.b16 %v1341
        %v4879 = vunpack.c.h.b16 %v1341
        %v4880 = vunpack.c.l.b16 %v1342
        %v4881 = vunpack.c.h.b16 %v1342
        %v4882 = vunpack.c.l.b16 %v1343
        %v4883 = vunpack.c.h.b16 %v1343
        %v4884 = vunpack.c.l.b16 %v1344
        %v4885 = vunpack.c.h.b16 %v1344
        %v4886 = vunpack.c.l.b16 %v1345
        %v4887 = vunpack.c.h.b16 %v1345
        %v4888 = vunpack.c.l.b16 %v1346
        %v4889 = vunpack.c.h.b16 %v1346
        %v4890 = vunpack.c.l.b16 %v1347
        %v4891 = vunpack.c.h.b16 %v1347
        %v4892 = vunpack.c.l.b16 %v1348
        %v4893 = vunpack.c.h.b16 %v1348
        %v4894 = vunpack.c.l.b16 %v1349
        %v4895 = vunpack.c.h.b16 %v1349
        %v4896 = vunpack.c.l.b16 %v1350
        %v4897 = vunpack.c.h.b16 %v1350
        %v4898 = vunpack.c.l.b16 %v1351
        %v4899 = vunpack.c.h.b16 %v1351
        %v4900 = vunpack.c.l.b16 %v1352
        %v4901 = vunpack.c.h.b16 %v1352
        %v4902 = vunpack.c.l.b16 %v1353
        %v4903 = vunpack.c.h.b16 %v1353
        %v4904 = vunpack.c.l.b16 %v1354
        %v4905 = vunpack.c.h.b16 %v1354
        %v4906 = vunpack.c.l.b16 %v1355
        %v4907 = vunpack.c.h.b16 %v1355
        %v4908 = vunpack.c.l.b16 %v1356
        %v4909 = vunpack.c.h.b16 %v1356
        %v4910 = vunpack.c.l.b16 %v1357
        %v4911 = vunpack.c.h.b16 %v1357
        %v4912 = vunpack.c.l.b16 %v1358
        %v4913 = vunpack.c.h.b16 %v1358
        %v4914 = vunpack.c.l.b16 %v1359
        %v4915 = vunpack.c.h.b16 %v1359
        %v4916 = vunpack.c.l.b16 %v1360
        %v4917 = vunpack.c.h.b16 %v1360
        %v4918 = vunpack.c.l.b16 %v1361
        %v4919 = vunpack.c.h.b16 %v1361
        %v4920 = vunpack.c.l.b16 %v1362
        %v4921 = vunpack.c.h.b16 %v1362
        %v4922 = vunpack.c.l.b16 %v1363
        %v4923 = vunpack.c.h.b16 %v1363
        %v4924 = vunpack.c.l.b16 %v1364
        %v4925 = vunpack.c.h.b16 %v1364
        %v4926 = vunpack.c.l.b16 %v1365
        %v4927 = vunpack.c.h.b16 %v1365
        %v4928 = vunpack.c.l.b16 %v1366
        %v4929 = vunpack.c.h.b16 %v1366
        %v4930 = vunpack.c.l.b16 %v1367
        %v4931 = vunpack.c.h.b16 %v1367
        %v4932 = vunpack.c.l.b16 %v1368
        %v4933 = vunpack.c.h.b16 %v1368
        %v4934 = vunpack.c.l.b16 %v1369
        %v4935 = vunpack.c.h.b16 %v1369
        %v4936 = vunpack.c.l.b16 %v1370
        %v4937 = vunpack.c.h.b16 %v1370
        %v4938 = vunpack.c.l.b16 %v1371
        %v4939 = vunpack.c.h.b16 %v1371
        %v4940 = vunpack.c.l.b16 %v1372
        %v4941 = vunpack.c.h.b16 %v1372
        %v4942 = vunpack.c.l.b16 %v1373
        %v4943 = vunpack.c.h.b16 %v1373
        %v4944 = vunpack.c.l.b16 %v1374
        %v4945 = vunpack.c.h.b16 %v1374
        %v4946 = vunpack.c.l.b16 %v1375
        %v4947 = vunpack.c.h.b16 %v1375
        %v4948 = vunpack.c.l.b16 %v1376
        %v4949 = vunpack.c.h.b16 %v1376
        %v4950 = vunpack.c.l.b16 %v1377
        %v4951 = vunpack.c.h.b16 %v1377
        %v4952 = vunpack.c.l.b16 %v1378
        %v4953 = vunpack.c.h.b16 %v1378
        %v4954 = vunpack.c.l.b16 %v1379
        %v4955 = vunpack.c.h.b16 %v1379
        %v4956 = vunpack.c.l.b16 %v1380
        %v4957 = vunpack.c.h.b16 %v1380
        %v4958 = vunpack.c.l.b16 %v1381
        %v4959 = vunpack.c.h.b16 %v1381
        %v4960 = vunpack.c.l.b16 %v1382
        %v4961 = vunpack.c.h.b16 %v1382
        %v4962 = vunpack.c.l.b16 %v1383
        %v4963 = vunpack.c.h.b16 %v1383
        %v4964 = vunpack.c.l.b16 %v1384
        %v4965 = vunpack.c.h.b16 %v1384
        %v4966 = vunpack.c.l.b16 %v1385
        %v4967 = vunpack.c.h.b16 %v1385
        %v4968 = vunpack.c.l.b16 %v1386
        %v4969 = vunpack.c.h.b16 %v1386
        %v4970 = vunpack.c.l.b16 %v1387
        %v4971 = vunpack.c.h.b16 %v1387
        %v4972 = vunpack.c.l.b16 %v1388
        %v4973 = vunpack.c.h.b16 %v1388
        %v4974 = vunpack.c.l.b16 %v1389
        %v4975 = vunpack.c.h.b16 %v1389
        %v4976 = vunpack.c.l.b16 %v1390
        %v4977 = vunpack.c.h.b16 %v1390
        %v4978 = vunpack.c.l.b16 %v1391
        %v4979 = vunpack.c.h.b16 %v1391
        %v4980 = vunpack.c.l.b16 %v1392
        %v4981 = vunpack.c.h.b16 %v1392
        %v4982 = vunpack.c.l.b16 %v1393
        %v4983 = vunpack.c.h.b16 %v1393
        %v4984 = vunpack.c.l.b16 %v1394
        %v4985 = vunpack.c.h.b16 %v1394
        %v4986 = vunpack.c.l.b16 %v1395
        %v4987 = vunpack.c.h.b16 %v1395
        %v4988 = vunpack.c.l.b16 %v1396
        %v4989 = vunpack.c.h.b16 %v1396
        %v4990 = vunpack.c.l.b16 %v1397
        %v4991 = vunpack.c.h.b16 %v1397
        %v4992 = vunpack.c.l.b16 %v1398
        %v4993 = vunpack.c.h.b16 %v1398
        %v4994 = vunpack.c.l.b16 %v1399
        %v4995 = vunpack.c.h.b16 %v1399
        %v4996 = vunpack.c.l.b16 %v1400
        %v4997 = vunpack.c.h.b16 %v1400
        %v4998 = vunpack.c.l.b16 %v1401
        %v4999 = vunpack.c.h.b16 %v1401
        %v5000 = vunpack.c.l.b16 %v1402
        %v5001 = vunpack.c.h.b16 %v1402
        %v5002 = vunpack.c.l.b16 %v1403
        %v5003 = vunpack.c.h.b16 %v1403
        %v5004 = vunpack.c.l.b16 %v1404
        %v5005 = vunpack.c.h.b16 %v1404
        %v5006 = vunpack.c.l.b16 %v1405
        %v5007 = vunpack.c.h.b16 %v1405
        %v5008 = vunpack.c.l.b16 %v1406
        %v5009 = vunpack.c.h.b16 %v1406
        %v5010 = vunpack.c.l.b16 %v1407
        %v5011 = vunpack.c.h.b16 %v1407
        %v5012 = vunpack.c.l.b16 %v1408
        %v5013 = vunpack.c.h.b16 %v1408
        %v5014 = vunpack.c.l.b16 %v1409
        %v5015 = vunpack.c.h.b16 %v1409
        %v5016 = vunpack.c.l.b16 %v1410
        %v5017 = vunpack.c.h.b16 %v1410
        %v5018 = vunpack.c.l.b16 %v1411
        %v5019 = vunpack.c.h.b16 %v1411
        %v5020 = vunpack.c.l.b16 %v1412
        %v5021 = vunpack.c.h.b16 %v1412
        %v5022 = vunpack.c.l.b16 %v1413
        %v5023 = vunpack.c.h.b16 %v1413
        %v5024 = vunpack.c.l.b16 %v1414
        %v5025 = vunpack.c.h.b16 %v1414
        %v5026 = vunpack.c.l.b16 %v1415
        %v5027 = vunpack.c.h.b16 %v1415
        %v5028 = vunpack.c.l.b16 %v1416
        %v5029 = vunpack.c.h.b16 %v1416
        %v5030 = vunpack.c.l.b16 %v1417
        %v5031 = vunpack.c.h.b16 %v1417
        %v5032 = vunpack.c.l.b16 %v1418
        %v5033 = vunpack.c.h.b16 %v1418
        %v5034 = vunpack.c.l.b16 %v1419
        %v5035 = vunpack.c.h.b16 %v1419
        %v5036 = vunpack.c.l.b16 %v1420
        %v5037 = vunpack.c.h.b16 %v1420
        %v5038 = vunpack.c.l.b16 %v1421
        %v5039 = vunpack.c.h.b16 %v1421
        %v5040 = vunpack.c.l.b16 %v1422
        %v5041 = vunpack.c.h.b16 %v1422
        %v5042 = vunpack.c.l.b16 %v1423
        %v5043 = vunpack.c.h.b16 %v1423
        %v5044 = vunpack.c.l.b16 %v1424
        %v5045 = vunpack.c.h.b16 %v1424
        %v5046 = vunpack.c.l.b16 %v1425
        %v5047 = vunpack.c.h.b16 %v1425
        %v5048 = vunpack.c.l.b16 %v1426
        %v5049 = vunpack.c.h.b16 %v1426
        %v5050 = vunpack.c.l.b16 %v1427
        %v5051 = vunpack.c.h.b16 %v1427
        %v5052 = vunpack.c.l.b16 %v1428
        %v5053 = vunpack.c.h.b16 %v1428
        %v5054 = vunpack.c.l.b16 %v1429
        %v5055 = vunpack.c.h.b16 %v1429
        %v5056 = vunpack.c.l.b16 %v1430
        %v5057 = vunpack.c.h.b16 %v1430
        %v5058 = vunpack.c.l.b16 %v1431
        %v5059 = vunpack.c.h.b16 %v1431
        %v5060 = vunpack.c.l.b16 %v1432
        %v5061 = vunpack.c.h.b16 %v1432
        %v5062 = vunpack.c.l.b16 %v1433
        %v5063 = vunpack.c.h.b16 %v1433
        %v5064 = vunpack.c.l.b16 %v1434
        %v5065 = vunpack.c.h.b16 %v1434
        %v5066 = vunpack.c.l.b16 %v1435
        %v5067 = vunpack.c.h.b16 %v1435
        %v5068 = vunpack.c.l.b16 %v1436
        %v5069 = vunpack.c.h.b16 %v1436
        %v5070 = vunpack.c.l.b16 %v1437
        %v5071 = vunpack.c.h.b16 %v1437
        %v5072 = vunpack.c.l.b16 %v1438
        %v5073 = vunpack.c.h.b16 %v1438
        %v5074 = vunpack.c.l.b16 %v1439
        %v5075 = vunpack.c.h.b16 %v1439
        %v5076 = vunpack.c.l.b16 %v1440
        %v5077 = vunpack.c.h.b16 %v1440
        %v5078 = vunpack.c.l.b16 %v1441
        %v5079 = vunpack.c.h.b16 %v1441
        %v5080 = vunpack.c.l.b16 %v1442
        %v5081 = vunpack.c.h.b16 %v1442
        %v5082 = vunpack.c.l.b16 %v1443
        %v5083 = vunpack.c.h.b16 %v1443
        %v5084 = vunpack.c.l.b16 %v1444
        %v5085 = vunpack.c.h.b16 %v1444
        %v5086 = vunpack.c.l.b16 %v1445
        %v5087 = vunpack.c.h.b16 %v1445
        %v5088 = vunpack.c.l.b16 %v1446
        %v5089 = vunpack.c.h.b16 %v1446
        %v5090 = vunpack.c.l.b16 %v1447
        %v5091 = vunpack.c.h.b16 %v1447
        %v5092 = vunpack.c.l.b16 %v1448
        %v5093 = vunpack.c.h.b16 %v1448
        %v5094 = vunpack.c.l.b16 %v1449
        %v5095 = vunpack.c.h.b16 %v1449
        %v5096 = vunpack.c.l.b16 %v1450
        %v5097 = vunpack.c.h.b16 %v1450
        %v5098 = vunpack.c.l.b16 %v1451
        %v5099 = vunpack.c.h.b16 %v1451
        %v5100 = vunpack.c.l.b16 %v1452
        %v5101 = vunpack.c.h.b16 %v1452
        %v5102 = vunpack.c.l.b16 %v1453
        %v5103 = vunpack.c.h.b16 %v1453
        %v5104 = vunpack.c.l.b16 %v1454
        %v5105 = vunpack.c.h.b16 %v1454
        %v5106 = vunpack.c.l.b16 %v1455
        %v5107 = vunpack.c.h.b16 %v1455
        %v5108 = vunpack.c.l.b16 %v1456
        %v5109 = vunpack.c.h.b16 %v1456
        %v5110 = vunpack.c.l.b16 %v1457
        %v5111 = vunpack.c.h.b16 %v1457
        %v5112 = vunpack.c.l.b16 %v1458
        %v5113 = vunpack.c.h.b16 %v1458
        %v5114 = vunpack.c.l.b16 %v1459
        %v5115 = vunpack.c.h.b16 %v1459
        %v5116 = vunpack.c.l.b16 %v1460
        %v5117 = vunpack.c.h.b16 %v1460
        %v5118 = vunpack.c.l.b16 %v1461
        %v5119 = vunpack.c.h.b16 %v1461
        %v5120 = vunpack.c.l.b16 %v1462
        %v5121 = vunpack.c.h.b16 %v1462
        %v5122 = vunpack.c.l.b16 %v1463
        %v5123 = vunpack.c.h.b16 %v1463
        %v5124 = vunpack.c.l.b16 %v1464
        %v5125 = vunpack.c.h.b16 %v1464
        %v5126 = vunpack.c.l.b16 %v1465
        %v5127 = vunpack.c.h.b16 %v1465
        %v5128 = vpack.c.b16 %v2830, %v2824
        %v5129 = vpack.c.b16 %v2831, %v2825
        %v5130 = vpack.c.b16 %v2832, %v2826
        %v5131 = vpack.c.b16 %v2833, %v2827
        %v5132 = vpack.c.b16 %v2834, %v2828
        %v5133 = vpack.c.b16 %v2835, %v2829
        %v5134 = vpack.c.b16 %v2842, %v2836
        %v5135 = vpack.c.b16 %v2843, %v2837
        %v5136 = vpack.c.b16 %v2844, %v2838
        %v5137 = vpack.c.b16 %v2845, %v2839
        %v5138 = vpack.c.b16 %v2846, %v2840
        %v5139 = vpack.c.b16 %v2847, %v2841
        %v5140 = vpack.c.b16 %v2854, %v2848
        %v5141 = vpack.c.b16 %v2855, %v2849
        %v5142 = vpack.c.b16 %v2856, %v2850
        %v5143 = vpack.c.b16 %v2857, %v2851
        %v5144 = vpack.c.b16 %v2858, %v2852
        %v5145 = vpack.c.b16 %v2859, %v2853
        %v5146 = vpack.c.b16 %v2866, %v2860
        %v5147 = vpack.c.b16 %v2867, %v2861
        %v5148 = vpack.c.b16 %v2868, %v2862
        %v5149 = vpack.c.b16 %v2869, %v2863
        %v5150 = vpack.c.b16 %v2870, %v2864
        %v5151 = vpack.c.b16 %v2871, %v2865
        %v5152 = vpack.c.b16 %v2878, %v2872
        %v5153 = vpack.c.b16 %v2879, %v2873
        %v5154 = vpack.c.b16 %v2880, %v2874
        %v5155 = vpack.c.b16 %v2881, %v2875
        %v5156 = vpack.c.b16 %v2882, %v2876
        %v5157 = vpack.c.b16 %v2883, %v2877
        %v5158 = vpack.c.b16 %v2890, %v2884
        %v5159 = vpack.c.b16 %v2891, %v2885
        %v5160 = vpack.c.b16 %v2892, %v2886
        %v5161 = vpack.c.b16 %v2893, %v2887
        %v5162 = vpack.c.b16 %v2894, %v2888
        %v5163 = vpack.c.b16 %v2895, %v2889
        %v5164 = vpack.c.b16 %v2902, %v2896
        %v5165 = vpack.c.b16 %v2903, %v2897
        %v5166 = vpack.c.b16 %v2904, %v2898
        %v5167 = vpack.c.b16 %v2905, %v2899
        %v5168 = vpack.c.b16 %v2906, %v2900
        %v5169 = vpack.c.b16 %v2907, %v2901
        %v5170 = vpack.c.b16 %v2914, %v2908
        %v5171 = vpack.c.b16 %v2915, %v2909
        %v5172 = vpack.c.b16 %v2916, %v2910
        %v5173 = vpack.c.b16 %v2917, %v2911
        %v5174 = vpack.c.b16 %v2918, %v2912
        %v5175 = vpack.c.b16 %v2919, %v2913
        %v5176 = vpack.c.b16 %v2926, %v2920
        %v5177 = vpack.c.b16 %v2927, %v2921
        %v5178 = vpack.c.b16 %v2928, %v2922
        %v5179 = vpack.c.b16 %v2929, %v2923
        %v5180 = vpack.c.b16 %v2930, %v2924
        %v5181 = vpack.c.b16 %v2931, %v2925
        %v5182 = vpack.c.b16 %v2938, %v2932
        %v5183 = vpack.c.b16 %v2939, %v2933
        %v5184 = vpack.c.b16 %v2940, %v2934
        %v5185 = vpack.c.b16 %v2941, %v2935
        %v5186 = vpack.c.b16 %v2942, %v2936
        %v5187 = vpack.c.b16 %v2943, %v2937
        %v5188 = vpack.c.b16 %v2950, %v2944
        %v5189 = vpack.c.b16 %v2951, %v2945
        %v5190 = vpack.c.b16 %v2952, %v2946
        %v5191 = vpack.c.b16 %v2953, %v2947
        %v5192 = vpack.c.b16 %v2954, %v2948
        %v5193 = vpack.c.b16 %v2955, %v2949
        %v5194 = vpack.c.b16 %v2962, %v2956
        %v5195 = vpack.c.b16 %v2963, %v2957
        %v5196 = vpack.c.b16 %v2964, %v2958
        %v5197 = vpack.c.b16 %v2965, %v2959
        %v5198 = vpack.c.b16 %v2966, %v2960
        %v5199 = vpack.c.b16 %v2967, %v2961
        %v5200 = vpack.c.b16 %v2974, %v2968
        %v5201 = vpack.c.b16 %v2975, %v2969
        %v5202 = vpack.c.b16 %v2976, %v2970
        %v5203 = vpack.c.b16 %v2977, %v2971
        %v5204 = vpack.c.b16 %v2978, %v2972
        %v5205 = vpack.c.b16 %v2979, %v2973
        %v5206 = vpack.c.b16 %v2986, %v2980
        %v5207 = vpack.c.b16 %v2987, %v2981
        %v5208 = vpack.c.b16 %v2988, %v2982
        %v5209 = vpack.c.b16 %v2989, %v2983
        %v5210 = vpack.c.b16 %v2990, %v2984
        %v5211 = vpack.c.b16 %v2991, %v2985
        %v5212 = vpack.c.b16 %v2998, %v2992
        %v5213 = vpack.c.b16 %v2999, %v2993
        %v5214 = vpack.c.b16 %v3000, %v2994
        %v5215 = vpack.c.b16 %v3001, %v2995
        %v5216 = vpack.c.b16 %v3002, %v2996
        %v5217 = vpack.c.b16 %v3003, %v2997
        %v5218 = vpack.c.b16 %v3010, %v3004
        %v5219 = vpack.c.b16 %v3011, %v3005
        %v5220 = vpack.c.b16 %v3012, %v3006
        %v5221 = vpack.c.b16 %v3013, %v3007
        %v5222 = vpack.c.b16 %v3014, %v3008
        %v5223 = vpack.c.b16 %v3015, %v3009
        %v5224 = vpack.c.b16 %v3022, %v3016
        %v5225 = vpack.c.b16 %v3023, %v3017
        %v5226 = vpack.c.b16 %v3024, %v3018
        %v5227 = vpack.c.b16 %v3025, %v3019
        %v5228 = vpack.c.b16 %v3026, %v3020
        %v5229 = vpack.c.b16 %v3027, %v3021
        %v5230 = vpack.c.b16 %v3034, %v3028
        %v5231 = vpack.c.b16 %v3035, %v3029
        %v5232 = vpack.c.b16 %v3036, %v3030
        %v5233 = vpack.c.b16 %v3037, %v3031
        %v5234 = vpack.c.b16 %v3038, %v3032
        %v5235 = vpack.c.b16 %v3039, %v3033
        %v5236 = vpack.c.b16 %v3046, %v3040
        %v5237 = vpack.c.b16 %v3047, %v3041
        %v5238 = vpack.c.b16 %v3048, %v3042
        %v5239 = vpack.c.b16 %v3049, %v3043
        %v5240 = vpack.c.b16 %v3050, %v3044
        %v5241 = vpack.c.b16 %v3051, %v3045
        %v5242 = vpack.c.b16 %v3058, %v3052
        %v5243 = vpack.c.b16 %v3059, %v3053
        %v5244 = vpack.c.b16 %v3060, %v3054
        %v5245 = vpack.c.b16 %v3061, %v3055
        %v5246 = vpack.c.b16 %v3062, %v3056
        %v5247 = vpack.c.b16 %v3063, %v3057
        %v5248 = vpack.c.b16 %v3070, %v3064
        %v5249 = vpack.c.b16 %v3071, %v3065
        %v5250 = vpack.c.b16 %v3072, %v3066
        %v5251 = vpack.c.b16 %v3073, %v3067
        %v5252 = vpack.c.b16 %v3074, %v3068
        %v5253 = vpack.c.b16 %v3075, %v3069
        %v5254 = vpack.c.b16 %v3082, %v3076
        %v5255 = vpack.c.b16 %v3083, %v3077
        %v5256 = vpack.c.b16 %v3084, %v3078
        %v5257 = vpack.c.b16 %v3085, %v3079
        %v5258 = vpack.c.b16 %v3086, %v3080
        %v5259 = vpack.c.b16 %v3087, %v3081
        %v5260 = vpack.c.b16 %v3094, %v3088
        %v5261 = vpack.c.b16 %v3095, %v3089
        %v5262 = vpack.c.b16 %v3096, %v3090
        %v5263 = vpack.c.b16 %v3097, %v3091
        %v5264 = vpack.c.b16 %v3098, %v3092
        %v5265 = vpack.c.b16 %v3099, %v3093
        %v5266 = vpack.c.b16 %v3106, %v3100
        %v5267 = vpack.c.b16 %v3107, %v3101
        %v5268 = vpack.c.b16 %v3108, %v3102
        %v5269 = vpack.c.b16 %v3109, %v3103
        %v5270 = vpack.c.b16 %v3110, %v3104
        %v5271 = vpack.c.b16 %v3111, %v3105
        %v5272 = vpack.c.b16 %v3118, %v3112
        %v5273 = vpack.c.b16 %v3119, %v3113
        %v5274 = vpack.c.b16 %v3120, %v3114
        %v5275 = vpack.c.b16 %v3121, %v3115
        %v5276 = vpack.c.b16 %v3122, %v3116
        %v5277 = vpack.c.b16 %v3123, %v3117
        %v5278 = vpack.c.b16 %v3130, %v3124
        %v5279 = vpack.c.b16 %v3131, %v3125
        %v5280 = vpack.c.b16 %v3132, %v3126
        %v5281 = vpack.c.b16 %v3133, %v3127
        %v5282 = vpack.c.b16 %v3134, %v3128
        %v5283 = vpack.c.b16 %v3135, %v3129
        %v5284 = vpack.c.b16 %v3142, %v3136
        %v5285 = vpack.c.b16 %v3143, %v3137
        %v5286 = vpack.c.b16 %v3144, %v3138
        %v5287 = vpack.c.b16 %v3145, %v3139
        %v5288 = vpack.c.b16 %v3146, %v3140
        %v5289 = vpack.c.b16 %v3147, %v3141
        %v5290 = vpack.c.b16 %v3154, %v3148
        %v5291 = vpack.c.b16 %v3155, %v3149
        %v5292 = vpack.c.b16 %v3156, %v3150
        %v5293 = vpack.c.b16 %v3157, %v3151
        %v5294 = vpack.c.b16 %v3158, %v3152
        %v5295 = vpack.c.b16 %v3159, %v3153
        %v5296 = vpack.c.b16 %v3166, %v3160
        %v5297 = vpack.c.b16 %v3167, %v3161
        %v5298 = vpack.c.b16 %v3168, %v3162
        %v5299 = vpack.c.b16 %v3169, %v3163
        %v5300 = vpack.c.b16 %v3170, %v3164
        %v5301 = vpack.c.b16 %v3171, %v3165
        %v5302 = vpack.c.b16 %v3178, %v3172
        %v5303 = vpack.c.b16 %v3179, %v3173
        %v5304 = vpack.c.b16 %v3180, %v3174
        %v5305 = vpack.c.b16 %v3181, %v3175
        %v5306 = vpack.c.b16 %v3182, %v3176
        %v5307 = vpack.c.b16 %v3183, %v3177
        %v5308 = vpack.c.b16 %v3190, %v3184
        %v5309 = vpack.c.b16 %v3191, %v3185
        %v5310 = vpack.c.b16 %v3192, %v3186
        %v5311 = vpack.c.b16 %v3193, %v3187
        %v5312 = vpack.c.b16 %v3194, %v3188
        %v5313 = vpack.c.b16 %v3195, %v3189
        %v5314 = vpack.c.b16 %v3202, %v3196
        %v5315 = vpack.c.b16 %v3203, %v3197
        %v5316 = vpack.c.b16 %v3204, %v3198
        %v5317 = vpack.c.b16 %v3205, %v3199
        %v5318 = vpack.c.b16 %v3206, %v3200
        %v5319 = vpack.c.b16 %v3207, %v3201
        %v5320 = vpack.c.b16 %v3214, %v3208
        %v5321 = vpack.c.b16 %v3215, %v3209
        %v5322 = vpack.c.b16 %v3216, %v3210
        %v5323 = vpack.c.b16 %v3217, %v3211
        %v5324 = vpack.c.b16 %v3218, %v3212
        %v5325 = vpack.c.b16 %v3219, %v3213
        %v5326 = vpack.c.b16 %v3226, %v3220
        %v5327 = vpack.c.b16 %v3227, %v3221
        %v5328 = vpack.c.b16 %v3228, %v3222
        %v5329 = vpack.c.b16 %v3229, %v3223
        %v5330 = vpack.c.b16 %v3230, %v3224
        %v5331 = vpack.c.b16 %v3231, %v3225
        %v5332 = vpack.c.b16 %v3238, %v3232
        %v5333 = vpack.c.b16 %v3239, %v3233
        %v5334 = vpack.c.b16 %v3240, %v3234
        %v5335 = vpack.c.b16 %v3241, %v3235
        %v5336 = vpack.c.b16 %v3242, %v3236
        %v5337 = vpack.c.b16 %v3243, %v3237
        %v5338 = vpack.c.b16 %v3250, %v3244
        %v5339 = vpack.c.b16 %v3251, %v3245
        %v5340 = vpack.c.b16 %v3252, %v3246
        %v5341 = vpack.c.b16 %v3253, %v3247
        %v5342 = vpack.c.b16 %v3254, %v3248
        %v5343 = vpack.c.b16 %v3255, %v3249
        %v5344 = vpack.c.b16 %v3262, %v3256
        %v5345 = vpack.c.b16 %v3263, %v3257
        %v5346 = vpack.c.b16 %v3264, %v3258
        %v5347 = vpack.c.b16 %v3265, %v3259
        %v5348 = vpack.c.b16 %v3266, %v3260
        %v5349 = vpack.c.b16 %v3267, %v3261
        %v5350 = vpack.c.b16 %v3274, %v3268
        %v5351 = vpack.c.b16 %v3275, %v3269
        %v5352 = vpack.c.b16 %v3276, %v3270
        %v5353 = vpack.c.b16 %v3277, %v3271
        %v5354 = vpack.c.b16 %v3278, %v3272
        %v5355 = vpack.c.b16 %v3279, %v3273
        %v5356 = vpack.c.b16 %v3286, %v3280
        %v5357 = vpack.c.b16 %v3287, %v3281
        %v5358 = vpack.c.b16 %v3288, %v3282
        %v5359 = vpack.c.b16 %v3289, %v3283
        %v5360 = vpack.c.b16 %v3290, %v3284
        %v5361 = vpack.c.b16 %v3291, %v3285
        %v5362 = vpack.c.b16 %v3298, %v3292
        %v5363 = vpack.c.b16 %v3299, %v3293
        %v5364 = vpack.c.b16 %v3300, %v3294
        %v5365 = vpack.c.b16 %v3301, %v3295
        %v5366 = vpack.c.b16 %v3302, %v3296
        %v5367 = vpack.c.b16 %v3303, %v3297
        %v5368 = vpack.c.b16 %v3310, %v3304
        %v5369 = vpack.c.b16 %v3311, %v3305
        %v5370 = vpack.c.b16 %v3312, %v3306
        %v5371 = vpack.c.b16 %v3313, %v3307
        %v5372 = vpack.c.b16 %v3314, %v3308
        %v5373 = vpack.c.b16 %v3315, %v3309
        %v5374 = vpack.c.b16 %v3322, %v3316
        %v5375 = vpack.c.b16 %v3323, %v3317
        %v5376 = vpack.c.b16 %v3324, %v3318
        %v5377 = vpack.c.b16 %v3325, %v3319
        %v5378 = vpack.c.b16 %v3326, %v3320
        %v5379 = vpack.c.b16 %v3327, %v3321
        %v5380 = vpack.c.b16 %v3334, %v3328
        %v5381 = vpack.c.b16 %v3335, %v3329
        %v5382 = vpack.c.b16 %v3336, %v3330
        %v5383 = vpack.c.b16 %v3337, %v3331
        %v5384 = vpack.c.b16 %v3338, %v3332
        %v5385 = vpack.c.b16 %v3339, %v3333
        %v5386 = vpack.c.b16 %v3346, %v3340
        %v5387 = vpack.c.b16 %v3347, %v3341
        %v5388 = vpack.c.b16 %v3348, %v3342
        %v5389 = vpack.c.b16 %v3349, %v3343
        %v5390 = vpack.c.b16 %v3350, %v3344
        %v5391 = vpack.c.b16 %v3351, %v3345
        %v5392 = vpack.c.b16 %v3358, %v3352
        %v5393 = vpack.c.b16 %v3359, %v3353
        %v5394 = vpack.c.b16 %v3360, %v3354
        %v5395 = vpack.c.b16 %v3361, %v3355
        %v5396 = vpack.c.b16 %v3362, %v3356
        %v5397 = vpack.c.b16 %v3363, %v3357
        %v5398 = vpack.c.b16 %v3370, %v3364
        %v5399 = vpack.c.b16 %v3371, %v3365
        %v5400 = vpack.c.b16 %v3372, %v3366
        %v5401 = vpack.c.b16 %v3373, %v3367
        %v5402 = vpack.c.b16 %v3374, %v3368
        %v5403 = vpack.c.b16 %v3375, %v3369
        %v5404 = vpack.c.b16 %v3382, %v3376
        %v5405 = vpack.c.b16 %v3383, %v3377
        %v5406 = vpack.c.b16 %v3384, %v3378
        %v5407 = vpack.c.b16 %v3385, %v3379
        %v5408 = vpack.c.b16 %v3386, %v3380
        %v5409 = vpack.c.b16 %v3387, %v3381
        %v5410 = vpack.c.b16 %v3394, %v3388
        %v5411 = vpack.c.b16 %v3395, %v3389
        %v5412 = vpack.c.b16 %v3396, %v3390
        %v5413 = vpack.c.b16 %v3397, %v3391
        %v5414 = vpack.c.b16 %v3398, %v3392
        %v5415 = vpack.c.b16 %v3399, %v3393
        %v5416 = vpack.c.b16 %v3406, %v3400
        %v5417 = vpack.c.b16 %v3407, %v3401
        %v5418 = vpack.c.b16 %v3408, %v3402
        %v5419 = vpack.c.b16 %v3409, %v3403
        %v5420 = vpack.c.b16 %v3410, %v3404
        %v5421 = vpack.c.b16 %v3411, %v3405
        %v5422 = vpack.c.b16 %v3418, %v3412
        %v5423 = vpack.c.b16 %v3419, %v3413
        %v5424 = vpack.c.b16 %v3420, %v3414
        %v5425 = vpack.c.b16 %v3421, %v3415
        %v5426 = vpack.c.b16 %v3422, %v3416
        %v5427 = vpack.c.b16 %v3423, %v3417
        %v5428 = vpack.c.b16 %v3430, %v3424
        %v5429 = vpack.c.b16 %v3431, %v3425
        %v5430 = vpack.c.b16 %v3432, %v3426
        %v5431 = vpack.c.b16 %v3433, %v3427
        %v5432 = vpack.c.b16 %v3434, %v3428
        %v5433 = vpack.c.b16 %v3435, %v3429
        %v5434 = vpack.c.b16 %v3442, %v3436
        %v5435 = vpack.c.b16 %v3443, %v3437
        %v5436 = vpack.c.b16 %v3444, %v3438
        %v5437 = vpack.c.b16 %v3445, %v3439
        %v5438 = vpack.c.b16 %v3446, %v3440
        %v5439 = vpack.c.b16 %v3447, %v3441
        %v5440 = vpack.c.b16 %v3454, %v3448
        %v5441 = vpack.c.b16 %v3455, %v3449
        %v5442 = vpack.c.b16 %v3456, %v3450
        %v5443 = vpack.c.b16 %v3457, %v3451
        %v5444 = vpack.c.b16 %v3458, %v3452
        %v5445 = vpack.c.b16 %v3459, %v3453
        %v5446 = vpack.c.b16 %v3466, %v3460
        %v5447 = vpack.c.b16 %v3467, %v3461
        %v5448 = vpack.c.b16 %v3468, %v3462
        %v5449 = vpack.c.b16 %v3469, %v3463
        %v5450 = vpack.c.b16 %v3470, %v3464
        %v5451 = vpack.c.b16 %v3471, %v3465
        %v5452 = vpack.c.b16 %v3478, %v3472
        %v5453 = vpack.c.b16 %v3479, %v3473
        %v5454 = vpack.c.b16 %v3480, %v3474
        %v5455 = vpack.c.b16 %v3481, %v3475
        %v5456 = vpack.c.b16 %v3482, %v3476
        %v5457 = vpack.c.b16 %v3483, %v3477
        %v5458 = vpack.c.b16 %v3490, %v3484
        %v5459 = vpack.c.b16 %v3491, %v3485
        %v5460 = vpack.c.b16 %v3492, %v3486
        %v5461 = vpack.c.b16 %v3493, %v3487
        %v5462 = vpack.c.b16 %v3494, %v3488
        %v5463 = vpack.c.b16 %v3495, %v3489
        %v5464 = vpack.c.b16 %v3502, %v3496
        %v5465 = vpack.c.b16 %v3503, %v3497
        %v5466 = vpack.c.b16 %v3504, %v3498
        %v5467 = vpack.c.b16 %v3505, %v3499
        %v5468 = vpack.c.b16 %v3506, %v3500
        %v5469 = vpack.c.b16 %v3507, %v3501
        %v5470 = vpack.c.b16 %v3514, %v3508
        %v5471 = vpack.c.b16 %v3515, %v3509
        %v5472 = vpack.c.b16 %v3516, %v3510
        %v5473 = vpack.c.b16 %v3517, %v3511
        %v5474 = vpack.c.b16 %v3518, %v3512
        %v5475 = vpack.c.b16 %v3519, %v3513
        %v5476 = vpack.c.b16 %v3526, %v3520
        %v5477 = vpack.c.b16 %v3527, %v3521
        %v5478 = vpack.c.b16 %v3528, %v3522
        %v5479 = vpack.c.b16 %v3529, %v3523
        %v5480 = vpack.c.b16 %v3530, %v3524
        %v5481 = vpack.c.b16 %v3531, %v3525
        %v5482 = vpack.c.b16 %v3538, %v3532
        %v5483 = vpack.c.b16 %v3539, %v3533
        %v5484 = vpack.c.b16 %v3540, %v3534
        %v5485 = vpack.c.b16 %v3541, %v3535
        %v5486 = vpack.c.b16 %v3542, %v3536
        %v5487 = vpack.c.b16 %v3543, %v3537
        %v5488 = vpack.c.b16 %v3550, %v3544
        %v5489 = vpack.c.b16 %v3551, %v3545
        %v5490 = vpack.c.b16 %v3552, %v3546
        %v5491 = vpack.c.b16 %v3553, %v3547
        %v5492 = vpack.c.b16 %v3554, %v3548
        %v5493 = vpack.c.b16 %v3555, %v3549
        %v5494 = vpack.c.b16 %v3562, %v3556
        %v5495 = vpack.c.b16 %v3563, %v3557
        %v5496 = vpack.c.b16 %v3564, %v3558
        %v5497 = vpack.c.b16 %v3565, %v3559
        %v5498 = vpack.c.b16 %v3566, %v3560
        %v5499 = vpack.c.b16 %v3567, %v3561
        %v5500 = vpack.c.b16 %v3574, %v3568
        %v5501 = vpack.c.b16 %v3575, %v3569
        %v5502 = vpack.c.b16 %v3576, %v3570
        %v5503 = vpack.c.b16 %v3577, %v3571
        %v5504 = vpack.c.b16 %v3578, %v3572
        %v5505 = vpack.c.b16 %v3579, %v3573
        %v5506 = vpack.c.b16 %v3586, %v3580
        %v5507 = vpack.c.b16 %v3587, %v3581
        %v5508 = vpack.c.b16 %v3588, %v3582
        %v5509 = vpack.c.b16 %v3589, %v3583
        %v5510 = vpack.c.b16 %v3590, %v3584
        %v5511 = vpack.c.b16 %v3591, %v3585
        %v5512 = vpack.c.b16 %v3598, %v3592
        %v5513 = vpack.c.b16 %v3599, %v3593
        %v5514 = vpack.c.b16 %v3600, %v3594
        %v5515 = vpack.c.b16 %v3601, %v3595
        %v5516 = vpack.c.b16 %v3602, %v3596
        %v5517 = vpack.c.b16 %v3603, %v3597
        %v5518 = vpack.c.b16 %v3610, %v3604
        %v5519 = vpack.c.b16 %v3611, %v3605
        %v5520 = vpack.c.b16 %v3612, %v3606
        %v5521 = vpack.c.b16 %v3613, %v3607
        %v5522 = vpack.c.b16 %v3614, %v3608
        %v5523 = vpack.c.b16 %v3615, %v3609
        %v5524 = vpack.c.b16 %v3622, %v3616
        %v5525 = vpack.c.b16 %v3623, %v3617
        %v5526 = vpack.c.b16 %v3624, %v3618
        %v5527 = vpack.c.b16 %v3625, %v3619
        %v5528 = vpack.c.b16 %v3626, %v3620
        %v5529 = vpack.c.b16 %v3627, %v3621
        %v5530 = vpack.c.b16 %v3634, %v3628
        %v5531 = vpack.c.b16 %v3635, %v3629
        %v5532 = vpack.c.b16 %v3636, %v3630
        %v5533 = vpack.c.b16 %v3637, %v3631
        %v5534 = vpack.c.b16 %v3638, %v3632
        %v5535 = vpack.c.b16 %v3639, %v3633
        %v5536 = vpack.c.b16 %v3646, %v3640
        %v5537 = vpack.c.b16 %v3647, %v3641
        %v5538 = vpack.c.b16 %v3648, %v3642
        %v5539 = vpack.c.b16 %v3649, %v3643
        %v5540 = vpack.c.b16 %v3650, %v3644
        %v5541 = vpack.c.b16 %v3651, %v3645
        %v5542 = vpack.c.b16 %v3658, %v3652
        %v5543 = vpack.c.b16 %v3659, %v3653
        %v5544 = vpack.c.b16 %v3660, %v3654
        %v5545 = vpack.c.b16 %v3661, %v3655
        %v5546 = vpack.c.b16 %v3662, %v3656
        %v5547 = vpack.c.b16 %v3663, %v3657
        %v5548 = vpack.c.b16 %v3670, %v3664
        %v5549 = vpack.c.b16 %v3671, %v3665
        %v5550 = vpack.c.b16 %v3672, %v3666
        %v5551 = vpack.c.b16 %v3673, %v3667
        %v5552 = vpack.c.b16 %v3674, %v3668
        %v5553 = vpack.c.b16 %v3675, %v3669
        %v5554 = vpack.c.b16 %v3682, %v3676
        %v5555 = vpack.c.b16 %v3683, %v3677
        %v5556 = vpack.c.b16 %v3684, %v3678
        %v5557 = vpack.c.b16 %v3685, %v3679
        %v5558 = vpack.c.b16 %v3686, %v3680
        %v5559 = vpack.c.b16 %v3687, %v3681
        %v5560 = vpack.c.b16 %v3694, %v3688
        %v5561 = vpack.c.b16 %v3695, %v3689
        %v5562 = vpack.c.b16 %v3696, %v3690
        %v5563 = vpack.c.b16 %v3697, %v3691
        %v5564 = vpack.c.b16 %v3698, %v3692
        %v5565 = vpack.c.b16 %v3699, %v3693
        %v5566 = vpack.c.b16 %v3706, %v3700
        %v5567 = vpack.c.b16 %v3707, %v3701
        %v5568 = vpack.c.b16 %v3708, %v3702
        %v5569 = vpack.c.b16 %v3709, %v3703
        %v5570 = vpack.c.b16 %v3710, %v3704
        %v5571 = vpack.c.b16 %v3711, %v3705
        %v5572 = vpack.c.b16 %v3718, %v3712
        %v5573 = vpack.c.b16 %v3719, %v3713
        %v5574 = vpack.c.b16 %v3720, %v3714
        %v5575 = vpack.c.b16 %v3721, %v3715
        %v5576 = vpack.c.b16 %v3722, %v3716
        %v5577 = vpack.c.b16 %v3723, %v3717
        %v5578 = vpack.c.b16 %v3730, %v3724
        %v5579 = vpack.c.b16 %v3731, %v3725
        %v5580 = vpack.c.b16 %v3732, %v3726
        %v5581 = vpack.c.b16 %v3733, %v3727
        %v5582 = vpack.c.b16 %v3734, %v3728
        %v5583 = vpack.c.b16 %v3735, %v3729
        %v5584 = vpack.c.b16 %v3742, %v3736
        %v5585 = vpack.c.b16 %v3743, %v3737
        %v5586 = vpack.c.b16 %v3744, %v3738
        %v5587 = vpack.c.b16 %v3745, %v3739
        %v5588 = vpack.c.b16 %v3746, %v3740
        %v5589 = vpack.c.b16 %v3747, %v3741
        %v5590 = vpack.c.b16 %v3754, %v3748
        %v5591 = vpack.c.b16 %v3755, %v3749
        %v5592 = vpack.c.b16 %v3756, %v3750
        %v5593 = vpack.c.b16 %v3757, %v3751
        %v5594 = vpack.c.b16 %v3758, %v3752
        %v5595 = vpack.c.b16 %v3759, %v3753
        %v5596 = vpack.c.b16 %v3766, %v3760
        %v5597 = vpack.c.b16 %v3767, %v3761
        %v5598 = vpack.c.b16 %v3768, %v3762
        %v5599 = vpack.c.b16 %v3769, %v3763
        %v5600 = vpack.c.b16 %v3770, %v3764
        %v5601 = vpack.c.b16 %v3771, %v3765
        %v5602 = vpack.c.b16 %v3778, %v3772
        %v5603 = vpack.c.b16 %v3779, %v3773
        %v5604 = vpack.c.b16 %v3780, %v3774
        %v5605 = vpack.c.b16 %v3781, %v3775
        %v5606 = vpack.c.b16 %v3782, %v3776
        %v5607 = vpack.c.b16 %v3783, %v3777
        %v5608 = vpack.c.b16 %v3790, %v3784
        %v5609 = vpack.c.b16 %v3791, %v3785
        %v5610 = vpack.c.b16 %v3792, %v3786
        %v5611 = vpack.c.b16 %v3793, %v3787
        %v5612 = vpack.c.b16 %v3794, %v3788
        %v5613 = vpack.c.b16 %v3795, %v3789
        %v5614 = vpack.c.b16 %v3802, %v3796
        %v5615 = vpack.c.b16 %v3803, %v3797
        %v5616 = vpack.c.b16 %v3804, %v3798
        %v5617 = vpack.c.b16 %v3805, %v3799
        %v5618 = vpack.c.b16 %v3806, %v3800
        %v5619 = vpack.c.b16 %v3807, %v3801
        %v5620 = vpack.c.b16 %v3814, %v3808
        %v5621 = vpack.c.b16 %v3815, %v3809
        %v5622 = vpack.c.b16 %v3816, %v3810
        %v5623 = vpack.c.b16 %v3817, %v3811
        %v5624 = vpack.c.b16 %v3818, %v3812
        %v5625 = vpack.c.b16 %v3819, %v3813
        %v5626 = vpack.c.b16 %v3826, %v3820
        %v5627 = vpack.c.b16 %v3827, %v3821
        %v5628 = vpack.c.b16 %v3828, %v3822
        %v5629 = vpack.c.b16 %v3829, %v3823
        %v5630 = vpack.c.b16 %v3830, %v3824
        %v5631 = vpack.c.b16 %v3831, %v3825
        %v5632 = vpack.c.b16 %v3838, %v3832
        %v5633 = vpack.c.b16 %v3839, %v3833
        %v5634 = vpack.c.b16 %v3840, %v3834
        %v5635 = vpack.c.b16 %v3841, %v3835
        %v5636 = vpack.c.b16 %v3842, %v3836
        %v5637 = vpack.c.b16 %v3843, %v3837
        %v5638 = vpack.c.b16 %v3850, %v3844
        %v5639 = vpack.c.b16 %v3851, %v3845
        %v5640 = vpack.c.b16 %v3852, %v3846
        %v5641 = vpack.c.b16 %v3853, %v3847
        %v5642 = vpack.c.b16 %v3854, %v3848
        %v5643 = vpack.c.b16 %v3855, %v3849
        %v5644 = vpack.c.b16 %v3862, %v3856
        %v5645 = vpack.c.b16 %v3863, %v3857
        %v5646 = vpack.c.b16 %v3864, %v3858
        %v5647 = vpack.c.b16 %v3865, %v3859
        %v5648 = vpack.c.b16 %v3866, %v3860
        %v5649 = vpack.c.b16 %v3867, %v3861
        %v5650 = vpack.c.b16 %v3874, %v3868
        %v5651 = vpack.c.b16 %v3875, %v3869
        %v5652 = vpack.c.b16 %v3876, %v3870
        %v5653 = vpack.c.b16 %v3877, %v3871
        %v5654 = vpack.c.b16 %v3878, %v3872
        %v5655 = vpack.c.b16 %v3879, %v3873
        %v5656 = vpack.c.b16 %v3886, %v3880
        %v5657 = vpack.c.b16 %v3887, %v3881
        %v5658 = vpack.c.b16 %v3888, %v3882
        %v5659 = vpack.c.b16 %v3889, %v3883
        %v5660 = vpack.c.b16 %v3890, %v3884
        %v5661 = vpack.c.b16 %v3891, %v3885
        %v5662 = vpack.c.b16 %v3898, %v3892
        %v5663 = vpack.c.b16 %v3899, %v3893
        %v5664 = vpack.c.b16 %v3900, %v3894
        %v5665 = vpack.c.b16 %v3901, %v3895
        %v5666 = vpack.c.b16 %v3902, %v3896
        %v5667 = vpack.c.b16 %v3903, %v3897
        %v5668 = vpack.c.b16 %v3910, %v3904
        %v5669 = vpack.c.b16 %v3911, %v3905
        %v5670 = vpack.c.b16 %v3912, %v3906
        %v5671 = vpack.c.b16 %v3913, %v3907
        %v5672 = vpack.c.b16 %v3914, %v3908
        %v5673 = vpack.c.b16 %v3915, %v3909
        %v5674 = vpack.c.b16 %v3922, %v3916
        %v5675 = vpack.c.b16 %v3923, %v3917
        %v5676 = vpack.c.b16 %v3924, %v3918
        %v5677 = vpack.c.b16 %v3925, %v3919
        %v5678 = vpack.c.b16 %v3926, %v3920
        %v5679 = vpack.c.b16 %v3927, %v3921
        %v5680 = vpack.c.b16 %v3934, %v3928
        %v5681 = vpack.c.b16 %v3935, %v3929
        %v5682 = vpack.c.b16 %v3936, %v3930
        %v5683 = vpack.c.b16 %v3937, %v3931
        %v5684 = vpack.c.b16 %v3938, %v3932
        %v5685 = vpack.c.b16 %v3939, %v3933
        %v5686 = vpack.c.b16 %v3946, %v3940
        %v5687 = vpack.c.b16 %v3947, %v3941
        %v5688 = vpack.c.b16 %v3948, %v3942
        %v5689 = vpack.c.b16 %v3949, %v3943
        %v5690 = vpack.c.b16 %v3950, %v3944
        %v5691 = vpack.c.b16 %v3951, %v3945
        %v5692 = vpack.c.b16 %v3958, %v3952
        %v5693 = vpack.c.b16 %v3959, %v3953
        %v5694 = vpack.c.b16 %v3960, %v3954
        %v5695 = vpack.c.b16 %v3961, %v3955
        %v5696 = vpack.c.b16 %v3962, %v3956
        %v5697 = vpack.c.b16 %v3963, %v3957
        %v5698 = vpack.c.b16 %v3970, %v3964
        %v5699 = vpack.c.b16 %v3971, %v3965
        %v5700 = vpack.c.b16 %v3972, %v3966
        %v5701 = vpack.c.b16 %v3973, %v3967
        %v5702 = vpack.c.b16 %v3974, %v3968
        %v5703 = vpack.c.b16 %v3975, %v3969
        %v5704 = vpack.c.b16 %v3982, %v3976
        %v5705 = vpack.c.b16 %v3983, %v3977
        %v5706 = vpack.c.b16 %v3984, %v3978
        %v5707 = vpack.c.b16 %v3985, %v3979
        %v5708 = vpack.c.b16 %v3986, %v3980
        %v5709 = vpack.c.b16 %v3987, %v3981
        %v5710 = vpack.c.b16 %v3994, %v3988
        %v5711 = vpack.c.b16 %v3995, %v3989
        %v5712 = vpack.c.b16 %v3996, %v3990
        %v5713 = vpack.c.b16 %v3997, %v3991
        %v5714 = vpack.c.b16 %v3998, %v3992
        %v5715 = vpack.c.b16 %v3999, %v3993
        %v5716 = vpack.c.b16 %v4006, %v4000
        %v5717 = vpack.c.b16 %v4007, %v4001
        %v5718 = vpack.c.b16 %v4008, %v4002
        %v5719 = vpack.c.b16 %v4009, %v4003
        %v5720 = vpack.c.b16 %v4010, %v4004
        %v5721 = vpack.c.b16 %v4011, %v4005
        %v5722 = vpack.c.b16 %v4018, %v4012
        %v5723 = vpack.c.b16 %v4019, %v4013
        %v5724 = vpack.c.b16 %v4020, %v4014
        %v5725 = vpack.c.b16 %v4021, %v4015
        %v5726 = vpack.c.b16 %v4022, %v4016
        %v5727 = vpack.c.b16 %v4023, %v4017
        %v5728 = vpack.c.b16 %v4030, %v4024
        %v5729 = vpack.c.b16 %v4031, %v4025
        %v5730 = vpack.c.b16 %v4032, %v4026
        %v5731 = vpack.c.b16 %v4033, %v4027
        %v5732 = vpack.c.b16 %v4034, %v4028
        %v5733 = vpack.c.b16 %v4035, %v4029
        %v5734 = vpack.c.b16 %v4042, %v4036
        %v5735 = vpack.c.b16 %v4043, %v4037
        %v5736 = vpack.c.b16 %v4044, %v4038
        %v5737 = vpack.c.b16 %v4045, %v4039
        %v5738 = vpack.c.b16 %v4046, %v4040
        %v5739 = vpack.c.b16 %v4047, %v4041
        %v5740 = vpack.c.b16 %v4054, %v4048
        %v5741 = vpack.c.b16 %v4055, %v4049
        %v5742 = vpack.c.b16 %v4056, %v4050
        %v5743 = vpack.c.b16 %v4057, %v4051
        %v5744 = vpack.c.b16 %v4058, %v4052
        %v5745 = vpack.c.b16 %v4059, %v4053
        %v5746 = vpack.c.b16 %v4066, %v4060
        %v5747 = vpack.c.b16 %v4067, %v4061
        %v5748 = vpack.c.b16 %v4068, %v4062
        %v5749 = vpack.c.b16 %v4069, %v4063
        %v5750 = vpack.c.b16 %v4070, %v4064
        %v5751 = vpack.c.b16 %v4071, %v4065
        %v5752 = vpack.c.b16 %v4078, %v4072
        %v5753 = vpack.c.b16 %v4079, %v4073
        %v5754 = vpack.c.b16 %v4080, %v4074
        %v5755 = vpack.c.b16 %v4081, %v4075
        %v5756 = vpack.c.b16 %v4082, %v4076
        %v5757 = vpack.c.b16 %v4083, %v4077
        %v5758 = vpack.c.b16 %v4090, %v4084
        %v5759 = vpack.c.b16 %v4091, %v4085
        %v5760 = vpack.c.b16 %v4092, %v4086
        %v5761 = vpack.c.b16 %v4093, %v4087
        %v5762 = vpack.c.b16 %v4094, %v4088
        %v5763 = vpack.c.b16 %v4095, %v4089
        %v5764 = vpack.c.b16 %v4102, %v4096
        %v5765 = vpack.c.b16 %v4103, %v4097
        %v5766 = vpack.c.b16 %v4104, %v4098
        %v5767 = vpack.c.b16 %v4105, %v4099
        %v5768 = vpack.c.b16 %v4106, %v4100
        %v5769 = vpack.c.b16 %v4107, %v4101
        %v5770 = vpack.c.b16 %v4114, %v4108
        %v5771 = vpack.c.b16 %v4115, %v4109
        %v5772 = vpack.c.b16 %v4116, %v4110
        %v5773 = vpack.c.b16 %v4117, %v4111
        %v5774 = vpack.c.b16 %v4118, %v4112
        %v5775 = vpack.c.b16 %v4119, %v4113
        %v5776 = vpack.c.b16 %v4126, %v4120
        %v5777 = vpack.c.b16 %v4127, %v4121
        %v5778 = vpack.c.b16 %v4128, %v4122
        %v5779 = vpack.c.b16 %v4129, %v4123
        %v5780 = vpack.c.b16 %v4130, %v4124
        %v5781 = vpack.c.b16 %v4131, %v4125
        %v5782 = vpack.c.b16 %v4138, %v4132
        %v5783 = vpack.c.b16 %v4139, %v4133
        %v5784 = vpack.c.b16 %v4140, %v4134
        %v5785 = vpack.c.b16 %v4141, %v4135
        %v5786 = vpack.c.b16 %v4142, %v4136
        %v5787 = vpack.c.b16 %v4143, %v4137
        %v5788 = vpack.c.b16 %v4150, %v4144
        %v5789 = vpack.c.b16 %v4151, %v4145
        %v5790 = vpack.c.b16 %v4152, %v4146
        %v5791 = vpack.c.b16 %v4153, %v4147
        %v5792 = vpack.c.b16 %v4154, %v4148
        %v5793 = vpack.c.b16 %v4155, %v4149
        %v5794 = vpack.c.b16 %v4162, %v4156
        %v5795 = vpack.c.b16 %v4163, %v4157
        %v5796 = vpack.c.b16 %v4164, %v4158
        %v5797 = vpack.c.b16 %v4165, %v4159
        %v5798 = vpack.c.b16 %v4166, %v4160
        %v5799 = vpack.c.b16 %v4167, %v4161
        %v5800 = vpack.c.b16 %v4174, %v4168
        %v5801 = vpack.c.b16 %v4175, %v4169
        %v5802 = vpack.c.b16 %v4176, %v4170
        %v5803 = vpack.c.b16 %v4177, %v4171
        %v5804 = vpack.c.b16 %v4178, %v4172
        %v5805 = vpack.c.b16 %v4179, %v4173
        %v5806 = vpack.c.b16 %v4186, %v4180
        %v5807 = vpack.c.b16 %v4187, %v4181
        %v5808 = vpack.c.b16 %v4188, %v4182
        %v5809 = vpack.c.b16 %v4189, %v4183
        %v5810 = vpack.c.b16 %v4190, %v4184
        %v5811 = vpack.c.b16 %v4191, %v4185
        %v5812 = vpack.c.b16 %v4198, %v4192
        %v5813 = vpack.c.b16 %v4199, %v4193
        %v5814 = vpack.c.b16 %v4200, %v4194
        %v5815 = vpack.c.b16 %v4201, %v4195
        %v5816 = vpack.c.b16 %v4202, %v4196
        %v5817 = vpack.c.b16 %v4203, %v4197
        %v5818 = vpack.c.b16 %v4210, %v4204
        %v5819 = vpack.c.b16 %v4211, %v4205
        %v5820 = vpack.c.b16 %v4212, %v4206
        %v5821 = vpack.c.b16 %v4213, %v4207
        %v5822 = vpack.c.b16 %v4214, %v4208
        %v5823 = vpack.c.b16 %v4215, %v4209
        %v5824 = vpack.c.b16 %v4222, %v4216
        %v5825 = vpack.c.b16 %v4223, %v4217
        %v5826 = vpack.c.b16 %v4224, %v4218
        %v5827 = vpack.c.b16 %v4225, %v4219
        %v5828 = vpack.c.b16 %v4226, %v4220
        %v5829 = vpack.c.b16 %v4227, %v4221
        %v5830 = vpack.c.b16 %v4234, %v4228
        %v5831 = vpack.c.b16 %v4235, %v4229
        %v5832 = vpack.c.b16 %v4236, %v4230
        %v5833 = vpack.c.b16 %v4237, %v4231
        %v5834 = vpack.c.b16 %v4238, %v4232
        %v5835 = vpack.c.b16 %v4239, %v4233
        %v5836 = vpack.c.b16 %v4246, %v4240
        %v5837 = vpack.c.b16 %v4247, %v4241
        %v5838 = vpack.c.b16 %v4248, %v4242
        %v5839 = vpack.c.b16 %v4249, %v4243
        %v5840 = vpack.c.b16 %v4250, %v4244
        %v5841 = vpack.c.b16 %v4251, %v4245
        %v5842 = vpack.c.b16 %v4258, %v4252
        %v5843 = vpack.c.b16 %v4259, %v4253
        %v5844 = vpack.c.b16 %v4260, %v4254
        %v5845 = vpack.c.b16 %v4261, %v4255
        %v5846 = vpack.c.b16 %v4262, %v4256
        %v5847 = vpack.c.b16 %v4263, %v4257
        %v5848 = vpack.c.b16 %v4270, %v4264
        %v5849 = vpack.c.b16 %v4271, %v4265
        %v5850 = vpack.c.b16 %v4272, %v4266
        %v5851 = vpack.c.b16 %v4273, %v4267
        %v5852 = vpack.c.b16 %v4274, %v4268
        %v5853 = vpack.c.b16 %v4275, %v4269
        %v5854 = vpack.c.b16 %v4282, %v4276
        %v5855 = vpack.c.b16 %v4283, %v4277
        %v5856 = vpack.c.b16 %v4284, %v4278
        %v5857 = vpack.c.b16 %v4285, %v4279
        %v5858 = vpack.c.b16 %v4286, %v4280
        %v5859 = vpack.c.b16 %v4287, %v4281
        %v5860 = vpack.c.b16 %v4294, %v4288
        %v5861 = vpack.c.b16 %v4295, %v4289
        %v5862 = vpack.c.b16 %v4296, %v4290
        %v5863 = vpack.c.b16 %v4297, %v4291
        %v5864 = vpack.c.b16 %v4298, %v4292
        %v5865 = vpack.c.b16 %v4299, %v4293
        %v5866 = vpack.c.b16 %v4306, %v4300
        %v5867 = vpack.c.b16 %v4307, %v4301
        %v5868 = vpack.c.b16 %v4308, %v4302
        %v5869 = vpack.c.b16 %v4309, %v4303
        %v5870 = vpack.c.b16 %v4310, %v4304
        %v5871 = vpack.c.b16 %v4311, %v4305
        %v5872 = vpack.c.b16 %v4318, %v4312
        %v5873 = vpack.c.b16 %v4319, %v4313
        %v5874 = vpack.c.b16 %v4320, %v4314
        %v5875 = vpack.c.b16 %v4321, %v4315
        %v5876 = vpack.c.b16 %v4322, %v4316
        %v5877 = vpack.c.b16 %v4323, %v4317
        %v5878 = vpack.c.b16 %v4330, %v4324
        %v5879 = vpack.c.b16 %v4331, %v4325
        %v5880 = vpack.c.b16 %v4332, %v4326
        %v5881 = vpack.c.b16 %v4333, %v4327
        %v5882 = vpack.c.b16 %v4334, %v4328
        %v5883 = vpack.c.b16 %v4335, %v4329
        %v5884 = vpack.c.b16 %v4342, %v4336
        %v5885 = vpack.c.b16 %v4343, %v4337
        %v5886 = vpack.c.b16 %v4344, %v4338
        %v5887 = vpack.c.b16 %v4345, %v4339
        %v5888 = vpack.c.b16 %v4346, %v4340
        %v5889 = vpack.c.b16 %v4347, %v4341
        %v5890 = vpack.c.b16 %v4354, %v4348
        %v5891 = vpack.c.b16 %v4355, %v4349
        %v5892 = vpack.c.b16 %v4356, %v4350
        %v5893 = vpack.c.b16 %v4357, %v4351
        %v5894 = vpack.c.b16 %v4358, %v4352
        %v5895 = vpack.c.b16 %v4359, %v4353
        %v5896 = vpack.c.b16 %v4366, %v4360
        %v5897 = vpack.c.b16 %v4367, %v4361
        %v5898 = vpack.c.b16 %v4368, %v4362
        %v5899 = vpack.c.b16 %v4369, %v4363
        %v5900 = vpack.c.b16 %v4370, %v4364
        %v5901 = vpack.c.b16 %v4371, %v4365
        %v5902 = vpack.c.b16 %v4378, %v4372
        %v5903 = vpack.c.b16 %v4379, %v4373
        %v5904 = vpack.c.b16 %v4380, %v4374
        %v5905 = vpack.c.b16 %v4381, %v4375
        %v5906 = vpack.c.b16 %v4382, %v4376
        %v5907 = vpack.c.b16 %v4383, %v4377
        %v5908 = vpack.c.b16 %v4390, %v4384
        %v5909 = vpack.c.b16 %v4391, %v4385
        %v5910 = vpack.c.b16 %v4392, %v4386
        %v5911 = vpack.c.b16 %v4393, %v4387
        %v5912 = vpack.c.b16 %v4394, %v4388
        %v5913 = vpack.c.b16 %v4395, %v4389
        %v5914 = vpack.c.b16 %v4402, %v4396
        %v5915 = vpack.c.b16 %v4403, %v4397
        %v5916 = vpack.c.b16 %v4404, %v4398
        %v5917 = vpack.c.b16 %v4405, %v4399
        %v5918 = vpack.c.b16 %v4406, %v4400
        %v5919 = vpack.c.b16 %v4407, %v4401
        %v5920 = vpack.c.b16 %v4414, %v4408
        %v5921 = vpack.c.b16 %v4415, %v4409
        %v5922 = vpack.c.b16 %v4416, %v4410
        %v5923 = vpack.c.b16 %v4417, %v4411
        %v5924 = vpack.c.b16 %v4418, %v4412
        %v5925 = vpack.c.b16 %v4419, %v4413
        %v5926 = vpack.c.b16 %v4426, %v4420
        %v5927 = vpack.c.b16 %v4427, %v4421
        %v5928 = vpack.c.b16 %v4428, %v4422
        %v5929 = vpack.c.b16 %v4429, %v4423
        %v5930 = vpack.c.b16 %v4430, %v4424
        %v5931 = vpack.c.b16 %v4431, %v4425
        %v5932 = vpack.c.b16 %v4438, %v4432
        %v5933 = vpack.c.b16 %v4439, %v4433
        %v5934 = vpack.c.b16 %v4440, %v4434
        %v5935 = vpack.c.b16 %v4441, %v4435
        %v5936 = vpack.c.b16 %v4442, %v4436
        %v5937 = vpack.c.b16 %v4443, %v4437
        %v5938 = vpack.c.b16 %v4450, %v4444
        %v5939 = vpack.c.b16 %v4451, %v4445
        %v5940 = vpack.c.b16 %v4452, %v4446
        %v5941 = vpack.c.b16 %v4453, %v4447
        %v5942 = vpack.c.b16 %v4454, %v4448
        %v5943 = vpack.c.b16 %v4455, %v4449
        %v5944 = vpack.c.b16 %v4462, %v4456
        %v5945 = vpack.c.b16 %v4463, %v4457
        %v5946 = vpack.c.b16 %v4464, %v4458
        %v5947 = vpack.c.b16 %v4465, %v4459
        %v5948 = vpack.c.b16 %v4466, %v4460
        %v5949 = vpack.c.b16 %v4467, %v4461
        %v5950 = vpack.c.b16 %v4474, %v4468
        %v5951 = vpack.c.b16 %v4475, %v4469
        %v5952 = vpack.c.b16 %v4476, %v4470
        %v5953 = vpack.c.b16 %v4477, %v4471
        %v5954 = vpack.c.b16 %v4478, %v4472
        %v5955 = vpack.c.b16 %v4479, %v4473
        %v5956 = vpack.c.b16 %v4486, %v4480
        %v5957 = vpack.c.b16 %v4487, %v4481
        %v5958 = vpack.c.b16 %v4488, %v4482
        %v5959 = vpack.c.b16 %v4489, %v4483
        %v5960 = vpack.c.b16 %v4490, %v4484
        %v5961 = vpack.c.b16 %v4491, %v4485
        %v5962 = vpack.c.b16 %v4498, %v4492
        %v5963 = vpack.c.b16 %v4499, %v4493
        %v5964 = vpack.c.b16 %v4500, %v4494
        %v5965 = vpack.c.b16 %v4501, %v4495
        %v5966 = vpack.c.b16 %v4502, %v4496
        %v5967 = vpack.c.b16 %v4503, %v4497
        %v5968 = vpack.c.b16 %v4510, %v4504
        %v5969 = vpack.c.b16 %v4511, %v4505
        %v5970 = vpack.c.b16 %v4512, %v4506
        %v5971 = vpack.c.b16 %v4513, %v4507
        %v5972 = vpack.c.b16 %v4514, %v4508
        %v5973 = vpack.c.b16 %v4515, %v4509
        %v5974 = vpack.c.b16 %v4522, %v4516
        %v5975 = vpack.c.b16 %v4523, %v4517
        %v5976 = vpack.c.b16 %v4524, %v4518
        %v5977 = vpack.c.b16 %v4525, %v4519
        %v5978 = vpack.c.b16 %v4526, %v4520
        %v5979 = vpack.c.b16 %v4527, %v4521
        %v5980 = vpack.c.b16 %v4534, %v4528
        %v5981 = vpack.c.b16 %v4535, %v4529
        %v5982 = vpack.c.b16 %v4536, %v4530
        %v5983 = vpack.c.b16 %v4537, %v4531
        %v5984 = vpack.c.b16 %v4538, %v4532
        %v5985 = vpack.c.b16 %v4539, %v4533
        %v5986 = vpack.c.b16 %v4546, %v4540
        %v5987 = vpack.c.b16 %v4547, %v4541
        %v5988 = vpack.c.b16 %v4548, %v4542
        %v5989 = vpack.c.b16 %v4549, %v4543
        %v5990 = vpack.c.b16 %v4550, %v4544
        %v5991 = vpack.c.b16 %v4551, %v4545
        %v5992 = vpack.c.b16 %v4558, %v4552
        %v5993 = vpack.c.b16 %v4559, %v4553
        %v5994 = vpack.c.b16 %v4560, %v4554
        %v5995 = vpack.c.b16 %v4561, %v4555
        %v5996 = vpack.c.b16 %v4562, %v4556
        %v5997 = vpack.c.b16 %v4563, %v4557
        %v5998 = vpack.c.b16 %v4570, %v4564
        %v5999 = vpack.c.b16 %v4571, %v4565
        %v6000 = vpack.c.b16 %v4572, %v4566
        %v6001 = vpack.c.b16 %v4573, %v4567
        %v6002 = vpack.c.b16 %v4574, %v4568
        %v6003 = vpack.c.b16 %v4575, %v4569
        %v6004 = vpack.c.b16 %v4582, %v4576
        %v6005 = vpack.c.b16 %v4583, %v4577
        %v6006 = vpack.c.b16 %v4584, %v4578
        %v6007 = vpack.c.b16 %v4585, %v4579
        %v6008 = vpack.c.b16 %v4586, %v4580
        %v6009 = vpack.c.b16 %v4587, %v4581
        %v6010 = vpack.c.b16 %v4594, %v4588
        %v6011 = vpack.c.b16 %v4595, %v4589
        %v6012 = vpack.c.b16 %v4596, %v4590
        %v6013 = vpack.c.b16 %v4597, %v4591
        %v6014 = vpack.c.b16 %v4598, %v4592
        %v6015 = vpack.c.b16 %v4599, %v4593
        %v6016 = vpack.c.b16 %v4606, %v4600
        %v6017 = vpack.c.b16 %v4607, %v4601
        %v6018 = vpack.c.b16 %v4608, %v4602
        %v6019 = vpack.c.b16 %v4609, %v4603
        %v6020 = vpack.c.b16 %v4610, %v4604
        %v6021 = vpack.c.b16 %v4611, %v4605
        %v6022 = vpack.c.b16 %v4618, %v4612
        %v6023 = vpack.c.b16 %v4619, %v4613
        %v6024 = vpack.c.b16 %v4620, %v4614
        %v6025 = vpack.c.b16 %v4621, %v4615
        %v6026 = vpack.c.b16 %v4622, %v4616
        %v6027 = vpack.c.b16 %v4623, %v4617
        %v6028 = vpack.c.b16 %v4630, %v4624
        %v6029 = vpack.c.b16 %v4631, %v4625
        %v6030 = vpack.c.b16 %v4632, %v4626
        %v6031 = vpack.c.b16 %v4633, %v4627
        %v6032 = vpack.c.b16 %v4634, %v4628
        %v6033 = vpack.c.b16 %v4635, %v4629
        %v6034 = vpack.c.b16 %v4642, %v4636
        %v6035 = vpack.c.b16 %v4643, %v4637
        %v6036 = vpack.c.b16 %v4644, %v4638
        %v6037 = vpack.c.b16 %v4645, %v4639
        %v6038 = vpack.c.b16 %v4646, %v4640
        %v6039 = vpack.c.b16 %v4647, %v4641
        %v6040 = vpack.c.b16 %v4654, %v4648
        %v6041 = vpack.c.b16 %v4655, %v4649
        %v6042 = vpack.c.b16 %v4656, %v4650
        %v6043 = vpack.c.b16 %v4657, %v4651
        %v6044 = vpack.c.b16 %v4658, %v4652
        %v6045 = vpack.c.b16 %v4659, %v4653
        %v6046 = vpack.c.b16 %v4666, %v4660
        %v6047 = vpack.c.b16 %v4667, %v4661
        %v6048 = vpack.c.b16 %v4668, %v4662
        %v6049 = vpack.c.b16 %v4669, %v4663
        %v6050 = vpack.c.b16 %v4670, %v4664
        %v6051 = vpack.c.b16 %v4671, %v4665
        %v6052 = vpack.c.b16 %v4678, %v4672
        %v6053 = vpack.c.b16 %v4679, %v4673
        %v6054 = vpack.c.b16 %v4680, %v4674
        %v6055 = vpack.c.b16 %v4681, %v4675
        %v6056 = vpack.c.b16 %v4682, %v4676
        %v6057 = vpack.c.b16 %v4683, %v4677
        %v6058 = vpack.c.b16 %v4690, %v4684
        %v6059 = vpack.c.b16 %v4691, %v4685
        %v6060 = vpack.c.b16 %v4692, %v4686
        %v6061 = vpack.c.b16 %v4693, %v4687
        %v6062 = vpack.c.b16 %v4694, %v4688
        %v6063 = vpack.c.b16 %v4695, %v4689
        %v6064 = vpack.c.b16 %v4702, %v4696
        %v6065 = vpack.c.b16 %v4703, %v4697
        %v6066 = vpack.c.b16 %v4704, %v4698
        %v6067 = vpack.c.b16 %v4705, %v4699
        %v6068 = vpack.c.b16 %v4706, %v4700
        %v6069 = vpack.c.b16 %v4707, %v4701
        %v6070 = vpack.c.b16 %v4714, %v4708
        %v6071 = vpack.c.b16 %v4715, %v4709
        %v6072 = vpack.c.b16 %v4716, %v4710
        %v6073 = vpack.c.b16 %v4717, %v4711
        %v6074 = vpack.c.b16 %v4718, %v4712
        %v6075 = vpack.c.b16 %v4719, %v4713
        %v6076 = vpack.c.b16 %v4726, %v4720
        %v6077 = vpack.c.b16 %v4727, %v4721
        %v6078 = vpack.c.b16 %v4728, %v4722
        %v6079 = vpack.c.b16 %v4729, %v4723
        %v6080 = vpack.c.b16 %v4730, %v4724
        %v6081 = vpack.c.b16 %v4731, %v4725
        %v6082 = vpack.c.b16 %v4738, %v4732
        %v6083 = vpack.c.b16 %v4739, %v4733
        %v6084 = vpack.c.b16 %v4740, %v4734
        %v6085 = vpack.c.b16 %v4741, %v4735
        %v6086 = vpack.c.b16 %v4742, %v4736
        %v6087 = vpack.c.b16 %v4743, %v4737
        %v6088 = vpack.c.b16 %v4750, %v4744
        %v6089 = vpack.c.b16 %v4751, %v4745
        %v6090 = vpack.c.b16 %v4752, %v4746
        %v6091 = vpack.c.b16 %v4753, %v4747
        %v6092 = vpack.c.b16 %v4754, %v4748
        %v6093 = vpack.c.b16 %v4755, %v4749
        %v6094 = vpack.c.b16 %v4762, %v4756
        %v6095 = vpack.c.b16 %v4763, %v4757
        %v6096 = vpack.c.b16 %v4764, %v4758
        %v6097 = vpack.c.b16 %v4765, %v4759
        %v6098 = vpack.c.b16 %v4766, %v4760
        %v6099 = vpack.c.b16 %v4767, %v4761
        %v6100 = vpack.c.b16 %v4774, %v4768
        %v6101 = vpack.c.b16 %v4775, %v4769
        %v6102 = vpack.c.b16 %v4776, %v4770
        %v6103 = vpack.c.b16 %v4777, %v4771
        %v6104 = vpack.c.b16 %v4778, %v4772
        %v6105 = vpack.c.b16 %v4779, %v4773
        %v6106 = vpack.c.b16 %v4786, %v4780
        %v6107 = vpack.c.b16 %v4787, %v4781
        %v6108 = vpack.c.b16 %v4788, %v4782
        %v6109 = vpack.c.b16 %v4789, %v4783
        %v6110 = vpack.c.b16 %v4790, %v4784
        %v6111 = vpack.c.b16 %v4791, %v4785
        %v6112 = vpack.c.b16 %v4798, %v4792
        %v6113 = vpack.c.b16 %v4799, %v4793
        %v6114 = vpack.c.b16 %v4800, %v4794
        %v6115 = vpack.c.b16 %v4801, %v4795
        %v6116 = vpack.c.b16 %v4802, %v4796
        %v6117 = vpack.c.b16 %v4803, %v4797
        %v6118 = vpack.c.b16 %v4810, %v4804
        %v6119 = vpack.c.b16 %v4811, %v4805
        %v6120 = vpack.c.b16 %v4812, %v4806
        %v6121 = vpack.c.b16 %v4813, %v4807
        %v6122 = vpack.c.b16 %v4814, %v4808
        %v6123 = vpack.c.b16 %v4815, %v4809
        %v6124 = vpack.c.b16 %v4822, %v4816
        %v6125 = vpack.c.b16 %v4823, %v4817
        %v6126 = vpack.c.b16 %v4824, %v4818
        %v6127 = vpack.c.b16 %v4825, %v4819
        %v6128 = vpack.c.b16 %v4826, %v4820
        %v6129 = vpack.c.b16 %v4827, %v4821
        %v6130 = vpack.c.b16 %v4834, %v4828
        %v6131 = vpack.c.b16 %v4835, %v4829
        %v6132 = vpack.c.b16 %v4836, %v4830
        %v6133 = vpack.c.b16 %v4837, %v4831
        %v6134 = vpack.c.b16 %v4838, %v4832
        %v6135 = vpack.c.b16 %v4839, %v4833
        %v6136 = vpack.c.b16 %v4846, %v4840
        %v6137 = vpack.c.b16 %v4847, %v4841
        %v6138 = vpack.c.b16 %v4848, %v4842
        %v6139 = vpack.c.b16 %v4849, %v4843
        %v6140 = vpack.c.b16 %v4850, %v4844
        %v6141 = vpack.c.b16 %v4851, %v4845
        %v6142 = vpack.c.b16 %v4858, %v4852
        %v6143 = vpack.c.b16 %v4859, %v4853
        %v6144 = vpack.c.b16 %v4860, %v4854
        %v6145 = vpack.c.b16 %v4861, %v4855
        %v6146 = vpack.c.b16 %v4862, %v4856
        %v6147 = vpack.c.b16 %v4863, %v4857
        %v6148 = vpack.c.b16 %v4870, %v4864
        %v6149 = vpack.c.b16 %v4871, %v4865
        %v6150 = vpack.c.b16 %v4872, %v4866
        %v6151 = vpack.c.b16 %v4873, %v4867
        %v6152 = vpack.c.b16 %v4874, %v4868
        %v6153 = vpack.c.b16 %v4875, %v4869
        %v6154 = vpack.c.b16 %v4882, %v4876
        %v6155 = vpack.c.b16 %v4883, %v4877
        %v6156 = vpack.c.b16 %v4884, %v4878
        %v6157 = vpack.c.b16 %v4885, %v4879
        %v6158 = vpack.c.b16 %v4886, %v4880
        %v6159 = vpack.c.b16 %v4887, %v4881
        %v6160 = vpack.c.b16 %v4894, %v4888
        %v6161 = vpack.c.b16 %v4895, %v4889
        %v6162 = vpack.c.b16 %v4896, %v4890
        %v6163 = vpack.c.b16 %v4897, %v4891
        %v6164 = vpack.c.b16 %v4898, %v4892
        %v6165 = vpack.c.b16 %v4899, %v4893
        %v6166 = vpack.c.b16 %v4906, %v4900
        %v6167 = vpack.c.b16 %v4907, %v4901
        %v6168 = vpack.c.b16 %v4908, %v4902
        %v6169 = vpack.c.b16 %v4909, %v4903
        %v6170 = vpack.c.b16 %v4910, %v4904
        %v6171 = vpack.c.b16 %v4911, %v4905
        %v6172 = vpack.c.b16 %v4918, %v4912
        %v6173 = vpack.c.b16 %v4919, %v4913
        %v6174 = vpack.c.b16 %v4920, %v4914
        %v6175 = vpack.c.b16 %v4921, %v4915
        %v6176 = vpack.c.b16 %v4922, %v4916
        %v6177 = vpack.c.b16 %v4923, %v4917
        %v6178 = vpack.c.b16 %v4930, %v4924
        %v6179 = vpack.c.b16 %v4931, %v4925
        %v6180 = vpack.c.b16 %v4932, %v4926
        %v6181 = vpack.c.b16 %v4933, %v4927
        %v6182 = vpack.c.b16 %v4934, %v4928
        %v6183 = vpack.c.b16 %v4935, %v4929
        %v6184 = vpack.c.b16 %v4942, %v4936
        %v6185 = vpack.c.b16 %v4943, %v4937
        %v6186 = vpack.c.b16 %v4944, %v4938
        %v6187 = vpack.c.b16 %v4945, %v4939
        %v6188 = vpack.c.b16 %v4946, %v4940
        %v6189 = vpack.c.b16 %v4947, %v4941
        %v6190 = vpack.c.b16 %v4954, %v4948
        %v6191 = vpack.c.b16 %v4955, %v4949
        %v6192 = vpack.c.b16 %v4956, %v4950
        %v6193 = vpack.c.b16 %v4957, %v4951
        %v6194 = vpack.c.b16 %v4958, %v4952
        %v6195 = vpack.c.b16 %v4959, %v4953
        %v6196 = vpack.c.b16 %v4966, %v4960
        %v6197 = vpack.c.b16 %v4967, %v4961
        %v6198 = vpack.c.b16 %v4968, %v4962
        %v6199 = vpack.c.b16 %v4969, %v4963
        %v6200 = vpack.c.b16 %v4970, %v4964
        %v6201 = vpack.c.b16 %v4971, %v4965
        %v6202 = vpack.c.b16 %v4978, %v4972
        %v6203 = vpack.c.b16 %v4979, %v4973
        %v6204 = vpack.c.b16 %v4980, %v4974
        %v6205 = vpack.c.b16 %v4981, %v4975
        %v6206 = vpack.c.b16 %v4982, %v4976
        %v6207 = vpack.c.b16 %v4983, %v4977
        %v6208 = vpack.c.b16 %v4990, %v4984
        %v6209 = vpack.c.b16 %v4991, %v4985
        %v6210 = vpack.c.b16 %v4992, %v4986
        %v6211 = vpack.c.b16 %v4993, %v4987
        %v6212 = vpack.c.b16 %v4994, %v4988
        %v6213 = vpack.c.b16 %v4995, %v4989
        %v6214 = vpack.c.b16 %v5002, %v4996
        %v6215 = vpack.c.b16 %v5003, %v4997
        %v6216 = vpack.c.b16 %v5004, %v4998
        %v6217 = vpack.c.b16 %v5005, %v4999
        %v6218 = vpack.c.b16 %v5006, %v5000
        %v6219 = vpack.c.b16 %v5007, %v5001
        %v6220 = vpack.c.b16 %v5014, %v5008
        %v6221 = vpack.c.b16 %v5015, %v5009
        %v6222 = vpack.c.b16 %v5016, %v5010
        %v6223 = vpack.c.b16 %v5017, %v5011
        %v6224 = vpack.c.b16 %v5018, %v5012
        %v6225 = vpack.c.b16 %v5019, %v5013
        %v6226 = vpack.c.b16 %v5026, %v5020
        %v6227 = vpack.c.b16 %v5027, %v5021
        %v6228 = vpack.c.b16 %v5028, %v5022
        %v6229 = vpack.c.b16 %v5029, %v5023
        %v6230 = vpack.c.b16 %v5030, %v5024
        %v6231 = vpack.c.b16 %v5031, %v5025
        %v6232 = vpack.c.b16 %v5038, %v5032
        %v6233 = vpack.c.b16 %v5039, %v5033
        %v6234 = vpack.c.b16 %v5040, %v5034
        %v6235 = vpack.c.b16 %v5041, %v5035
        %v6236 = vpack.c.b16 %v5042, %v5036
        %v6237 = vpack.c.b16 %v5043, %v5037
        %v6238 = vpack.c.b16 %v5050, %v5044
        %v6239 = vpack.c.b16 %v5051, %v5045
        %v6240 = vpack.c.b16 %v5052, %v5046
        %v6241 = vpack.c.b16 %v5053, %v5047
        %v6242 = vpack.c.b16 %v5054, %v5048
        %v6243 = vpack.c.b16 %v5055, %v5049
        %v6244 = vpack.c.b16 %v5062, %v5056
        %v6245 = vpack.c.b16 %v5063, %v5057
        %v6246 = vpack.c.b16 %v5064, %v5058
        %v6247 = vpack.c.b16 %v5065, %v5059
        %v6248 = vpack.c.b16 %v5066, %v5060
        %v6249 = vpack.c.b16 %v5067, %v5061
        %v6250 = vpack.c.b16 %v5074, %v5068
        %v6251 = vpack.c.b16 %v5075, %v5069
        %v6252 = vpack.c.b16 %v5076, %v5070
        %v6253 = vpack.c.b16 %v5077, %v5071
        %v6254 = vpack.c.b16 %v5078, %v5072
        %v6255 = vpack.c.b16 %v5079, %v5073
        %v6256 = vpack.c.b16 %v5086, %v5080
        %v6257 = vpack.c.b16 %v5087, %v5081
        %v6258 = vpack.c.b16 %v5088, %v5082
        %v6259 = vpack.c.b16 %v5089, %v5083
        %v6260 = vpack.c.b16 %v5090, %v5084
        %v6261 = vpack.c.b16 %v5091, %v5085
        %v6262 = vpack.c.b16 %v5098, %v5092
        %v6263 = vpack.c.b16 %v5099, %v5093
        %v6264 = vpack.c.b16 %v5100, %v5094
        %v6265 = vpack.c.b16 %v5101, %v5095
        %v6266 = vpack.c.b16 %v5102, %v5096
        %v6267 = vpack.c.b16 %v5103, %v5097
        %v6268 = vpack.c.b16 %v5110, %v5104
        %v6269 = vpack.c.b16 %v5111, %v5105
        %v6270 = vpack.c.b16 %v5112, %v5106
        %v6271 = vpack.c.b16 %v5113, %v5107
        %v6272 = vpack.c.b16 %v5114, %v5108
        %v6273 = vpack.c.b16 %v5115, %v5109
        %v6274 = vpack.c.b16 %v5122, %v5116
        %v6275 = vpack.c.b16 %v5123, %v5117
        %v6276 = vpack.c.b16 %v5124, %v5118
        %v6277 = vpack.c.b16 %v5125, %v5119
        %v6278 = vpack.c.b16 %v5126, %v5120
        %v6279 = vpack.c.b16 %v5127, %v5121
        %7432 = vmatprep.subr.bf16.mxu0 %v5129
        %7433 = vmatpush1.bf16.msra.mxu0 %v5128
        %7434 = vmatprep.subr.bf16.mxu0 %v5135
        %7435 = vmatpush1.bf16.msra.mxu0 %v5134
        %7436 = vmatprep.subr.bf16.mxu0 %v5141
        %7437 = vmatpush1.bf16.msra.mxu0 %v5140
        %7438 = vmatprep.subr.bf16.mxu0 %v5147
        %7439 = vmatpush1.bf16.msra.mxu0 %v5146
        %7440 = vmatprep.subr.bf16.mxu0 %v5153
        %7441 = vmatpush1.bf16.msra.mxu0 %v5152
        %7442 = vmatprep.subr.bf16.mxu0 %v5159
        %7443 = vmatpush1.bf16.msra.mxu0 %v5158
        %7444 = vmatprep.subr.bf16.mxu0 %v5165
        %7445 = vmatpush1.bf16.msra.mxu0 %v5164
        %7446 = vmatprep.subr.bf16.mxu0 %v5171
        %7447 = vmatpush1.bf16.msra.mxu0 %v5170
        %7448 = vmatprep.subr.bf16.mxu0 %v5177
        %7449 = vmatpush1.bf16.msra.mxu0 %v5176
        %7450 = vmatprep.subr.bf16.mxu0 %v5183
        %7451 = vmatpush1.bf16.msra.mxu0 %v5182
        %7452 = vmatprep.subr.bf16.mxu0 %v5189
        %7453 = vmatpush1.bf16.msra.mxu0 %v5188
        %7454 = vmatprep.subr.bf16.mxu0 %v5195
        %7455 = vmatpush1.bf16.msra.mxu0 %v5194
        %7456 = vmatprep.subr.bf16.mxu0 %v5201
        %7457 = vmatpush1.bf16.msra.mxu0 %v5200
        %7458 = vmatprep.subr.bf16.mxu0 %v5207
        %7459 = vmatpush1.bf16.msra.mxu0 %v5206
        %7460 = vmatprep.subr.bf16.mxu0 %v5213
        %7461 = vmatpush1.bf16.msra.mxu0 %v5212
        %7462 = vmatprep.subr.bf16.mxu0 %v5219
        %7463 = vmatpush1.bf16.msra.mxu0 %v5218
        %7464 = vmatprep.mubr.bf16.mxu0 %v1538
        %7465 = vmatmul.mubr.bf16.gmra.mrb[0].mxu0 %v1524
        %v7466 = vpop.f32.mrb[0].mxu0
        %v7467 = vadd.f32 %v1471, %v7466
        %v7468 = vpop.f32.mrb[0].mxu0
        %v7469 = vadd.f32 %v1475, %v7468
        %v7470 = vpop.f32.mrb[0].mxu0
        %v7471 = vpop.f32.mrb[0].mxu0
        %7472 = vdwg.mxu0
        %7473 = vmatprep.subr.bf16.mxu0 %v5225
        %7474 = vmatpush1.bf16.msra.mxu0 %v5224
        %7475 = vmatprep.subr.bf16.mxu0 %v5231
        %7476 = vmatpush1.bf16.msra.mxu0 %v5230
        %7477 = vmatprep.subr.bf16.mxu0 %v5237
        %7478 = vmatpush1.bf16.msra.mxu0 %v5236
        %7479 = vmatprep.subr.bf16.mxu0 %v5243
        %7480 = vmatpush1.bf16.msra.mxu0 %v5242
        %7481 = vmatprep.subr.bf16.mxu0 %v5249
        %7482 = vmatpush1.bf16.msra.mxu0 %v5248
        %7483 = vmatprep.subr.bf16.mxu0 %v5255
        %7484 = vmatpush1.bf16.msra.mxu0 %v5254
        %7485 = vmatprep.subr.bf16.mxu0 %v5261
        %7486 = vmatpush1.bf16.msra.mxu0 %v5260
        %7487 = vmatprep.subr.bf16.mxu0 %v5267
        %7488 = vmatpush1.bf16.msra.mxu0 %v5266
        %7489 = vmatprep.subr.bf16.mxu0 %v5273
        %7490 = vmatpush1.bf16.msra.mxu0 %v5272
        %7491 = vmatprep.subr.bf16.mxu0 %v5279
        %7492 = vmatpush1.bf16.msra.mxu0 %v5278
        %7493 = vmatprep.subr.bf16.mxu0 %v5285
        %7494 = vmatpush1.bf16.msra.mxu0 %v5284
        %7495 = vmatprep.subr.bf16.mxu0 %v5291
        %7496 = vmatpush1.bf16.msra.mxu0 %v5290
        %7497 = vmatprep.subr.bf16.mxu0 %v5297
        %7498 = vmatpush1.bf16.msra.mxu0 %v5296
        %7499 = vmatprep.subr.bf16.mxu0 %v5303
        %7500 = vmatpush1.bf16.msra.mxu0 %v5302
        %7501 = vmatprep.subr.bf16.mxu0 %v5309
        %7502 = vmatpush1.bf16.msra.mxu0 %v5308
        %7503 = vmatprep.subr.bf16.mxu0 %v5315
        %7504 = vmatpush1.bf16.msra.mxu0 %v5314
        %7505 = vmatprep.mubr.bf16.mxu0 %v1548
        %7506 = vmatmul.mubr.bf16.gmra.mrb[0].mxu0 %v1546
        %v7507 = vpop.f32.mrb[0].mxu0
        %v7508 = vadd.f32 %v7467, %v7507
        %v7509 = vpop.f32.mrb[0].mxu0
        %v7510 = vadd.f32 %v7469, %v7509
        %v7511 = vpop.f32.mrb[0].mxu0
        %v7512 = vpop.f32.mrb[0].mxu0
        %7513 = vdwg.mxu0
        %7514 = vmatprep.subr.bf16.mxu0 %v5321
        %7515 = vmatpush1.bf16.msra.mxu0 %v5320
        %7516 = vmatprep.subr.bf16.mxu0 %v5327
        %7517 = vmatpush1.bf16.msra.mxu0 %v5326
        %7518 = vmatprep.subr.bf16.mxu0 %v5333
        %7519 = vmatpush1.bf16.msra.mxu0 %v5332
        %7520 = vmatprep.subr.bf16.mxu0 %v5339
        %7521 = vmatpush1.bf16.msra.mxu0 %v5338
        %7522 = vmatprep.subr.bf16.mxu0 %v5345
        %7523 = vmatpush1.bf16.msra.mxu0 %v5344
        %7524 = vmatprep.subr.bf16.mxu0 %v5351
        %7525 = vmatpush1.bf16.msra.mxu0 %v5350
        %7526 = vmatprep.subr.bf16.mxu0 %v5357
        %7527 = vmatpush1.bf16.msra.mxu0 %v5356
        %7528 = vmatprep.subr.bf16.mxu0 %v5363
        %7529 = vmatpush1.bf16.msra.mxu0 %v5362
        %7530 = vmatprep.subr.bf16.mxu0 %v5369
        %7531 = vmatpush1.bf16.msra.mxu0 %v5368
        %7532 = vmatprep.subr.bf16.mxu0 %v5375
        %7533 = vmatpush1.bf16.msra.mxu0 %v5374
        %7534 = vmatprep.subr.bf16.mxu0 %v5381
        %7535 = vmatpush1.bf16.msra.mxu0 %v5380
        %7536 = vmatprep.subr.bf16.mxu0 %v5387
        %7537 = vmatpush1.bf16.msra.mxu0 %v5386
        %7538 = vmatprep.subr.bf16.mxu0 %v5393
        %7539 = vmatpush1.bf16.msra.mxu0 %v5392
        %7540 = vmatprep.subr.bf16.mxu0 %v5399
        %7541 = vmatpush1.bf16.msra.mxu0 %v5398
        %7542 = vmatprep.subr.bf16.mxu0 %v5405
        %7543 = vmatpush1.bf16.msra.mxu0 %v5404
        %7544 = vmatprep.subr.bf16.mxu0 %v5411
        %7545 = vmatpush1.bf16.msra.mxu0 %v5410
        %7546 = vmatprep.mubr.bf16.mxu0 %v1545
        %7547 = vmatmul.mubr.bf16.gmra.mrb[0].mxu0 %v1531
        %v7548 = vpop.f32.mrb[0].mxu0
        %v7549 = vadd.f32 %v7508, %v7548
        %v7550 = vpop.f32.mrb[0].mxu0
        %v7551 = vadd.f32 %v7510, %v7550
        %v7552 = vpop.f32.mrb[0].mxu0
        %v7553 = vpop.f32.mrb[0].mxu0
        %7554 = vdwg.mxu0
        %7555 = vmatprep.subr.bf16.mxu0 %v5417
        %7556 = vmatpush1.bf16.msra.mxu0 %v5416
        %7557 = vmatprep.subr.bf16.mxu0 %v5423
        %7558 = vmatpush1.bf16.msra.mxu0 %v5422
        %7559 = vmatprep.subr.bf16.mxu0 %v5429
        %7560 = vmatpush1.bf16.msra.mxu0 %v5428
        %7561 = vmatprep.subr.bf16.mxu0 %v5435
        %7562 = vmatpush1.bf16.msra.mxu0 %v5434
        %7563 = vmatprep.subr.bf16.mxu0 %v5441
        %7564 = vmatpush1.bf16.msra.mxu0 %v5440
        %7565 = vmatprep.subr.bf16.mxu0 %v5447
        %7566 = vmatpush1.bf16.msra.mxu0 %v5446
        %7567 = vmatprep.subr.bf16.mxu0 %v5453
        %7568 = vmatpush1.bf16.msra.mxu0 %v5452
        %7569 = vmatprep.subr.bf16.mxu0 %v5459
        %7570 = vmatpush1.bf16.msra.mxu0 %v5458
        %7571 = vmatprep.subr.bf16.mxu0 %v5465
        %7572 = vmatpush1.bf16.msra.mxu0 %v5464
        %7573 = vmatprep.subr.bf16.mxu0 %v5471
        %7574 = vmatpush1.bf16.msra.mxu0 %v5470
        %7575 = vmatprep.subr.bf16.mxu0 %v5477
        %7576 = vmatpush1.bf16.msra.mxu0 %v5476
        %7577 = vmatprep.subr.bf16.mxu0 %v5483
        %7578 = vmatpush1.bf16.msra.mxu0 %v5482
        %7579 = vmatprep.subr.bf16.mxu0 %v5489
        %7580 = vmatpush1.bf16.msra.mxu0 %v5488
        %7581 = vmatprep.subr.bf16.mxu0 %v5495
        %7582 = vmatpush1.bf16.msra.mxu0 %v5494
        %7583 = vmatprep.subr.bf16.mxu0 %v5501
        %7584 = vmatpush1.bf16.msra.mxu0 %v5500
        %7585 = vmatprep.subr.bf16.mxu0 %v5507
        %7586 = vmatpush1.bf16.msra.mxu0 %v5506
        %7587 = vmatprep.mubr.bf16.mxu0 %v1549
        %7588 = vmatmul.mubr.bf16.gmra.mrb[0].mxu0 %v1547
        %v7589 = vpop.f32.mrb[0].mxu0
        %v7590 = vadd.f32 %v7549, %v7589
        %v7591 = vpop.f32.mrb[0].mxu0
        %v7592 = vadd.f32 %v7551, %v7591
        %v7593 = vpop.f32.mrb[0].mxu0
        %v7594 = vpop.f32.mrb[0].mxu0
        %7595 = vdwg.mxu0
        %7596 = vmatprep.subr.bf16.mxu0 %v5513
        %7597 = vmatpush1.bf16.msra.mxu0 %v5512
        %7598 = vmatprep.subr.bf16.mxu0 %v5519
        %7599 = vmatpush1.bf16.msra.mxu0 %v5518
        %7600 = vmatprep.subr.bf16.mxu0 %v5525
        %7601 = vmatpush1.bf16.msra.mxu0 %v5524
        %7602 = vmatprep.subr.bf16.mxu0 %v5531
        %7603 = vmatpush1.bf16.msra.mxu0 %v5530
        %7604 = vmatprep.subr.bf16.mxu0 %v5537
        %7605 = vmatpush1.bf16.msra.mxu0 %v5536
        %7606 = vmatprep.subr.bf16.mxu0 %v5543
        %7607 = vmatpush1.bf16.msra.mxu0 %v5542
        %7608 = vmatprep.subr.bf16.mxu0 %v5549
        %7609 = vmatpush1.bf16.msra.mxu0 %v5548
        %7610 = vmatprep.subr.bf16.mxu0 %v5555
        %7611 = vmatpush1.bf16.msra.mxu0 %v5554
        %7612 = vmatprep.subr.bf16.mxu0 %v5561
        %7613 = vmatpush1.bf16.msra.mxu0 %v5560
        %7614 = vmatprep.subr.bf16.mxu0 %v5567
        %7615 = vmatpush1.bf16.msra.mxu0 %v5566
        %7616 = vmatprep.subr.bf16.mxu0 %v5573
        %7617 = vmatpush1.bf16.msra.mxu0 %v5572
        %7618 = vmatprep.subr.bf16.mxu0 %v5579
        %7619 = vmatpush1.bf16.msra.mxu0 %v5578
        %7620 = vmatprep.subr.bf16.mxu0 %v5585
        %7621 = vmatpush1.bf16.msra.mxu0 %v5584
        %7622 = vmatprep.subr.bf16.mxu0 %v5591
        %7623 = vmatpush1.bf16.msra.mxu0 %v5590
        %7624 = vmatprep.subr.bf16.mxu0 %v5597
        %7625 = vmatpush1.bf16.msra.mxu0 %v5596
        %7626 = vmatprep.subr.bf16.mxu0 %v5603
        %7627 = vmatpush1.bf16.msra.mxu0 %v5602
        %7628 = vmatprep.mubr.bf16.mxu0 %v1587
        %7629 = vmatmul.mubr.bf16.gmra.mrb[0].mxu0 %v1573
        %v7630 = vpop.f32.mrb[0].mxu0
        %v7631 = vadd.f32 %v7590, %v7630
        %v7632 = vpop.f32.mrb[0].mxu0
        %v7633 = vadd.f32 %v7592, %v7632
        %v7634 = vpop.f32.mrb[0].mxu0
        %v7635 = vpop.f32.mrb[0].mxu0
        %7636 = vdwg.mxu0
        %7637 = vmatprep.subr.bf16.mxu0 %v5609
        %7638 = vmatpush1.bf16.msra.mxu0 %v5608
        %7639 = vmatprep.subr.bf16.mxu0 %v5615
        %7640 = vmatpush1.bf16.msra.mxu0 %v5614
        %7641 = vmatprep.subr.bf16.mxu0 %v5621
        %7642 = vmatpush1.bf16.msra.mxu0 %v5620
        %7643 = vmatprep.subr.bf16.mxu0 %v5627
        %7644 = vmatpush1.bf16.msra.mxu0 %v5626
        %7645 = vmatprep.subr.bf16.mxu0 %v5633
        %7646 = vmatpush1.bf16.msra.mxu0 %v5632
        %7647 = vmatprep.subr.bf16.mxu0 %v5639
        %7648 = vmatpush1.bf16.msra.mxu0 %v5638
        %7649 = vmatprep.subr.bf16.mxu0 %v5645
        %7650 = vmatpush1.bf16.msra.mxu0 %v5644
        %7651 = vmatprep.subr.bf16.mxu0 %v5651
        %7652 = vmatpush1.bf16.msra.mxu0 %v5650
        %7653 = vmatprep.subr.bf16.mxu0 %v5657
        %7654 = vmatpush1.bf16.msra.mxu0 %v5656
        %7655 = vmatprep.subr.bf16.mxu0 %v5663
        %7656 = vmatpush1.bf16.msra.mxu0 %v5662
        %7657 = vmatprep.subr.bf16.mxu0 %v5669
        %7658 = vmatpush1.bf16.msra.mxu0 %v5668
        %7659 = vmatprep.subr.bf16.mxu0 %v5675
        %7660 = vmatpush1.bf16.msra.mxu0 %v5674
        %7661 = vmatprep.subr.bf16.mxu0 %v5681
        %7662 = vmatpush1.bf16.msra.mxu0 %v5680
        %7663 = vmatprep.subr.bf16.mxu0 %v5687
        %7664 = vmatpush1.bf16.msra.mxu0 %v5686
        %7665 = vmatprep.subr.bf16.mxu0 %v5693
        %7666 = vmatpush1.bf16.msra.mxu0 %v5692
        %7667 = vmatprep.subr.bf16.mxu0 %v5699
        %7668 = vmatpush1.bf16.msra.mxu0 %v5698
        %7669 = vmatprep.mubr.bf16.mxu0 %v1597
        %7670 = vmatmul.mubr.bf16.gmra.mrb[0].mxu0 %v1595
        %v7671 = vpop.f32.mrb[0].mxu0
        %v7672 = vadd.f32 %v7631, %v7671
        %v7673 = vpop.f32.mrb[0].mxu0
        %v7674 = vadd.f32 %v7633, %v7673
        %v7675 = vpop.f32.mrb[0].mxu0
        %v7676 = vpop.f32.mrb[0].mxu0
        %7677 = vdwg.mxu0
        %7678 = vmatprep.subr.bf16.mxu0 %v5705
        %7679 = vmatpush1.bf16.msra.mxu0 %v5704
        %7680 = vmatprep.subr.bf16.mxu0 %v5711
        %7681 = vmatpush1.bf16.msra.mxu0 %v5710
        %7682 = vmatprep.subr.bf16.mxu0 %v5717
        %7683 = vmatpush1.bf16.msra.mxu0 %v5716
        %7684 = vmatprep.subr.bf16.mxu0 %v5723
        %7685 = vmatpush1.bf16.msra.mxu0 %v5722
        %7686 = vmatprep.subr.bf16.mxu0 %v5729
        %7687 = vmatpush1.bf16.msra.mxu0 %v5728
        %7688 = vmatprep.subr.bf16.mxu0 %v5735
        %7689 = vmatpush1.bf16.msra.mxu0 %v5734
        %7690 = vmatprep.subr.bf16.mxu0 %v5741
        %7691 = vmatpush1.bf16.msra.mxu0 %v5740
        %7692 = vmatprep.subr.bf16.mxu0 %v5747
        %7693 = vmatpush1.bf16.msra.mxu0 %v5746
        %7694 = vmatprep.subr.bf16.mxu0 %v5753
        %7695 = vmatpush1.bf16.msra.mxu0 %v5752
        %7696 = vmatprep.subr.bf16.mxu0 %v5759
        %7697 = vmatpush1.bf16.msra.mxu0 %v5758
        %7698 = vmatprep.subr.bf16.mxu0 %v5765
        %7699 = vmatpush1.bf16.msra.mxu0 %v5764
        %7700 = vmatprep.subr.bf16.mxu0 %v5771
        %7701 = vmatpush1.bf16.msra.mxu0 %v5770
        %7702 = vmatprep.subr.bf16.mxu0 %v5777
        %7703 = vmatpush1.bf16.msra.mxu0 %v5776
        %7704 = vmatprep.subr.bf16.mxu0 %v5783
        %7705 = vmatpush1.bf16.msra.mxu0 %v5782
        %7706 = vmatprep.subr.bf16.mxu0 %v5789
        %7707 = vmatpush1.bf16.msra.mxu0 %v5788
        %7708 = vmatprep.subr.bf16.mxu0 %v5795
        %7709 = vmatpush1.bf16.msra.mxu0 %v5794
        %7710 = vmatprep.mubr.bf16.mxu0 %v1594
        %7711 = vmatmul.mubr.bf16.gmra.mrb[0].mxu0 %v1580
        %v7712 = vpop.f32.mrb[0].mxu0
        %v7713 = vadd.f32 %v7672, %v7712
        %v7714 = vpop.f32.mrb[0].mxu0
        %v7715 = vadd.f32 %v7674, %v7714
        %v7716 = vpop.f32.mrb[0].mxu0
        %v7717 = vpop.f32.mrb[0].mxu0
        %7718 = vdwg.mxu0
        %7719 = vmatprep.subr.bf16.mxu0 %v5801
        %7720 = vmatpush1.bf16.msra.mxu0 %v5800
        %7721 = vmatprep.subr.bf16.mxu0 %v5807
        %7722 = vmatpush1.bf16.msra.mxu0 %v5806
        %7723 = vmatprep.subr.bf16.mxu0 %v5813
        %7724 = vmatpush1.bf16.msra.mxu0 %v5812
        %7725 = vmatprep.subr.bf16.mxu0 %v5819
        %7726 = vmatpush1.bf16.msra.mxu0 %v5818
        %7727 = vmatprep.subr.bf16.mxu0 %v5825
        %7728 = vmatpush1.bf16.msra.mxu0 %v5824
        %7729 = vmatprep.subr.bf16.mxu0 %v5831
        %7730 = vmatpush1.bf16.msra.mxu0 %v5830
        %7731 = vmatprep.subr.bf16.mxu0 %v5837
        %7732 = vmatpush1.bf16.msra.mxu0 %v5836
        %7733 = vmatprep.subr.bf16.mxu0 %v5843
        %7734 = vmatpush1.bf16.msra.mxu0 %v5842
        %7735 = vmatprep.subr.bf16.mxu0 %v5849
        %7736 = vmatpush1.bf16.msra.mxu0 %v5848
        %7737 = vmatprep.subr.bf16.mxu0 %v5855
        %7738 = vmatpush1.bf16.msra.mxu0 %v5854
        %7739 = vmatprep.subr.bf16.mxu0 %v5861
        %7740 = vmatpush1.bf16.msra.mxu0 %v5860
        %7741 = vmatprep.subr.bf16.mxu0 %v5867
        %7742 = vmatpush1.bf16.msra.mxu0 %v5866
        %7743 = vmatprep.subr.bf16.mxu0 %v5873
        %7744 = vmatpush1.bf16.msra.mxu0 %v5872
        %7745 = vmatprep.subr.bf16.mxu0 %v5879
        %7746 = vmatpush1.bf16.msra.mxu0 %v5878
        %7747 = vmatprep.subr.bf16.mxu0 %v5885
        %7748 = vmatpush1.bf16.msra.mxu0 %v5884
        %7749 = vmatprep.subr.bf16.mxu0 %v5891
        %7750 = vmatpush1.bf16.msra.mxu0 %v5890
        %7751 = vmatprep.mubr.bf16.mxu0 %v1598
        %7752 = vmatmul.mubr.bf16.gmra.mrb[0].mxu0 %v1596
        %v7753 = vpop.f32.mrb[0].mxu0
        %v7754 = vadd.f32 %v7713, %v7753
        %v7755 = vpop.f32.mrb[0].mxu0
        %v7756 = vadd.f32 %v7715, %v7755
        %v7757 = vpop.f32.mrb[0].mxu0
        %v7758 = vpop.f32.mrb[0].mxu0
        %7759 = vdwg.mxu0
        %7760 = vmatprep.subr.bf16.mxu0 %v5897
        %7761 = vmatpush1.bf16.msra.mxu0 %v5896
        %7762 = vmatprep.subr.bf16.mxu0 %v5903
        %7763 = vmatpush1.bf16.msra.mxu0 %v5902
        %7764 = vmatprep.subr.bf16.mxu0 %v5909
        %7765 = vmatpush1.bf16.msra.mxu0 %v5908
        %7766 = vmatprep.subr.bf16.mxu0 %v5915
        %7767 = vmatpush1.bf16.msra.mxu0 %v5914
        %7768 = vmatprep.subr.bf16.mxu0 %v5921
        %7769 = vmatpush1.bf16.msra.mxu0 %v5920
        %7770 = vmatprep.subr.bf16.mxu0 %v5927
        %7771 = vmatpush1.bf16.msra.mxu0 %v5926
        %7772 = vmatprep.subr.bf16.mxu0 %v5933
        %7773 = vmatpush1.bf16.msra.mxu0 %v5932
        %7774 = vmatprep.subr.bf16.mxu0 %v5939
        %7775 = vmatpush1.bf16.msra.mxu0 %v5938
        %7776 = vmatprep.subr.bf16.mxu0 %v5945
        %7777 = vmatpush1.bf16.msra.mxu0 %v5944
        %7778 = vmatprep.subr.bf16.mxu0 %v5951
        %7779 = vmatpush1.bf16.msra.mxu0 %v5950
        %7780 = vmatprep.subr.bf16.mxu0 %v5957
        %7781 = vmatpush1.bf16.msra.mxu0 %v5956
        %7782 = vmatprep.subr.bf16.mxu0 %v5963
        %7783 = vmatpush1.bf16.msra.mxu0 %v5962
        %7784 = vmatprep.subr.bf16.mxu0 %v5969
        %7785 = vmatpush1.bf16.msra.mxu0 %v5968
        %7786 = vmatprep.subr.bf16.mxu0 %v5975
        %7787 = vmatpush1.bf16.msra.mxu0 %v5974
        %7788 = vmatprep.subr.bf16.mxu0 %v5981
        %7789 = vmatpush1.bf16.msra.mxu0 %v5980
        %7790 = vmatprep.subr.bf16.mxu0 %v5987
        %7791 = vmatpush1.bf16.msra.mxu0 %v5986
        %7792 = vmatprep.mubr.bf16.mxu0 %v1636
        %7793 = vmatmul.mubr.bf16.gmra.mrb[0].mxu0 %v1622
        %v7794 = vpop.f32.mrb[0].mxu0
        %v7795 = vadd.f32 %v7754, %v7794
        %v7796 = vpop.f32.mrb[0].mxu0
        %v7797 = vadd.f32 %v7756, %v7796
        %v7798 = vpop.f32.mrb[0].mxu0
        %v7799 = vpop.f32.mrb[0].mxu0
        %7800 = vdwg.mxu0
        %7801 = vmatprep.subr.bf16.mxu0 %v5993
        %7802 = vmatpush1.bf16.msra.mxu0 %v5992
        %7803 = vmatprep.subr.bf16.mxu0 %v5999
        %7804 = vmatpush1.bf16.msra.mxu0 %v5998
        %7805 = vmatprep.subr.bf16.mxu0 %v6005
        %7806 = vmatpush1.bf16.msra.mxu0 %v6004
        %7807 = vmatprep.subr.bf16.mxu0 %v6011
        %7808 = vmatpush1.bf16.msra.mxu0 %v6010
        %7809 = vmatprep.subr.bf16.mxu0 %v6017
        %7810 = vmatpush1.bf16.msra.mxu0 %v6016
        %7811 = vmatprep.subr.bf16.mxu0 %v6023
        %7812 = vmatpush1.bf16.msra.mxu0 %v6022
        %7813 = vmatprep.subr.bf16.mxu0 %v6029
        %7814 = vmatpush1.bf16.msra.mxu0 %v6028
        %7815 = vmatprep.subr.bf16.mxu0 %v6035
        %7816 = vmatpush1.bf16.msra.mxu0 %v6034
        %7817 = vmatprep.subr.bf16.mxu0 %v6041
        %7818 = vmatpush1.bf16.msra.mxu0 %v6040
        %7819 = vmatprep.subr.bf16.mxu0 %v6047
        %7820 = vmatpush1.bf16.msra.mxu0 %v6046
        %7821 = vmatprep.subr.bf16.mxu0 %v6053
        %7822 = vmatpush1.bf16.msra.mxu0 %v6052
        %7823 = vmatprep.subr.bf16.mxu0 %v6059
        %7824 = vmatpush1.bf16.msra.mxu0 %v6058
        %7825 = vmatprep.subr.bf16.mxu0 %v6065
        %7826 = vmatpush1.bf16.msra.mxu0 %v6064
        %7827 = vmatprep.subr.bf16.mxu0 %v6071
        %7828 = vmatpush1.bf16.msra.mxu0 %v6070
        %7829 = vmatprep.subr.bf16.mxu0 %v6077
        %7830 = vmatpush1.bf16.msra.mxu0 %v6076
        %7831 = vmatprep.subr.bf16.mxu0 %v6083
        %7832 = vmatpush1.bf16.msra.mxu0 %v6082
        %7833 = vmatprep.mubr.bf16.mxu0 %v1646
        %7834 = vmatmul.mubr.bf16.gmra.mrb[0].mxu0 %v1644
        %v7835 = vpop.f32.mrb[0].mxu0
        %v7836 = vadd.f32 %v7795, %v7835
        %v7837 = vpop.f32.mrb[0].mxu0
        %v7838 = vadd.f32 %v7797, %v7837
        %v7839 = vpop.f32.mrb[0].mxu0
        %v7840 = vpop.f32.mrb[0].mxu0
        %7841 = vdwg.mxu0
        %7842 = vmatprep.subr.bf16.mxu0 %v6089
        %7843 = vmatpush1.bf16.msra.mxu0 %v6088
        %7844 = vmatprep.subr.bf16.mxu0 %v6095
        %7845 = vmatpush1.bf16.msra.mxu0 %v6094
        %7846 = vmatprep.subr.bf16.mxu0 %v6101
        %7847 = vmatpush1.bf16.msra.mxu0 %v6100
        %7848 = vmatprep.subr.bf16.mxu0 %v6107
        %7849 = vmatpush1.bf16.msra.mxu0 %v6106
        %7850 = vmatprep.subr.bf16.mxu0 %v6113
        %7851 = vmatpush1.bf16.msra.mxu0 %v6112
        %7852 = vmatprep.subr.bf16.mxu0 %v6119
        %7853 = vmatpush1.bf16.msra.mxu0 %v6118
        %7854 = vmatprep.subr.bf16.mxu0 %v6125
        %7855 = vmatpush1.bf16.msra.mxu0 %v6124
        %7856 = vmatprep.subr.bf16.mxu0 %v6131
        %7857 = vmatpush1.bf16.msra.mxu0 %v6130
        %7858 = vmatprep.subr.bf16.mxu0 %v6137
        %7859 = vmatpush1.bf16.msra.mxu0 %v6136
        %7860 = vmatprep.subr.bf16.mxu0 %v6143
        %7861 = vmatpush1.bf16.msra.mxu0 %v6142
        %7862 = vmatprep.subr.bf16.mxu0 %v6149
        %7863 = vmatpush1.bf16.msra.mxu0 %v6148
        %7864 = vmatprep.subr.bf16.mxu0 %v6155
        %7865 = vmatpush1.bf16.msra.mxu0 %v6154
        %7866 = vmatprep.subr.bf16.mxu0 %v6161
        %7867 = vmatpush1.bf16.msra.mxu0 %v6160
        %7868 = vmatprep.subr.bf16.mxu0 %v6167
        %7869 = vmatpush1.bf16.msra.mxu0 %v6166
        %7870 = vmatprep.subr.bf16.mxu0 %v6173
        %7871 = vmatpush1.bf16.msra.mxu0 %v6172
        %7872 = vmatprep.subr.bf16.mxu0 %v6179
        %7873 = vmatpush1.bf16.msra.mxu0 %v6178
        %7874 = vmatprep.mubr.bf16.mxu0 %v1643
        %7875 = vmatmul.mubr.bf16.gmra.mrb[0].mxu0 %v1629
        %v7876 = vpop.f32.mrb[0].mxu0
        %v7877 = vadd.f32 %v7836, %v7876
        %v7878 = vpop.f32.mrb[0].mxu0
        %v7879 = vadd.f32 %v7838, %v7878
        %v7880 = vpop.f32.mrb[0].mxu0
        %v7881 = vpop.f32.mrb[0].mxu0
        %7882 = vdwg.mxu0
        %7883 = vmatprep.subr.bf16.mxu0 %v6185
        %7884 = vmatpush1.bf16.msra.mxu0 %v6184
        %7885 = vmatprep.subr.bf16.mxu0 %v6191
        %7886 = vmatpush1.bf16.msra.mxu0 %v6190
        %7887 = vmatprep.subr.bf16.mxu0 %v6197
        %7888 = vmatpush1.bf16.msra.mxu0 %v6196
        %7889 = vmatprep.subr.bf16.mxu0 %v6203
        %7890 = vmatpush1.bf16.msra.mxu0 %v6202
        %7891 = vmatprep.subr.bf16.mxu0 %v6209
        %7892 = vmatpush1.bf16.msra.mxu0 %v6208
        %7893 = vmatprep.subr.bf16.mxu0 %v6215
        %7894 = vmatpush1.bf16.msra.mxu0 %v6214
        %7895 = vmatprep.subr.bf16.mxu0 %v6221
        %7896 = vmatpush1.bf16.msra.mxu0 %v6220
        %7897 = vmatprep.subr.bf16.mxu0 %v6227
        %7898 = vmatpush1.bf16.msra.mxu0 %v6226
        %7899 = vmatprep.subr.bf16.mxu0 %v6233
        %7900 = vmatpush1.bf16.msra.mxu0 %v6232
        %7901 = vmatprep.subr.bf16.mxu0 %v6239
        %7902 = vmatpush1.bf16.msra.mxu0 %v6238
        %7903 = vmatprep.subr.bf16.mxu0 %v6245
        %7904 = vmatpush1.bf16.msra.mxu0 %v6244
        %7905 = vmatprep.subr.bf16.mxu0 %v6251
        %7906 = vmatpush1.bf16.msra.mxu0 %v6250
        %7907 = vmatprep.subr.bf16.mxu0 %v6257
        %7908 = vmatpush1.bf16.msra.mxu0 %v6256
        %7909 = vmatprep.subr.bf16.mxu0 %v6263
        %7910 = vmatpush1.bf16.msra.mxu0 %v6262
        %7911 = vmatprep.subr.bf16.mxu0 %v6269
        %7912 = vmatpush1.bf16.msra.mxu0 %v6268
        %7913 = vmatprep.subr.bf16.mxu0 %v6275
        %7914 = vmatpush1.bf16.msra.mxu0 %v6274
        %7915 = vmatprep.mubr.bf16.mxu0 %v1647
        %7916 = vmatmul.mubr.bf16.gmra.mrb[0].mxu0 %v1645
        %v7917 = vpop.f32.mrb[0].mxu0
        %v7918 = vadd.f32 %v7877, %v7917
        %v7919 = vpop.f32.mrb[0].mxu0
        %v7920 = vadd.f32 %v7879, %v7919
        %v7921 = vpop.f32.mrb[0].mxu0
        %v7922 = vpop.f32.mrb[0].mxu0
        %7923 = vdwg.mxu0
        %7924 = vmatprep.subr.bf16.mxu0 %v5131
        %7925 = vmatpush1.bf16.msra.mxu0 %v5130
        %7926 = vmatprep.subr.bf16.mxu0 %v5137
        %7927 = vmatpush1.bf16.msra.mxu0 %v5136
        %7928 = vmatprep.subr.bf16.mxu0 %v5143
        %7929 = vmatpush1.bf16.msra.mxu0 %v5142
        %7930 = vmatprep.subr.bf16.mxu0 %v5149
        %7931 = vmatpush1.bf16.msra.mxu0 %v5148
        %7932 = vmatprep.subr.bf16.mxu0 %v5155
        %7933 = vmatpush1.bf16.msra.mxu0 %v5154
        %7934 = vmatprep.subr.bf16.mxu0 %v5161
        %7935 = vmatpush1.bf16.msra.mxu0 %v5160
        %7936 = vmatprep.subr.bf16.mxu0 %v5167
        %7937 = vmatpush1.bf16.msra.mxu0 %v5166
        %7938 = vmatprep.subr.bf16.mxu0 %v5173
        %7939 = vmatpush1.bf16.msra.mxu0 %v5172
        %7940 = vmatprep.subr.bf16.mxu0 %v5179
        %7941 = vmatpush1.bf16.msra.mxu0 %v5178
        %7942 = vmatprep.subr.bf16.mxu0 %v5185
        %7943 = vmatpush1.bf16.msra.mxu0 %v5184
        %7944 = vmatprep.subr.bf16.mxu0 %v5191
        %7945 = vmatpush1.bf16.msra.mxu0 %v5190
        %7946 = vmatprep.subr.bf16.mxu0 %v5197
        %7947 = vmatpush1.bf16.msra.mxu0 %v5196
        %7948 = vmatprep.subr.bf16.mxu0 %v5203
        %7949 = vmatpush1.bf16.msra.mxu0 %v5202
        %7950 = vmatprep.subr.bf16.mxu0 %v5209
        %7951 = vmatpush1.bf16.msra.mxu0 %v5208
        %7952 = vmatprep.subr.bf16.mxu0 %v5215
        %7953 = vmatpush1.bf16.msra.mxu0 %v5214
        %7954 = vmatprep.subr.bf16.mxu0 %v5221
        %7955 = vmatpush1.bf16.msra.mxu0 %v5220
        %7956 = vmatprep.mubr.bf16.mxu0 %v1538
        %7957 = vmatmul.mubr.bf16.gmra.mrb[0].mxu0 %v1524
        %v7958 = vpop.f32.mrb[0].mxu0
        %v7959 = vadd.f32 %v1479, %v7958
        %v7960 = vpop.f32.mrb[0].mxu0
        %v7961 = vadd.f32 %v1483, %v7960
        %v7962 = vpop.f32.mrb[0].mxu0
        %v7963 = vpop.f32.mrb[0].mxu0
        %7964 = vdwg.mxu0
        %7965 = vmatprep.subr.bf16.mxu0 %v5227
        %7966 = vmatpush1.bf16.msra.mxu0 %v5226
        %7967 = vmatprep.subr.bf16.mxu0 %v5233
        %7968 = vmatpush1.bf16.msra.mxu0 %v5232
        %7969 = vmatprep.subr.bf16.mxu0 %v5239
        %7970 = vmatpush1.bf16.msra.mxu0 %v5238
        %7971 = vmatprep.subr.bf16.mxu0 %v5245
        %7972 = vmatpush1.bf16.msra.mxu0 %v5244
        %7973 = vmatprep.subr.bf16.mxu0 %v5251
        %7974 = vmatpush1.bf16.msra.mxu0 %v5250
        %7975 = vmatprep.subr.bf16.mxu0 %v5257
        %7976 = vmatpush1.bf16.msra.mxu0 %v5256
        %7977 = vmatprep.subr.bf16.mxu0 %v5263
        %7978 = vmatpush1.bf16.msra.mxu0 %v5262
        %7979 = vmatprep.subr.bf16.mxu0 %v5269
        %7980 = vmatpush1.bf16.msra.mxu0 %v5268
        %7981 = vmatprep.subr.bf16.mxu0 %v5275
        %7982 = vmatpush1.bf16.msra.mxu0 %v5274
        %7983 = vmatprep.subr.bf16.mxu0 %v5281
        %7984 = vmatpush1.bf16.msra.mxu0 %v5280
        %7985 = vmatprep.subr.bf16.mxu0 %v5287
        %7986 = vmatpush1.bf16.msra.mxu0 %v5286
        %7987 = vmatprep.subr.bf16.mxu0 %v5293
        %7988 = vmatpush1.bf16.msra.mxu0 %v5292
        %7989 = vmatprep.subr.bf16.mxu0 %v5299
        %7990 = vmatpush1.bf16.msra.mxu0 %v5298
        %7991 = vmatprep.subr.bf16.mxu0 %v5305
        %7992 = vmatpush1.bf16.msra.mxu0 %v5304
        %7993 = vmatprep.subr.bf16.mxu0 %v5311
        %7994 = vmatpush1.bf16.msra.mxu0 %v5310
        %7995 = vmatprep.subr.bf16.mxu0 %v5317
        %7996 = vmatpush1.bf16.msra.mxu0 %v5316
        %7997 = vmatprep.mubr.bf16.mxu0 %v1548
        %7998 = vmatmul.mubr.bf16.gmra.mrb[0].mxu0 %v1546
        %v7999 = vpop.f32.mrb[0].mxu0
        %v8000 = vadd.f32 %v7959, %v7999
        %v8001 = vpop.f32.mrb[0].mxu0
        %v8002 = vadd.f32 %v7961, %v8001
        %v8003 = vpop.f32.mrb[0].mxu0
        %v8004 = vpop.f32.mrb[0].mxu0
        %8005 = vdwg.mxu0
        %8006 = vmatprep.subr.bf16.mxu0 %v5323
        %8007 = vmatpush1.bf16.msra.mxu0 %v5322
        %8008 = vmatprep.subr.bf16.mxu0 %v5329
        %8009 = vmatpush1.bf16.msra.mxu0 %v5328
        %8010 = vmatprep.subr.bf16.mxu0 %v5335
        %8011 = vmatpush1.bf16.msra.mxu0 %v5334
        %8012 = vmatprep.subr.bf16.mxu0 %v5341
        %8013 = vmatpush1.bf16.msra.mxu0 %v5340
        %8014 = vmatprep.subr.bf16.mxu0 %v5347
        %8015 = vmatpush1.bf16.msra.mxu0 %v5346
        %8016 = vmatprep.subr.bf16.mxu0 %v5353
        %8017 = vmatpush1.bf16.msra.mxu0 %v5352
        %8018 = vmatprep.subr.bf16.mxu0 %v5359
        %8019 = vmatpush1.bf16.msra.mxu0 %v5358
        %8020 = vmatprep.subr.bf16.mxu0 %v5365
        %8021 = vmatpush1.bf16.msra.mxu0 %v5364
        %8022 = vmatprep.subr.bf16.mxu0 %v5371
        %8023 = vmatpush1.bf16.msra.mxu0 %v5370
        %8024 = vmatprep.subr.bf16.mxu0 %v5377
        %8025 = vmatpush1.bf16.msra.mxu0 %v5376
        %8026 = vmatprep.subr.bf16.mxu0 %v5383
        %8027 = vmatpush1.bf16.msra.mxu0 %v5382
        %8028 = vmatprep.subr.bf16.mxu0 %v5389
        %8029 = vmatpush1.bf16.msra.mxu0 %v5388
        %8030 = vmatprep.subr.bf16.mxu0 %v5395
        %8031 = vmatpush1.bf16.msra.mxu0 %v5394
        %8032 = vmatprep.subr.bf16.mxu0 %v5401
        %8033 = vmatpush1.bf16.msra.mxu0 %v5400
        %8034 = vmatprep.subr.bf16.mxu0 %v5407
        %8035 = vmatpush1.bf16.msra.mxu0 %v5406
        %8036 = vmatprep.subr.bf16.mxu0 %v5413
        %8037 = vmatpush1.bf16.msra.mxu0 %v5412
        %8038 = vmatprep.mubr.bf16.mxu0 %v1545
        %8039 = vmatmul.mubr.bf16.gmra.mrb[0].mxu0 %v1531
        %v8040 = vpop.f32.mrb[0].mxu0
        %v8041 = vadd.f32 %v8000, %v8040
        %v8042 = vpop.f32.mrb[0].mxu0
        %v8043 = vadd.f32 %v8002, %v8042
        %v8044 = vpop.f32.mrb[0].mxu0
        %v8045 = vpop.f32.mrb[0].mxu0
        %8046 = vdwg.mxu0
        %8047 = vmatprep.subr.bf16.mxu0 %v5419
        %8048 = vmatpush1.bf16.msra.mxu0 %v5418
        %8049 = vmatprep.subr.bf16.mxu0 %v5425
        %8050 = vmatpush1.bf16.msra.mxu0 %v5424
        %8051 = vmatprep.subr.bf16.mxu0 %v5431
        %8052 = vmatpush1.bf16.msra.mxu0 %v5430
        %8053 = vmatprep.subr.bf16.mxu0 %v5437
        %8054 = vmatpush1.bf16.msra.mxu0 %v5436
        %8055 = vmatprep.subr.bf16.mxu0 %v5443
        %8056 = vmatpush1.bf16.msra.mxu0 %v5442
        %8057 = vmatprep.subr.bf16.mxu0 %v5449
        %8058 = vmatpush1.bf16.msra.mxu0 %v5448
        %8059 = vmatprep.subr.bf16.mxu0 %v5455
        %8060 = vmatpush1.bf16.msra.mxu0 %v5454
        %8061 = vmatprep.subr.bf16.mxu0 %v5461
        %8062 = vmatpush1.bf16.msra.mxu0 %v5460
        %8063 = vmatprep.subr.bf16.mxu0 %v5467
        %8064 = vmatpush1.bf16.msra.mxu0 %v5466
        %8065 = vmatprep.subr.bf16.mxu0 %v5473
        %8066 = vmatpush1.bf16.msra.mxu0 %v5472
        %8067 = vmatprep.subr.bf16.mxu0 %v5479
        %8068 = vmatpush1.bf16.msra.mxu0 %v5478
        %8069 = vmatprep.subr.bf16.mxu0 %v5485
        %8070 = vmatpush1.bf16.msra.mxu0 %v5484
        %8071 = vmatprep.subr.bf16.mxu0 %v5491
        %8072 = vmatpush1.bf16.msra.mxu0 %v5490
        %8073 = vmatprep.subr.bf16.mxu0 %v5497
        %8074 = vmatpush1.bf16.msra.mxu0 %v5496
        %8075 = vmatprep.subr.bf16.mxu0 %v5503
        %8076 = vmatpush1.bf16.msra.mxu0 %v5502
        %8077 = vmatprep.subr.bf16.mxu0 %v5509
        %8078 = vmatpush1.bf16.msra.mxu0 %v5508
        %8079 = vmatprep.mubr.bf16.mxu0 %v1549
        %8080 = vmatmul.mubr.bf16.gmra.mrb[0].mxu0 %v1547
        %v8081 = vpop.f32.mrb[0].mxu0
        %v8082 = vadd.f32 %v8041, %v8081
        %v8083 = vpop.f32.mrb[0].mxu0
        %v8084 = vadd.f32 %v8043, %v8083
        %v8085 = vpop.f32.mrb[0].mxu0
        %v8086 = vpop.f32.mrb[0].mxu0
        %8087 = vdwg.mxu0
        %8088 = vmatprep.subr.bf16.mxu0 %v5515
        %8089 = vmatpush1.bf16.msra.mxu0 %v5514
        %8090 = vmatprep.subr.bf16.mxu0 %v5521
        %8091 = vmatpush1.bf16.msra.mxu0 %v5520
        %8092 = vmatprep.subr.bf16.mxu0 %v5527
        %8093 = vmatpush1.bf16.msra.mxu0 %v5526
        %8094 = vmatprep.subr.bf16.mxu0 %v5533
        %8095 = vmatpush1.bf16.msra.mxu0 %v5532
        %8096 = vmatprep.subr.bf16.mxu0 %v5539
        %8097 = vmatpush1.bf16.msra.mxu0 %v5538
        %8098 = vmatprep.subr.bf16.mxu0 %v5545
        %8099 = vmatpush1.bf16.msra.mxu0 %v5544
        %8100 = vmatprep.subr.bf16.mxu0 %v5551
        %8101 = vmatpush1.bf16.msra.mxu0 %v5550
        %8102 = vmatprep.subr.bf16.mxu0 %v5557
        %8103 = vmatpush1.bf16.msra.mxu0 %v5556
        %8104 = vmatprep.subr.bf16.mxu0 %v5563
        %8105 = vmatpush1.bf16.msra.mxu0 %v5562
        %8106 = vmatprep.subr.bf16.mxu0 %v5569
        %8107 = vmatpush1.bf16.msra.mxu0 %v5568
        %8108 = vmatprep.subr.bf16.mxu0 %v5575
        %8109 = vmatpush1.bf16.msra.mxu0 %v5574
        %8110 = vmatprep.subr.bf16.mxu0 %v5581
        %8111 = vmatpush1.bf16.msra.mxu0 %v5580
        %8112 = vmatprep.subr.bf16.mxu0 %v5587
        %8113 = vmatpush1.bf16.msra.mxu0 %v5586
        %8114 = vmatprep.subr.bf16.mxu0 %v5593
        %8115 = vmatpush1.bf16.msra.mxu0 %v5592
        %8116 = vmatprep.subr.bf16.mxu0 %v5599
        %8117 = vmatpush1.bf16.msra.mxu0 %v5598
        %8118 = vmatprep.subr.bf16.mxu0 %v5605
        %8119 = vmatpush1.bf16.msra.mxu0 %v5604
        %8120 = vmatprep.mubr.bf16.mxu0 %v1587
        %8121 = vmatmul.mubr.bf16.gmra.mrb[0].mxu0 %v1573
        %v8122 = vpop.f32.mrb[0].mxu0
        %v8123 = vadd.f32 %v8082, %v8122
        %v8124 = vpop.f32.mrb[0].mxu0
        %v8125 = vadd.f32 %v8084, %v8124
        %v8126 = vpop.f32.mrb[0].mxu0
        %v8127 = vpop.f32.mrb[0].mxu0
        %8128 = vdwg.mxu0
        %8129 = vmatprep.subr.bf16.mxu0 %v5611
        %8130 = vmatpush1.bf16.msra.mxu0 %v5610
        %8131 = vmatprep.subr.bf16.mxu0 %v5617
        %8132 = vmatpush1.bf16.msra.mxu0 %v5616
        %8133 = vmatprep.subr.bf16.mxu0 %v5623
        %8134 = vmatpush1.bf16.msra.mxu0 %v5622
        %8135 = vmatprep.subr.bf16.mxu0 %v5629
        %8136 = vmatpush1.bf16.msra.mxu0 %v5628
        %8137 = vmatprep.subr.bf16.mxu0 %v5635
        %8138 = vmatpush1.bf16.msra.mxu0 %v5634
        %8139 = vmatprep.subr.bf16.mxu0 %v5641
        %8140 = vmatpush1.bf16.msra.mxu0 %v5640
        %8141 = vmatprep.subr.bf16.mxu0 %v5647
        %8142 = vmatpush1.bf16.msra.mxu0 %v5646
        %8143 = vmatprep.subr.bf16.mxu0 %v5653
        %8144 = vmatpush1.bf16.msra.mxu0 %v5652
        %8145 = vmatprep.subr.bf16.mxu0 %v5659
        %8146 = vmatpush1.bf16.msra.mxu0 %v5658
        %8147 = vmatprep.subr.bf16.mxu0 %v5665
        %8148 = vmatpush1.bf16.msra.mxu0 %v5664
        %8149 = vmatprep.subr.bf16.mxu0 %v5671
        %8150 = vmatpush1.bf16.msra.mxu0 %v5670
        %8151 = vmatprep.subr.bf16.mxu0 %v5677
        %8152 = vmatpush1.bf16.msra.mxu0 %v5676
        %8153 = vmatprep.subr.bf16.mxu0 %v5683
        %8154 = vmatpush1.bf16.msra.mxu0 %v5682
        %8155 = vmatprep.subr.bf16.mxu0 %v5689
        %8156 = vmatpush1.bf16.msra.mxu0 %v5688
        %8157 = vmatprep.subr.bf16.mxu0 %v5695
        %8158 = vmatpush1.bf16.msra.mxu0 %v5694
        %8159 = vmatprep.subr.bf16.mxu0 %v5701
        %8160 = vmatpush1.bf16.msra.mxu0 %v5700
        %8161 = vmatprep.mubr.bf16.mxu0 %v1597
        %8162 = vmatmul.mubr.bf16.gmra.mrb[0].mxu0 %v1595
        %v8163 = vpop.f32.mrb[0].mxu0
        %v8164 = vadd.f32 %v8123, %v8163
        %v8165 = vpop.f32.mrb[0].mxu0
        %v8166 = vadd.f32 %v8125, %v8165
        %v8167 = vpop.f32.mrb[0].mxu0
        %v8168 = vpop.f32.mrb[0].mxu0
        %8169 = vdwg.mxu0
        %8170 = vmatprep.subr.bf16.mxu0 %v5707
        %8171 = vmatpush1.bf16.msra.mxu0 %v5706
        %8172 = vmatprep.subr.bf16.mxu0 %v5713
        %8173 = vmatpush1.bf16.msra.mxu0 %v5712
        %8174 = vmatprep.subr.bf16.mxu0 %v5719
        %8175 = vmatpush1.bf16.msra.mxu0 %v5718
        %8176 = vmatprep.subr.bf16.mxu0 %v5725
        %8177 = vmatpush1.bf16.msra.mxu0 %v5724
        %8178 = vmatprep.subr.bf16.mxu0 %v5731
        %8179 = vmatpush1.bf16.msra.mxu0 %v5730
        %8180 = vmatprep.subr.bf16.mxu0 %v5737
        %8181 = vmatpush1.bf16.msra.mxu0 %v5736
        %8182 = vmatprep.subr.bf16.mxu0 %v5743
        %8183 = vmatpush1.bf16.msra.mxu0 %v5742
        %8184 = vmatprep.subr.bf16.mxu0 %v5749
        %8185 = vmatpush1.bf16.msra.mxu0 %v5748
        %8186 = vmatprep.subr.bf16.mxu0 %v5755
        %8187 = vmatpush1.bf16.msra.mxu0 %v5754
        %8188 = vmatprep.subr.bf16.mxu0 %v5761
        %8189 = vmatpush1.bf16.msra.mxu0 %v5760
        %8190 = vmatprep.subr.bf16.mxu0 %v5767
        %8191 = vmatpush1.bf16.msra.mxu0 %v5766
        %8192 = vmatprep.subr.bf16.mxu0 %v5773
        %8193 = vmatpush1.bf16.msra.mxu0 %v5772
        %8194 = vmatprep.subr.bf16.mxu0 %v5779
        %8195 = vmatpush1.bf16.msra.mxu0 %v5778
        %8196 = vmatprep.subr.bf16.mxu0 %v5785
        %8197 = vmatpush1.bf16.msra.mxu0 %v5784
        %8198 = vmatprep.subr.bf16.mxu0 %v5791
        %8199 = vmatpush1.bf16.msra.mxu0 %v5790
        %8200 = vmatprep.subr.bf16.mxu0 %v5797
        %8201 = vmatpush1.bf16.msra.mxu0 %v5796
        %8202 = vmatprep.mubr.bf16.mxu0 %v1594
        %8203 = vmatmul.mubr.bf16.gmra.mrb[0].mxu0 %v1580
        %v8204 = vpop.f32.mrb[0].mxu0
        %v8205 = vadd.f32 %v8164, %v8204
        %v8206 = vpop.f32.mrb[0].mxu0
        %v8207 = vadd.f32 %v8166, %v8206
        %v8208 = vpop.f32.mrb[0].mxu0
        %v8209 = vpop.f32.mrb[0].mxu0
        %8210 = vdwg.mxu0
        %8211 = vmatprep.subr.bf16.mxu0 %v5803
        %8212 = vmatpush1.bf16.msra.mxu0 %v5802
        %8213 = vmatprep.subr.bf16.mxu0 %v5809
        %8214 = vmatpush1.bf16.msra.mxu0 %v5808
        %8215 = vmatprep.subr.bf16.mxu0 %v5815
        %8216 = vmatpush1.bf16.msra.mxu0 %v5814
        %8217 = vmatprep.subr.bf16.mxu0 %v5821
        %8218 = vmatpush1.bf16.msra.mxu0 %v5820
        %8219 = vmatprep.subr.bf16.mxu0 %v5827
        %8220 = vmatpush1.bf16.msra.mxu0 %v5826
        %8221 = vmatprep.subr.bf16.mxu0 %v5833
        %8222 = vmatpush1.bf16.msra.mxu0 %v5832
        %8223 = vmatprep.subr.bf16.mxu0 %v5839
        %8224 = vmatpush1.bf16.msra.mxu0 %v5838
        %8225 = vmatprep.subr.bf16.mxu0 %v5845
        %8226 = vmatpush1.bf16.msra.mxu0 %v5844
        %8227 = vmatprep.subr.bf16.mxu0 %v5851
        %8228 = vmatpush1.bf16.msra.mxu0 %v5850
        %8229 = vmatprep.subr.bf16.mxu0 %v5857
        %8230 = vmatpush1.bf16.msra.mxu0 %v5856
        %8231 = vmatprep.subr.bf16.mxu0 %v5863
        %8232 = vmatpush1.bf16.msra.mxu0 %v5862
        %8233 = vmatprep.subr.bf16.mxu0 %v5869
        %8234 = vmatpush1.bf16.msra.mxu0 %v5868
        %8235 = vmatprep.subr.bf16.mxu0 %v5875
        %8236 = vmatpush1.bf16.msra.mxu0 %v5874
        %8237 = vmatprep.subr.bf16.mxu0 %v5881
        %8238 = vmatpush1.bf16.msra.mxu0 %v5880
        %8239 = vmatprep.subr.bf16.mxu0 %v5887
        %8240 = vmatpush1.bf16.msra.mxu0 %v5886
        %8241 = vmatprep.subr.bf16.mxu0 %v5893
        %8242 = vmatpush1.bf16.msra.mxu0 %v5892
        %8243 = vmatprep.mubr.bf16.mxu0 %v1598
        %8244 = vmatmul.mubr.bf16.gmra.mrb[0].mxu0 %v1596
        %v8245 = vpop.f32.mrb[0].mxu0
        %v8246 = vadd.f32 %v8205, %v8245
        %v8247 = vpop.f32.mrb[0].mxu0
        %v8248 = vadd.f32 %v8207, %v8247
        %v8249 = vpop.f32.mrb[0].mxu0
        %v8250 = vpop.f32.mrb[0].mxu0
        %8251 = vdwg.mxu0
        %8252 = vmatprep.subr.bf16.mxu0 %v5899
        %8253 = vmatpush1.bf16.msra.mxu0 %v5898
        %8254 = vmatprep.subr.bf16.mxu0 %v5905
        %8255 = vmatpush1.bf16.msra.mxu0 %v5904
        %8256 = vmatprep.subr.bf16.mxu0 %v5911
        %8257 = vmatpush1.bf16.msra.mxu0 %v5910
        %8258 = vmatprep.subr.bf16.mxu0 %v5917
        %8259 = vmatpush1.bf16.msra.mxu0 %v5916
        %8260 = vmatprep.subr.bf16.mxu0 %v5923
        %8261 = vmatpush1.bf16.msra.mxu0 %v5922
        %8262 = vmatprep.subr.bf16.mxu0 %v5929
        %8263 = vmatpush1.bf16.msra.mxu0 %v5928
        %8264 = vmatprep.subr.bf16.mxu0 %v5935
        %8265 = vmatpush1.bf16.msra.mxu0 %v5934
        %8266 = vmatprep.subr.bf16.mxu0 %v5941
        %8267 = vmatpush1.bf16.msra.mxu0 %v5940
        %8268 = vmatprep.subr.bf16.mxu0 %v5947
        %8269 = vmatpush1.bf16.msra.mxu0 %v5946
        %8270 = vmatprep.subr.bf16.mxu0 %v5953
        %8271 = vmatpush1.bf16.msra.mxu0 %v5952
        %8272 = vmatprep.subr.bf16.mxu0 %v5959
        %8273 = vmatpush1.bf16.msra.mxu0 %v5958
        %8274 = vmatprep.subr.bf16.mxu0 %v5965
        %8275 = vmatpush1.bf16.msra.mxu0 %v5964
        %8276 = vmatprep.subr.bf16.mxu0 %v5971
        %8277 = vmatpush1.bf16.msra.mxu0 %v5970
        %8278 = vmatprep.subr.bf16.mxu0 %v5977
        %8279 = vmatpush1.bf16.msra.mxu0 %v5976
        %8280 = vmatprep.subr.bf16.mxu0 %v5983
        %8281 = vmatpush1.bf16.msra.mxu0 %v5982
        %8282 = vmatprep.subr.bf16.mxu0 %v5989
        %8283 = vmatpush1.bf16.msra.mxu0 %v5988
        %8284 = vmatprep.mubr.bf16.mxu0 %v1636
        %8285 = vmatmul.mubr.bf16.gmra.mrb[0].mxu0 %v1622
        %v8286 = vpop.f32.mrb[0].mxu0
        %v8287 = vadd.f32 %v8246, %v8286
        %v8288 = vpop.f32.mrb[0].mxu0
        %v8289 = vadd.f32 %v8248, %v8288
        %v8290 = vpop.f32.mrb[0].mxu0
        %v8291 = vpop.f32.mrb[0].mxu0
        %8292 = vdwg.mxu0
        %8293 = vmatprep.subr.bf16.mxu0 %v5995
        %8294 = vmatpush1.bf16.msra.mxu0 %v5994
        %8295 = vmatprep.subr.bf16.mxu0 %v6001
        %8296 = vmatpush1.bf16.msra.mxu0 %v6000
        %8297 = vmatprep.subr.bf16.mxu0 %v6007
        %8298 = vmatpush1.bf16.msra.mxu0 %v6006
        %8299 = vmatprep.subr.bf16.mxu0 %v6013
        %8300 = vmatpush1.bf16.msra.mxu0 %v6012
        %8301 = vmatprep.subr.bf16.mxu0 %v6019
        %8302 = vmatpush1.bf16.msra.mxu0 %v6018
        %8303 = vmatprep.subr.bf16.mxu0 %v6025
        %8304 = vmatpush1.bf16.msra.mxu0 %v6024
        %8305 = vmatprep.subr.bf16.mxu0 %v6031
        %8306 = vmatpush1.bf16.msra.mxu0 %v6030
        %8307 = vmatprep.subr.bf16.mxu0 %v6037
        %8308 = vmatpush1.bf16.msra.mxu0 %v6036
        %8309 = vmatprep.subr.bf16.mxu0 %v6043
        %8310 = vmatpush1.bf16.msra.mxu0 %v6042
        %8311 = vmatprep.subr.bf16.mxu0 %v6049
        %8312 = vmatpush1.bf16.msra.mxu0 %v6048
        %8313 = vmatprep.subr.bf16.mxu0 %v6055
        %8314 = vmatpush1.bf16.msra.mxu0 %v6054
        %8315 = vmatprep.subr.bf16.mxu0 %v6061
        %8316 = vmatpush1.bf16.msra.mxu0 %v6060
        %8317 = vmatprep.subr.bf16.mxu0 %v6067
        %8318 = vmatpush1.bf16.msra.mxu0 %v6066
        %8319 = vmatprep.subr.bf16.mxu0 %v6073
        %8320 = vmatpush1.bf16.msra.mxu0 %v6072
        %8321 = vmatprep.subr.bf16.mxu0 %v6079
        %8322 = vmatpush1.bf16.msra.mxu0 %v6078
        %8323 = vmatprep.subr.bf16.mxu0 %v6085
        %8324 = vmatpush1.bf16.msra.mxu0 %v6084
        %8325 = vmatprep.mubr.bf16.mxu0 %v1646
        %8326 = vmatmul.mubr.bf16.gmra.mrb[0].mxu0 %v1644
        %v8327 = vpop.f32.mrb[0].mxu0
        %v8328 = vadd.f32 %v8287, %v8327
        %v8329 = vpop.f32.mrb[0].mxu0
        %v8330 = vadd.f32 %v8289, %v8329
        %v8331 = vpop.f32.mrb[0].mxu0
        %v8332 = vpop.f32.mrb[0].mxu0
        %8333 = vdwg.mxu0
        %8334 = vmatprep.subr.bf16.mxu0 %v6091
        %8335 = vmatpush1.bf16.msra.mxu0 %v6090
        %8336 = vmatprep.subr.bf16.mxu0 %v6097
        %8337 = vmatpush1.bf16.msra.mxu0 %v6096
        %8338 = vmatprep.subr.bf16.mxu0 %v6103
        %8339 = vmatpush1.bf16.msra.mxu0 %v6102
        %8340 = vmatprep.subr.bf16.mxu0 %v6109
        %8341 = vmatpush1.bf16.msra.mxu0 %v6108
        %8342 = vmatprep.subr.bf16.mxu0 %v6115
        %8343 = vmatpush1.bf16.msra.mxu0 %v6114
        %8344 = vmatprep.subr.bf16.mxu0 %v6121
        %8345 = vmatpush1.bf16.msra.mxu0 %v6120
        %8346 = vmatprep.subr.bf16.mxu0 %v6127
        %8347 = vmatpush1.bf16.msra.mxu0 %v6126
        %8348 = vmatprep.subr.bf16.mxu0 %v6133
        %8349 = vmatpush1.bf16.msra.mxu0 %v6132
        %8350 = vmatprep.subr.bf16.mxu0 %v6139
        %8351 = vmatpush1.bf16.msra.mxu0 %v6138
        %8352 = vmatprep.subr.bf16.mxu0 %v6145
        %8353 = vmatpush1.bf16.msra.mxu0 %v6144
        %8354 = vmatprep.subr.bf16.mxu0 %v6151
        %8355 = vmatpush1.bf16.msra.mxu0 %v6150
        %8356 = vmatprep.subr.bf16.mxu0 %v6157
        %8357 = vmatpush1.bf16.msra.mxu0 %v6156
        %8358 = vmatprep.subr.bf16.mxu0 %v6163
        %8359 = vmatpush1.bf16.msra.mxu0 %v6162
        %8360 = vmatprep.subr.bf16.mxu0 %v6169
        %8361 = vmatpush1.bf16.msra.mxu0 %v6168
        %8362 = vmatprep.subr.bf16.mxu0 %v6175
        %8363 = vmatpush1.bf16.msra.mxu0 %v6174
        %8364 = vmatprep.subr.bf16.mxu0 %v6181
        %8365 = vmatpush1.bf16.msra.mxu0 %v6180
        %8366 = vmatprep.mubr.bf16.mxu0 %v1643
        %8367 = vmatmul.mubr.bf16.gmra.mrb[0].mxu0 %v1629
        %v8368 = vpop.f32.mrb[0].mxu0
        %v8369 = vadd.f32 %v8328, %v8368
        %v8370 = vpop.f32.mrb[0].mxu0
        %v8371 = vadd.f32 %v8330, %v8370
        %v8372 = vpop.f32.mrb[0].mxu0
        %v8373 = vpop.f32.mrb[0].mxu0
        %8374 = vdwg.mxu0
        %8375 = vmatprep.subr.bf16.mxu0 %v6187
        %8376 = vmatpush1.bf16.msra.mxu0 %v6186
        %8377 = vmatprep.subr.bf16.mxu0 %v6193
        %8378 = vmatpush1.bf16.msra.mxu0 %v6192
        %8379 = vmatprep.subr.bf16.mxu0 %v6199
        %8380 = vmatpush1.bf16.msra.mxu0 %v6198
        %8381 = vmatprep.subr.bf16.mxu0 %v6205
        %8382 = vmatpush1.bf16.msra.mxu0 %v6204
        %8383 = vmatprep.subr.bf16.mxu0 %v6211
        %8384 = vmatpush1.bf16.msra.mxu0 %v6210
        %8385 = vmatprep.subr.bf16.mxu0 %v6217
        %8386 = vmatpush1.bf16.msra.mxu0 %v6216
        %8387 = vmatprep.subr.bf16.mxu0 %v6223
        %8388 = vmatpush1.bf16.msra.mxu0 %v6222
        %8389 = vmatprep.subr.bf16.mxu0 %v6229
        %8390 = vmatpush1.bf16.msra.mxu0 %v6228
        %8391 = vmatprep.subr.bf16.mxu0 %v6235
        %8392 = vmatpush1.bf16.msra.mxu0 %v6234
        %8393 = vmatprep.subr.bf16.mxu0 %v6241
        %8394 = vmatpush1.bf16.msra.mxu0 %v6240
        %8395 = vmatprep.subr.bf16.mxu0 %v6247
        %8396 = vmatpush1.bf16.msra.mxu0 %v6246
        %8397 = vmatprep.subr.bf16.mxu0 %v6253
        %8398 = vmatpush1.bf16.msra.mxu0 %v6252
        %8399 = vmatprep.subr.bf16.mxu0 %v6259
        %8400 = vmatpush1.bf16.msra.mxu0 %v6258
        %8401 = vmatprep.subr.bf16.mxu0 %v6265
        %8402 = vmatpush1.bf16.msra.mxu0 %v6264
        %8403 = vmatprep.subr.bf16.mxu0 %v6271
        %8404 = vmatpush1.bf16.msra.mxu0 %v6270
        %8405 = vmatprep.subr.bf16.mxu0 %v6277
        %8406 = vmatpush1.bf16.msra.mxu0 %v6276
        %8407 = vmatprep.mubr.bf16.mxu0 %v1647
        %8408 = vmatmul.mubr.bf16.gmra.mrb[0].mxu0 %v1645
        %v8409 = vpop.f32.mrb[0].mxu0
        %v8410 = vadd.f32 %v8369, %v8409
        %v8411 = vpop.f32.mrb[0].mxu0
        %v8412 = vadd.f32 %v8371, %v8411
        %v8413 = vpop.f32.mrb[0].mxu0
        %v8414 = vpop.f32.mrb[0].mxu0
        %8415 = vdwg.mxu0
        %8416 = vmatprep.subr.bf16.mxu0 %v5133
        %8417 = vmatpush1.bf16.msra.mxu0 %v5132
        %8418 = vmatprep.subr.bf16.mxu0 %v5139
        %8419 = vmatpush1.bf16.msra.mxu0 %v5138
        %8420 = vmatprep.subr.bf16.mxu0 %v5145
        %8421 = vmatpush1.bf16.msra.mxu0 %v5144
        %8422 = vmatprep.subr.bf16.mxu0 %v5151
        %8423 = vmatpush1.bf16.msra.mxu0 %v5150
        %8424 = vmatprep.subr.bf16.mxu0 %v5157
        %8425 = vmatpush1.bf16.msra.mxu0 %v5156
        %8426 = vmatprep.subr.bf16.mxu0 %v5163
        %8427 = vmatpush1.bf16.msra.mxu0 %v5162
        %8428 = vmatprep.subr.bf16.mxu0 %v5169
        %8429 = vmatpush1.bf16.msra.mxu0 %v5168
        %8430 = vmatprep.subr.bf16.mxu0 %v5175
        %8431 = vmatpush1.bf16.msra.mxu0 %v5174
        %8432 = vmatprep.subr.bf16.mxu0 %v5181
        %8433 = vmatpush1.bf16.msra.mxu0 %v5180
        %8434 = vmatprep.subr.bf16.mxu0 %v5187
        %8435 = vmatpush1.bf16.msra.mxu0 %v5186
        %8436 = vmatprep.subr.bf16.mxu0 %v5193
        %8437 = vmatpush1.bf16.msra.mxu0 %v5192
        %8438 = vmatprep.subr.bf16.mxu0 %v5199
        %8439 = vmatpush1.bf16.msra.mxu0 %v5198
        %8440 = vmatprep.subr.bf16.mxu0 %v5205
        %8441 = vmatpush1.bf16.msra.mxu0 %v5204
        %8442 = vmatprep.subr.bf16.mxu0 %v5211
        %8443 = vmatpush1.bf16.msra.mxu0 %v5210
        %8444 = vmatprep.subr.bf16.mxu0 %v5217
        %8445 = vmatpush1.bf16.msra.mxu0 %v5216
        %8446 = vmatprep.subr.bf16.mxu0 %v5223
        %8447 = vmatpush1.bf16.msra.mxu0 %v5222
        %8448 = vmatprep.mubr.bf16.mxu0 %v1538
        %8449 = vmatmul.mubr.bf16.gmra.mrb[0].mxu0 %v1524
        %v8450 = vpop.f32.mrb[0].mxu0
        %v8451 = vadd.f32 %v1487, %v8450
        %v8452 = vpop.f32.mrb[0].mxu0
        %v8453 = vadd.f32 %v1491, %v8452
        %v8454 = vpop.f32.mrb[0].mxu0
        %v8455 = vpop.f32.mrb[0].mxu0
        %8456 = vdwg.mxu0
        %8457 = vmatprep.subr.bf16.mxu0 %v5229
        %8458 = vmatpush1.bf16.msra.mxu0 %v5228
        %8459 = vmatprep.subr.bf16.mxu0 %v5235
        %8460 = vmatpush1.bf16.msra.mxu0 %v5234
        %8461 = vmatprep.subr.bf16.mxu0 %v5241
        %8462 = vmatpush1.bf16.msra.mxu0 %v5240
        %8463 = vmatprep.subr.bf16.mxu0 %v5247
        %8464 = vmatpush1.bf16.msra.mxu0 %v5246
        %8465 = vmatprep.subr.bf16.mxu0 %v5253
        %8466 = vmatpush1.bf16.msra.mxu0 %v5252
        %8467 = vmatprep.subr.bf16.mxu0 %v5259
        %8468 = vmatpush1.bf16.msra.mxu0 %v5258
        %8469 = vmatprep.subr.bf16.mxu0 %v5265
        %8470 = vmatpush1.bf16.msra.mxu0 %v5264
        %8471 = vmatprep.subr.bf16.mxu0 %v5271
        %8472 = vmatpush1.bf16.msra.mxu0 %v5270
        %8473 = vmatprep.subr.bf16.mxu0 %v5277
        %8474 = vmatpush1.bf16.msra.mxu0 %v5276
        %8475 = vmatprep.subr.bf16.mxu0 %v5283
        %8476 = vmatpush1.bf16.msra.mxu0 %v5282
        %8477 = vmatprep.subr.bf16.mxu0 %v5289
        %8478 = vmatpush1.bf16.msra.mxu0 %v5288
        %8479 = vmatprep.subr.bf16.mxu0 %v5295
        %8480 = vmatpush1.bf16.msra.mxu0 %v5294
        %8481 = vmatprep.subr.bf16.mxu0 %v5301
        %8482 = vmatpush1.bf16.msra.mxu0 %v5300
        %8483 = vmatprep.subr.bf16.mxu0 %v5307
        %8484 = vmatpush1.bf16.msra.mxu0 %v5306
        %8485 = vmatprep.subr.bf16.mxu0 %v5313
        %8486 = vmatpush1.bf16.msra.mxu0 %v5312
        %8487 = vmatprep.subr.bf16.mxu0 %v5319
        %8488 = vmatpush1.bf16.msra.mxu0 %v5318
        %8489 = vmatprep.mubr.bf16.mxu0 %v1548
        %8490 = vmatmul.mubr.bf16.gmra.mrb[0].mxu0 %v1546
        %v8491 = vpop.f32.mrb[0].mxu0
        %v8492 = vadd.f32 %v8451, %v8491
        %v8493 = vpop.f32.mrb[0].mxu0
        %v8494 = vadd.f32 %v8453, %v8493
        %v8495 = vpop.f32.mrb[0].mxu0
        %v8496 = vpop.f32.mrb[0].mxu0
        %8497 = vdwg.mxu0
        %8498 = vmatprep.subr.bf16.mxu0 %v5325
        %8499 = vmatpush1.bf16.msra.mxu0 %v5324
        %8500 = vmatprep.subr.bf16.mxu0 %v5331
        %8501 = vmatpush1.bf16.msra.mxu0 %v5330
        %8502 = vmatprep.subr.bf16.mxu0 %v5337
        %8503 = vmatpush1.bf16.msra.mxu0 %v5336
        %8504 = vmatprep.subr.bf16.mxu0 %v5343
        %8505 = vmatpush1.bf16.msra.mxu0 %v5342
        %8506 = vmatprep.subr.bf16.mxu0 %v5349
        %8507 = vmatpush1.bf16.msra.mxu0 %v5348
        %8508 = vmatprep.subr.bf16.mxu0 %v5355
        %8509 = vmatpush1.bf16.msra.mxu0 %v5354
        %8510 = vmatprep.subr.bf16.mxu0 %v5361
        %8511 = vmatpush1.bf16.msra.mxu0 %v5360
        %8512 = vmatprep.subr.bf16.mxu0 %v5367
        %8513 = vmatpush1.bf16.msra.mxu0 %v5366
        %8514 = vmatprep.subr.bf16.mxu0 %v5373
        %8515 = vmatpush1.bf16.msra.mxu0 %v5372
        %8516 = vmatprep.subr.bf16.mxu0 %v5379
        %8517 = vmatpush1.bf16.msra.mxu0 %v5378
        %8518 = vmatprep.subr.bf16.mxu0 %v5385
        %8519 = vmatpush1.bf16.msra.mxu0 %v5384
        %8520 = vmatprep.subr.bf16.mxu0 %v5391
        %8521 = vmatpush1.bf16.msra.mxu0 %v5390
        %8522 = vmatprep.subr.bf16.mxu0 %v5397
        %8523 = vmatpush1.bf16.msra.mxu0 %v5396
        %8524 = vmatprep.subr.bf16.mxu0 %v5403
        %8525 = vmatpush1.bf16.msra.mxu0 %v5402
        %8526 = vmatprep.subr.bf16.mxu0 %v5409
        %8527 = vmatpush1.bf16.msra.mxu0 %v5408
        %8528 = vmatprep.subr.bf16.mxu0 %v5415
        %8529 = vmatpush1.bf16.msra.mxu0 %v5414
        %8530 = vmatprep.mubr.bf16.mxu0 %v1545
        %8531 = vmatmul.mubr.bf16.gmra.mrb[0].mxu0 %v1531
        %v8532 = vpop.f32.mrb[0].mxu0
        %v8533 = vadd.f32 %v8492, %v8532
        %v8534 = vpop.f32.mrb[0].mxu0
        %v8535 = vadd.f32 %v8494, %v8534
        %v8536 = vpop.f32.mrb[0].mxu0
        %v8537 = vpop.f32.mrb[0].mxu0
        %8538 = vdwg.mxu0
        %8539 = vmatprep.subr.bf16.mxu0 %v5421
        %8540 = vmatpush1.bf16.msra.mxu0 %v5420
        %8541 = vmatprep.subr.bf16.mxu0 %v5427
        %8542 = vmatpush1.bf16.msra.mxu0 %v5426
        %8543 = vmatprep.subr.bf16.mxu0 %v5433
        %8544 = vmatpush1.bf16.msra.mxu0 %v5432
        %8545 = vmatprep.subr.bf16.mxu0 %v5439
        %8546 = vmatpush1.bf16.msra.mxu0 %v5438
        %8547 = vmatprep.subr.bf16.mxu0 %v5445
        %8548 = vmatpush1.bf16.msra.mxu0 %v5444
        %8549 = vmatprep.subr.bf16.mxu0 %v5451
        %8550 = vmatpush1.bf16.msra.mxu0 %v5450
        %8551 = vmatprep.subr.bf16.mxu0 %v5457
        %8552 = vmatpush1.bf16.msra.mxu0 %v5456
        %8553 = vmatprep.subr.bf16.mxu0 %v5463
        %8554 = vmatpush1.bf16.msra.mxu0 %v5462
        %8555 = vmatprep.subr.bf16.mxu0 %v5469
        %8556 = vmatpush1.bf16.msra.mxu0 %v5468
        %8557 = vmatprep.subr.bf16.mxu0 %v5475
        %8558 = vmatpush1.bf16.msra.mxu0 %v5474
        %8559 = vmatprep.subr.bf16.mxu0 %v5481
        %8560 = vmatpush1.bf16.msra.mxu0 %v5480
        %8561 = vmatprep.subr.bf16.mxu0 %v5487
        %8562 = vmatpush1.bf16.msra.mxu0 %v5486
        %8563 = vmatprep.subr.bf16.mxu0 %v5493
        %8564 = vmatpush1.bf16.msra.mxu0 %v5492
        %8565 = vmatprep.subr.bf16.mxu0 %v5499
        %8566 = vmatpush1.bf16.msra.mxu0 %v5498
        %8567 = vmatprep.subr.bf16.mxu0 %v5505
        %8568 = vmatpush1.bf16.msra.mxu0 %v5504
        %8569 = vmatprep.subr.bf16.mxu0 %v5511
        %8570 = vmatpush1.bf16.msra.mxu0 %v5510
        %8571 = vmatprep.mubr.bf16.mxu0 %v1549
        %8572 = vmatmul.mubr.bf16.gmra.mrb[0].mxu0 %v1547
        %v8573 = vpop.f32.mrb[0].mxu0
        %v8574 = vadd.f32 %v8533, %v8573
        %v8575 = vpop.f32.mrb[0].mxu0
        %v8576 = vadd.f32 %v8535, %v8575
        %v8577 = vpop.f32.mrb[0].mxu0
        %v8578 = vpop.f32.mrb[0].mxu0
        %8579 = vdwg.mxu0
        %8580 = vmatprep.subr.bf16.mxu0 %v5517
        %8581 = vmatpush1.bf16.msra.mxu0 %v5516
        %8582 = vmatprep.subr.bf16.mxu0 %v5523
        %8583 = vmatpush1.bf16.msra.mxu0 %v5522
        %8584 = vmatprep.subr.bf16.mxu0 %v5529
        %8585 = vmatpush1.bf16.msra.mxu0 %v5528
        %8586 = vmatprep.subr.bf16.mxu0 %v5535
        %8587 = vmatpush1.bf16.msra.mxu0 %v5534
        %8588 = vmatprep.subr.bf16.mxu0 %v5541
        %8589 = vmatpush1.bf16.msra.mxu0 %v5540
        %8590 = vmatprep.subr.bf16.mxu0 %v5547
        %8591 = vmatpush1.bf16.msra.mxu0 %v5546
        %8592 = vmatprep.subr.bf16.mxu0 %v5553
        %8593 = vmatpush1.bf16.msra.mxu0 %v5552
        %8594 = vmatprep.subr.bf16.mxu0 %v5559
        %8595 = vmatpush1.bf16.msra.mxu0 %v5558
        %8596 = vmatprep.subr.bf16.mxu0 %v5565
        %8597 = vmatpush1.bf16.msra.mxu0 %v5564
        %8598 = vmatprep.subr.bf16.mxu0 %v5571
        %8599 = vmatpush1.bf16.msra.mxu0 %v5570
        %8600 = vmatprep.subr.bf16.mxu0 %v5577
        %8601 = vmatpush1.bf16.msra.mxu0 %v5576
        %8602 = vmatprep.subr.bf16.mxu0 %v5583
        %8603 = vmatpush1.bf16.msra.mxu0 %v5582
        %8604 = vmatprep.subr.bf16.mxu0 %v5589
        %8605 = vmatpush1.bf16.msra.mxu0 %v5588
        %8606 = vmatprep.subr.bf16.mxu0 %v5595
        %8607 = vmatpush1.bf16.msra.mxu0 %v5594
        %8608 = vmatprep.subr.bf16.mxu0 %v5601
        %8609 = vmatpush1.bf16.msra.mxu0 %v5600
        %8610 = vmatprep.subr.bf16.mxu0 %v5607
        %8611 = vmatpush1.bf16.msra.mxu0 %v5606
        %8612 = vmatprep.mubr.bf16.mxu0 %v1587
        %8613 = vmatmul.mubr.bf16.gmra.mrb[0].mxu0 %v1573
        %v8614 = vpop.f32.mrb[0].mxu0
        %v8615 = vadd.f32 %v8574, %v8614
        %v8616 = vpop.f32.mrb[0].mxu0
        %v8617 = vadd.f32 %v8576, %v8616
        %v8618 = vpop.f32.mrb[0].mxu0
        %v8619 = vpop.f32.mrb[0].mxu0
        %8620 = vdwg.mxu0
        %8621 = vmatprep.subr.bf16.mxu0 %v5613
        %8622 = vmatpush1.bf16.msra.mxu0 %v5612
        %8623 = vmatprep.subr.bf16.mxu0 %v5619
        %8624 = vmatpush1.bf16.msra.mxu0 %v5618
        %8625 = vmatprep.subr.bf16.mxu0 %v5625
        %8626 = vmatpush1.bf16.msra.mxu0 %v5624
        %8627 = vmatprep.subr.bf16.mxu0 %v5631
        %8628 = vmatpush1.bf16.msra.mxu0 %v5630
        %8629 = vmatprep.subr.bf16.mxu0 %v5637
        %8630 = vmatpush1.bf16.msra.mxu0 %v5636
        %8631 = vmatprep.subr.bf16.mxu0 %v5643
        %8632 = vmatpush1.bf16.msra.mxu0 %v5642
        %8633 = vmatprep.subr.bf16.mxu0 %v5649
        %8634 = vmatpush1.bf16.msra.mxu0 %v5648
        %8635 = vmatprep.subr.bf16.mxu0 %v5655
        %8636 = vmatpush1.bf16.msra.mxu0 %v5654
        %8637 = vmatprep.subr.bf16.mxu0 %v5661
        %8638 = vmatpush1.bf16.msra.mxu0 %v5660
        %8639 = vmatprep.subr.bf16.mxu0 %v5667
        %8640 = vmatpush1.bf16.msra.mxu0 %v5666
        %8641 = vmatprep.subr.bf16.mxu0 %v5673
        %8642 = vmatpush1.bf16.msra.mxu0 %v5672
        %8643 = vmatprep.subr.bf16.mxu0 %v5679
        %8644 = vmatpush1.bf16.msra.mxu0 %v5678
        %8645 = vmatprep.subr.bf16.mxu0 %v5685
        %8646 = vmatpush1.bf16.msra.mxu0 %v5684
        %8647 = vmatprep.subr.bf16.mxu0 %v5691
        %8648 = vmatpush1.bf16.msra.mxu0 %v5690
        %8649 = vmatprep.subr.bf16.mxu0 %v5697
        %8650 = vmatpush1.bf16.msra.mxu0 %v5696
        %8651 = vmatprep.subr.bf16.mxu0 %v5703
        %8652 = vmatpush1.bf16.msra.mxu0 %v5702
        %8653 = vmatprep.mubr.bf16.mxu0 %v1597
        %8654 = vmatmul.mubr.bf16.gmra.mrb[0].mxu0 %v1595
        %v8655 = vpop.f32.mrb[0].mxu0
        %v8656 = vadd.f32 %v8615, %v8655
        %v8657 = vpop.f32.mrb[0].mxu0
        %v8658 = vadd.f32 %v8617, %v8657
        %v8659 = vpop.f32.mrb[0].mxu0
        %v8660 = vpop.f32.mrb[0].mxu0
        %8661 = vdwg.mxu0
        %8662 = vmatprep.subr.bf16.mxu0 %v5709
        %8663 = vmatpush1.bf16.msra.mxu0 %v5708
        %8664 = vmatprep.subr.bf16.mxu0 %v5715
        %8665 = vmatpush1.bf16.msra.mxu0 %v5714
        %8666 = vmatprep.subr.bf16.mxu0 %v5721
        %8667 = vmatpush1.bf16.msra.mxu0 %v5720
        %8668 = vmatprep.subr.bf16.mxu0 %v5727
        %8669 = vmatpush1.bf16.msra.mxu0 %v5726
        %8670 = vmatprep.subr.bf16.mxu0 %v5733
        %8671 = vmatpush1.bf16.msra.mxu0 %v5732
        %8672 = vmatprep.subr.bf16.mxu0 %v5739
        %8673 = vmatpush1.bf16.msra.mxu0 %v5738
        %8674 = vmatprep.subr.bf16.mxu0 %v5745
        %8675 = vmatpush1.bf16.msra.mxu0 %v5744
        %8676 = vmatprep.subr.bf16.mxu0 %v5751
        %8677 = vmatpush1.bf16.msra.mxu0 %v5750
        %8678 = vmatprep.subr.bf16.mxu0 %v5757
        %8679 = vmatpush1.bf16.msra.mxu0 %v5756
        %8680 = vmatprep.subr.bf16.mxu0 %v5763
        %8681 = vmatpush1.bf16.msra.mxu0 %v5762
        %8682 = vmatprep.subr.bf16.mxu0 %v5769
        %8683 = vmatpush1.bf16.msra.mxu0 %v5768
        %8684 = vmatprep.subr.bf16.mxu0 %v5775
        %8685 = vmatpush1.bf16.msra.mxu0 %v5774
        %8686 = vmatprep.subr.bf16.mxu0 %v5781
        %8687 = vmatpush1.bf16.msra.mxu0 %v5780
        %8688 = vmatprep.subr.bf16.mxu0 %v5787
        %8689 = vmatpush1.bf16.msra.mxu0 %v5786
        %8690 = vmatprep.subr.bf16.mxu0 %v5793
        %8691 = vmatpush1.bf16.msra.mxu0 %v5792
        %8692 = vmatprep.subr.bf16.mxu0 %v5799
        %8693 = vmatpush1.bf16.msra.mxu0 %v5798
        %8694 = vmatprep.mubr.bf16.mxu0 %v1594
        %8695 = vmatmul.mubr.bf16.gmra.mrb[0].mxu0 %v1580
        %v8696 = vpop.f32.mrb[0].mxu0
        %v8697 = vadd.f32 %v8656, %v8696
        %v8698 = vpop.f32.mrb[0].mxu0
        %v8699 = vadd.f32 %v8658, %v8698
        %v8700 = vpop.f32.mrb[0].mxu0
        %v8701 = vpop.f32.mrb[0].mxu0
        %8702 = vdwg.mxu0
        %8703 = vmatprep.subr.bf16.mxu0 %v5805
        %8704 = vmatpush1.bf16.msra.mxu0 %v5804
        %8705 = vmatprep.subr.bf16.mxu0 %v5811
        %8706 = vmatpush1.bf16.msra.mxu0 %v5810
        %8707 = vmatprep.subr.bf16.mxu0 %v5817
        %8708 = vmatpush1.bf16.msra.mxu0 %v5816
        %8709 = vmatprep.subr.bf16.mxu0 %v5823
        %8710 = vmatpush1.bf16.msra.mxu0 %v5822
        %8711 = vmatprep.subr.bf16.mxu0 %v5829
        %8712 = vmatpush1.bf16.msra.mxu0 %v5828
        %8713 = vmatprep.subr.bf16.mxu0 %v5835
        %8714 = vmatpush1.bf16.msra.mxu0 %v5834
        %8715 = vmatprep.subr.bf16.mxu0 %v5841
        %8716 = vmatpush1.bf16.msra.mxu0 %v5840
        %8717 = vmatprep.subr.bf16.mxu0 %v5847
        %8718 = vmatpush1.bf16.msra.mxu0 %v5846
        %8719 = vmatprep.subr.bf16.mxu0 %v5853
        %8720 = vmatpush1.bf16.msra.mxu0 %v5852
        %8721 = vmatprep.subr.bf16.mxu0 %v5859
        %8722 = vmatpush1.bf16.msra.mxu0 %v5858
        %8723 = vmatprep.subr.bf16.mxu0 %v5865
        %8724 = vmatpush1.bf16.msra.mxu0 %v5864
        %8725 = vmatprep.subr.bf16.mxu0 %v5871
        %8726 = vmatpush1.bf16.msra.mxu0 %v5870
        %8727 = vmatprep.subr.bf16.mxu0 %v5877
        %8728 = vmatpush1.bf16.msra.mxu0 %v5876
        %8729 = vmatprep.subr.bf16.mxu0 %v5883
        %8730 = vmatpush1.bf16.msra.mxu0 %v5882
        %8731 = vmatprep.subr.bf16.mxu0 %v5889
        %8732 = vmatpush1.bf16.msra.mxu0 %v5888
        %8733 = vmatprep.subr.bf16.mxu0 %v5895
        %8734 = vmatpush1.bf16.msra.mxu0 %v5894
        %8735 = vmatprep.mubr.bf16.mxu0 %v1598
        %8736 = vmatmul.mubr.bf16.gmra.mrb[0].mxu0 %v1596
        %v8737 = vpop.f32.mrb[0].mxu0
        %v8738 = vadd.f32 %v8697, %v8737
        %v8739 = vpop.f32.mrb[0].mxu0
        %v8740 = vadd.f32 %v8699, %v8739
        %v8741 = vpop.f32.mrb[0].mxu0
        %v8742 = vpop.f32.mrb[0].mxu0
        %8743 = vdwg.mxu0
        %8744 = vmatprep.subr.bf16.mxu0 %v5901
        %8745 = vmatpush1.bf16.msra.mxu0 %v5900
        %8746 = vmatprep.subr.bf16.mxu0 %v5907
        %8747 = vmatpush1.bf16.msra.mxu0 %v5906
        %8748 = vmatprep.subr.bf16.mxu0 %v5913
        %8749 = vmatpush1.bf16.msra.mxu0 %v5912
        %8750 = vmatprep.subr.bf16.mxu0 %v5919
        %8751 = vmatpush1.bf16.msra.mxu0 %v5918
        %8752 = vmatprep.subr.bf16.mxu0 %v5925
        %8753 = vmatpush1.bf16.msra.mxu0 %v5924
        %8754 = vmatprep.subr.bf16.mxu0 %v5931
        %8755 = vmatpush1.bf16.msra.mxu0 %v5930
        %8756 = vmatprep.subr.bf16.mxu0 %v5937
        %8757 = vmatpush1.bf16.msra.mxu0 %v5936
        %8758 = vmatprep.subr.bf16.mxu0 %v5943
        %8759 = vmatpush1.bf16.msra.mxu0 %v5942
        %8760 = vmatprep.subr.bf16.mxu0 %v5949
        %8761 = vmatpush1.bf16.msra.mxu0 %v5948
        %8762 = vmatprep.subr.bf16.mxu0 %v5955
        %8763 = vmatpush1.bf16.msra.mxu0 %v5954
        %8764 = vmatprep.subr.bf16.mxu0 %v5961
        %8765 = vmatpush1.bf16.msra.mxu0 %v5960
        %8766 = vmatprep.subr.bf16.mxu0 %v5967
        %8767 = vmatpush1.bf16.msra.mxu0 %v5966
        %8768 = vmatprep.subr.bf16.mxu0 %v5973
        %8769 = vmatpush1.bf16.msra.mxu0 %v5972
        %8770 = vmatprep.subr.bf16.mxu0 %v5979
        %8771 = vmatpush1.bf16.msra.mxu0 %v5978
        %8772 = vmatprep.subr.bf16.mxu0 %v5985
        %8773 = vmatpush1.bf16.msra.mxu0 %v5984
        %8774 = vmatprep.subr.bf16.mxu0 %v5991
        %8775 = vmatpush1.bf16.msra.mxu0 %v5990
        %8776 = vmatprep.mubr.bf16.mxu0 %v1636
        %8777 = vmatmul.mubr.bf16.gmra.mrb[0].mxu0 %v1622
        %v8778 = vpop.f32.mrb[0].mxu0
        %v8779 = vadd.f32 %v8738, %v8778
        %v8780 = vpop.f32.mrb[0].mxu0
        %v8781 = vadd.f32 %v8740, %v8780
        %v8782 = vpop.f32.mrb[0].mxu0
        %v8783 = vpop.f32.mrb[0].mxu0
        %8784 = vdwg.mxu0
        %8785 = vmatprep.subr.bf16.mxu0 %v5997
        %8786 = vmatpush1.bf16.msra.mxu0 %v5996
        %8787 = vmatprep.subr.bf16.mxu0 %v6003
        %8788 = vmatpush1.bf16.msra.mxu0 %v6002
        %8789 = vmatprep.subr.bf16.mxu0 %v6009
        %8790 = vmatpush1.bf16.msra.mxu0 %v6008
        %8791 = vmatprep.subr.bf16.mxu0 %v6015
        %8792 = vmatpush1.bf16.msra.mxu0 %v6014
        %8793 = vmatprep.subr.bf16.mxu0 %v6021
        %8794 = vmatpush1.bf16.msra.mxu0 %v6020
        %8795 = vmatprep.subr.bf16.mxu0 %v6027
        %8796 = vmatpush1.bf16.msra.mxu0 %v6026
        %8797 = vmatprep.subr.bf16.mxu0 %v6033
        %8798 = vmatpush1.bf16.msra.mxu0 %v6032
        %8799 = vmatprep.subr.bf16.mxu0 %v6039
        %8800 = vmatpush1.bf16.msra.mxu0 %v6038
        %8801 = vmatprep.subr.bf16.mxu0 %v6045
        %8802 = vmatpush1.bf16.msra.mxu0 %v6044
        %8803 = vmatprep.subr.bf16.mxu0 %v6051
        %8804 = vmatpush1.bf16.msra.mxu0 %v6050
        %8805 = vmatprep.subr.bf16.mxu0 %v6057
        %8806 = vmatpush1.bf16.msra.mxu0 %v6056
        %8807 = vmatprep.subr.bf16.mxu0 %v6063
        %8808 = vmatpush1.bf16.msra.mxu0 %v6062
        %8809 = vmatprep.subr.bf16.mxu0 %v6069
        %8810 = vmatpush1.bf16.msra.mxu0 %v6068
        %8811 = vmatprep.subr.bf16.mxu0 %v6075
        %8812 = vmatpush1.bf16.msra.mxu0 %v6074
        %8813 = vmatprep.subr.bf16.mxu0 %v6081
        %8814 = vmatpush1.bf16.msra.mxu0 %v6080
        %8815 = vmatprep.subr.bf16.mxu0 %v6087
        %8816 = vmatpush1.bf16.msra.mxu0 %v6086
        %8817 = vmatprep.mubr.bf16.mxu0 %v1646
        %8818 = vmatmul.mubr.bf16.gmra.mrb[0].mxu0 %v1644
        %v8819 = vpop.f32.mrb[0].mxu0
        %v8820 = vadd.f32 %v8779, %v8819
        %v8821 = vpop.f32.mrb[0].mxu0
        %v8822 = vadd.f32 %v8781, %v8821
        %v8823 = vpop.f32.mrb[0].mxu0
        %v8824 = vpop.f32.mrb[0].mxu0
        %8825 = vdwg.mxu0
        %8826 = vmatprep.subr.bf16.mxu0 %v6093
        %8827 = vmatpush1.bf16.msra.mxu0 %v6092
        %8828 = vmatprep.subr.bf16.mxu0 %v6099
        %8829 = vmatpush1.bf16.msra.mxu0 %v6098
        %8830 = vmatprep.subr.bf16.mxu0 %v6105
        %8831 = vmatpush1.bf16.msra.mxu0 %v6104
        %8832 = vmatprep.subr.bf16.mxu0 %v6111
        %8833 = vmatpush1.bf16.msra.mxu0 %v6110
        %8834 = vmatprep.subr.bf16.mxu0 %v6117
        %8835 = vmatpush1.bf16.msra.mxu0 %v6116
        %8836 = vmatprep.subr.bf16.mxu0 %v6123
        %8837 = vmatpush1.bf16.msra.mxu0 %v6122
        %8838 = vmatprep.subr.bf16.mxu0 %v6129
        %8839 = vmatpush1.bf16.msra.mxu0 %v6128
        %8840 = vmatprep.subr.bf16.mxu0 %v6135
        %8841 = vmatpush1.bf16.msra.mxu0 %v6134
        %8842 = vmatprep.subr.bf16.mxu0 %v6141
        %8843 = vmatpush1.bf16.msra.mxu0 %v6140
        %8844 = vmatprep.subr.bf16.mxu0 %v6147
        %8845 = vmatpush1.bf16.msra.mxu0 %v6146
        %8846 = vmatprep.subr.bf16.mxu0 %v6153
        %8847 = vmatpush1.bf16.msra.mxu0 %v6152
        %8848 = vmatprep.subr.bf16.mxu0 %v6159
        %8849 = vmatpush1.bf16.msra.mxu0 %v6158
        %8850 = vmatprep.subr.bf16.mxu0 %v6165
        %8851 = vmatpush1.bf16.msra.mxu0 %v6164
        %8852 = vmatprep.subr.bf16.mxu0 %v6171
        %8853 = vmatpush1.bf16.msra.mxu0 %v6170
        %8854 = vmatprep.subr.bf16.mxu0 %v6177
        %8855 = vmatpush1.bf16.msra.mxu0 %v6176
        %8856 = vmatprep.subr.bf16.mxu0 %v6183
        %8857 = vmatpush1.bf16.msra.mxu0 %v6182
        %8858 = vmatprep.mubr.bf16.mxu0 %v1643
        %8859 = vmatmul.mubr.bf16.gmra.mrb[0].mxu0 %v1629
        %v8860 = vpop.f32.mrb[0].mxu0
        %v8861 = vadd.f32 %v8820, %v8860
        %v8862 = vpop.f32.mrb[0].mxu0
        %v8863 = vadd.f32 %v8822, %v8862
        %v8864 = vpop.f32.mrb[0].mxu0
        %v8865 = vpop.f32.mrb[0].mxu0
        %8866 = vdwg.mxu0
        %8867 = vmatprep.subr.bf16.mxu0 %v6189
        %8868 = vmatpush1.bf16.msra.mxu0 %v6188
        %8869 = vmatprep.subr.bf16.mxu0 %v6195
        %8870 = vmatpush1.bf16.msra.mxu0 %v6194
        %8871 = vmatprep.subr.bf16.mxu0 %v6201
        %8872 = vmatpush1.bf16.msra.mxu0 %v6200
        %8873 = vmatprep.subr.bf16.mxu0 %v6207
        %8874 = vmatpush1.bf16.msra.mxu0 %v6206
        %8875 = vmatprep.subr.bf16.mxu0 %v6213
        %8876 = vmatpush1.bf16.msra.mxu0 %v6212
        %8877 = vmatprep.subr.bf16.mxu0 %v6219
        %8878 = vmatpush1.bf16.msra.mxu0 %v6218
        %8879 = vmatprep.subr.bf16.mxu0 %v6225
        %8880 = vmatpush1.bf16.msra.mxu0 %v6224
        %8881 = vmatprep.subr.bf16.mxu0 %v6231
        %8882 = vmatpush1.bf16.msra.mxu0 %v6230
        %8883 = vmatprep.subr.bf16.mxu0 %v6237
        %8884 = vmatpush1.bf16.msra.mxu0 %v6236
        %8885 = vmatprep.subr.bf16.mxu0 %v6243
        %8886 = vmatpush1.bf16.msra.mxu0 %v6242
        %8887 = vmatprep.subr.bf16.mxu0 %v6249
        %8888 = vmatpush1.bf16.msra.mxu0 %v6248
        %8889 = vmatprep.subr.bf16.mxu0 %v6255
        %8890 = vmatpush1.bf16.msra.mxu0 %v6254
        %8891 = vmatprep.subr.bf16.mxu0 %v6261
        %8892 = vmatpush1.bf16.msra.mxu0 %v6260
        %8893 = vmatprep.subr.bf16.mxu0 %v6267
        %8894 = vmatpush1.bf16.msra.mxu0 %v6266
        %8895 = vmatprep.subr.bf16.mxu0 %v6273
        %8896 = vmatpush1.bf16.msra.mxu0 %v6272
        %8897 = vmatprep.subr.bf16.mxu0 %v6279
        %8898 = vmatpush1.bf16.msra.mxu0 %v6278
        %8899 = vmatprep.mubr.bf16.mxu0 %v1647
        %8900 = vmatmul.mubr.bf16.gmra.mrb[0].mxu0 %v1645
        %v8901 = vpop.f32.mrb[0].mxu0
        %v8902 = vadd.f32 %v8861, %v8901
        %v8903 = vpop.f32.mrb[0].mxu0
        %v8904 = vadd.f32 %v8863, %v8903
        %v8905 = vpop.f32.mrb[0].mxu0
        %v8906 = vpop.f32.mrb[0].mxu0
        %8907 = vdwg.mxu0
        %v8908 = vmax.f32 %v7918, 0.0
        %v8909 = vmax.f32 %v7920, 0.0
        %v8910 = vmax.f32 %v8410, 0.0
        %v8911 = vmax.f32 %v8412, 0.0
        %v8912 = vmax.f32 %v8902, 0.0
        %v8913 = vmax.f32 %v8904, 0.0
        %v8914 = vld [vmem:[#allocation8] sm:$0x3]
        %v8915 = vpack.c.bf16 %v8908, %v8908
        %v8916 = vpack.c.bf16 %v8909, %v8909
        %v8917 = vpack.c.bf16 %v8910, %v8910
        %v8918 = vpack.c.bf16 %v8911, %v8911
        %v8919 = vpack.c.bf16 %v8912, %v8912
        %v8920 = vpack.c.bf16 %v8913, %v8913
        %v8921 = vld [vmem:[%s302] sm:$0xf]
        %v8922 = vld [vmem:[%s302 + $0x4] sm:$0xf]
        %v8923 = vld [vmem:[%s302 + $0x8] sm:$0xf]
        %v8924 = vld [vmem:[%s302 + $0xc] sm:$0xf]
        %v8925 = vld [vmem:[%s302 + $0x10] sm:$0xf]
        %v8926 = vld [vmem:[%s302 + $0x14] sm:$0xf]
        %v8927 = vld [vmem:[%s302 + $0x18] sm:$0xf]
        %v8928 = vld [vmem:[%s302 + $0x1c] sm:$0xf]
        %v8929 = vld [vmem:[%s302 + $0x20] sm:$0xf]
        %v8930 = vld [vmem:[%s302 + $0x24] sm:$0xf]
        %v8931 = vld [vmem:[%s302 + $0x28] sm:$0xf]
        %v8932 = vld [vmem:[%s302 + $0x2c] sm:$0xf]
        %v8933 = vld [vmem:[%s302 + $0x30] sm:$0xf]
        %v8934 = vld [vmem:[%s302 + $0x34] sm:$0xf]
        %v8935 = vld [vmem:[%s302 + $0x38] sm:$0xf]
        %v8936 = vld [vmem:[%s302 + $0x3c] sm:$0xf]
        %v8937 = vld [vmem:[%s302 + $0x40] sm:$0xf]
        %v8938 = vld [vmem:[%s302 + $0x44] sm:$0xf]
        %v8939 = vld [vmem:[%s302 + $0x48] sm:$0xf]
        %v8940 = vld [vmem:[%s302 + $0x4c] sm:$0xf]
        %v8941 = vld [vmem:[%s302 + $0x50] sm:$0xf]
        %v8942 = vld [vmem:[%s302 + $0x54] sm:$0xf]
        %v8943 = vld [vmem:[%s302 + $0x58] sm:$0xf]
        %v8944 = vld [vmem:[%s302 + $0x5c] sm:$0xf]
        %v8945 = vld [vmem:[%s302 + $0x60] sm:$0xf]
        %v8946 = vld [vmem:[%s302 + $0x64] sm:$0xf]
        %v8947 = vld [vmem:[%s302 + $0x68] sm:$0xf]
        %v8948 = vld [vmem:[%s302 + $0x6c] sm:$0xf]
        %v8949 = vld [vmem:[%s302 + $0x70] sm:$0xf]
        %v8950 = vld [vmem:[%s302 + $0x74] sm:$0xf]
        %v8951 = vld [vmem:[%s302 + $0x78] sm:$0xf]
        %v8952 = vld [vmem:[%s302 + $0x7c] sm:$0xf]
        %v8953 = vld [vmem:[%s302 + $0x80] sm:$0xf]
        %v8954 = vld [vmem:[%s302 + $0x84] sm:$0xf]
        %v8955 = vld [vmem:[%s302 + $0x88] sm:$0xf]
        %v8956 = vld [vmem:[%s302 + $0x8c] sm:$0xf]
        %v8957 = vld [vmem:[%s302 + $0x90] sm:$0xf]
        %v8958 = vld [vmem:[%s302 + $0x94] sm:$0xf]
        %v8959 = vld [vmem:[%s302 + $0x98] sm:$0xf]
        %v8960 = vld [vmem:[%s302 + $0x9c] sm:$0xf]
        %v8961 = vld [vmem:[%s302 + $0xa0] sm:$0xf]
        %v8962 = vld [vmem:[%s302 + $0xa4] sm:$0xf]
        %v8963 = vld [vmem:[%s302 + $0xa8] sm:$0xf]
        %v8964 = vld [vmem:[%s302 + $0xac] sm:$0xf]
        %v8965 = vld [vmem:[%s302 + $0xb0] sm:$0xf]
        %v8966 = vld [vmem:[%s302 + $0xb4] sm:$0xf]
        %v8967 = vld [vmem:[%s302 + $0xb8] sm:$0xf]
        %v8968 = vld [vmem:[%s302 + $0xbc] sm:$0xf]
        %v8969 = vld [vmem:[%s302 + $0xc0] sm:$0xf]
        %v8970 = vld [vmem:[%s302 + $0xc4] sm:$0xf]
        %v8971 = vld [vmem:[%s302 + $0xc8] sm:$0xf]
        %v8972 = vld [vmem:[%s302 + $0xcc] sm:$0xf]
        %v8973 = vld [vmem:[%s302 + $0xd0] sm:$0xf]
        %v8974 = vld [vmem:[%s302 + $0xd4] sm:$0xf]
        %v8975 = vld [vmem:[%s302 + $0xd8] sm:$0xf]
        %v8976 = vld [vmem:[%s302 + $0xdc] sm:$0xf]
        %v8977 = vld [vmem:[%s302 + $0xe0] sm:$0xf]
        %v8978 = vld [vmem:[%s302 + $0xe4] sm:$0xf]
        %v8979 = vld [vmem:[%s302 + $0xe8] sm:$0xf]
        %v8980 = vld [vmem:[%s302 + $0xec] sm:$0xf]
        %v8981 = vld [vmem:[%s302 + $0xf0] sm:$0xf]
        %v8982 = vld [vmem:[%s302 + $0xf4] sm:$0xf]
        %v8983 = vld [vmem:[%s302 + $0xf8] sm:$0xf]
        %v8984 = vld [vmem:[%s302 + $0xfc] sm:$0xf]
        %v8985 = vld [vmem:[%s302 + $0x100] sm:$0xf]
        %v8986 = vld [vmem:[%s302 + $0x104] sm:$0xf]
        %v8987 = vld [vmem:[%s302 + $0x108] sm:$0xf]
        %v8988 = vld [vmem:[%s302 + $0x10c] sm:$0xf]
        %v8989 = vld [vmem:[%s302 + $0x110] sm:$0xf]
        %v8990 = vld [vmem:[%s302 + $0x114] sm:$0xf]
        %v8991 = vld [vmem:[%s302 + $0x118] sm:$0xf]
        %v8992 = vld [vmem:[%s302 + $0x11c] sm:$0xf]
        %v8993 = vld [vmem:[%s302 + $0x120] sm:$0xf]
        %v8994 = vld [vmem:[%s302 + $0x124] sm:$0xf]
        %v8995 = vld [vmem:[%s302 + $0x128] sm:$0xf]
        %v8996 = vld [vmem:[%s302 + $0x12c] sm:$0xf]
        %v8997 = vld [vmem:[%s302 + $0x130] sm:$0xf]
        %v8998 = vld [vmem:[%s302 + $0x134] sm:$0xf]
        %v8999 = vld [vmem:[%s302 + $0x138] sm:$0xf]
        %v9000 = vld [vmem:[%s302 + $0x13c] sm:$0xf]
        %v9001 = vld [vmem:[%s302 + $0x140] sm:$0xf]
        %v9002 = vld [vmem:[%s302 + $0x144] sm:$0xf]
        %v9003 = vld [vmem:[%s302 + $0x148] sm:$0xf]
        %v9004 = vld [vmem:[%s302 + $0x14c] sm:$0xf]
        %v9005 = vld [vmem:[%s302 + $0x150] sm:$0xf]
        %v9006 = vld [vmem:[%s302 + $0x154] sm:$0xf]
        %v9007 = vld [vmem:[%s302 + $0x158] sm:$0xf]
        %v9008 = vld [vmem:[%s302 + $0x15c] sm:$0xf]
        %v9009 = vld [vmem:[%s302 + $0x160] sm:$0xf]
        %v9010 = vld [vmem:[%s302 + $0x164] sm:$0xf]
        %v9011 = vld [vmem:[%s302 + $0x168] sm:$0xf]
        %v9012 = vld [vmem:[%s302 + $0x16c] sm:$0xf]
        %v9013 = vld [vmem:[%s302 + $0x170] sm:$0xf]
        %v9014 = vld [vmem:[%s302 + $0x174] sm:$0xf]
        %v9015 = vld [vmem:[%s302 + $0x178] sm:$0xf]
        %v9016 = vld [vmem:[%s302 + $0x17c] sm:$0xf]
        %v9113 = vunpack.c.l.b16 %v8921
        %v9114 = vunpack.c.l.b16 %v8922
        %v9115 = vunpack.c.l.b16 %v8923
        %v9116 = vunpack.c.l.b16 %v8924
        %v9117 = vunpack.c.l.b16 %v8925
        %v9118 = vunpack.c.l.b16 %v8926
        %v9119 = vunpack.c.l.b16 %v8927
        %v9120 = vunpack.c.l.b16 %v8928
        %v9121 = vunpack.c.l.b16 %v8929
        %v9122 = vunpack.c.l.b16 %v8930
        %v9123 = vunpack.c.l.b16 %v8931
        %v9124 = vunpack.c.l.b16 %v8932
        %v9125 = vunpack.c.l.b16 %v8933
        %v9126 = vunpack.c.l.b16 %v8934
        %v9127 = vunpack.c.l.b16 %v8935
        %v9128 = vunpack.c.l.b16 %v8936
        %v9129 = vunpack.c.l.b16 %v8937
        %v9130 = vunpack.c.l.b16 %v8938
        %v9131 = vunpack.c.l.b16 %v8939
        %v9132 = vunpack.c.l.b16 %v8940
        %v9133 = vunpack.c.l.b16 %v8941
        %v9134 = vunpack.c.l.b16 %v8942
        %v9135 = vunpack.c.l.b16 %v8943
        %v9136 = vunpack.c.l.b16 %v8944
        %v9137 = vunpack.c.l.b16 %v8945
        %v9138 = vunpack.c.l.b16 %v8946
        %v9139 = vunpack.c.l.b16 %v8947
        %v9140 = vunpack.c.l.b16 %v8948
        %v9141 = vunpack.c.l.b16 %v8949
        %v9142 = vunpack.c.l.b16 %v8950
        %v9143 = vunpack.c.l.b16 %v8951
        %v9144 = vunpack.c.l.b16 %v8952
        %v9145 = vunpack.c.l.b16 %v8953
        %v9146 = vunpack.c.l.b16 %v8954
        %v9147 = vunpack.c.l.b16 %v8955
        %v9148 = vunpack.c.l.b16 %v8956
        %v9149 = vunpack.c.l.b16 %v8957
        %v9150 = vunpack.c.l.b16 %v8958
        %v9151 = vunpack.c.l.b16 %v8959
        %v9152 = vunpack.c.l.b16 %v8960
        %v9153 = vunpack.c.l.b16 %v8961
        %v9154 = vunpack.c.l.b16 %v8962
        %v9155 = vunpack.c.l.b16 %v8963
        %v9156 = vunpack.c.l.b16 %v8964
        %v9157 = vunpack.c.l.b16 %v8965
        %v9158 = vunpack.c.l.b16 %v8966
        %v9159 = vunpack.c.l.b16 %v8967
        %v9160 = vunpack.c.l.b16 %v8968
        %v9161 = vunpack.c.l.b16 %v8969
        %v9162 = vunpack.c.l.b16 %v8970
        %v9163 = vunpack.c.l.b16 %v8971
        %v9164 = vunpack.c.l.b16 %v8972
        %v9165 = vunpack.c.l.b16 %v8973
        %v9166 = vunpack.c.l.b16 %v8974
        %v9167 = vunpack.c.l.b16 %v8975
        %v9168 = vunpack.c.l.b16 %v8976
        %v9169 = vunpack.c.l.b16 %v8977
        %v9170 = vunpack.c.l.b16 %v8978
        %v9171 = vunpack.c.l.b16 %v8979
        %v9172 = vunpack.c.l.b16 %v8980
        %v9173 = vunpack.c.l.b16 %v8981
        %v9174 = vunpack.c.l.b16 %v8982
        %v9175 = vunpack.c.l.b16 %v8983
        %v9176 = vunpack.c.l.b16 %v8984
        %v9177 = vunpack.c.l.b16 %v8985
        %v9178 = vunpack.c.l.b16 %v8986
        %v9179 = vunpack.c.l.b16 %v8987
        %v9180 = vunpack.c.l.b16 %v8988
        %v9181 = vunpack.c.l.b16 %v8989
        %v9182 = vunpack.c.l.b16 %v8990
        %v9183 = vunpack.c.l.b16 %v8991
        %v9184 = vunpack.c.l.b16 %v8992
        %v9185 = vunpack.c.l.b16 %v8993
        %v9186 = vunpack.c.l.b16 %v8994
        %v9187 = vunpack.c.l.b16 %v8995
        %v9188 = vunpack.c.l.b16 %v8996
        %v9189 = vunpack.c.l.b16 %v8997
        %v9190 = vunpack.c.l.b16 %v8998
        %v9191 = vunpack.c.l.b16 %v8999
        %v9192 = vunpack.c.l.b16 %v9000
        %v9193 = vunpack.c.l.b16 %v9001
        %v9194 = vunpack.c.l.b16 %v9002
        %v9195 = vunpack.c.l.b16 %v9003
        %v9196 = vunpack.c.l.b16 %v9004
        %v9197 = vunpack.c.l.b16 %v9005
        %v9198 = vunpack.c.l.b16 %v9006
        %v9199 = vunpack.c.l.b16 %v9007
        %v9200 = vunpack.c.l.b16 %v9008
        %v9201 = vunpack.c.l.b16 %v9009
        %v9202 = vunpack.c.l.b16 %v9010
        %v9203 = vunpack.c.l.b16 %v9011
        %v9204 = vunpack.c.l.b16 %v9012
        %v9205 = vunpack.c.l.b16 %v9013
        %v9206 = vunpack.c.l.b16 %v9014
        %v9207 = vunpack.c.l.b16 %v9015
        %v9208 = vunpack.c.l.b16 %v9016
        %v9209 = vpack.c.b16 %v9114, %v9113
        %v9210 = vpack.c.b16 %v9116, %v9115
        %v9211 = vpack.c.b16 %v9118, %v9117
        %v9212 = vpack.c.b16 %v9120, %v9119
        %v9213 = vpack.c.b16 %v9122, %v9121
        %v9214 = vpack.c.b16 %v9124, %v9123
        %v9215 = vpack.c.b16 %v9126, %v9125
        %v9216 = vpack.c.b16 %v9128, %v9127
        %v9217 = vpack.c.b16 %v9130, %v9129
        %v9218 = vpack.c.b16 %v9132, %v9131
        %v9219 = vpack.c.b16 %v9134, %v9133
        %v9220 = vpack.c.b16 %v9136, %v9135
        %v9221 = vpack.c.b16 %v9138, %v9137
        %v9222 = vpack.c.b16 %v9140, %v9139
        %v9223 = vpack.c.b16 %v9142, %v9141
        %v9224 = vpack.c.b16 %v9144, %v9143
        %v9225 = vpack.c.b16 %v9146, %v9145
        %v9226 = vpack.c.b16 %v9148, %v9147
        %v9227 = vpack.c.b16 %v9150, %v9149
        %v9228 = vpack.c.b16 %v9152, %v9151
        %v9229 = vpack.c.b16 %v9154, %v9153
        %v9230 = vpack.c.b16 %v9156, %v9155
        %v9231 = vpack.c.b16 %v9158, %v9157
        %v9232 = vpack.c.b16 %v9160, %v9159
        %v9233 = vpack.c.b16 %v9162, %v9161
        %v9234 = vpack.c.b16 %v9164, %v9163
        %v9235 = vpack.c.b16 %v9166, %v9165
        %v9236 = vpack.c.b16 %v9168, %v9167
        %v9237 = vpack.c.b16 %v9170, %v9169
        %v9238 = vpack.c.b16 %v9172, %v9171
        %v9239 = vpack.c.b16 %v9174, %v9173
        %v9240 = vpack.c.b16 %v9176, %v9175
        %v9241 = vpack.c.b16 %v9178, %v9177
        %v9242 = vpack.c.b16 %v9180, %v9179
        %v9243 = vpack.c.b16 %v9182, %v9181
        %v9244 = vpack.c.b16 %v9184, %v9183
        %v9245 = vpack.c.b16 %v9186, %v9185
        %v9246 = vpack.c.b16 %v9188, %v9187
        %v9247 = vpack.c.b16 %v9190, %v9189
        %v9248 = vpack.c.b16 %v9192, %v9191
        %v9249 = vpack.c.b16 %v9194, %v9193
        %v9250 = vpack.c.b16 %v9196, %v9195
        %v9251 = vpack.c.b16 %v9198, %v9197
        %v9252 = vpack.c.b16 %v9200, %v9199
        %v9253 = vpack.c.b16 %v9202, %v9201
        %v9254 = vpack.c.b16 %v9204, %v9203
        %v9255 = vpack.c.b16 %v9206, %v9205
        %v9256 = vpack.c.b16 %v9208, %v9207
        %9305 = vmatprep.subr.bf16.mxu0 0
        %9306 = vmatpush1.bf16.msra.mxu0 %v9209
        %9307 = vmatprep.subr.bf16.mxu0 0
        %9308 = vmatpush1.bf16.msra.mxu0 %v9210
        %9309 = vmatprep.subr.bf16.mxu0 0
        %9310 = vmatpush1.bf16.msra.mxu0 %v9211
        %9311 = vmatprep.subr.bf16.mxu0 0
        %9312 = vmatpush1.bf16.msra.mxu0 %v9212
        %9313 = vmatprep.subr.bf16.mxu0 0
        %9314 = vmatpush1.bf16.msra.mxu0 %v9213
        %9315 = vmatprep.subr.bf16.mxu0 0
        %9316 = vmatpush1.bf16.msra.mxu0 %v9214
        %9317 = vmatprep.subr.bf16.mxu0 0
        %9318 = vmatpush1.bf16.msra.mxu0 %v9215
        %9319 = vmatprep.subr.bf16.mxu0 0
        %9320 = vmatpush1.bf16.msra.mxu0 %v9216
        %9321 = vmatprep.subr.bf16.mxu0 0
        %9322 = vmatpush1.bf16.msra.mxu0 %v9217
        %9323 = vmatprep.subr.bf16.mxu0 0
        %9324 = vmatpush1.bf16.msra.mxu0 %v9218
        %9325 = vmatprep.subr.bf16.mxu0 0
        %9326 = vmatpush1.bf16.msra.mxu0 %v9219
        %9327 = vmatprep.subr.bf16.mxu0 0
        %9328 = vmatpush1.bf16.msra.mxu0 %v9220
        %9329 = vmatprep.subr.bf16.mxu0 0
        %9330 = vmatpush1.bf16.msra.mxu0 %v9221
        %9331 = vmatprep.subr.bf16.mxu0 0
        %9332 = vmatpush1.bf16.msra.mxu0 %v9222
        %9333 = vmatprep.subr.bf16.mxu0 0
        %9334 = vmatpush1.bf16.msra.mxu0 %v9223
        %9335 = vmatprep.subr.bf16.mxu0 0
        %9336 = vmatpush1.bf16.msra.mxu0 %v9224
        %9337 = vmatprep.mubr.bf16.mxu0 %v8916
        %9338 = vmatmul.mubr.bf16.gmra.mrb[0].mxu0 %v8915
        %v9339 = vpop.f32.mrb[0].mxu0
        %v9340 = vadd.f32 0.0, %v9339
        %v9341 = vpop.f32.mrb[0].mxu0
        %v9342 = vpop.f32.mrb[0].mxu0
        %v9343 = vpop.f32.mrb[0].mxu0
        %9344 = vdwg.mxu0
        %9345 = vmatprep.subr.bf16.mxu0 0
        %9346 = vmatpush1.bf16.msra.mxu0 %v9225
        %9347 = vmatprep.subr.bf16.mxu0 0
        %9348 = vmatpush1.bf16.msra.mxu0 %v9226
        %9349 = vmatprep.subr.bf16.mxu0 0
        %9350 = vmatpush1.bf16.msra.mxu0 %v9227
        %9351 = vmatprep.subr.bf16.mxu0 0
        %9352 = vmatpush1.bf16.msra.mxu0 %v9228
        %9353 = vmatprep.subr.bf16.mxu0 0
        %9354 = vmatpush1.bf16.msra.mxu0 %v9229
        %9355 = vmatprep.subr.bf16.mxu0 0
        %9356 = vmatpush1.bf16.msra.mxu0 %v9230
        %9357 = vmatprep.subr.bf16.mxu0 0
        %9358 = vmatpush1.bf16.msra.mxu0 %v9231
        %9359 = vmatprep.subr.bf16.mxu0 0
        %9360 = vmatpush1.bf16.msra.mxu0 %v9232
        %9361 = vmatprep.subr.bf16.mxu0 0
        %9362 = vmatpush1.bf16.msra.mxu0 %v9233
        %9363 = vmatprep.subr.bf16.mxu0 0
        %9364 = vmatpush1.bf16.msra.mxu0 %v9234
        %9365 = vmatprep.subr.bf16.mxu0 0
        %9366 = vmatpush1.bf16.msra.mxu0 %v9235
        %9367 = vmatprep.subr.bf16.mxu0 0
        %9368 = vmatpush1.bf16.msra.mxu0 %v9236
        %9369 = vmatprep.subr.bf16.mxu0 0
        %9370 = vmatpush1.bf16.msra.mxu0 %v9237
        %9371 = vmatprep.subr.bf16.mxu0 0
        %9372 = vmatpush1.bf16.msra.mxu0 %v9238
        %9373 = vmatprep.subr.bf16.mxu0 0
        %9374 = vmatpush1.bf16.msra.mxu0 %v9239
        %9375 = vmatprep.subr.bf16.mxu0 0
        %9376 = vmatpush1.bf16.msra.mxu0 %v9240
        %9377 = vmatprep.mubr.bf16.mxu0 %v8918
        %9378 = vmatmul.mubr.bf16.gmra.mrb[0].mxu0 %v8917
        %v9379 = vpop.f32.mrb[0].mxu0
        %v9380 = vadd.f32 %v9340, %v9379
        %v9381 = vpop.f32.mrb[0].mxu0
        %v9382 = vpop.f32.mrb[0].mxu0
        %v9383 = vpop.f32.mrb[0].mxu0
        %9384 = vdwg.mxu0
        %9385 = vmatprep.subr.bf16.mxu0 0
        %9386 = vmatpush1.bf16.msra.mxu0 %v9241
        %9387 = vmatprep.subr.bf16.mxu0 0
        %9388 = vmatpush1.bf16.msra.mxu0 %v9242
        %9389 = vmatprep.subr.bf16.mxu0 0
        %9390 = vmatpush1.bf16.msra.mxu0 %v9243
        %9391 = vmatprep.subr.bf16.mxu0 0
        %9392 = vmatpush1.bf16.msra.mxu0 %v9244
        %9393 = vmatprep.subr.bf16.mxu0 0
        %9394 = vmatpush1.bf16.msra.mxu0 %v9245
        %9395 = vmatprep.subr.bf16.mxu0 0
        %9396 = vmatpush1.bf16.msra.mxu0 %v9246
        %9397 = vmatprep.subr.bf16.mxu0 0
        %9398 = vmatpush1.bf16.msra.mxu0 %v9247
        %9399 = vmatprep.subr.bf16.mxu0 0
        %9400 = vmatpush1.bf16.msra.mxu0 %v9248
        %9401 = vmatprep.subr.bf16.mxu0 0
        %9402 = vmatpush1.bf16.msra.mxu0 %v9249
        %9403 = vmatprep.subr.bf16.mxu0 0
        %9404 = vmatpush1.bf16.msra.mxu0 %v9250
        %9405 = vmatprep.subr.bf16.mxu0 0
        %9406 = vmatpush1.bf16.msra.mxu0 %v9251
        %9407 = vmatprep.subr.bf16.mxu0 0
        %9408 = vmatpush1.bf16.msra.mxu0 %v9252
        %9409 = vmatprep.subr.bf16.mxu0 0
        %9410 = vmatpush1.bf16.msra.mxu0 %v9253
        %9411 = vmatprep.subr.bf16.mxu0 0
        %9412 = vmatpush1.bf16.msra.mxu0 %v9254
        %9413 = vmatprep.subr.bf16.mxu0 0
        %9414 = vmatpush1.bf16.msra.mxu0 %v9255
        %9415 = vmatprep.subr.bf16.mxu0 0
        %9416 = vmatpush1.bf16.msra.mxu0 %v9256
        %9417 = vmatprep.mubr.bf16.mxu0 %v8920
        %9418 = vmatmul.mubr.bf16.gmra.mrb[0].mxu0 %v8919
        %v9419 = vpop.f32.mrb[0].mxu0
        %v9420 = vadd.f32 %v9380, %v9419
        %v9421 = vpop.f32.mrb[0].mxu0
        %v9422 = vpop.f32.mrb[0].mxu0
        %v9423 = vpop.f32.mrb[0].mxu0
        %9424 = vdwg.mxu0
        %v9425 = vadd.f32 %v8914, %v9420
        %vm9426 = vcmask 74752
        %9427 = vst.msk [vmem:[#allocation8] sm:$0x3] %vm9426, %v9425
        %p9428 = scmp.eq.s32.totalorder %s23, 1
        // Predicated region
        $region57: #{mlp_forward.1} parent=39 // pred_check
          %p9429 = pneg %p9428
        $region58: #{mlp_forward.1} parent=39 // pred_check_branch
          %9431 = sbr.rel (%p9429) target = $region60
        $region59: #{mlp_forward.1} parent=39 // pred_region
          %v9432 = vld [vmem:[#allocation8] sm:$0x3]
          %v9433 = vld [vmem:[#allocation7] sm:$0x1]
          %v9435 = vlaneseq
          %v9436 = vshrl.u32 %v9435, 7
          %v9437 = vsub.s32 0, %v9436
          %v9438 = vrot.slane %v9433, %v9437
          %v9440 = vadd.f32 %v9432, %v9438
          %9441 = vst.msk [vmem:[#allocation8] sm:$0x3] %vm9426, %v9440
        $region60: #{mlp_forward.1} parent=39 // pred_fallthru
          _
        // Predicated region
        $region61: #{mlp_forward.1} parent=39 // pred_check
          %p9442 = pneg %p156
        $region62: #{mlp_forward.1} parent=39 // pred_check_branch
          %9444 = sbr.rel (%p9442) target = $region64
        $region63: #{mlp_forward.1} parent=39 // pred_region
          %s9446 = ssub.s32 32, 32
          %9447 = vsyncadd [#allocation4], %s9446
          %s9449 = sshll.u32 [#allocation8], 4
          %s9450 = int_to_ptr.vmem [resolvable:$true] %s9449
          %9452 = dma.vmem_to_hbm [thread:$0]  %s9450, 32, %s5, [#allocation4]
        $region64: #{mlp_forward.1} parent=39 // pred_fallthru
          _
        // Predicated region
        $region65: #{mlp_forward.1} parent=39 // pred_check
          %p9453 = pneg %p156
        $region66: #{mlp_forward.1} parent=39 // pred_check_branch
          %9455 = sbr.rel (%p9453) target = $region68
        $region67: #{mlp_forward.1} parent=39 // pred_region
          %9456 = dma.done [#allocation4], 32
        $region68: #{mlp_forward.1} parent=39 // pred_fallthru
          _
      $region40: #{mlp_forward.1} parent=5 // pred_fallthru
        _
      %p9457 = scmp.le.s32.totalorder 2, %s18
      // Predicated region
      $region69: #{mlp_forward.1} parent=5 // pred_check
        %p9458 = pneg %p9457
      $region70: #{mlp_forward.1} parent=5 // pred_check_branch
        %9460 = sbr.rel (%p9458) target = $region72
      $region71: #{mlp_forward.1} parent=5 // pred_region
        %s9461 = ssub.s32 %s18, 2
      $region72: #{mlp_forward.1} parent=5 // pred_fallthru
        _
    $region6: #{mlp_forward.1} parent=1 // loop_footer
      %s22 = sadd.s32 1, %s18
    $region7: #{mlp_forward.1} parent=1 // loop_footer_branch
      %17 = sbr.rel target = $region3
    $region8: #{mlp_forward.1} parent=1 // loop_exit
      _
    %9462 = vsyncpa [#allocation3], 1
    %s9463 = scalar_lea.sflag [#allocation3], 1
    %9464 = vsyncpa %s9463, 1
    %9465 = vsyncpa [#allocation6], 1
    %s9466 = scalar_lea.sflag [#allocation6], 1
    %9467 = vsyncpa %s9466, 1
    %9468 = vsyncpa [#allocation4], 1
    %s9469 = scalar_lea.sflag [#allocation4], 1
    %9470 = vsyncpa %s9469, 1

</llo_original>
